<compile_context>
chip_gen: v7x
topology: tpu7x:2x2x1
jax: 0.10.0
libtpu: 0.0.40
codegen_flags: <defaults>
</compile_context>

<pallas_src>
import functools

import jax
import jax.numpy as jnp
from jax.experimental import pallas as pl
from jax.experimental.pallas import tpu as pltpu  # noqa: F401  (TPU backend)

# ----------------------------- hyper-params ----------------------------------
N_INSTRUCTIONS = 8   # num_queries (T)
NINP = 32            # embedding dim (E)
NHEAD = 4            # heads (dh = 8)
NHID = 64            # FFN hidden
NLAYERS = 2
BATCH = 2            # B
MEM_SEQ = 8          # memory sequence length (S)


# --------------------------- in-kernel helpers --------------------------------
def _add_layernorm(x, res, g, b):
    # LayerNorm(x + res) over the last dim, eps = 1e-5 (PyTorch default)
    y = x + res
    mu = jnp.mean(y, axis=-1, keepdims=True)
    var = jnp.mean(jnp.square(y - mu), axis=-1, keepdims=True)
    return (y - mu) * jax.lax.rsqrt(var + 1e-5) * g + b


def _mha(x2d, mem2d, w_in, b_in, w_out, b_out, *, nhead, batch, cross):
    # x2d: (B*T, E) batch-major rows; mem2d: (B*S, E) (== x2d for self-attn).
    # w_in: (E, 3E) pre-transposed [Wq | Wk | Wv]; w_out: (E, E) pre-transposed.
    rows_q, E = x2d.shape
    T = rows_q // batch
    S = mem2d.shape[0] // batch
    dh = E // nhead
    scale = 1.0 / float(dh) ** 0.5

    if cross:
        q2d = jnp.dot(x2d, w_in[:, :E], preferred_element_type=jnp.float32) + b_in[:, :E]
        kv = jnp.dot(mem2d, w_in[:, E:], preferred_element_type=jnp.float32) + b_in[:, E:]
        k2d, v2d = kv[:, :E], kv[:, E:]
    else:
        qkv = jnp.dot(x2d, w_in, preferred_element_type=jnp.float32) + b_in
        q2d, k2d, v2d = qkv[:, :E], qkv[:, E:2 * E], qkv[:, 2 * E:]

    q3 = (q2d * scale).reshape(batch, T, E)   # fold 1/sqrt(dh) into q
    k3 = k2d.reshape(batch, S, E)
    v3 = v2d.reshape(batch, S, E)

    out = None
    for h in range(nhead):
        sl = slice(h * dh, (h + 1) * dh)
        s = jnp.einsum("bqd,bkd->bqk", q3[:, :, sl], k3[:, :, sl],
                       preferred_element_type=jnp.float32)          # (B, T, S)
        m = jnp.max(s, axis=-1, keepdims=True)
        p = jnp.exp(s - m)
        p = p * pl.reciprocal(jnp.sum(p, axis=-1, keepdims=True), approx=True)
        o_h = jnp.einsum("bqk,bkd->bqd", p, v3[:, :, sl],
                         preferred_element_type=jnp.float32).reshape(rows_q, dh)
        # fold head h straight into the output projection (lane-dense E cols)
        contrib = jnp.dot(o_h, w_out[sl, :], preferred_element_type=jnp.float32)
        out = contrib if out is None else out + contrib
    return out + b_out


def _ffn(x, w1, b1, w2, b2):
    # linear2(relu(linear1(x))); dropout inside is identity at eval time
    h = jnp.maximum(jnp.dot(x, w1, preferred_element_type=jnp.float32) + b1, 0.0)
    return jnp.dot(h, w2, preferred_element_type=jnp.float32) + b2


# ------------------------------ fused kernel ----------------------------------
def _decoder_kernel(tgt_ref, mem_ref,
                    sa_w_in_ref, sa_b_in_ref, sa_w_out_ref, sa_b_out_ref,
                    ca_w_in_ref, ca_b_in_ref, ca_w_out_ref, ca_b_out_ref,
                    ff_w1_ref, ff_b1_ref, ff_w2_ref, ff_b2_ref,
                    ln_g_ref, ln_b_ref, lnf_g_ref, lnf_b_ref,
                    out_ref, *, nlayers, nhead, batch):
    x = tgt_ref[...]      # (B*T, E), batch-major rows
    mem = mem_ref[...]    # (B*S, E), batch-major rows

    for l in range(nlayers):          # unrolled at trace time
        ln_g = ln_g_ref[l]            # (3, E)
        ln_b = ln_b_ref[l]
        # --- self-attention block ---
        sa = _mha(x, x, sa_w_in_ref[l], sa_b_in_ref[l],
                  sa_w_out_ref[l], sa_b_out_ref[l],
                  nhead=nhead, batch=batch, cross=False)
        x = _add_layernorm(x, sa, ln_g[0:1, :], ln_b[0:1, :])
        # --- cross-attention block ---
        ca = _mha(x, mem, ca_w_in_ref[l], ca_b_in_ref[l],
                  ca_w_out_ref[l], ca_b_out_ref[l],
                  nhead=nhead, batch=batch, cross=True)
        x = _add_layernorm(x, ca, ln_g[1:2, :], ln_b[1:2, :])
        # --- feed-forward block ---
        ff = _ffn(x, ff_w1_ref[l], ff_b1_ref[l], ff_w2_ref[l], ff_b2_ref[l])
        x = _add_layernorm(x, ff, ln_g[2:3, :], ln_b[2:3, :])

    # final LayerNorm (TransformerDecoder norm=LayerNorm(ninp)), no residual
    mu = jnp.mean(x, axis=-1, keepdims=True)
    var = jnp.mean(jnp.square(x - mu), axis=-1, keepdims=True)
    out_ref[...] = (x - mu) * jax.lax.rsqrt(var + 1e-5) * lnf_g_ref[...] + lnf_b_ref[...]


# ------------------------------ model wrapper ----------------------------------
def question_decoder_forward(memory, params, *, nhead, nlayers):
    # memory: (S, B, E) seq-first, as in the PyTorch module
    S, B, E = memory.shape
    T = params["query_embed"].shape[0]
    # instr_queries = query_embed.weight.unsqueeze(1).repeat(1, B, 1) -> (T,B,E);
    # internally we keep a batch-major (B*T, E) slab for the fused kernel.
    tgt = jnp.broadcast_to(params["query_embed"][None, :, :], (B, T, E)).reshape(B * T, E)
    mem = jnp.transpose(memory, (1, 0, 2)).reshape(B * S, E)

    kern = functools.partial(_decoder_kernel, nlayers=nlayers, nhead=nhead, batch=B)
    out2d = pl.pallas_call(
        kern,
        out_shape=jax.ShapeDtypeStruct((B * T, E), jnp.float32),
    )(tgt.astype(jnp.float32), mem.astype(jnp.float32),
      params["sa_w_in"], params["sa_b_in"], params["sa_w_out"], params["sa_b_out"],
      params["ca_w_in"], params["ca_b_in"], params["ca_w_out"], params["ca_b_out"],
      params["ff_w1"], params["ff_b1"], params["ff_w2"], params["ff_b2"],
      params["ln_g"], params["ln_b"], params["lnf_g"], params["lnf_b"])

    # back to (T, B, E) to match the PyTorch module output
    return out2d.reshape(B, T, E).transpose(1, 0, 2)


# ------------------------------ param init ------------------------------------
def init_params(key, n_instructions, ninp, nhead, nhid, nlayers):
    # Weights are stored pre-transposed to (in, out) -- i.e. W_pt.T for every
    # PyTorch nn.Linear / in_proj weight -- and QKV is pre-concatenated.
    keys = iter(jax.random.split(key, 1 + 6 * nlayers))

    def dense(k, shape, scale=0.05):
        return (jax.random.normal(k, shape, jnp.float32) * scale).astype(jnp.float32)

    qe = dense(next(keys), (n_instructions, ninp), scale=1.0)
    sa_w_in, sa_w_out, ca_w_in, ca_w_out, ff_w1, ff_w2 = [], [], [], [], [], []
    for _ in range(nlayers):
        sa_w_in.append(dense(next(keys), (ninp, 3 * ninp)))
        sa_w_out.append(dense(next(keys), (ninp, ninp)))
        ca_w_in.append(dense(next(keys), (ninp, 3 * ninp)))
        ca_w_out.append(dense(next(keys), (ninp, ninp)))
        ff_w1.append(dense(next(keys), (ninp, nhid)))
        ff_w2.append(dense(next(keys), (nhid, ninp)))

    params = {
        "query_embed": qe,
        "sa_w_in": jnp.stack(sa_w_in),                                   # (L, E, 3E)
        "sa_b_in": jnp.zeros((nlayers, 1, 3 * ninp), jnp.float32),
        "sa_w_out": jnp.stack(sa_w_out),                                 # (L, E, E)
        "sa_b_out": jnp.zeros((nlayers, 1, ninp), jnp.float32),
        "ca_w_in": jnp.stack(ca_w_in),
        "ca_b_in": jnp.zeros((nlayers, 1, 3 * ninp), jnp.float32),
        "ca_w_out": jnp.stack(ca_w_out),
        "ca_b_out": jnp.zeros((nlayers, 1, ninp), jnp.float32),
        "ff_w1": jnp.stack(ff_w1),                                       # (L, E, H)
        "ff_b1": jnp.zeros((nlayers, 1, nhid), jnp.float32),
        "ff_w2": jnp.stack(ff_w2),                                       # (L, H, E)
        "ff_b2": jnp.zeros((nlayers, 1, ninp), jnp.float32),
        "ln_g": jnp.ones((nlayers, 3, ninp), jnp.float32),               # ln1/ln2/ln3
        "ln_b": jnp.zeros((nlayers, 3, ninp), jnp.float32),
        "lnf_g": jnp.ones((1, ninp), jnp.float32),
        "lnf_b": jnp.zeros((1, ninp), jnp.float32),
    }
    return params


# ----------------------------------- main --------------------------------------
if __name__ == "__main__":
    key = jax.random.PRNGKey(0)
    k_param, k_mem = jax.random.split(key)
    params = init_params(k_param, N_INSTRUCTIONS, NINP, NHEAD, NHID, NLAYERS)

    memory = jax.random.normal(k_mem, (MEM_SEQ, BATCH, NINP), jnp.float32)

    fwd = jax.jit(
        functools.partial(question_decoder_forward, nhead=NHEAD, nlayers=NLAYERS)
    )
    out = fwd(memory, params)
    jax.block_until_ready(out)

    assert out.shape == (N_INSTRUCTIONS, BATCH, NINP), out.shape
    assert out.dtype == jnp.float32
    # TODO(synk): training-mode dropout (p=0.1) not implemented; eval-mode semantics only.
    print("KERNEL_OK")
</pallas_src>

<mosaic_0001>
module attributes {stable_mosaic.version = 11 : i64} {
  func.func @_decoder_kernel(%arg0: memref<16x32xf32, #tpu.memory_space<vmem>>, %arg1: memref<16x32xf32, #tpu.memory_space<vmem>>, %arg2: memref<2x32x96xf32, #tpu.memory_space<vmem>>, %arg3: memref<2x1x96xf32, #tpu.memory_space<vmem>>, %arg4: memref<2x32x32xf32, #tpu.memory_space<vmem>>, %arg5: memref<2x1x32xf32, #tpu.memory_space<vmem>>, %arg6: memref<2x32x96xf32, #tpu.memory_space<vmem>>, %arg7: memref<2x1x96xf32, #tpu.memory_space<vmem>>, %arg8: memref<2x32x32xf32, #tpu.memory_space<vmem>>, %arg9: memref<2x1x32xf32, #tpu.memory_space<vmem>>, %arg10: memref<2x32x64xf32, #tpu.memory_space<vmem>>, %arg11: memref<2x1x64xf32, #tpu.memory_space<vmem>>, %arg12: memref<2x64x32xf32, #tpu.memory_space<vmem>>, %arg13: memref<2x1x32xf32, #tpu.memory_space<vmem>>, %arg14: memref<2x3x32xf32, #tpu.memory_space<vmem>>, %arg15: memref<2x3x32xf32, #tpu.memory_space<vmem>>, %arg16: memref<1x32xf32, #tpu.memory_space<vmem>>, %arg17: memref<1x32xf32, #tpu.memory_space<vmem>>, %arg18: memref<16x32xf32, #tpu.memory_space<vmem>>) attributes {dimension_semantics = [], scalar_prefetch = 0 : i64, scratch_operands = 0 : i64, tpu.core_type = #tpu.core_type<tc>} {
    %c0 = arith.constant 0 : index
    %c0_0 = arith.constant 0 : index
    %0 = vector.load %arg0[%c0, %c0_0] : memref<16x32xf32, #tpu.memory_space<vmem>>, vector<16x32xf32>
    %c0_1 = arith.constant 0 : index
    %c0_2 = arith.constant 0 : index
    %1 = vector.load %arg1[%c0_1, %c0_2] : memref<16x32xf32, #tpu.memory_space<vmem>>, vector<16x32xf32>
    %c0_3 = arith.constant 0 : index
    %c0_4 = arith.constant 0 : index
    %c0_5 = arith.constant 0 : index
    %2 = vector.load %arg14[%c0_3, %c0_4, %c0_5] : memref<2x3x32xf32, #tpu.memory_space<vmem>>, vector<1x3x32xf32>
    %3 = vector.shape_cast %2 : vector<1x3x32xf32> to vector<3x32xf32>
    %c0_6 = arith.constant 0 : index
    %c0_7 = arith.constant 0 : index
    %c0_8 = arith.constant 0 : index
    %4 = vector.load %arg15[%c0_6, %c0_7, %c0_8] : memref<2x3x32xf32, #tpu.memory_space<vmem>>, vector<1x3x32xf32>
    %5 = vector.shape_cast %4 : vector<1x3x32xf32> to vector<3x32xf32>
    %c0_9 = arith.constant 0 : index
    %c0_10 = arith.constant 0 : index
    %c0_11 = arith.constant 0 : index
    %6 = vector.load %arg2[%c0_9, %c0_10, %c0_11] : memref<2x32x96xf32, #tpu.memory_space<vmem>>, vector<1x32x96xf32>
    %7 = vector.shape_cast %6 : vector<1x32x96xf32> to vector<32x96xf32>
    %c0_12 = arith.constant 0 : index
    %c0_13 = arith.constant 0 : index
    %c0_14 = arith.constant 0 : index
    %8 = vector.load %arg3[%c0_12, %c0_13, %c0_14] : memref<2x1x96xf32, #tpu.memory_space<vmem>>, vector<1x1x96xf32>
    %9 = vector.shape_cast %8 : vector<1x1x96xf32> to vector<1x96xf32>
    %c0_15 = arith.constant 0 : index
    %c0_16 = arith.constant 0 : index
    %c0_17 = arith.constant 0 : index
    %10 = vector.load %arg4[%c0_15, %c0_16, %c0_17] : memref<2x32x32xf32, #tpu.memory_space<vmem>>, vector<1x32x32xf32>
    %11 = vector.shape_cast %10 : vector<1x32x32xf32> to vector<32x32xf32>
    %c0_18 = arith.constant 0 : index
    %c0_19 = arith.constant 0 : index
    %c0_20 = arith.constant 0 : index
    %12 = vector.load %arg5[%c0_18, %c0_19, %c0_20] : memref<2x1x32xf32, #tpu.memory_space<vmem>>, vector<1x1x32xf32>
    %13 = vector.shape_cast %12 : vector<1x1x32xf32> to vector<1x32xf32>
    %cst = arith.constant dense<0.000000e+00> : vector<16x96xf32>
    %14 = tpu.matmul %0, %7, %cst {dimension_numbers = #tpu.dot_dimension_numbers<[1], [0], [0], [1], [0, 0, 1, 1], [], []>} : vector<16x32xf32>, vector<32x96xf32>, vector<16x96xf32> -> vector<16x96xf32>
    %15 = vector.broadcast %9 : vector<1x96xf32> to vector<16x96xf32>
    %16 = arith.addf %14, %15 : vector<16x96xf32>
    %17 = vector.extract_strided_slice %16 {offsets = [0, 0], sizes = [16, 32], strides = [1, 1]} : vector<16x96xf32> to vector<16x32xf32>
    %18 = vector.extract_strided_slice %16 {offsets = [0, 32], sizes = [16, 32], strides = [1, 1]} : vector<16x96xf32> to vector<16x32xf32>
    %19 = vector.extract_strided_slice %16 {offsets = [0, 64], sizes = [16, 32], strides = [1, 1]} : vector<16x96xf32> to vector<16x32xf32>
    %cst_21 = arith.constant 0.353553385 : f32
    %20 = vector.broadcast %cst_21 : f32 to vector<16x32xf32>
    %21 = arith.mulf %17, %20 : vector<16x32xf32>
    %22 = vector.shape_cast %21 : vector<16x32xf32> to vector<2x8x32xf32>
    %23 = vector.shape_cast %18 : vector<16x32xf32> to vector<2x8x32xf32>
    %24 = vector.shape_cast %19 : vector<16x32xf32> to vector<2x8x32xf32>
    %25 = vector.extract_strided_slice %22 {offsets = [0, 0, 0], sizes = [2, 8, 8], strides = [1, 1, 1]} : vector<2x8x32xf32> to vector<2x8x8xf32>
    %26 = vector.extract_strided_slice %23 {offsets = [0, 0, 0], sizes = [2, 8, 8], strides = [1, 1, 1]} : vector<2x8x32xf32> to vector<2x8x8xf32>
    "tpu.trace_start"() <{level = 10 : i32, message = "bqd,bkd->bqk"}> : () -> ()
    %cst_22 = arith.constant dense<0.000000e+00> : vector<2x8x8xf32>
    %27 = tpu.matmul %25, %26, %cst_22 {dimension_numbers = #tpu.dot_dimension_numbers<[2], [2], [1], [1], [0, 0, 0, 1, 1, 1], [0], [0]>} : vector<2x8x8xf32>, vector<2x8x8xf32>, vector<2x8x8xf32> -> vector<2x8x8xf32>
    "tpu.trace_stop"() : () -> ()
    %cst_23 = arith.constant dense<0xFF800000> : vector<2x8xf32>
    %28 = vector.multi_reduction <maximumf>, %27, %cst_23 [2] : vector<2x8x8xf32> to vector<2x8xf32>
    %29 = vector.shape_cast %28 : vector<2x8xf32> to vector<2x8x1xf32>
    %30 = vector.broadcast %29 : vector<2x8x1xf32> to vector<2x8x8xf32>
    %31 = arith.subf %27, %30 : vector<2x8x8xf32>
    %32 = math.exp %31 : vector<2x8x8xf32>
    %cst_24 = arith.constant dense<0.000000e+00> : vector<2x8xf32>
    %33 = vector.multi_reduction <add>, %32, %cst_24 [2] : vector<2x8x8xf32> to vector<2x8xf32>
    %34 = vector.shape_cast %33 : vector<2x8xf32> to vector<2x8x1xf32>
    %35 = tpu.reciprocal %34 {approx = true} : vector<2x8x1xf32> -> vector<2x8x1xf32>
    %36 = vector.broadcast %35 : vector<2x8x1xf32> to vector<2x8x8xf32>
    %37 = arith.mulf %32, %36 : vector<2x8x8xf32>
    %38 = vector.extract_strided_slice %24 {offsets = [0, 0, 0], sizes = [2, 8, 8], strides = [1, 1, 1]} : vector<2x8x32xf32> to vector<2x8x8xf32>
    "tpu.trace_start"() <{level = 10 : i32, message = "bqk,bkd->bqd"}> : () -> ()
    %cst_25 = arith.constant dense<0.000000e+00> : vector<2x8x8xf32>
    %39 = tpu.matmul %37, %38, %cst_25 {dimension_numbers = #tpu.dot_dimension_numbers<[2], [1], [1], [2], [0, 0, 0, 1, 1, 2], [0], [0]>} : vector<2x8x8xf32>, vector<2x8x8xf32>, vector<2x8x8xf32> -> vector<2x8x8xf32>
    "tpu.trace_stop"() : () -> ()
    %40 = vector.shape_cast %39 : vector<2x8x8xf32> to vector<16x8xf32>
    %41 = vector.extract_strided_slice %11 {offsets = [0, 0], sizes = [8, 32], strides = [1, 1]} : vector<32x32xf32> to vector<8x32xf32>
    %cst_26 = arith.constant dense<0.000000e+00> : vector<16x32xf32>
    %42 = tpu.matmul %40, %41, %cst_26 {dimension_numbers = #tpu.dot_dimension_numbers<[1], [0], [0], [1], [0, 0, 1, 1], [], []>} : vector<16x8xf32>, vector<8x32xf32>, vector<16x32xf32> -> vector<16x32xf32>
    %43 = vector.extract_strided_slice %22 {offsets = [0, 0, 8], sizes = [2, 8, 8], strides = [1, 1, 1]} : vector<2x8x32xf32> to vector<2x8x8xf32>
    %44 = vector.extract_strided_slice %23 {offsets = [0, 0, 8], sizes = [2, 8, 8], strides = [1, 1, 1]} : vector<2x8x32xf32> to vector<2x8x8xf32>
    "tpu.trace_start"() <{level = 10 : i32, message = "bqd,bkd->bqk"}> : () -> ()
    %cst_27 = arith.constant dense<0.000000e+00> : vector<2x8x8xf32>
    %45 = tpu.matmul %43, %44, %cst_27 {dimension_numbers = #tpu.dot_dimension_numbers<[2], [2], [1], [1], [0, 0, 0, 1, 1, 1], [0], [0]>} : vector<2x8x8xf32>, vector<2x8x8xf32>, vector<2x8x8xf32> -> vector<2x8x8xf32>
    "tpu.trace_stop"() : () -> ()
    %cst_28 = arith.constant dense<0xFF800000> : vector<2x8xf32>
    %46 = vector.multi_reduction <maximumf>, %45, %cst_28 [2] : vector<2x8x8xf32> to vector<2x8xf32>
    %47 = vector.shape_cast %46 : vector<2x8xf32> to vector<2x8x1xf32>
    %48 = vector.broadcast %47 : vector<2x8x1xf32> to vector<2x8x8xf32>
    %49 = arith.subf %45, %48 : vector<2x8x8xf32>
    %50 = math.exp %49 : vector<2x8x8xf32>
    %cst_29 = arith.constant dense<0.000000e+00> : vector<2x8xf32>
    %51 = vector.multi_reduction <add>, %50, %cst_29 [2] : vector<2x8x8xf32> to vector<2x8xf32>
    %52 = vector.shape_cast %51 : vector<2x8xf32> to vector<2x8x1xf32>
    %53 = tpu.reciprocal %52 {approx = true} : vector<2x8x1xf32> -> vector<2x8x1xf32>
    %54 = vector.broadcast %53 : vector<2x8x1xf32> to vector<2x8x8xf32>
    %55 = arith.mulf %50, %54 : vector<2x8x8xf32>
    %56 = vector.extract_strided_slice %24 {offsets = [0, 0, 8], sizes = [2, 8, 8], strides = [1, 1, 1]} : vector<2x8x32xf32> to vector<2x8x8xf32>
    "tpu.trace_start"() <{level = 10 : i32, message = "bqk,bkd->bqd"}> : () -> ()
    %cst_30 = arith.constant dense<0.000000e+00> : vector<2x8x8xf32>
    %57 = tpu.matmul %55, %56, %cst_30 {dimension_numbers = #tpu.dot_dimension_numbers<[2], [1], [1], [2], [0, 0, 0, 1, 1, 2], [0], [0]>} : vector<2x8x8xf32>, vector<2x8x8xf32>, vector<2x8x8xf32> -> vector<2x8x8xf32>
    "tpu.trace_stop"() : () -> ()
    %58 = vector.shape_cast %57 : vector<2x8x8xf32> to vector<16x8xf32>
    %59 = vector.extract_strided_slice %11 {offsets = [8, 0], sizes = [8, 32], strides = [1, 1]} : vector<32x32xf32> to vector<8x32xf32>
    %cst_31 = arith.constant dense<0.000000e+00> : vector<16x32xf32>
    %60 = tpu.matmul %58, %59, %cst_31 {dimension_numbers = #tpu.dot_dimension_numbers<[1], [0], [0], [1], [0, 0, 1, 1], [], []>} : vector<16x8xf32>, vector<8x32xf32>, vector<16x32xf32> -> vector<16x32xf32>
    %61 = arith.addf %42, %60 : vector<16x32xf32>
    %62 = vector.extract_strided_slice %22 {offsets = [0, 0, 16], sizes = [2, 8, 8], strides = [1, 1, 1]} : vector<2x8x32xf32> to vector<2x8x8xf32>
    %63 = vector.extract_strided_slice %23 {offsets = [0, 0, 16], sizes = [2, 8, 8], strides = [1, 1, 1]} : vector<2x8x32xf32> to vector<2x8x8xf32>
    "tpu.trace_start"() <{level = 10 : i32, message = "bqd,bkd->bqk"}> : () -> ()
    %cst_32 = arith.constant dense<0.000000e+00> : vector<2x8x8xf32>
    %64 = tpu.matmul %62, %63, %cst_32 {dimension_numbers = #tpu.dot_dimension_numbers<[2], [2], [1], [1], [0, 0, 0, 1, 1, 1], [0], [0]>} : vector<2x8x8xf32>, vector<2x8x8xf32>, vector<2x8x8xf32> -> vector<2x8x8xf32>
    "tpu.trace_stop"() : () -> ()
    %cst_33 = arith.constant dense<0xFF800000> : vector<2x8xf32>
    %65 = vector.multi_reduction <maximumf>, %64, %cst_33 [2] : vector<2x8x8xf32> to vector<2x8xf32>
    %66 = vector.shape_cast %65 : vector<2x8xf32> to vector<2x8x1xf32>
    %67 = vector.broadcast %66 : vector<2x8x1xf32> to vector<2x8x8xf32>
    %68 = arith.subf %64, %67 : vector<2x8x8xf32>
    %69 = math.exp %68 : vector<2x8x8xf32>
    %cst_34 = arith.constant dense<0.000000e+00> : vector<2x8xf32>
    %70 = vector.multi_reduction <add>, %69, %cst_34 [2] : vector<2x8x8xf32> to vector<2x8xf32>
    %71 = vector.shape_cast %70 : vector<2x8xf32> to vector<2x8x1xf32>
    %72 = tpu.reciprocal %71 {approx = true} : vector<2x8x1xf32> -> vector<2x8x1xf32>
    %73 = vector.broadcast %72 : vector<2x8x1xf32> to vector<2x8x8xf32>
    %74 = arith.mulf %69, %73 : vector<2x8x8xf32>
    %75 = vector.extract_strided_slice %24 {offsets = [0, 0, 16], sizes = [2, 8, 8], strides = [1, 1, 1]} : vector<2x8x32xf32> to vector<2x8x8xf32>
    "tpu.trace_start"() <{level = 10 : i32, message = "bqk,bkd->bqd"}> : () -> ()
    %cst_35 = arith.constant dense<0.000000e+00> : vector<2x8x8xf32>
    %76 = tpu.matmul %74, %75, %cst_35 {dimension_numbers = #tpu.dot_dimension_numbers<[2], [1], [1], [2], [0, 0, 0, 1, 1, 2], [0], [0]>} : vector<2x8x8xf32>, vector<2x8x8xf32>, vector<2x8x8xf32> -> vector<2x8x8xf32>
    "tpu.trace_stop"() : () -> ()
    %77 = vector.shape_cast %76 : vector<2x8x8xf32> to vector<16x8xf32>
    %78 = vector.extract_strided_slice %11 {offsets = [16, 0], sizes = [8, 32], strides = [1, 1]} : vector<32x32xf32> to vector<8x32xf32>
    %cst_36 = arith.constant dense<0.000000e+00> : vector<16x32xf32>
    %79 = tpu.matmul %77, %78, %cst_36 {dimension_numbers = #tpu.dot_dimension_numbers<[1], [0], [0], [1], [0, 0, 1, 1], [], []>} : vector<16x8xf32>, vector<8x32xf32>, vector<16x32xf32> -> vector<16x32xf32>
    %80 = arith.addf %61, %79 : vector<16x32xf32>
    %81 = vector.extract_strided_slice %22 {offsets = [0, 0, 24], sizes = [2, 8, 8], strides = [1, 1, 1]} : vector<2x8x32xf32> to vector<2x8x8xf32>
    %82 = vector.extract_strided_slice %23 {offsets = [0, 0, 24], sizes = [2, 8, 8], strides = [1, 1, 1]} : vector<2x8x32xf32> to vector<2x8x8xf32>
    "tpu.trace_start"() <{level = 10 : i32, message = "bqd,bkd->bqk"}> : () -> ()
    %cst_37 = arith.constant dense<0.000000e+00> : vector<2x8x8xf32>
    %83 = tpu.matmul %81, %82, %cst_37 {dimension_numbers = #tpu.dot_dimension_numbers<[2], [2], [1], [1], [0, 0, 0, 1, 1, 1], [0], [0]>} : vector<2x8x8xf32>, vector<2x8x8xf32>, vector<2x8x8xf32> -> vector<2x8x8xf32>
    "tpu.trace_stop"() : () -> ()
    %cst_38 = arith.constant dense<0xFF800000> : vector<2x8xf32>
    %84 = vector.multi_reduction <maximumf>, %83, %cst_38 [2] : vector<2x8x8xf32> to vector<2x8xf32>
    %85 = vector.shape_cast %84 : vector<2x8xf32> to vector<2x8x1xf32>
    %86 = vector.broadcast %85 : vector<2x8x1xf32> to vector<2x8x8xf32>
    %87 = arith.subf %83, %86 : vector<2x8x8xf32>
    %88 = math.exp %87 : vector<2x8x8xf32>
    %cst_39 = arith.constant dense<0.000000e+00> : vector<2x8xf32>
    %89 = vector.multi_reduction <add>, %88, %cst_39 [2] : vector<2x8x8xf32> to vector<2x8xf32>
    %90 = vector.shape_cast %89 : vector<2x8xf32> to vector<2x8x1xf32>
    %91 = tpu.reciprocal %90 {approx = true} : vector<2x8x1xf32> -> vector<2x8x1xf32>
    %92 = vector.broadcast %91 : vector<2x8x1xf32> to vector<2x8x8xf32>
    %93 = arith.mulf %88, %92 : vector<2x8x8xf32>
    %94 = vector.extract_strided_slice %24 {offsets = [0, 0, 24], sizes = [2, 8, 8], strides = [1, 1, 1]} : vector<2x8x32xf32> to vector<2x8x8xf32>
    "tpu.trace_start"() <{level = 10 : i32, message = "bqk,bkd->bqd"}> : () -> ()
    %cst_40 = arith.constant dense<0.000000e+00> : vector<2x8x8xf32>
    %95 = tpu.matmul %93, %94, %cst_40 {dimension_numbers = #tpu.dot_dimension_numbers<[2], [1], [1], [2], [0, 0, 0, 1, 1, 2], [0], [0]>} : vector<2x8x8xf32>, vector<2x8x8xf32>, vector<2x8x8xf32> -> vector<2x8x8xf32>
    "tpu.trace_stop"() : () -> ()
    %96 = vector.shape_cast %95 : vector<2x8x8xf32> to vector<16x8xf32>
    %97 = vector.extract_strided_slice %11 {offsets = [24, 0], sizes = [8, 32], strides = [1, 1]} : vector<32x32xf32> to vector<8x32xf32>
    %cst_41 = arith.constant dense<0.000000e+00> : vector<16x32xf32>
    %98 = tpu.matmul %96, %97, %cst_41 {dimension_numbers = #tpu.dot_dimension_numbers<[1], [0], [0], [1], [0, 0, 1, 1], [], []>} : vector<16x8xf32>, vector<8x32xf32>, vector<16x32xf32> -> vector<16x32xf32>
    %99 = arith.addf %80, %98 : vector<16x32xf32>
    %100 = vector.broadcast %13 : vector<1x32xf32> to vector<16x32xf32>
    %101 = arith.addf %99, %100 : vector<16x32xf32>
    %102 = vector.extract_strided_slice %3 {offsets = [0, 0], sizes = [1, 32], strides = [1, 1]} : vector<3x32xf32> to vector<1x32xf32>
    %103 = vector.extract_strided_slice %5 {offsets = [0, 0], sizes = [1, 32], strides = [1, 1]} : vector<3x32xf32> to vector<1x32xf32>
    %104 = arith.addf %0, %101 : vector<16x32xf32>
    %cst_42 = arith.constant dense<0.000000e+00> : vector<16xf32>
    %105 = vector.multi_reduction <add>, %104, %cst_42 [1] : vector<16x32xf32> to vector<16xf32>
    %106 = vector.shape_cast %105 : vector<16xf32> to vector<16x1xf32>
    %cst_43 = arith.constant 3.200000e+01 : f32
    %107 = vector.broadcast %cst_43 : f32 to vector<16x1xf32>
    %108 = arith.divf %106, %107 : vector<16x1xf32>
    %109 = vector.broadcast %108 : vector<16x1xf32> to vector<16x32xf32>
    %110 = arith.subf %104, %109 : vector<16x32xf32>
    %111 = arith.mulf %110, %110 : vector<16x32xf32>
    %cst_44 = arith.constant dense<0.000000e+00> : vector<16xf32>
    %112 = vector.multi_reduction <add>, %111, %cst_44 [1] : vector<16x32xf32> to vector<16xf32>
    %113 = vector.shape_cast %112 : vector<16xf32> to vector<16x1xf32>
    %cst_45 = arith.constant 3.200000e+01 : f32
    %114 = vector.broadcast %cst_45 : f32 to vector<16x1xf32>
    %115 = arith.divf %113, %114 : vector<16x1xf32>
    %116 = vector.broadcast %108 : vector<16x1xf32> to vector<16x32xf32>
    %117 = arith.subf %104, %116 : vector<16x32xf32>
    %cst_46 = arith.constant 9.99999974E-6 : f32
    %118 = vector.broadcast %cst_46 : f32 to vector<16x1xf32>
    %119 = arith.addf %115, %118 : vector<16x1xf32>
    %120 = math.rsqrt %119 : vector<16x1xf32>
    %121 = vector.broadcast %120 : vector<16x1xf32> to vector<16x32xf32>
    %122 = arith.mulf %117, %121 : vector<16x32xf32>
    %123 = vector.broadcast %102 : vector<1x32xf32> to vector<16x32xf32>
    %124 = arith.mulf %122, %123 : vector<16x32xf32>
    %125 = vector.broadcast %103 : vector<1x32xf32> to vector<16x32xf32>
    %126 = arith.addf %124, %125 : vector<16x32xf32>
    %c0_47 = arith.constant 0 : index
    %c0_48 = arith.constant 0 : index
    %c0_49 = arith.constant 0 : index
    %127 = vector.load %arg6[%c0_47, %c0_48, %c0_49] : memref<2x32x96xf32, #tpu.memory_space<vmem>>, vector<1x32x96xf32>
    %128 = vector.shape_cast %127 : vector<1x32x96xf32> to vector<32x96xf32>
    %c0_50 = arith.constant 0 : index
    %c0_51 = arith.constant 0 : index
    %c0_52 = arith.constant 0 : index
    %129 = vector.load %arg7[%c0_50, %c0_51, %c0_52] : memref<2x1x96xf32, #tpu.memory_space<vmem>>, vector<1x1x96xf32>
    %130 = vector.shape_cast %129 : vector<1x1x96xf32> to vector<1x96xf32>
    %c0_53 = arith.constant 0 : index
    %c0_54 = arith.constant 0 : index
    %c0_55 = arith.constant 0 : index
    %131 = vector.load %arg8[%c0_53, %c0_54, %c0_55] : memref<2x32x32xf32, #tpu.memory_space<vmem>>, vector<1x32x32xf32>
    %132 = vector.shape_cast %131 : vector<1x32x32xf32> to vector<32x32xf32>
    %c0_56 = arith.constant 0 : index
    %c0_57 = arith.constant 0 : index
    %c0_58 = arith.constant 0 : index
    %133 = vector.load %arg9[%c0_56, %c0_57, %c0_58] : memref<2x1x32xf32, #tpu.memory_space<vmem>>, vector<1x1x32xf32>
    %134 = vector.shape_cast %133 : vector<1x1x32xf32> to vector<1x32xf32>
    %135 = vector.extract_strided_slice %128 {offsets = [0, 0], sizes = [32, 32], strides = [1, 1]} : vector<32x96xf32> to vector<32x32xf32>
    %cst_59 = arith.constant dense<0.000000e+00> : vector<16x32xf32>
    %136 = tpu.matmul %126, %135, %cst_59 {dimension_numbers = #tpu.dot_dimension_numbers<[1], [0], [0], [1], [0, 0, 1, 1], [], []>} : vector<16x32xf32>, vector<32x32xf32>, vector<16x32xf32> -> vector<16x32xf32>
    %137 = vector.extract_strided_slice %130 {offsets = [0, 0], sizes = [1, 32], strides = [1, 1]} : vector<1x96xf32> to vector<1x32xf32>
    %138 = vector.broadcast %137 : vector<1x32xf32> to vector<16x32xf32>
    %139 = arith.addf %136, %138 : vector<16x32xf32>
    %140 = vector.extract_strided_slice %128 {offsets = [0, 32], sizes = [32, 64], strides = [1, 1]} : vector<32x96xf32> to vector<32x64xf32>
    %cst_60 = arith.constant dense<0.000000e+00> : vector<16x64xf32>
    %141 = tpu.matmul %1, %140, %cst_60 {dimension_numbers = #tpu.dot_dimension_numbers<[1], [0], [0], [1], [0, 0, 1, 1], [], []>} : vector<16x32xf32>, vector<32x64xf32>, vector<16x64xf32> -> vector<16x64xf32>
    %142 = vector.extract_strided_slice %130 {offsets = [0, 32], sizes = [1, 64], strides = [1, 1]} : vector<1x96xf32> to vector<1x64xf32>
    %143 = vector.broadcast %142 : vector<1x64xf32> to vector<16x64xf32>
    %144 = arith.addf %141, %143 : vector<16x64xf32>
    %145 = vector.extract_strided_slice %144 {offsets = [0, 0], sizes = [16, 32], strides = [1, 1]} : vector<16x64xf32> to vector<16x32xf32>
    %146 = vector.extract_strided_slice %144 {offsets = [0, 32], sizes = [16, 32], strides = [1, 1]} : vector<16x64xf32> to vector<16x32xf32>
    %cst_61 = arith.constant 0.353553385 : f32
    %147 = vector.broadcast %cst_61 : f32 to vector<16x32xf32>
    %148 = arith.mulf %139, %147 : vector<16x32xf32>
    %149 = vector.shape_cast %148 : vector<16x32xf32> to vector<2x8x32xf32>
    %150 = vector.shape_cast %145 : vector<16x32xf32> to vector<2x8x32xf32>
    %151 = vector.shape_cast %146 : vector<16x32xf32> to vector<2x8x32xf32>
    %152 = vector.extract_strided_slice %149 {offsets = [0, 0, 0], sizes = [2, 8, 8], strides = [1, 1, 1]} : vector<2x8x32xf32> to vector<2x8x8xf32>
    %153 = vector.extract_strided_slice %150 {offsets = [0, 0, 0], sizes = [2, 8, 8], strides = [1, 1, 1]} : vector<2x8x32xf32> to vector<2x8x8xf32>
    "tpu.trace_start"() <{level = 10 : i32, message = "bqd,bkd->bqk"}> : () -> ()
    %cst_62 = arith.constant dense<0.000000e+00> : vector<2x8x8xf32>
    %154 = tpu.matmul %152, %153, %cst_62 {dimension_numbers = #tpu.dot_dimension_numbers<[2], [2], [1], [1], [0, 0, 0, 1, 1, 1], [0], [0]>} : vector<2x8x8xf32>, vector<2x8x8xf32>, vector<2x8x8xf32> -> vector<2x8x8xf32>
    "tpu.trace_stop"() : () -> ()
    %cst_63 = arith.constant dense<0xFF800000> : vector<2x8xf32>
    %155 = vector.multi_reduction <maximumf>, %154, %cst_63 [2] : vector<2x8x8xf32> to vector<2x8xf32>
    %156 = vector.shape_cast %155 : vector<2x8xf32> to vector<2x8x1xf32>
    %157 = vector.broadcast %156 : vector<2x8x1xf32> to vector<2x8x8xf32>
    %158 = arith.subf %154, %157 : vector<2x8x8xf32>
    %159 = math.exp %158 : vector<2x8x8xf32>
    %cst_64 = arith.constant dense<0.000000e+00> : vector<2x8xf32>
    %160 = vector.multi_reduction <add>, %159, %cst_64 [2] : vector<2x8x8xf32> to vector<2x8xf32>
    %161 = vector.shape_cast %160 : vector<2x8xf32> to vector<2x8x1xf32>
    %162 = tpu.reciprocal %161 {approx = true} : vector<2x8x1xf32> -> vector<2x8x1xf32>
    %163 = vector.broadcast %162 : vector<2x8x1xf32> to vector<2x8x8xf32>
    %164 = arith.mulf %159, %163 : vector<2x8x8xf32>
    %165 = vector.extract_strided_slice %151 {offsets = [0, 0, 0], sizes = [2, 8, 8], strides = [1, 1, 1]} : vector<2x8x32xf32> to vector<2x8x8xf32>
    "tpu.trace_start"() <{level = 10 : i32, message = "bqk,bkd->bqd"}> : () -> ()
    %cst_65 = arith.constant dense<0.000000e+00> : vector<2x8x8xf32>
    %166 = tpu.matmul %164, %165, %cst_65 {dimension_numbers = #tpu.dot_dimension_numbers<[2], [1], [1], [2], [0, 0, 0, 1, 1, 2], [0], [0]>} : vector<2x8x8xf32>, vector<2x8x8xf32>, vector<2x8x8xf32> -> vector<2x8x8xf32>
    "tpu.trace_stop"() : () -> ()
    %167 = vector.shape_cast %166 : vector<2x8x8xf32> to vector<16x8xf32>
    %168 = vector.extract_strided_slice %132 {offsets = [0, 0], sizes = [8, 32], strides = [1, 1]} : vector<32x32xf32> to vector<8x32xf32>
    %cst_66 = arith.constant dense<0.000000e+00> : vector<16x32xf32>
    %169 = tpu.matmul %167, %168, %cst_66 {dimension_numbers = #tpu.dot_dimension_numbers<[1], [0], [0], [1], [0, 0, 1, 1], [], []>} : vector<16x8xf32>, vector<8x32xf32>, vector<16x32xf32> -> vector<16x32xf32>
    %170 = vector.extract_strided_slice %149 {offsets = [0, 0, 8], sizes = [2, 8, 8], strides = [1, 1, 1]} : vector<2x8x32xf32> to vector<2x8x8xf32>
    %171 = vector.extract_strided_slice %150 {offsets = [0, 0, 8], sizes = [2, 8, 8], strides = [1, 1, 1]} : vector<2x8x32xf32> to vector<2x8x8xf32>
    "tpu.trace_start"() <{level = 10 : i32, message = "bqd,bkd->bqk"}> : () -> ()
    %cst_67 = arith.constant dense<0.000000e+00> : vector<2x8x8xf32>
    %172 = tpu.matmul %170, %171, %cst_67 {dimension_numbers = #tpu.dot_dimension_numbers<[2], [2], [1], [1], [0, 0, 0, 1, 1, 1], [0], [0]>} : vector<2x8x8xf32>, vector<2x8x8xf32>, vector<2x8x8xf32> -> vector<2x8x8xf32>
    "tpu.trace_stop"() : () -> ()
    %cst_68 = arith.constant dense<0xFF800000> : vector<2x8xf32>
    %173 = vector.multi_reduction <maximumf>, %172, %cst_68 [2] : vector<2x8x8xf32> to vector<2x8xf32>
    %174 = vector.shape_cast %173 : vector<2x8xf32> to vector<2x8x1xf32>
    %175 = vector.broadcast %174 : vector<2x8x1xf32> to vector<2x8x8xf32>
    %176 = arith.subf %172, %175 : vector<2x8x8xf32>
    %177 = math.exp %176 : vector<2x8x8xf32>
    %cst_69 = arith.constant dense<0.000000e+00> : vector<2x8xf32>
    %178 = vector.multi_reduction <add>, %177, %cst_69 [2] : vector<2x8x8xf32> to vector<2x8xf32>
    %179 = vector.shape_cast %178 : vector<2x8xf32> to vector<2x8x1xf32>
    %180 = tpu.reciprocal %179 {approx = true} : vector<2x8x1xf32> -> vector<2x8x1xf32>
    %181 = vector.broadcast %180 : vector<2x8x1xf32> to vector<2x8x8xf32>
    %182 = arith.mulf %177, %181 : vector<2x8x8xf32>
    %183 = vector.extract_strided_slice %151 {offsets = [0, 0, 8], sizes = [2, 8, 8], strides = [1, 1, 1]} : vector<2x8x32xf32> to vector<2x8x8xf32>
    "tpu.trace_start"() <{level = 10 : i32, message = "bqk,bkd->bqd"}> : () -> ()
    %cst_70 = arith.constant dense<0.000000e+00> : vector<2x8x8xf32>
    %184 = tpu.matmul %182, %183, %cst_70 {dimension_numbers = #tpu.dot_dimension_numbers<[2], [1], [1], [2], [0, 0, 0, 1, 1, 2], [0], [0]>} : vector<2x8x8xf32>, vector<2x8x8xf32>, vector<2x8x8xf32> -> vector<2x8x8xf32>
    "tpu.trace_stop"() : () -> ()
    %185 = vector.shape_cast %184 : vector<2x8x8xf32> to vector<16x8xf32>
    %186 = vector.extract_strided_slice %132 {offsets = [8, 0], sizes = [8, 32], strides = [1, 1]} : vector<32x32xf32> to vector<8x32xf32>
    %cst_71 = arith.constant dense<0.000000e+00> : vector<16x32xf32>
    %187 = tpu.matmul %185, %186, %cst_71 {dimension_numbers = #tpu.dot_dimension_numbers<[1], [0], [0], [1], [0, 0, 1, 1], [], []>} : vector<16x8xf32>, vector<8x32xf32>, vector<16x32xf32> -> vector<16x32xf32>
    %188 = arith.addf %169, %187 : vector<16x32xf32>
    %189 = vector.extract_strided_slice %149 {offsets = [0, 0, 16], sizes = [2, 8, 8], strides = [1, 1, 1]} : vector<2x8x32xf32> to vector<2x8x8xf32>
    %190 = vector.extract_strided_slice %150 {offsets = [0, 0, 16], sizes = [2, 8, 8], strides = [1, 1, 1]} : vector<2x8x32xf32> to vector<2x8x8xf32>
    "tpu.trace_start"() <{level = 10 : i32, message = "bqd,bkd->bqk"}> : () -> ()
    %cst_72 = arith.constant dense<0.000000e+00> : vector<2x8x8xf32>
    %191 = tpu.matmul %189, %190, %cst_72 {dimension_numbers = #tpu.dot_dimension_numbers<[2], [2], [1], [1], [0, 0, 0, 1, 1, 1], [0], [0]>} : vector<2x8x8xf32>, vector<2x8x8xf32>, vector<2x8x8xf32> -> vector<2x8x8xf32>
    "tpu.trace_stop"() : () -> ()
    %cst_73 = arith.constant dense<0xFF800000> : vector<2x8xf32>
    %192 = vector.multi_reduction <maximumf>, %191, %cst_73 [2] : vector<2x8x8xf32> to vector<2x8xf32>
    %193 = vector.shape_cast %192 : vector<2x8xf32> to vector<2x8x1xf32>
    %194 = vector.broadcast %193 : vector<2x8x1xf32> to vector<2x8x8xf32>
    %195 = arith.subf %191, %194 : vector<2x8x8xf32>
    %196 = math.exp %195 : vector<2x8x8xf32>
    %cst_74 = arith.constant dense<0.000000e+00> : vector<2x8xf32>
    %197 = vector.multi_reduction <add>, %196, %cst_74 [2] : vector<2x8x8xf32> to vector<2x8xf32>
    %198 = vector.shape_cast %197 : vector<2x8xf32> to vector<2x8x1xf32>
    %199 = tpu.reciprocal %198 {approx = true} : vector<2x8x1xf32> -> vector<2x8x1xf32>
    %200 = vector.broadcast %199 : vector<2x8x1xf32> to vector<2x8x8xf32>
    %201 = arith.mulf %196, %200 : vector<2x8x8xf32>
    %202 = vector.extract_strided_slice %151 {offsets = [0, 0, 16], sizes = [2, 8, 8], strides = [1, 1, 1]} : vector<2x8x32xf32> to vector<2x8x8xf32>
    "tpu.trace_start"() <{level = 10 : i32, message = "bqk,bkd->bqd"}> : () -> ()
    %cst_75 = arith.constant dense<0.000000e+00> : vector<2x8x8xf32>
    %203 = tpu.matmul %201, %202, %cst_75 {dimension_numbers = #tpu.dot_dimension_numbers<[2], [1], [1], [2], [0, 0, 0, 1, 1, 2], [0], [0]>} : vector<2x8x8xf32>, vector<2x8x8xf32>, vector<2x8x8xf32> -> vector<2x8x8xf32>
    "tpu.trace_stop"() : () -> ()
    %204 = vector.shape_cast %203 : vector<2x8x8xf32> to vector<16x8xf32>
    %205 = vector.extract_strided_slice %132 {offsets = [16, 0], sizes = [8, 32], strides = [1, 1]} : vector<32x32xf32> to vector<8x32xf32>
    %cst_76 = arith.constant dense<0.000000e+00> : vector<16x32xf32>
    %206 = tpu.matmul %204, %205, %cst_76 {dimension_numbers = #tpu.dot_dimension_numbers<[1], [0], [0], [1], [0, 0, 1, 1], [], []>} : vector<16x8xf32>, vector<8x32xf32>, vector<16x32xf32> -> vector<16x32xf32>
    %207 = arith.addf %188, %206 : vector<16x32xf32>
    %208 = vector.extract_strided_slice %149 {offsets = [0, 0, 24], sizes = [2, 8, 8], strides = [1, 1, 1]} : vector<2x8x32xf32> to vector<2x8x8xf32>
    %209 = vector.extract_strided_slice %150 {offsets = [0, 0, 24], sizes = [2, 8, 8], strides = [1, 1, 1]} : vector<2x8x32xf32> to vector<2x8x8xf32>
    "tpu.trace_start"() <{level = 10 : i32, message = "bqd,bkd->bqk"}> : () -> ()
    %cst_77 = arith.constant dense<0.000000e+00> : vector<2x8x8xf32>
    %210 = tpu.matmul %208, %209, %cst_77 {dimension_numbers = #tpu.dot_dimension_numbers<[2], [2], [1], [1], [0, 0, 0, 1, 1, 1], [0], [0]>} : vector<2x8x8xf32>, vector<2x8x8xf32>, vector<2x8x8xf32> -> vector<2x8x8xf32>
    "tpu.trace_stop"() : () -> ()
    %cst_78 = arith.constant dense<0xFF800000> : vector<2x8xf32>
    %211 = vector.multi_reduction <maximumf>, %210, %cst_78 [2] : vector<2x8x8xf32> to vector<2x8xf32>
    %212 = vector.shape_cast %211 : vector<2x8xf32> to vector<2x8x1xf32>
    %213 = vector.broadcast %212 : vector<2x8x1xf32> to vector<2x8x8xf32>
    %214 = arith.subf %210, %213 : vector<2x8x8xf32>
    %215 = math.exp %214 : vector<2x8x8xf32>
    %cst_79 = arith.constant dense<0.000000e+00> : vector<2x8xf32>
    %216 = vector.multi_reduction <add>, %215, %cst_79 [2] : vector<2x8x8xf32> to vector<2x8xf32>
    %217 = vector.shape_cast %216 : vector<2x8xf32> to vector<2x8x1xf32>
    %218 = tpu.reciprocal %217 {approx = true} : vector<2x8x1xf32> -> vector<2x8x1xf32>
    %219 = vector.broadcast %218 : vector<2x8x1xf32> to vector<2x8x8xf32>
    %220 = arith.mulf %215, %219 : vector<2x8x8xf32>
    %221 = vector.extract_strided_slice %151 {offsets = [0, 0, 24], sizes = [2, 8, 8], strides = [1, 1, 1]} : vector<2x8x32xf32> to vector<2x8x8xf32>
    "tpu.trace_start"() <{level = 10 : i32, message = "bqk,bkd->bqd"}> : () -> ()
    %cst_80 = arith.constant dense<0.000000e+00> : vector<2x8x8xf32>
    %222 = tpu.matmul %220, %221, %cst_80 {dimension_numbers = #tpu.dot_dimension_numbers<[2], [1], [1], [2], [0, 0, 0, 1, 1, 2], [0], [0]>} : vector<2x8x8xf32>, vector<2x8x8xf32>, vector<2x8x8xf32> -> vector<2x8x8xf32>
    "tpu.trace_stop"() : () -> ()
    %223 = vector.shape_cast %222 : vector<2x8x8xf32> to vector<16x8xf32>
    %224 = vector.extract_strided_slice %132 {offsets = [24, 0], sizes = [8, 32], strides = [1, 1]} : vector<32x32xf32> to vector<8x32xf32>
    %cst_81 = arith.constant dense<0.000000e+00> : vector<16x32xf32>
    %225 = tpu.matmul %223, %224, %cst_81 {dimension_numbers = #tpu.dot_dimension_numbers<[1], [0], [0], [1], [0, 0, 1, 1], [], []>} : vector<16x8xf32>, vector<8x32xf32>, vector<16x32xf32> -> vector<16x32xf32>
    %226 = arith.addf %207, %225 : vector<16x32xf32>
    %227 = vector.broadcast %134 : vector<1x32xf32> to vector<16x32xf32>
    %228 = arith.addf %226, %227 : vector<16x32xf32>
    %229 = vector.extract_strided_slice %3 {offsets = [1, 0], sizes = [1, 32], strides = [1, 1]} : vector<3x32xf32> to vector<1x32xf32>
    %230 = vector.extract_strided_slice %5 {offsets = [1, 0], sizes = [1, 32], strides = [1, 1]} : vector<3x32xf32> to vector<1x32xf32>
    %231 = arith.addf %126, %228 : vector<16x32xf32>
    %cst_82 = arith.constant dense<0.000000e+00> : vector<16xf32>
    %232 = vector.multi_reduction <add>, %231, %cst_82 [1] : vector<16x32xf32> to vector<16xf32>
    %233 = vector.shape_cast %232 : vector<16xf32> to vector<16x1xf32>
    %cst_83 = arith.constant 3.200000e+01 : f32
    %234 = vector.broadcast %cst_83 : f32 to vector<16x1xf32>
    %235 = arith.divf %233, %234 : vector<16x1xf32>
    %236 = vector.broadcast %235 : vector<16x1xf32> to vector<16x32xf32>
    %237 = arith.subf %231, %236 : vector<16x32xf32>
    %238 = arith.mulf %237, %237 : vector<16x32xf32>
    %cst_84 = arith.constant dense<0.000000e+00> : vector<16xf32>
    %239 = vector.multi_reduction <add>, %238, %cst_84 [1] : vector<16x32xf32> to vector<16xf32>
    %240 = vector.shape_cast %239 : vector<16xf32> to vector<16x1xf32>
    %cst_85 = arith.constant 3.200000e+01 : f32
    %241 = vector.broadcast %cst_85 : f32 to vector<16x1xf32>
    %242 = arith.divf %240, %241 : vector<16x1xf32>
    %243 = vector.broadcast %235 : vector<16x1xf32> to vector<16x32xf32>
    %244 = arith.subf %231, %243 : vector<16x32xf32>
    %cst_86 = arith.constant 9.99999974E-6 : f32
    %245 = vector.broadcast %cst_86 : f32 to vector<16x1xf32>
    %246 = arith.addf %242, %245 : vector<16x1xf32>
    %247 = math.rsqrt %246 : vector<16x1xf32>
    %248 = vector.broadcast %247 : vector<16x1xf32> to vector<16x32xf32>
    %249 = arith.mulf %244, %248 : vector<16x32xf32>
    %250 = vector.broadcast %229 : vector<1x32xf32> to vector<16x32xf32>
    %251 = arith.mulf %249, %250 : vector<16x32xf32>
    %252 = vector.broadcast %230 : vector<1x32xf32> to vector<16x32xf32>
    %253 = arith.addf %251, %252 : vector<16x32xf32>
    %c0_87 = arith.constant 0 : index
    %c0_88 = arith.constant 0 : index
    %c0_89 = arith.constant 0 : index
    %254 = vector.load %arg10[%c0_87, %c0_88, %c0_89] : memref<2x32x64xf32, #tpu.memory_space<vmem>>, vector<1x32x64xf32>
    %255 = vector.shape_cast %254 : vector<1x32x64xf32> to vector<32x64xf32>
    %c0_90 = arith.constant 0 : index
    %c0_91 = arith.constant 0 : index
    %c0_92 = arith.constant 0 : index
    %256 = vector.load %arg11[%c0_90, %c0_91, %c0_92] : memref<2x1x64xf32, #tpu.memory_space<vmem>>, vector<1x1x64xf32>
    %257 = vector.shape_cast %256 : vector<1x1x64xf32> to vector<1x64xf32>
    %c0_93 = arith.constant 0 : index
    %c0_94 = arith.constant 0 : index
    %c0_95 = arith.constant 0 : index
    %258 = vector.load %arg12[%c0_93, %c0_94, %c0_95] : memref<2x64x32xf32, #tpu.memory_space<vmem>>, vector<1x64x32xf32>
    %259 = vector.shape_cast %258 : vector<1x64x32xf32> to vector<64x32xf32>
    %c0_96 = arith.constant 0 : index
    %c0_97 = arith.constant 0 : index
    %c0_98 = arith.constant 0 : index
    %260 = vector.load %arg13[%c0_96, %c0_97, %c0_98] : memref<2x1x32xf32, #tpu.memory_space<vmem>>, vector<1x1x32xf32>
    %261 = vector.shape_cast %260 : vector<1x1x32xf32> to vector<1x32xf32>
    %cst_99 = arith.constant dense<0.000000e+00> : vector<16x64xf32>
    %262 = tpu.matmul %253, %255, %cst_99 {dimension_numbers = #tpu.dot_dimension_numbers<[1], [0], [0], [1], [0, 0, 1, 1], [], []>} : vector<16x32xf32>, vector<32x64xf32>, vector<16x64xf32> -> vector<16x64xf32>
    %263 = vector.broadcast %257 : vector<1x64xf32> to vector<16x64xf32>
    %264 = arith.addf %262, %263 : vector<16x64xf32>
    %cst_100 = arith.constant 0.000000e+00 : f32
    %265 = vector.broadcast %cst_100 : f32 to vector<16x64xf32>
    %266 = arith.maximumf %264, %265 : vector<16x64xf32>
    %cst_101 = arith.constant dense<0.000000e+00> : vector<16x32xf32>
    %267 = tpu.matmul %266, %259, %cst_101 {dimension_numbers = #tpu.dot_dimension_numbers<[1], [0], [0], [1], [0, 0, 1, 1], [], []>} : vector<16x64xf32>, vector<64x32xf32>, vector<16x32xf32> -> vector<16x32xf32>
    %268 = vector.broadcast %261 : vector<1x32xf32> to vector<16x32xf32>
    %269 = arith.addf %267, %268 : vector<16x32xf32>
    %270 = vector.extract_strided_slice %3 {offsets = [2, 0], sizes = [1, 32], strides = [1, 1]} : vector<3x32xf32> to vector<1x32xf32>
    %271 = vector.extract_strided_slice %5 {offsets = [2, 0], sizes = [1, 32], strides = [1, 1]} : vector<3x32xf32> to vector<1x32xf32>
    %272 = arith.addf %253, %269 : vector<16x32xf32>
    %cst_102 = arith.constant dense<0.000000e+00> : vector<16xf32>
    %273 = vector.multi_reduction <add>, %272, %cst_102 [1] : vector<16x32xf32> to vector<16xf32>
    %274 = vector.shape_cast %273 : vector<16xf32> to vector<16x1xf32>
    %cst_103 = arith.constant 3.200000e+01 : f32
    %275 = vector.broadcast %cst_103 : f32 to vector<16x1xf32>
    %276 = arith.divf %274, %275 : vector<16x1xf32>
    %277 = vector.broadcast %276 : vector<16x1xf32> to vector<16x32xf32>
    %278 = arith.subf %272, %277 : vector<16x32xf32>
    %279 = arith.mulf %278, %278 : vector<16x32xf32>
    %cst_104 = arith.constant dense<0.000000e+00> : vector<16xf32>
    %280 = vector.multi_reduction <add>, %279, %cst_104 [1] : vector<16x32xf32> to vector<16xf32>
    %281 = vector.shape_cast %280 : vector<16xf32> to vector<16x1xf32>
    %cst_105 = arith.constant 3.200000e+01 : f32
    %282 = vector.broadcast %cst_105 : f32 to vector<16x1xf32>
    %283 = arith.divf %281, %282 : vector<16x1xf32>
    %284 = vector.broadcast %276 : vector<16x1xf32> to vector<16x32xf32>
    %285 = arith.subf %272, %284 : vector<16x32xf32>
    %cst_106 = arith.constant 9.99999974E-6 : f32
    %286 = vector.broadcast %cst_106 : f32 to vector<16x1xf32>
    %287 = arith.addf %283, %286 : vector<16x1xf32>
    %288 = math.rsqrt %287 : vector<16x1xf32>
    %289 = vector.broadcast %288 : vector<16x1xf32> to vector<16x32xf32>
    %290 = arith.mulf %285, %289 : vector<16x32xf32>
    %291 = vector.broadcast %270 : vector<1x32xf32> to vector<16x32xf32>
    %292 = arith.mulf %290, %291 : vector<16x32xf32>
    %293 = vector.broadcast %271 : vector<1x32xf32> to vector<16x32xf32>
    %294 = arith.addf %292, %293 : vector<16x32xf32>
    %c1 = arith.constant 1 : index
    %c0_107 = arith.constant 0 : index
    %c0_108 = arith.constant 0 : index
    %295 = vector.load %arg14[%c1, %c0_107, %c0_108] : memref<2x3x32xf32, #tpu.memory_space<vmem>>, vector<1x3x32xf32>
    %296 = vector.shape_cast %295 : vector<1x3x32xf32> to vector<3x32xf32>
    %c1_109 = arith.constant 1 : index
    %c0_110 = arith.constant 0 : index
    %c0_111 = arith.constant 0 : index
    %297 = vector.load %arg15[%c1_109, %c0_110, %c0_111] : memref<2x3x32xf32, #tpu.memory_space<vmem>>, vector<1x3x32xf32>
    %298 = vector.shape_cast %297 : vector<1x3x32xf32> to vector<3x32xf32>
    %c1_112 = arith.constant 1 : index
    %c0_113 = arith.constant 0 : index
    %c0_114 = arith.constant 0 : index
    %299 = vector.load %arg2[%c1_112, %c0_113, %c0_114] : memref<2x32x96xf32, #tpu.memory_space<vmem>>, vector<1x32x96xf32>
    %300 = vector.shape_cast %299 : vector<1x32x96xf32> to vector<32x96xf32>
    %c1_115 = arith.constant 1 : index
    %c0_116 = arith.constant 0 : index
    %c0_117 = arith.constant 0 : index
    %301 = vector.load %arg3[%c1_115, %c0_116, %c0_117] : memref<2x1x96xf32, #tpu.memory_space<vmem>>, vector<1x1x96xf32>
    %302 = vector.shape_cast %301 : vector<1x1x96xf32> to vector<1x96xf32>
    %c1_118 = arith.constant 1 : index
    %c0_119 = arith.constant 0 : index
    %c0_120 = arith.constant 0 : index
    %303 = vector.load %arg4[%c1_118, %c0_119, %c0_120] : memref<2x32x32xf32, #tpu.memory_space<vmem>>, vector<1x32x32xf32>
    %304 = vector.shape_cast %303 : vector<1x32x32xf32> to vector<32x32xf32>
    %c1_121 = arith.constant 1 : index
    %c0_122 = arith.constant 0 : index
    %c0_123 = arith.constant 0 : index
    %305 = vector.load %arg5[%c1_121, %c0_122, %c0_123] : memref<2x1x32xf32, #tpu.memory_space<vmem>>, vector<1x1x32xf32>
    %306 = vector.shape_cast %305 : vector<1x1x32xf32> to vector<1x32xf32>
    %cst_124 = arith.constant dense<0.000000e+00> : vector<16x96xf32>
    %307 = tpu.matmul %294, %300, %cst_124 {dimension_numbers = #tpu.dot_dimension_numbers<[1], [0], [0], [1], [0, 0, 1, 1], [], []>} : vector<16x32xf32>, vector<32x96xf32>, vector<16x96xf32> -> vector<16x96xf32>
    %308 = vector.broadcast %302 : vector<1x96xf32> to vector<16x96xf32>
    %309 = arith.addf %307, %308 : vector<16x96xf32>
    %310 = vector.extract_strided_slice %309 {offsets = [0, 0], sizes = [16, 32], strides = [1, 1]} : vector<16x96xf32> to vector<16x32xf32>
    %311 = vector.extract_strided_slice %309 {offsets = [0, 32], sizes = [16, 32], strides = [1, 1]} : vector<16x96xf32> to vector<16x32xf32>
    %312 = vector.extract_strided_slice %309 {offsets = [0, 64], sizes = [16, 32], strides = [1, 1]} : vector<16x96xf32> to vector<16x32xf32>
    %cst_125 = arith.constant 0.353553385 : f32
    %313 = vector.broadcast %cst_125 : f32 to vector<16x32xf32>
    %314 = arith.mulf %310, %313 : vector<16x32xf32>
    %315 = vector.shape_cast %314 : vector<16x32xf32> to vector<2x8x32xf32>
    %316 = vector.shape_cast %311 : vector<16x32xf32> to vector<2x8x32xf32>
    %317 = vector.shape_cast %312 : vector<16x32xf32> to vector<2x8x32xf32>
    %318 = vector.extract_strided_slice %315 {offsets = [0, 0, 0], sizes = [2, 8, 8], strides = [1, 1, 1]} : vector<2x8x32xf32> to vector<2x8x8xf32>
    %319 = vector.extract_strided_slice %316 {offsets = [0, 0, 0], sizes = [2, 8, 8], strides = [1, 1, 1]} : vector<2x8x32xf32> to vector<2x8x8xf32>
    "tpu.trace_start"() <{level = 10 : i32, message = "bqd,bkd->bqk"}> : () -> ()
    %cst_126 = arith.constant dense<0.000000e+00> : vector<2x8x8xf32>
    %320 = tpu.matmul %318, %319, %cst_126 {dimension_numbers = #tpu.dot_dimension_numbers<[2], [2], [1], [1], [0, 0, 0, 1, 1, 1], [0], [0]>} : vector<2x8x8xf32>, vector<2x8x8xf32>, vector<2x8x8xf32> -> vector<2x8x8xf32>
    "tpu.trace_stop"() : () -> ()
    %cst_127 = arith.constant dense<0xFF800000> : vector<2x8xf32>
    %321 = vector.multi_reduction <maximumf>, %320, %cst_127 [2] : vector<2x8x8xf32> to vector<2x8xf32>
    %322 = vector.shape_cast %321 : vector<2x8xf32> to vector<2x8x1xf32>
    %323 = vector.broadcast %322 : vector<2x8x1xf32> to vector<2x8x8xf32>
    %324 = arith.subf %320, %323 : vector<2x8x8xf32>
    %325 = math.exp %324 : vector<2x8x8xf32>
    %cst_128 = arith.constant dense<0.000000e+00> : vector<2x8xf32>
    %326 = vector.multi_reduction <add>, %325, %cst_128 [2] : vector<2x8x8xf32> to vector<2x8xf32>
    %327 = vector.shape_cast %326 : vector<2x8xf32> to vector<2x8x1xf32>
    %328 = tpu.reciprocal %327 {approx = true} : vector<2x8x1xf32> -> vector<2x8x1xf32>
    %329 = vector.broadcast %328 : vector<2x8x1xf32> to vector<2x8x8xf32>
    %330 = arith.mulf %325, %329 : vector<2x8x8xf32>
    %331 = vector.extract_strided_slice %317 {offsets = [0, 0, 0], sizes = [2, 8, 8], strides = [1, 1, 1]} : vector<2x8x32xf32> to vector<2x8x8xf32>
    "tpu.trace_start"() <{level = 10 : i32, message = "bqk,bkd->bqd"}> : () -> ()
    %cst_129 = arith.constant dense<0.000000e+00> : vector<2x8x8xf32>
    %332 = tpu.matmul %330, %331, %cst_129 {dimension_numbers = #tpu.dot_dimension_numbers<[2], [1], [1], [2], [0, 0, 0, 1, 1, 2], [0], [0]>} : vector<2x8x8xf32>, vector<2x8x8xf32>, vector<2x8x8xf32> -> vector<2x8x8xf32>
    "tpu.trace_stop"() : () -> ()
    %333 = vector.shape_cast %332 : vector<2x8x8xf32> to vector<16x8xf32>
    %334 = vector.extract_strided_slice %304 {offsets = [0, 0], sizes = [8, 32], strides = [1, 1]} : vector<32x32xf32> to vector<8x32xf32>
    %cst_130 = arith.constant dense<0.000000e+00> : vector<16x32xf32>
    %335 = tpu.matmul %333, %334, %cst_130 {dimension_numbers = #tpu.dot_dimension_numbers<[1], [0], [0], [1], [0, 0, 1, 1], [], []>} : vector<16x8xf32>, vector<8x32xf32>, vector<16x32xf32> -> vector<16x32xf32>
    %336 = vector.extract_strided_slice %315 {offsets = [0, 0, 8], sizes = [2, 8, 8], strides = [1, 1, 1]} : vector<2x8x32xf32> to vector<2x8x8xf32>
    %337 = vector.extract_strided_slice %316 {offsets = [0, 0, 8], sizes = [2, 8, 8], strides = [1, 1, 1]} : vector<2x8x32xf32> to vector<2x8x8xf32>
    "tpu.trace_start"() <{level = 10 : i32, message = "bqd,bkd->bqk"}> : () -> ()
    %cst_131 = arith.constant dense<0.000000e+00> : vector<2x8x8xf32>
    %338 = tpu.matmul %336, %337, %cst_131 {dimension_numbers = #tpu.dot_dimension_numbers<[2], [2], [1], [1], [0, 0, 0, 1, 1, 1], [0], [0]>} : vector<2x8x8xf32>, vector<2x8x8xf32>, vector<2x8x8xf32> -> vector<2x8x8xf32>
    "tpu.trace_stop"() : () -> ()
    %cst_132 = arith.constant dense<0xFF800000> : vector<2x8xf32>
    %339 = vector.multi_reduction <maximumf>, %338, %cst_132 [2] : vector<2x8x8xf32> to vector<2x8xf32>
    %340 = vector.shape_cast %339 : vector<2x8xf32> to vector<2x8x1xf32>
    %341 = vector.broadcast %340 : vector<2x8x1xf32> to vector<2x8x8xf32>
    %342 = arith.subf %338, %341 : vector<2x8x8xf32>
    %343 = math.exp %342 : vector<2x8x8xf32>
    %cst_133 = arith.constant dense<0.000000e+00> : vector<2x8xf32>
    %344 = vector.multi_reduction <add>, %343, %cst_133 [2] : vector<2x8x8xf32> to vector<2x8xf32>
    %345 = vector.shape_cast %344 : vector<2x8xf32> to vector<2x8x1xf32>
    %346 = tpu.reciprocal %345 {approx = true} : vector<2x8x1xf32> -> vector<2x8x1xf32>
    %347 = vector.broadcast %346 : vector<2x8x1xf32> to vector<2x8x8xf32>
    %348 = arith.mulf %343, %347 : vector<2x8x8xf32>
    %349 = vector.extract_strided_slice %317 {offsets = [0, 0, 8], sizes = [2, 8, 8], strides = [1, 1, 1]} : vector<2x8x32xf32> to vector<2x8x8xf32>
    "tpu.trace_start"() <{level = 10 : i32, message = "bqk,bkd->bqd"}> : () -> ()
    %cst_134 = arith.constant dense<0.000000e+00> : vector<2x8x8xf32>
    %350 = tpu.matmul %348, %349, %cst_134 {dimension_numbers = #tpu.dot_dimension_numbers<[2], [1], [1], [2], [0, 0, 0, 1, 1, 2], [0], [0]>} : vector<2x8x8xf32>, vector<2x8x8xf32>, vector<2x8x8xf32> -> vector<2x8x8xf32>
    "tpu.trace_stop"() : () -> ()
    %351 = vector.shape_cast %350 : vector<2x8x8xf32> to vector<16x8xf32>
    %352 = vector.extract_strided_slice %304 {offsets = [8, 0], sizes = [8, 32], strides = [1, 1]} : vector<32x32xf32> to vector<8x32xf32>
    %cst_135 = arith.constant dense<0.000000e+00> : vector<16x32xf32>
    %353 = tpu.matmul %351, %352, %cst_135 {dimension_numbers = #tpu.dot_dimension_numbers<[1], [0], [0], [1], [0, 0, 1, 1], [], []>} : vector<16x8xf32>, vector<8x32xf32>, vector<16x32xf32> -> vector<16x32xf32>
    %354 = arith.addf %335, %353 : vector<16x32xf32>
    %355 = vector.extract_strided_slice %315 {offsets = [0, 0, 16], sizes = [2, 8, 8], strides = [1, 1, 1]} : vector<2x8x32xf32> to vector<2x8x8xf32>
    %356 = vector.extract_strided_slice %316 {offsets = [0, 0, 16], sizes = [2, 8, 8], strides = [1, 1, 1]} : vector<2x8x32xf32> to vector<2x8x8xf32>
    "tpu.trace_start"() <{level = 10 : i32, message = "bqd,bkd->bqk"}> : () -> ()
    %cst_136 = arith.constant dense<0.000000e+00> : vector<2x8x8xf32>
    %357 = tpu.matmul %355, %356, %cst_136 {dimension_numbers = #tpu.dot_dimension_numbers<[2], [2], [1], [1], [0, 0, 0, 1, 1, 1], [0], [0]>} : vector<2x8x8xf32>, vector<2x8x8xf32>, vector<2x8x8xf32> -> vector<2x8x8xf32>
    "tpu.trace_stop"() : () -> ()
    %cst_137 = arith.constant dense<0xFF800000> : vector<2x8xf32>
    %358 = vector.multi_reduction <maximumf>, %357, %cst_137 [2] : vector<2x8x8xf32> to vector<2x8xf32>
    %359 = vector.shape_cast %358 : vector<2x8xf32> to vector<2x8x1xf32>
    %360 = vector.broadcast %359 : vector<2x8x1xf32> to vector<2x8x8xf32>
    %361 = arith.subf %357, %360 : vector<2x8x8xf32>
    %362 = math.exp %361 : vector<2x8x8xf32>
    %cst_138 = arith.constant dense<0.000000e+00> : vector<2x8xf32>
    %363 = vector.multi_reduction <add>, %362, %cst_138 [2] : vector<2x8x8xf32> to vector<2x8xf32>
    %364 = vector.shape_cast %363 : vector<2x8xf32> to vector<2x8x1xf32>
    %365 = tpu.reciprocal %364 {approx = true} : vector<2x8x1xf32> -> vector<2x8x1xf32>
    %366 = vector.broadcast %365 : vector<2x8x1xf32> to vector<2x8x8xf32>
    %367 = arith.mulf %362, %366 : vector<2x8x8xf32>
    %368 = vector.extract_strided_slice %317 {offsets = [0, 0, 16], sizes = [2, 8, 8], strides = [1, 1, 1]} : vector<2x8x32xf32> to vector<2x8x8xf32>
    "tpu.trace_start"() <{level = 10 : i32, message = "bqk,bkd->bqd"}> : () -> ()
    %cst_139 = arith.constant dense<0.000000e+00> : vector<2x8x8xf32>
    %369 = tpu.matmul %367, %368, %cst_139 {dimension_numbers = #tpu.dot_dimension_numbers<[2], [1], [1], [2], [0, 0, 0, 1, 1, 2], [0], [0]>} : vector<2x8x8xf32>, vector<2x8x8xf32>, vector<2x8x8xf32> -> vector<2x8x8xf32>
    "tpu.trace_stop"() : () -> ()
    %370 = vector.shape_cast %369 : vector<2x8x8xf32> to vector<16x8xf32>
    %371 = vector.extract_strided_slice %304 {offsets = [16, 0], sizes = [8, 32], strides = [1, 1]} : vector<32x32xf32> to vector<8x32xf32>
    %cst_140 = arith.constant dense<0.000000e+00> : vector<16x32xf32>
    %372 = tpu.matmul %370, %371, %cst_140 {dimension_numbers = #tpu.dot_dimension_numbers<[1], [0], [0], [1], [0, 0, 1, 1], [], []>} : vector<16x8xf32>, vector<8x32xf32>, vector<16x32xf32> -> vector<16x32xf32>
    %373 = arith.addf %354, %372 : vector<16x32xf32>
    %374 = vector.extract_strided_slice %315 {offsets = [0, 0, 24], sizes = [2, 8, 8], strides = [1, 1, 1]} : vector<2x8x32xf32> to vector<2x8x8xf32>
    %375 = vector.extract_strided_slice %316 {offsets = [0, 0, 24], sizes = [2, 8, 8], strides = [1, 1, 1]} : vector<2x8x32xf32> to vector<2x8x8xf32>
    "tpu.trace_start"() <{level = 10 : i32, message = "bqd,bkd->bqk"}> : () -> ()
    %cst_141 = arith.constant dense<0.000000e+00> : vector<2x8x8xf32>
    %376 = tpu.matmul %374, %375, %cst_141 {dimension_numbers = #tpu.dot_dimension_numbers<[2], [2], [1], [1], [0, 0, 0, 1, 1, 1], [0], [0]>} : vector<2x8x8xf32>, vector<2x8x8xf32>, vector<2x8x8xf32> -> vector<2x8x8xf32>
    "tpu.trace_stop"() : () -> ()
    %cst_142 = arith.constant dense<0xFF800000> : vector<2x8xf32>
    %377 = vector.multi_reduction <maximumf>, %376, %cst_142 [2] : vector<2x8x8xf32> to vector<2x8xf32>
    %378 = vector.shape_cast %377 : vector<2x8xf32> to vector<2x8x1xf32>
    %379 = vector.broadcast %378 : vector<2x8x1xf32> to vector<2x8x8xf32>
    %380 = arith.subf %376, %379 : vector<2x8x8xf32>
    %381 = math.exp %380 : vector<2x8x8xf32>
    %cst_143 = arith.constant dense<0.000000e+00> : vector<2x8xf32>
    %382 = vector.multi_reduction <add>, %381, %cst_143 [2] : vector<2x8x8xf32> to vector<2x8xf32>
    %383 = vector.shape_cast %382 : vector<2x8xf32> to vector<2x8x1xf32>
    %384 = tpu.reciprocal %383 {approx = true} : vector<2x8x1xf32> -> vector<2x8x1xf32>
    %385 = vector.broadcast %384 : vector<2x8x1xf32> to vector<2x8x8xf32>
    %386 = arith.mulf %381, %385 : vector<2x8x8xf32>
    %387 = vector.extract_strided_slice %317 {offsets = [0, 0, 24], sizes = [2, 8, 8], strides = [1, 1, 1]} : vector<2x8x32xf32> to vector<2x8x8xf32>
    "tpu.trace_start"() <{level = 10 : i32, message = "bqk,bkd->bqd"}> : () -> ()
    %cst_144 = arith.constant dense<0.000000e+00> : vector<2x8x8xf32>
    %388 = tpu.matmul %386, %387, %cst_144 {dimension_numbers = #tpu.dot_dimension_numbers<[2], [1], [1], [2], [0, 0, 0, 1, 1, 2], [0], [0]>} : vector<2x8x8xf32>, vector<2x8x8xf32>, vector<2x8x8xf32> -> vector<2x8x8xf32>
    "tpu.trace_stop"() : () -> ()
    %389 = vector.shape_cast %388 : vector<2x8x8xf32> to vector<16x8xf32>
    %390 = vector.extract_strided_slice %304 {offsets = [24, 0], sizes = [8, 32], strides = [1, 1]} : vector<32x32xf32> to vector<8x32xf32>
    %cst_145 = arith.constant dense<0.000000e+00> : vector<16x32xf32>
    %391 = tpu.matmul %389, %390, %cst_145 {dimension_numbers = #tpu.dot_dimension_numbers<[1], [0], [0], [1], [0, 0, 1, 1], [], []>} : vector<16x8xf32>, vector<8x32xf32>, vector<16x32xf32> -> vector<16x32xf32>
    %392 = arith.addf %373, %391 : vector<16x32xf32>
    %393 = vector.broadcast %306 : vector<1x32xf32> to vector<16x32xf32>
    %394 = arith.addf %392, %393 : vector<16x32xf32>
    %395 = vector.extract_strided_slice %296 {offsets = [0, 0], sizes = [1, 32], strides = [1, 1]} : vector<3x32xf32> to vector<1x32xf32>
    %396 = vector.extract_strided_slice %298 {offsets = [0, 0], sizes = [1, 32], strides = [1, 1]} : vector<3x32xf32> to vector<1x32xf32>
    %397 = arith.addf %294, %394 : vector<16x32xf32>
    %cst_146 = arith.constant dense<0.000000e+00> : vector<16xf32>
    %398 = vector.multi_reduction <add>, %397, %cst_146 [1] : vector<16x32xf32> to vector<16xf32>
    %399 = vector.shape_cast %398 : vector<16xf32> to vector<16x1xf32>
    %cst_147 = arith.constant 3.200000e+01 : f32
    %400 = vector.broadcast %cst_147 : f32 to vector<16x1xf32>
    %401 = arith.divf %399, %400 : vector<16x1xf32>
    %402 = vector.broadcast %401 : vector<16x1xf32> to vector<16x32xf32>
    %403 = arith.subf %397, %402 : vector<16x32xf32>
    %404 = arith.mulf %403, %403 : vector<16x32xf32>
    %cst_148 = arith.constant dense<0.000000e+00> : vector<16xf32>
    %405 = vector.multi_reduction <add>, %404, %cst_148 [1] : vector<16x32xf32> to vector<16xf32>
    %406 = vector.shape_cast %405 : vector<16xf32> to vector<16x1xf32>
    %cst_149 = arith.constant 3.200000e+01 : f32
    %407 = vector.broadcast %cst_149 : f32 to vector<16x1xf32>
    %408 = arith.divf %406, %407 : vector<16x1xf32>
    %409 = vector.broadcast %401 : vector<16x1xf32> to vector<16x32xf32>
    %410 = arith.subf %397, %409 : vector<16x32xf32>
    %cst_150 = arith.constant 9.99999974E-6 : f32
    %411 = vector.broadcast %cst_150 : f32 to vector<16x1xf32>
    %412 = arith.addf %408, %411 : vector<16x1xf32>
    %413 = math.rsqrt %412 : vector<16x1xf32>
    %414 = vector.broadcast %413 : vector<16x1xf32> to vector<16x32xf32>
    %415 = arith.mulf %410, %414 : vector<16x32xf32>
    %416 = vector.broadcast %395 : vector<1x32xf32> to vector<16x32xf32>
    %417 = arith.mulf %415, %416 : vector<16x32xf32>
    %418 = vector.broadcast %396 : vector<1x32xf32> to vector<16x32xf32>
    %419 = arith.addf %417, %418 : vector<16x32xf32>
    %c1_151 = arith.constant 1 : index
    %c0_152 = arith.constant 0 : index
    %c0_153 = arith.constant 0 : index
    %420 = vector.load %arg6[%c1_151, %c0_152, %c0_153] : memref<2x32x96xf32, #tpu.memory_space<vmem>>, vector<1x32x96xf32>
    %421 = vector.shape_cast %420 : vector<1x32x96xf32> to vector<32x96xf32>
    %c1_154 = arith.constant 1 : index
    %c0_155 = arith.constant 0 : index
    %c0_156 = arith.constant 0 : index
    %422 = vector.load %arg7[%c1_154, %c0_155, %c0_156] : memref<2x1x96xf32, #tpu.memory_space<vmem>>, vector<1x1x96xf32>
    %423 = vector.shape_cast %422 : vector<1x1x96xf32> to vector<1x96xf32>
    %c1_157 = arith.constant 1 : index
    %c0_158 = arith.constant 0 : index
    %c0_159 = arith.constant 0 : index
    %424 = vector.load %arg8[%c1_157, %c0_158, %c0_159] : memref<2x32x32xf32, #tpu.memory_space<vmem>>, vector<1x32x32xf32>
    %425 = vector.shape_cast %424 : vector<1x32x32xf32> to vector<32x32xf32>
    %c1_160 = arith.constant 1 : index
    %c0_161 = arith.constant 0 : index
    %c0_162 = arith.constant 0 : index
    %426 = vector.load %arg9[%c1_160, %c0_161, %c0_162] : memref<2x1x32xf32, #tpu.memory_space<vmem>>, vector<1x1x32xf32>
    %427 = vector.shape_cast %426 : vector<1x1x32xf32> to vector<1x32xf32>
    %428 = vector.extract_strided_slice %421 {offsets = [0, 0], sizes = [32, 32], strides = [1, 1]} : vector<32x96xf32> to vector<32x32xf32>
    %cst_163 = arith.constant dense<0.000000e+00> : vector<16x32xf32>
    %429 = tpu.matmul %419, %428, %cst_163 {dimension_numbers = #tpu.dot_dimension_numbers<[1], [0], [0], [1], [0, 0, 1, 1], [], []>} : vector<16x32xf32>, vector<32x32xf32>, vector<16x32xf32> -> vector<16x32xf32>
    %430 = vector.extract_strided_slice %423 {offsets = [0, 0], sizes = [1, 32], strides = [1, 1]} : vector<1x96xf32> to vector<1x32xf32>
    %431 = vector.broadcast %430 : vector<1x32xf32> to vector<16x32xf32>
    %432 = arith.addf %429, %431 : vector<16x32xf32>
    %433 = vector.extract_strided_slice %421 {offsets = [0, 32], sizes = [32, 64], strides = [1, 1]} : vector<32x96xf32> to vector<32x64xf32>
    %cst_164 = arith.constant dense<0.000000e+00> : vector<16x64xf32>
    %434 = tpu.matmul %1, %433, %cst_164 {dimension_numbers = #tpu.dot_dimension_numbers<[1], [0], [0], [1], [0, 0, 1, 1], [], []>} : vector<16x32xf32>, vector<32x64xf32>, vector<16x64xf32> -> vector<16x64xf32>
    %435 = vector.extract_strided_slice %423 {offsets = [0, 32], sizes = [1, 64], strides = [1, 1]} : vector<1x96xf32> to vector<1x64xf32>
    %436 = vector.broadcast %435 : vector<1x64xf32> to vector<16x64xf32>
    %437 = arith.addf %434, %436 : vector<16x64xf32>
    %438 = vector.extract_strided_slice %437 {offsets = [0, 0], sizes = [16, 32], strides = [1, 1]} : vector<16x64xf32> to vector<16x32xf32>
    %439 = vector.extract_strided_slice %437 {offsets = [0, 32], sizes = [16, 32], strides = [1, 1]} : vector<16x64xf32> to vector<16x32xf32>
    %cst_165 = arith.constant 0.353553385 : f32
    %440 = vector.broadcast %cst_165 : f32 to vector<16x32xf32>
    %441 = arith.mulf %432, %440 : vector<16x32xf32>
    %442 = vector.shape_cast %441 : vector<16x32xf32> to vector<2x8x32xf32>
    %443 = vector.shape_cast %438 : vector<16x32xf32> to vector<2x8x32xf32>
    %444 = vector.shape_cast %439 : vector<16x32xf32> to vector<2x8x32xf32>
    %445 = vector.extract_strided_slice %442 {offsets = [0, 0, 0], sizes = [2, 8, 8], strides = [1, 1, 1]} : vector<2x8x32xf32> to vector<2x8x8xf32>
    %446 = vector.extract_strided_slice %443 {offsets = [0, 0, 0], sizes = [2, 8, 8], strides = [1, 1, 1]} : vector<2x8x32xf32> to vector<2x8x8xf32>
    "tpu.trace_start"() <{level = 10 : i32, message = "bqd,bkd->bqk"}> : () -> ()
    %cst_166 = arith.constant dense<0.000000e+00> : vector<2x8x8xf32>
    %447 = tpu.matmul %445, %446, %cst_166 {dimension_numbers = #tpu.dot_dimension_numbers<[2], [2], [1], [1], [0, 0, 0, 1, 1, 1], [0], [0]>} : vector<2x8x8xf32>, vector<2x8x8xf32>, vector<2x8x8xf32> -> vector<2x8x8xf32>
    "tpu.trace_stop"() : () -> ()
    %cst_167 = arith.constant dense<0xFF800000> : vector<2x8xf32>
    %448 = vector.multi_reduction <maximumf>, %447, %cst_167 [2] : vector<2x8x8xf32> to vector<2x8xf32>
    %449 = vector.shape_cast %448 : vector<2x8xf32> to vector<2x8x1xf32>
    %450 = vector.broadcast %449 : vector<2x8x1xf32> to vector<2x8x8xf32>
    %451 = arith.subf %447, %450 : vector<2x8x8xf32>
    %452 = math.exp %451 : vector<2x8x8xf32>
    %cst_168 = arith.constant dense<0.000000e+00> : vector<2x8xf32>
    %453 = vector.multi_reduction <add>, %452, %cst_168 [2] : vector<2x8x8xf32> to vector<2x8xf32>
    %454 = vector.shape_cast %453 : vector<2x8xf32> to vector<2x8x1xf32>
    %455 = tpu.reciprocal %454 {approx = true} : vector<2x8x1xf32> -> vector<2x8x1xf32>
    %456 = vector.broadcast %455 : vector<2x8x1xf32> to vector<2x8x8xf32>
    %457 = arith.mulf %452, %456 : vector<2x8x8xf32>
    %458 = vector.extract_strided_slice %444 {offsets = [0, 0, 0], sizes = [2, 8, 8], strides = [1, 1, 1]} : vector<2x8x32xf32> to vector<2x8x8xf32>
    "tpu.trace_start"() <{level = 10 : i32, message = "bqk,bkd->bqd"}> : () -> ()
    %cst_169 = arith.constant dense<0.000000e+00> : vector<2x8x8xf32>
    %459 = tpu.matmul %457, %458, %cst_169 {dimension_numbers = #tpu.dot_dimension_numbers<[2], [1], [1], [2], [0, 0, 0, 1, 1, 2], [0], [0]>} : vector<2x8x8xf32>, vector<2x8x8xf32>, vector<2x8x8xf32> -> vector<2x8x8xf32>
    "tpu.trace_stop"() : () -> ()
    %460 = vector.shape_cast %459 : vector<2x8x8xf32> to vector<16x8xf32>
    %461 = vector.extract_strided_slice %425 {offsets = [0, 0], sizes = [8, 32], strides = [1, 1]} : vector<32x32xf32> to vector<8x32xf32>
    %cst_170 = arith.constant dense<0.000000e+00> : vector<16x32xf32>
    %462 = tpu.matmul %460, %461, %cst_170 {dimension_numbers = #tpu.dot_dimension_numbers<[1], [0], [0], [1], [0, 0, 1, 1], [], []>} : vector<16x8xf32>, vector<8x32xf32>, vector<16x32xf32> -> vector<16x32xf32>
    %463 = vector.extract_strided_slice %442 {offsets = [0, 0, 8], sizes = [2, 8, 8], strides = [1, 1, 1]} : vector<2x8x32xf32> to vector<2x8x8xf32>
    %464 = vector.extract_strided_slice %443 {offsets = [0, 0, 8], sizes = [2, 8, 8], strides = [1, 1, 1]} : vector<2x8x32xf32> to vector<2x8x8xf32>
    "tpu.trace_start"() <{level = 10 : i32, message = "bqd,bkd->bqk"}> : () -> ()
    %cst_171 = arith.constant dense<0.000000e+00> : vector<2x8x8xf32>
    %465 = tpu.matmul %463, %464, %cst_171 {dimension_numbers = #tpu.dot_dimension_numbers<[2], [2], [1], [1], [0, 0, 0, 1, 1, 1], [0], [0]>} : vector<2x8x8xf32>, vector<2x8x8xf32>, vector<2x8x8xf32> -> vector<2x8x8xf32>
    "tpu.trace_stop"() : () -> ()
    %cst_172 = arith.constant dense<0xFF800000> : vector<2x8xf32>
    %466 = vector.multi_reduction <maximumf>, %465, %cst_172 [2] : vector<2x8x8xf32> to vector<2x8xf32>
    %467 = vector.shape_cast %466 : vector<2x8xf32> to vector<2x8x1xf32>
    %468 = vector.broadcast %467 : vector<2x8x1xf32> to vector<2x8x8xf32>
    %469 = arith.subf %465, %468 : vector<2x8x8xf32>
    %470 = math.exp %469 : vector<2x8x8xf32>
    %cst_173 = arith.constant dense<0.000000e+00> : vector<2x8xf32>
    %471 = vector.multi_reduction <add>, %470, %cst_173 [2] : vector<2x8x8xf32> to vector<2x8xf32>
    %472 = vector.shape_cast %471 : vector<2x8xf32> to vector<2x8x1xf32>
    %473 = tpu.reciprocal %472 {approx = true} : vector<2x8x1xf32> -> vector<2x8x1xf32>
    %474 = vector.broadcast %473 : vector<2x8x1xf32> to vector<2x8x8xf32>
    %475 = arith.mulf %470, %474 : vector<2x8x8xf32>
    %476 = vector.extract_strided_slice %444 {offsets = [0, 0, 8], sizes = [2, 8, 8], strides = [1, 1, 1]} : vector<2x8x32xf32> to vector<2x8x8xf32>
    "tpu.trace_start"() <{level = 10 : i32, message = "bqk,bkd->bqd"}> : () -> ()
    %cst_174 = arith.constant dense<0.000000e+00> : vector<2x8x8xf32>
    %477 = tpu.matmul %475, %476, %cst_174 {dimension_numbers = #tpu.dot_dimension_numbers<[2], [1], [1], [2], [0, 0, 0, 1, 1, 2], [0], [0]>} : vector<2x8x8xf32>, vector<2x8x8xf32>, vector<2x8x8xf32> -> vector<2x8x8xf32>
    "tpu.trace_stop"() : () -> ()
    %478 = vector.shape_cast %477 : vector<2x8x8xf32> to vector<16x8xf32>
    %479 = vector.extract_strided_slice %425 {offsets = [8, 0], sizes = [8, 32], strides = [1, 1]} : vector<32x32xf32> to vector<8x32xf32>
    %cst_175 = arith.constant dense<0.000000e+00> : vector<16x32xf32>
    %480 = tpu.matmul %478, %479, %cst_175 {dimension_numbers = #tpu.dot_dimension_numbers<[1], [0], [0], [1], [0, 0, 1, 1], [], []>} : vector<16x8xf32>, vector<8x32xf32>, vector<16x32xf32> -> vector<16x32xf32>
    %481 = arith.addf %462, %480 : vector<16x32xf32>
    %482 = vector.extract_strided_slice %442 {offsets = [0, 0, 16], sizes = [2, 8, 8], strides = [1, 1, 1]} : vector<2x8x32xf32> to vector<2x8x8xf32>
    %483 = vector.extract_strided_slice %443 {offsets = [0, 0, 16], sizes = [2, 8, 8], strides = [1, 1, 1]} : vector<2x8x32xf32> to vector<2x8x8xf32>
    "tpu.trace_start"() <{level = 10 : i32, message = "bqd,bkd->bqk"}> : () -> ()
    %cst_176 = arith.constant dense<0.000000e+00> : vector<2x8x8xf32>
    %484 = tpu.matmul %482, %483, %cst_176 {dimension_numbers = #tpu.dot_dimension_numbers<[2], [2], [1], [1], [0, 0, 0, 1, 1, 1], [0], [0]>} : vector<2x8x8xf32>, vector<2x8x8xf32>, vector<2x8x8xf32> -> vector<2x8x8xf32>
    "tpu.trace_stop"() : () -> ()
    %cst_177 = arith.constant dense<0xFF800000> : vector<2x8xf32>
    %485 = vector.multi_reduction <maximumf>, %484, %cst_177 [2] : vector<2x8x8xf32> to vector<2x8xf32>
    %486 = vector.shape_cast %485 : vector<2x8xf32> to vector<2x8x1xf32>
    %487 = vector.broadcast %486 : vector<2x8x1xf32> to vector<2x8x8xf32>
    %488 = arith.subf %484, %487 : vector<2x8x8xf32>
    %489 = math.exp %488 : vector<2x8x8xf32>
    %cst_178 = arith.constant dense<0.000000e+00> : vector<2x8xf32>
    %490 = vector.multi_reduction <add>, %489, %cst_178 [2] : vector<2x8x8xf32> to vector<2x8xf32>
    %491 = vector.shape_cast %490 : vector<2x8xf32> to vector<2x8x1xf32>
    %492 = tpu.reciprocal %491 {approx = true} : vector<2x8x1xf32> -> vector<2x8x1xf32>
    %493 = vector.broadcast %492 : vector<2x8x1xf32> to vector<2x8x8xf32>
    %494 = arith.mulf %489, %493 : vector<2x8x8xf32>
    %495 = vector.extract_strided_slice %444 {offsets = [0, 0, 16], sizes = [2, 8, 8], strides = [1, 1, 1]} : vector<2x8x32xf32> to vector<2x8x8xf32>
    "tpu.trace_start"() <{level = 10 : i32, message = "bqk,bkd->bqd"}> : () -> ()
    %cst_179 = arith.constant dense<0.000000e+00> : vector<2x8x8xf32>
    %496 = tpu.matmul %494, %495, %cst_179 {dimension_numbers = #tpu.dot_dimension_numbers<[2], [1], [1], [2], [0, 0, 0, 1, 1, 2], [0], [0]>} : vector<2x8x8xf32>, vector<2x8x8xf32>, vector<2x8x8xf32> -> vector<2x8x8xf32>
    "tpu.trace_stop"() : () -> ()
    %497 = vector.shape_cast %496 : vector<2x8x8xf32> to vector<16x8xf32>
    %498 = vector.extract_strided_slice %425 {offsets = [16, 0], sizes = [8, 32], strides = [1, 1]} : vector<32x32xf32> to vector<8x32xf32>
    %cst_180 = arith.constant dense<0.000000e+00> : vector<16x32xf32>
    %499 = tpu.matmul %497, %498, %cst_180 {dimension_numbers = #tpu.dot_dimension_numbers<[1], [0], [0], [1], [0, 0, 1, 1], [], []>} : vector<16x8xf32>, vector<8x32xf32>, vector<16x32xf32> -> vector<16x32xf32>
    %500 = arith.addf %481, %499 : vector<16x32xf32>
    %501 = vector.extract_strided_slice %442 {offsets = [0, 0, 24], sizes = [2, 8, 8], strides = [1, 1, 1]} : vector<2x8x32xf32> to vector<2x8x8xf32>
    %502 = vector.extract_strided_slice %443 {offsets = [0, 0, 24], sizes = [2, 8, 8], strides = [1, 1, 1]} : vector<2x8x32xf32> to vector<2x8x8xf32>
    "tpu.trace_start"() <{level = 10 : i32, message = "bqd,bkd->bqk"}> : () -> ()
    %cst_181 = arith.constant dense<0.000000e+00> : vector<2x8x8xf32>
    %503 = tpu.matmul %501, %502, %cst_181 {dimension_numbers = #tpu.dot_dimension_numbers<[2], [2], [1], [1], [0, 0, 0, 1, 1, 1], [0], [0]>} : vector<2x8x8xf32>, vector<2x8x8xf32>, vector<2x8x8xf32> -> vector<2x8x8xf32>
    "tpu.trace_stop"() : () -> ()
    %cst_182 = arith.constant dense<0xFF800000> : vector<2x8xf32>
    %504 = vector.multi_reduction <maximumf>, %503, %cst_182 [2] : vector<2x8x8xf32> to vector<2x8xf32>
    %505 = vector.shape_cast %504 : vector<2x8xf32> to vector<2x8x1xf32>
    %506 = vector.broadcast %505 : vector<2x8x1xf32> to vector<2x8x8xf32>
    %507 = arith.subf %503, %506 : vector<2x8x8xf32>
    %508 = math.exp %507 : vector<2x8x8xf32>
    %cst_183 = arith.constant dense<0.000000e+00> : vector<2x8xf32>
    %509 = vector.multi_reduction <add>, %508, %cst_183 [2] : vector<2x8x8xf32> to vector<2x8xf32>
    %510 = vector.shape_cast %509 : vector<2x8xf32> to vector<2x8x1xf32>
    %511 = tpu.reciprocal %510 {approx = true} : vector<2x8x1xf32> -> vector<2x8x1xf32>
    %512 = vector.broadcast %511 : vector<2x8x1xf32> to vector<2x8x8xf32>
    %513 = arith.mulf %508, %512 : vector<2x8x8xf32>
    %514 = vector.extract_strided_slice %444 {offsets = [0, 0, 24], sizes = [2, 8, 8], strides = [1, 1, 1]} : vector<2x8x32xf32> to vector<2x8x8xf32>
    "tpu.trace_start"() <{level = 10 : i32, message = "bqk,bkd->bqd"}> : () -> ()
    %cst_184 = arith.constant dense<0.000000e+00> : vector<2x8x8xf32>
    %515 = tpu.matmul %513, %514, %cst_184 {dimension_numbers = #tpu.dot_dimension_numbers<[2], [1], [1], [2], [0, 0, 0, 1, 1, 2], [0], [0]>} : vector<2x8x8xf32>, vector<2x8x8xf32>, vector<2x8x8xf32> -> vector<2x8x8xf32>
    "tpu.trace_stop"() : () -> ()
    %516 = vector.shape_cast %515 : vector<2x8x8xf32> to vector<16x8xf32>
    %517 = vector.extract_strided_slice %425 {offsets = [24, 0], sizes = [8, 32], strides = [1, 1]} : vector<32x32xf32> to vector<8x32xf32>
    %cst_185 = arith.constant dense<0.000000e+00> : vector<16x32xf32>
    %518 = tpu.matmul %516, %517, %cst_185 {dimension_numbers = #tpu.dot_dimension_numbers<[1], [0], [0], [1], [0, 0, 1, 1], [], []>} : vector<16x8xf32>, vector<8x32xf32>, vector<16x32xf32> -> vector<16x32xf32>
    %519 = arith.addf %500, %518 : vector<16x32xf32>
    %520 = vector.broadcast %427 : vector<1x32xf32> to vector<16x32xf32>
    %521 = arith.addf %519, %520 : vector<16x32xf32>
    %522 = vector.extract_strided_slice %296 {offsets = [1, 0], sizes = [1, 32], strides = [1, 1]} : vector<3x32xf32> to vector<1x32xf32>
    %523 = vector.extract_strided_slice %298 {offsets = [1, 0], sizes = [1, 32], strides = [1, 1]} : vector<3x32xf32> to vector<1x32xf32>
    %524 = arith.addf %419, %521 : vector<16x32xf32>
    %cst_186 = arith.constant dense<0.000000e+00> : vector<16xf32>
    %525 = vector.multi_reduction <add>, %524, %cst_186 [1] : vector<16x32xf32> to vector<16xf32>
    %526 = vector.shape_cast %525 : vector<16xf32> to vector<16x1xf32>
    %cst_187 = arith.constant 3.200000e+01 : f32
    %527 = vector.broadcast %cst_187 : f32 to vector<16x1xf32>
    %528 = arith.divf %526, %527 : vector<16x1xf32>
    %529 = vector.broadcast %528 : vector<16x1xf32> to vector<16x32xf32>
    %530 = arith.subf %524, %529 : vector<16x32xf32>
    %531 = arith.mulf %530, %530 : vector<16x32xf32>
    %cst_188 = arith.constant dense<0.000000e+00> : vector<16xf32>
    %532 = vector.multi_reduction <add>, %531, %cst_188 [1] : vector<16x32xf32> to vector<16xf32>
    %533 = vector.shape_cast %532 : vector<16xf32> to vector<16x1xf32>
    %cst_189 = arith.constant 3.200000e+01 : f32
    %534 = vector.broadcast %cst_189 : f32 to vector<16x1xf32>
    %535 = arith.divf %533, %534 : vector<16x1xf32>
    %536 = vector.broadcast %528 : vector<16x1xf32> to vector<16x32xf32>
    %537 = arith.subf %524, %536 : vector<16x32xf32>
    %cst_190 = arith.constant 9.99999974E-6 : f32
    %538 = vector.broadcast %cst_190 : f32 to vector<16x1xf32>
    %539 = arith.addf %535, %538 : vector<16x1xf32>
    %540 = math.rsqrt %539 : vector<16x1xf32>
    %541 = vector.broadcast %540 : vector<16x1xf32> to vector<16x32xf32>
    %542 = arith.mulf %537, %541 : vector<16x32xf32>
    %543 = vector.broadcast %522 : vector<1x32xf32> to vector<16x32xf32>
    %544 = arith.mulf %542, %543 : vector<16x32xf32>
    %545 = vector.broadcast %523 : vector<1x32xf32> to vector<16x32xf32>
    %546 = arith.addf %544, %545 : vector<16x32xf32>
    %c1_191 = arith.constant 1 : index
    %c0_192 = arith.constant 0 : index
    %c0_193 = arith.constant 0 : index
    %547 = vector.load %arg10[%c1_191, %c0_192, %c0_193] : memref<2x32x64xf32, #tpu.memory_space<vmem>>, vector<1x32x64xf32>
    %548 = vector.shape_cast %547 : vector<1x32x64xf32> to vector<32x64xf32>
    %c1_194 = arith.constant 1 : index
    %c0_195 = arith.constant 0 : index
    %c0_196 = arith.constant 0 : index
    %549 = vector.load %arg11[%c1_194, %c0_195, %c0_196] : memref<2x1x64xf32, #tpu.memory_space<vmem>>, vector<1x1x64xf32>
    %550 = vector.shape_cast %549 : vector<1x1x64xf32> to vector<1x64xf32>
    %c1_197 = arith.constant 1 : index
    %c0_198 = arith.constant 0 : index
    %c0_199 = arith.constant 0 : index
    %551 = vector.load %arg12[%c1_197, %c0_198, %c0_199] : memref<2x64x32xf32, #tpu.memory_space<vmem>>, vector<1x64x32xf32>
    %552 = vector.shape_cast %551 : vector<1x64x32xf32> to vector<64x32xf32>
    %c1_200 = arith.constant 1 : index
    %c0_201 = arith.constant 0 : index
    %c0_202 = arith.constant 0 : index
    %553 = vector.load %arg13[%c1_200, %c0_201, %c0_202] : memref<2x1x32xf32, #tpu.memory_space<vmem>>, vector<1x1x32xf32>
    %554 = vector.shape_cast %553 : vector<1x1x32xf32> to vector<1x32xf32>
    %cst_203 = arith.constant dense<0.000000e+00> : vector<16x64xf32>
    %555 = tpu.matmul %546, %548, %cst_203 {dimension_numbers = #tpu.dot_dimension_numbers<[1], [0], [0], [1], [0, 0, 1, 1], [], []>} : vector<16x32xf32>, vector<32x64xf32>, vector<16x64xf32> -> vector<16x64xf32>
    %556 = vector.broadcast %550 : vector<1x64xf32> to vector<16x64xf32>
    %557 = arith.addf %555, %556 : vector<16x64xf32>
    %cst_204 = arith.constant 0.000000e+00 : f32
    %558 = vector.broadcast %cst_204 : f32 to vector<16x64xf32>
    %559 = arith.maximumf %557, %558 : vector<16x64xf32>
    %cst_205 = arith.constant dense<0.000000e+00> : vector<16x32xf32>
    %560 = tpu.matmul %559, %552, %cst_205 {dimension_numbers = #tpu.dot_dimension_numbers<[1], [0], [0], [1], [0, 0, 1, 1], [], []>} : vector<16x64xf32>, vector<64x32xf32>, vector<16x32xf32> -> vector<16x32xf32>
    %561 = vector.broadcast %554 : vector<1x32xf32> to vector<16x32xf32>
    %562 = arith.addf %560, %561 : vector<16x32xf32>
    %563 = vector.extract_strided_slice %296 {offsets = [2, 0], sizes = [1, 32], strides = [1, 1]} : vector<3x32xf32> to vector<1x32xf32>
    %564 = vector.extract_strided_slice %298 {offsets = [2, 0], sizes = [1, 32], strides = [1, 1]} : vector<3x32xf32> to vector<1x32xf32>
    %565 = arith.addf %546, %562 : vector<16x32xf32>
    %cst_206 = arith.constant dense<0.000000e+00> : vector<16xf32>
    %566 = vector.multi_reduction <add>, %565, %cst_206 [1] : vector<16x32xf32> to vector<16xf32>
    %567 = vector.shape_cast %566 : vector<16xf32> to vector<16x1xf32>
    %cst_207 = arith.constant 3.200000e+01 : f32
    %568 = vector.broadcast %cst_207 : f32 to vector<16x1xf32>
    %569 = arith.divf %567, %568 : vector<16x1xf32>
    %570 = vector.broadcast %569 : vector<16x1xf32> to vector<16x32xf32>
    %571 = arith.subf %565, %570 : vector<16x32xf32>
    %572 = arith.mulf %571, %571 : vector<16x32xf32>
    %cst_208 = arith.constant dense<0.000000e+00> : vector<16xf32>
    %573 = vector.multi_reduction <add>, %572, %cst_208 [1] : vector<16x32xf32> to vector<16xf32>
    %574 = vector.shape_cast %573 : vector<16xf32> to vector<16x1xf32>
    %cst_209 = arith.constant 3.200000e+01 : f32
    %575 = vector.broadcast %cst_209 : f32 to vector<16x1xf32>
    %576 = arith.divf %574, %575 : vector<16x1xf32>
    %577 = vector.broadcast %569 : vector<16x1xf32> to vector<16x32xf32>
    %578 = arith.subf %565, %577 : vector<16x32xf32>
    %cst_210 = arith.constant 9.99999974E-6 : f32
    %579 = vector.broadcast %cst_210 : f32 to vector<16x1xf32>
    %580 = arith.addf %576, %579 : vector<16x1xf32>
    %581 = math.rsqrt %580 : vector<16x1xf32>
    %582 = vector.broadcast %581 : vector<16x1xf32> to vector<16x32xf32>
    %583 = arith.mulf %578, %582 : vector<16x32xf32>
    %584 = vector.broadcast %563 : vector<1x32xf32> to vector<16x32xf32>
    %585 = arith.mulf %583, %584 : vector<16x32xf32>
    %586 = vector.broadcast %564 : vector<1x32xf32> to vector<16x32xf32>
    %587 = arith.addf %585, %586 : vector<16x32xf32>
    %cst_211 = arith.constant dense<0.000000e+00> : vector<16xf32>
    %588 = vector.multi_reduction <add>, %587, %cst_211 [1] : vector<16x32xf32> to vector<16xf32>
    %589 = vector.shape_cast %588 : vector<16xf32> to vector<16x1xf32>
    %cst_212 = arith.constant 3.200000e+01 : f32
    %590 = vector.broadcast %cst_212 : f32 to vector<16x1xf32>
    %591 = arith.divf %589, %590 : vector<16x1xf32>
    %592 = vector.broadcast %591 : vector<16x1xf32> to vector<16x32xf32>
    %593 = arith.subf %587, %592 : vector<16x32xf32>
    %594 = arith.mulf %593, %593 : vector<16x32xf32>
    %cst_213 = arith.constant dense<0.000000e+00> : vector<16xf32>
    %595 = vector.multi_reduction <add>, %594, %cst_213 [1] : vector<16x32xf32> to vector<16xf32>
    %596 = vector.shape_cast %595 : vector<16xf32> to vector<16x1xf32>
    %cst_214 = arith.constant 3.200000e+01 : f32
    %597 = vector.broadcast %cst_214 : f32 to vector<16x1xf32>
    %598 = arith.divf %596, %597 : vector<16x1xf32>
    %599 = vector.broadcast %591 : vector<16x1xf32> to vector<16x32xf32>
    %600 = arith.subf %587, %599 : vector<16x32xf32>
    %cst_215 = arith.constant 9.99999974E-6 : f32
    %601 = vector.broadcast %cst_215 : f32 to vector<16x1xf32>
    %602 = arith.addf %598, %601 : vector<16x1xf32>
    %603 = math.rsqrt %602 : vector<16x1xf32>
    %604 = vector.broadcast %603 : vector<16x1xf32> to vector<16x32xf32>
    %605 = arith.mulf %600, %604 : vector<16x32xf32>
    %c0_216 = arith.constant 0 : index
    %c0_217 = arith.constant 0 : index
    %606 = vector.load %arg16[%c0_216, %c0_217] : memref<1x32xf32, #tpu.memory_space<vmem>>, vector<1x32xf32>
    %607 = vector.broadcast %606 : vector<1x32xf32> to vector<16x32xf32>
    %608 = arith.mulf %605, %607 : vector<16x32xf32>
    %c0_218 = arith.constant 0 : index
    %c0_219 = arith.constant 0 : index
    %609 = vector.load %arg17[%c0_218, %c0_219] : memref<1x32xf32, #tpu.memory_space<vmem>>, vector<1x32xf32>
    %610 = vector.broadcast %609 : vector<1x32xf32> to vector<16x32xf32>
    %611 = arith.addf %608, %610 : vector<16x32xf32>
    %c0_220 = arith.constant 0 : index
    %c0_221 = arith.constant 0 : index
    %612 = vector.load %arg18[%c0_220, %c0_221] : memref<16x32xf32, #tpu.memory_space<vmem>>, vector<16x32xf32>
    tpu.vector_store %arg18[%c0_220, %c0_221], %611 {strides = array<i32>} : memref<16x32xf32, #tpu.memory_space<vmem>>, vector<16x32xf32>,
    return
  }
}

</mosaic_0001>

<llo_original>
// kernel: question_decoder_forward.1
$region0: #{question_decoder_forward.1}
  #allocation0 [shape = 'u32[]', space=smem, size = 0x4, offset = 0x4, fixed_abs, tag = 'smem constant byte address 0x4 - core index']
  #allocation1 [shape = 'u32[144,128]{1,0:T(1,128)}', space=vmem, size = 0x12000, scoped, tag = 'internal scratch']
  %s0 = inlined_call_operand.vmem [shape: f32[16,32], index: 0, kind: input, shape index: {}]
  %s1 = inlined_call_operand.vmem [shape: f32[16,32], index: 1, kind: input, shape index: {}]
  %s2 = inlined_call_operand.vmem [shape: f32[2,32,96], index: 2, kind: input, shape index: {}]
  %s3 = inlined_call_operand.vmem [shape: f32[2,1,96], index: 3, kind: input, shape index: {}]
  %s4 = inlined_call_operand.vmem [shape: f32[2,32,32], index: 4, kind: input, shape index: {}]
  %s5 = inlined_call_operand.vmem [shape: f32[2,1,32], index: 5, kind: input, shape index: {}]
  %s6 = inlined_call_operand.vmem [shape: f32[2,32,96], index: 6, kind: input, shape index: {}]
  %s7 = inlined_call_operand.vmem [shape: f32[2,1,96], index: 7, kind: input, shape index: {}]
  %s8 = inlined_call_operand.hbm [shape: f32[2,32,32], index: 8, kind: input, shape index: {}]
  %s9 = inlined_call_operand.vmem [shape: f32[2,1,32], index: 9, kind: input, shape index: {}]
  %s10 = inlined_call_operand.hbm [shape: f32[2,32,64], index: 10, kind: input, shape index: {}]
  %s11 = inlined_call_operand.vmem [shape: f32[2,1,64], index: 11, kind: input, shape index: {}]
  %s12 = inlined_call_operand.vmem [shape: f32[2,64,32], index: 12, kind: input, shape index: {}]
  %s13 = inlined_call_operand.vmem [shape: f32[2,1,32], index: 13, kind: input, shape index: {}]
  %s14 = inlined_call_operand.vmem [shape: f32[2,3,32], index: 14, kind: input, shape index: {}]
  %s15 = inlined_call_operand.vmem [shape: f32[2,3,32], index: 15, kind: input, shape index: {}]
  %s16 = inlined_call_operand.vmem [shape: f32[1,32], index: 16, kind: input, shape index: {}]
  %s17 = inlined_call_operand.vmem [shape: f32[1,32], index: 17, kind: input, shape index: {}]
  %s18 = inlined_call_operand.vmem [shape: f32[16,32], index: 18, kind: output, shape index: {}]
  %s19 = sld [smem:[#allocation0]]
  $region90: #{question_decoder_forward.1} parent=0
    _
  %s21 = ssub.s32 1, %s19
  %s22 = scalar_select 0, %s21, %s19
  $region1: #{question_decoder_forward.1} parent=0
    #allocation2 [shape = 'u8[32768]{0}', space=vmem, size = 0x8000, scoped, tag = 'input window, operand 8, single buffered']
    #allocation3 [shape = 's32[1]{0}', space=sflag, size = 0x4, scoped, tag = 'scoped memory for question_decoder_forward.1']
    #allocation4 [shape = 'u8[32768]{0}', space=vmem, size = 0x8000, scoped, tag = 'input window, operand 10, single buffered']
    #allocation5 [shape = 's32[1]{0}', space=sflag, size = 0x4, scoped, tag = 'scoped memory for question_decoder_forward.1']
    %23 = vsyncpa [#allocation3], 0
    %24 = vsyncpa [#allocation5], 0
    // Predicated region
    $region2: #{question_decoder_forward.1} parent=1 // pred_check
      _
    $region3: #{question_decoder_forward.1} parent=1 // pred_check_branch
      %26 = sbr.rel (0) target = $region5
    $region4: #{question_decoder_forward.1} parent=1 // pred_region
      _
    $region5: #{question_decoder_forward.1} parent=1 // pred_fallthru
      _
    // Predicated region
    $region6: #{question_decoder_forward.1} parent=1 // pred_check
      _
    $region7: #{question_decoder_forward.1} parent=1 // pred_check_branch
      %28 = sbr.rel (0) target = $region9
    $region8: #{question_decoder_forward.1} parent=1 // pred_region
      _
    $region9: #{question_decoder_forward.1} parent=1 // pred_fallthru
      _
    // Predicated region
    $region10: #{question_decoder_forward.1} parent=1 // pred_check
      _
    $region11: #{question_decoder_forward.1} parent=1 // pred_check_branch
      %30 = sbr.rel (0) target = $region13
    $region12: #{question_decoder_forward.1} parent=1 // pred_region
      _
    $region13: #{question_decoder_forward.1} parent=1 // pred_fallthru
      _
    // Predicated region
    $region14: #{question_decoder_forward.1} parent=1 // pred_check
      _
    $region15: #{question_decoder_forward.1} parent=1 // pred_check_branch
      %32 = sbr.rel (0) target = $region17
    $region16: #{question_decoder_forward.1} parent=1 // pred_region
      _
    $region17: #{question_decoder_forward.1} parent=1 // pred_fallthru
      _
    // Predicated region
    $region18: #{question_decoder_forward.1} parent=1 // pred_check
      _
    $region19: #{question_decoder_forward.1} parent=1 // pred_check_branch
      %34 = sbr.rel (0) target = $region21
    $region20: #{question_decoder_forward.1} parent=1 // pred_region
      _
    $region21: #{question_decoder_forward.1} parent=1 // pred_fallthru
      _
    // Predicated region
    $region22: #{question_decoder_forward.1} parent=1 // pred_check
      _
    $region23: #{question_decoder_forward.1} parent=1 // pred_check_branch
      %36 = sbr.rel (0) target = $region25
    $region24: #{question_decoder_forward.1} parent=1 // pred_region
      _
    $region25: #{question_decoder_forward.1} parent=1 // pred_fallthru
      _
    // Predicated region
    $region26: #{question_decoder_forward.1} parent=1 // pred_check
      _
    $region27: #{question_decoder_forward.1} parent=1 // pred_check_branch
      %38 = sbr.rel (0) target = $region29
    $region28: #{question_decoder_forward.1} parent=1 // pred_region
      _
    $region29: #{question_decoder_forward.1} parent=1 // pred_fallthru
      _
    // Predicated region
    $region30: #{question_decoder_forward.1} parent=1 // pred_check
      _
    $region31: #{question_decoder_forward.1} parent=1 // pred_check_branch
      %40 = sbr.rel (0) target = $region33
    $region32: #{question_decoder_forward.1} parent=1 // pred_region
      _
    $region33: #{question_decoder_forward.1} parent=1 // pred_fallthru
      _
    // Predicated region
    $region34: #{question_decoder_forward.1} parent=1 // pred_check
      _
    $region35: #{question_decoder_forward.1} parent=1 // pred_check_branch
      %42 = sbr.rel (0) target = $region37
    $region36: #{question_decoder_forward.1} parent=1 // pred_region
      %s44 = ssub.s32 1024, 1024
      %45 = vsyncadd [#allocation3], %s44
      %s46 = sshll.u32 [#allocation2], 4
      %s47 = int_to_ptr.vmem [resolvable:$true] %s46
      %52 = dma.hbm_to_vmem [thread:$0]  %s8, 1024, %s47, [#allocation3], 128, 128, 8
    $region37: #{question_decoder_forward.1} parent=1 // pred_fallthru
      _
    // Predicated region
    $region38: #{question_decoder_forward.1} parent=1 // pred_check
      _
    $region39: #{question_decoder_forward.1} parent=1 // pred_check_branch
      %54 = sbr.rel (0) target = $region41
    $region40: #{question_decoder_forward.1} parent=1 // pred_region
      _
    $region41: #{question_decoder_forward.1} parent=1 // pred_fallthru
      _
    // Predicated region
    $region42: #{question_decoder_forward.1} parent=1 // pred_check
      _
    $region43: #{question_decoder_forward.1} parent=1 // pred_check_branch
      %56 = sbr.rel (0) target = $region45
    $region44: #{question_decoder_forward.1} parent=1 // pred_region
      %s58 = ssub.s32 1024, 1024
      %59 = vsyncadd [#allocation5], %s58
      %s60 = sshll.u32 [#allocation4], 4
      %s61 = int_to_ptr.vmem [resolvable:$true] %s60
      %66 = dma.hbm_to_vmem [thread:$0]  %s10, 1024, %s61, [#allocation5], 128, 128, 8
    $region45: #{question_decoder_forward.1} parent=1 // pred_fallthru
      _
    // Predicated region
    $region46: #{question_decoder_forward.1} parent=1 // pred_check
      _
    $region47: #{question_decoder_forward.1} parent=1 // pred_check_branch
      %68 = sbr.rel (0) target = $region49
    $region48: #{question_decoder_forward.1} parent=1 // pred_region
      _
    $region49: #{question_decoder_forward.1} parent=1 // pred_fallthru
      _
    // Predicated region
    $region50: #{question_decoder_forward.1} parent=1 // pred_check
      _
    $region51: #{question_decoder_forward.1} parent=1 // pred_check_branch
      %70 = sbr.rel (0) target = $region53
    $region52: #{question_decoder_forward.1} parent=1 // pred_region
      _
    $region53: #{question_decoder_forward.1} parent=1 // pred_fallthru
      _
    // Predicated region
    $region54: #{question_decoder_forward.1} parent=1 // pred_check
      _
    $region55: #{question_decoder_forward.1} parent=1 // pred_check_branch
      %72 = sbr.rel (0) target = $region57
    $region56: #{question_decoder_forward.1} parent=1 // pred_region
      _
    $region57: #{question_decoder_forward.1} parent=1 // pred_fallthru
      _
    // Predicated region
    $region58: #{question_decoder_forward.1} parent=1 // pred_check
      _
    $region59: #{question_decoder_forward.1} parent=1 // pred_check_branch
      %74 = sbr.rel (0) target = $region61
    $region60: #{question_decoder_forward.1} parent=1 // pred_region
      _
    $region61: #{question_decoder_forward.1} parent=1 // pred_fallthru
      _
    // Predicated region
    $region62: #{question_decoder_forward.1} parent=1 // pred_check
      _
    $region63: #{question_decoder_forward.1} parent=1 // pred_check_branch
      %76 = sbr.rel (0) target = $region65
    $region64: #{question_decoder_forward.1} parent=1 // pred_region
      _
    $region65: #{question_decoder_forward.1} parent=1 // pred_fallthru
      _
    // Predicated region
    $region66: #{question_decoder_forward.1} parent=1 // pred_check
      _
    $region67: #{question_decoder_forward.1} parent=1 // pred_check_branch
      %78 = sbr.rel (0) target = $region69
    $region68: #{question_decoder_forward.1} parent=1 // pred_region
      _
    $region69: #{question_decoder_forward.1} parent=1 // pred_fallthru
      _
    // Predicated region
    $region70: #{question_decoder_forward.1} parent=1 // pred_check
      _
    $region71: #{question_decoder_forward.1} parent=1 // pred_check_branch
      %80 = sbr.rel (0) target = $region73
    $region72: #{question_decoder_forward.1} parent=1 // pred_region
      _
    $region73: #{question_decoder_forward.1} parent=1 // pred_fallthru
      _
    // Predicated region
    $region74: #{question_decoder_forward.1} parent=1 // pred_check
      _
    $region75: #{question_decoder_forward.1} parent=1 // pred_check_branch
      %82 = sbr.rel (0) target = $region77
    $region76: #{question_decoder_forward.1} parent=1 // pred_region
      %83 = dma.done [#allocation3], 1024
    $region77: #{question_decoder_forward.1} parent=1 // pred_fallthru
      _
    // Predicated region
    $region78: #{question_decoder_forward.1} parent=1 // pred_check
      _
    $region79: #{question_decoder_forward.1} parent=1 // pred_check_branch
      %85 = sbr.rel (0) target = $region81
    $region80: #{question_decoder_forward.1} parent=1 // pred_region
      %86 = dma.done [#allocation5], 1024
    $region81: #{question_decoder_forward.1} parent=1 // pred_fallthru
      _
    %v87 = vld [vmem:[%s0] sm:$0xff]
    %v88 = vld [vmem:[%s0 + $0x8] sm:$0xff]
    %v89 = vld [vmem:[%s1] sm:$0xff]
    %v90 = vld [vmem:[%s1 + $0x8] sm:$0xff]
    %v91 = vld [vmem:[%s14] sm:$0x7]
    %v92 = vld [vmem:[%s15] sm:$0x7]
    %v93 = vld [vmem:[%s2] sm:$0xff]
    %v94 = vld [vmem:[%s2 + $0x8] sm:$0xff]
    %v95 = vld [vmem:[%s2 + $0x10] sm:$0xff]
    %v96 = vld [vmem:[%s2 + $0x18] sm:$0xff]
    %v97 = vld [vmem:[%s3] sm:$0x1]
    %v98 = vld [vmem:[%s4] sm:$0xff]
    %v99 = vld [vmem:[%s4 + $0x8] sm:$0xff]
    %v100 = vld [vmem:[%s4 + $0x10] sm:$0xff]
    %v101 = vld [vmem:[%s4 + $0x18] sm:$0xff]
    %v102 = vld [vmem:[%s5] sm:$0x1]
    %v104 = vlaneseq
    %v105 = vshrl.u32 %v104, 7
    %v106 = vsub.s32 0, %v105
    %v107 = vrot.slane %v97, %v106
    %vm109 = vcmask 261120
    %v111 = vsel %vm109, %v87, 0
    %v114 = vsel %vm109, %v88, 0
    %116 = vmatprep.subr.mxu0 0.0
    %117 = vmatpush1.msra.mxu0 %v93
    %118 = vmatprep.subr.mxu0 0.0
    %119 = vmatpush1.msra.mxu0 %v94
    %120 = vmatprep.subr.mxu0 0.0
    %121 = vmatpush1.msra.mxu0 %v95
    %122 = vmatprep.subr.mxu0 0.0
    %123 = vmatpush1.msra.mxu0 %v96
    %124 = vmatprep.subr.mxu0 0.0
    %125 = vmatpush1.msra.mxu0 0.0
    %126 = vmatprep.subr.mxu0 0.0
    %127 = vmatpush1.msra.mxu0 0.0
    %128 = vmatprep.subr.mxu0 0.0
    %129 = vmatpush1.msra.mxu0 0.0
    %130 = vmatprep.subr.mxu0 0.0
    %131 = vmatpush1.msra.mxu0 0.0
    %132 = vmatprep.subr.mxu0 0.0
    %133 = vmatpush1.msra.mxu0 0.0
    %134 = vmatprep.subr.mxu0 0.0
    %135 = vmatpush1.msra.mxu0 0.0
    %136 = vmatprep.subr.mxu0 0.0
    %137 = vmatpush1.msra.mxu0 0.0
    %138 = vmatprep.subr.mxu0 0.0
    %139 = vmatpush1.msra.mxu0 0.0
    %140 = vmatprep.subr.mxu0 0.0
    %141 = vmatpush1.msra.mxu0 0.0
    %142 = vmatprep.subr.mxu0 0.0
    %143 = vmatpush1.msra.mxu0 0.0
    %144 = vmatprep.subr.mxu0 0.0
    %145 = vmatpush1.msra.mxu0 0.0
    %146 = vmatprep.subr.mxu0 0.0
    %147 = vmatpush1.msra.mxu0 0.0
    %148 = vmatprep.subr.mxu0 0.0
    %149 = vmatpush1.msra.mxu0 0.0
    %150 = vmatprep.subr.mxu0 0.0
    %151 = vmatpush1.msra.mxu0 0.0
    %152 = vmatprep.subr.mxu0 0.0
    %153 = vmatpush1.msra.mxu0 0.0
    %154 = vmatprep.subr.mxu0 0.0
    %155 = vmatpush1.msra.mxu0 0.0
    %156 = vmatprep.subr.mxu0 0.0
    %157 = vmatpush1.msra.mxu0 0.0
    %158 = vmatprep.subr.mxu0 0.0
    %159 = vmatpush1.msra.mxu0 0.0
    %160 = vmatprep.subr.mxu0 0.0
    %161 = vmatpush1.msra.mxu0 0.0
    %162 = vmatprep.subr.mxu0 0.0
    %163 = vmatpush1.msra.mxu0 0.0
    %164 = vmatprep.subr.mxu0 0.0
    %165 = vmatpush1.msra.mxu0 0.0
    %166 = vmatprep.subr.mxu0 0.0
    %167 = vmatpush1.msra.mxu0 0.0
    %168 = vmatprep.subr.mxu0 0.0
    %169 = vmatpush1.msra.mxu0 0.0
    %170 = vmatprep.subr.mxu0 0.0
    %171 = vmatpush1.msra.mxu0 0.0
    %172 = vmatprep.subr.mxu0 0.0
    %173 = vmatpush1.msra.mxu0 0.0
    %174 = vmatprep.subr.mxu0 0.0
    %175 = vmatpush1.msra.mxu0 0.0
    %176 = vmatprep.subr.mxu0 0.0
    %177 = vmatpush1.msra.mxu0 0.0
    %178 = vmatprep.subr.mxu0 0.0
    %179 = vmatpush1.msra.mxu0 0.0
    %180 = vmatprep.mubr.f32.mxu0 0.0
    %181 = vmatmul.mubr.f32.gmra.mrb[0].mxu0 %v111
    %v182 = vpop.f32.mrb[0].mxu0
    %v183 = vadd.f32 %v107, %v182
    %v184 = vpop.f32.mrb[0].mxu0
    %185 = vmatprep.mubr.f32.mxu0 0.0
    %186 = vmatmul.mubr.f32.gmra.mrb[0].mxu0 %v114
    %v187 = vpop.f32.mrb[0].mxu0
    %v188 = vadd.f32 %v107, %v187
    %v189 = vpop.f32.mrb[0].mxu0
    %190 = vdwg.mxu0
    %v191 = vmul.f32 %v183, 0.35355338
    %v192 = vmul.f32 %v188, 0.35355338
    %194 = vrot.lane.b32.xlu0 %v183, 96
    %v195 = vpop.permute.xlu0 %194
    %vm196 = vcmask 64512
    %v198 = vsel %vm196, %v191, 0
    %v200 = vsel %vm196, %v195, 0
    %202 = vmatprep.subr.mxu0 0.0
    %203 = vmatpush1.xpose.msra.mxu0 %v200
    %204 = vmatprep.subr.mxu0 0.0
    %205 = vmatpush1.xpose.msra.mxu0 0.0
    %206 = vmatprep.subr.mxu0 0.0
    %207 = vmatpush1.xpose.msra.mxu0 0.0
    %208 = vmatprep.subr.mxu0 0.0
    %209 = vmatpush1.xpose.msra.mxu0 0.0
    %210 = vmatprep.subr.mxu0 0.0
    %211 = vmatpush1.xpose.msra.mxu0 0.0
    %212 = vmatprep.subr.mxu0 0.0
    %213 = vmatpush1.xpose.msra.mxu0 0.0
    %214 = vmatprep.subr.mxu0 0.0
    %215 = vmatpush1.xpose.msra.mxu0 0.0
    %216 = vmatprep.subr.mxu0 0.0
    %217 = vmatpush1.xpose.msra.mxu0 0.0
    %218 = vmatprep.subr.mxu0 0.0
    %219 = vmatpush1.xpose.msra.mxu0 0.0
    %220 = vmatprep.subr.mxu0 0.0
    %221 = vmatpush1.xpose.msra.mxu0 0.0
    %222 = vmatprep.subr.mxu0 0.0
    %223 = vmatpush1.xpose.msra.mxu0 0.0
    %224 = vmatprep.subr.mxu0 0.0
    %225 = vmatpush1.xpose.msra.mxu0 0.0
    %226 = vmatprep.subr.mxu0 0.0
    %227 = vmatpush1.xpose.msra.mxu0 0.0
    %228 = vmatprep.subr.mxu0 0.0
    %229 = vmatpush1.xpose.msra.mxu0 0.0
    %230 = vmatprep.subr.mxu0 0.0
    %231 = vmatpush1.xpose.msra.mxu0 0.0
    %232 = vmatprep.subr.mxu0 0.0
    %233 = vmatpush1.xpose.msra.mxu0 0.0
    %234 = vmatprep.subr.mxu0 0.0
    %235 = vmatpush1.xpose.msra.mxu0 0.0
    %236 = vmatprep.subr.mxu0 0.0
    %237 = vmatpush1.xpose.msra.mxu0 0.0
    %238 = vmatprep.subr.mxu0 0.0
    %239 = vmatpush1.xpose.msra.mxu0 0.0
    %240 = vmatprep.subr.mxu0 0.0
    %241 = vmatpush1.xpose.msra.mxu0 0.0
    %242 = vmatprep.subr.mxu0 0.0
    %243 = vmatpush1.xpose.msra.mxu0 0.0
    %244 = vmatprep.subr.mxu0 0.0
    %245 = vmatpush1.xpose.msra.mxu0 0.0
    %246 = vmatprep.subr.mxu0 0.0
    %247 = vmatpush1.xpose.msra.mxu0 0.0
    %248 = vmatprep.subr.mxu0 0.0
    %249 = vmatpush1.xpose.msra.mxu0 0.0
    %250 = vmatprep.subr.mxu0 0.0
    %251 = vmatpush1.xpose.msra.mxu0 0.0
    %252 = vmatprep.subr.mxu0 0.0
    %253 = vmatpush1.xpose.msra.mxu0 0.0
    %254 = vmatprep.subr.mxu0 0.0
    %255 = vmatpush1.xpose.msra.mxu0 0.0
    %256 = vmatprep.subr.mxu0 0.0
    %257 = vmatpush1.xpose.msra.mxu0 0.0
    %258 = vmatprep.subr.mxu0 0.0
    %259 = vmatpush1.xpose.msra.mxu0 0.0
    %260 = vmatprep.subr.mxu0 0.0
    %261 = vmatpush1.xpose.msra.mxu0 0.0
    %262 = vmatprep.subr.mxu0 0.0
    %263 = vmatpush1.xpose.msra.mxu0 0.0
    %264 = vmatprep.subr.mxu0 0.0
    %265 = vmatpush1.xpose.msra.mxu0 0.0
    %266 = vmatprep.mubr.f32.mxu0 0.0
    %267 = vmatmul.mubr.f32.gmra.mrb[0].mxu0 %v198
    %v268 = vpop.f32.mrb[0].mxu0
    %v269 = vadd.f32 0.0, %v268
    %v270 = vpop.f32.mrb[0].mxu0
    %271 = vdwg.mxu0
    %273 = vrot.lane.b32.xlu0 %v188, 96
    %v274 = vpop.permute.xlu0 %273
    %v276 = vsel %vm196, %v192, 0
    %v278 = vsel %vm196, %v274, 0
    %280 = vmatprep.subr.mxu0 0.0
    %281 = vmatpush1.xpose.msra.mxu0 %v278
    %282 = vmatprep.subr.mxu0 0.0
    %283 = vmatpush1.xpose.msra.mxu0 0.0
    %284 = vmatprep.subr.mxu0 0.0
    %285 = vmatpush1.xpose.msra.mxu0 0.0
    %286 = vmatprep.subr.mxu0 0.0
    %287 = vmatpush1.xpose.msra.mxu0 0.0
    %288 = vmatprep.subr.mxu0 0.0
    %289 = vmatpush1.xpose.msra.mxu0 0.0
    %290 = vmatprep.subr.mxu0 0.0
    %291 = vmatpush1.xpose.msra.mxu0 0.0
    %292 = vmatprep.subr.mxu0 0.0
    %293 = vmatpush1.xpose.msra.mxu0 0.0
    %294 = vmatprep.subr.mxu0 0.0
    %295 = vmatpush1.xpose.msra.mxu0 0.0
    %296 = vmatprep.subr.mxu0 0.0
    %297 = vmatpush1.xpose.msra.mxu0 0.0
    %298 = vmatprep.subr.mxu0 0.0
    %299 = vmatpush1.xpose.msra.mxu0 0.0
    %300 = vmatprep.subr.mxu0 0.0
    %301 = vmatpush1.xpose.msra.mxu0 0.0
    %302 = vmatprep.subr.mxu0 0.0
    %303 = vmatpush1.xpose.msra.mxu0 0.0
    %304 = vmatprep.subr.mxu0 0.0
    %305 = vmatpush1.xpose.msra.mxu0 0.0
    %306 = vmatprep.subr.mxu0 0.0
    %307 = vmatpush1.xpose.msra.mxu0 0.0
    %308 = vmatprep.subr.mxu0 0.0
    %309 = vmatpush1.xpose.msra.mxu0 0.0
    %310 = vmatprep.subr.mxu0 0.0
    %311 = vmatpush1.xpose.msra.mxu0 0.0
    %312 = vmatprep.subr.mxu0 0.0
    %313 = vmatpush1.xpose.msra.mxu0 0.0
    %314 = vmatprep.subr.mxu0 0.0
    %315 = vmatpush1.xpose.msra.mxu0 0.0
    %316 = vmatprep.subr.mxu0 0.0
    %317 = vmatpush1.xpose.msra.mxu0 0.0
    %318 = vmatprep.subr.mxu0 0.0
    %319 = vmatpush1.xpose.msra.mxu0 0.0
    %320 = vmatprep.subr.mxu0 0.0
    %321 = vmatpush1.xpose.msra.mxu0 0.0
    %322 = vmatprep.subr.mxu0 0.0
    %323 = vmatpush1.xpose.msra.mxu0 0.0
    %324 = vmatprep.subr.mxu0 0.0
    %325 = vmatpush1.xpose.msra.mxu0 0.0
    %326 = vmatprep.subr.mxu0 0.0
    %327 = vmatpush1.xpose.msra.mxu0 0.0
    %328 = vmatprep.subr.mxu0 0.0
    %329 = vmatpush1.xpose.msra.mxu0 0.0
    %330 = vmatprep.subr.mxu0 0.0
    %331 = vmatpush1.xpose.msra.mxu0 0.0
    %332 = vmatprep.subr.mxu0 0.0
    %333 = vmatpush1.xpose.msra.mxu0 0.0
    %334 = vmatprep.subr.mxu0 0.0
    %335 = vmatpush1.xpose.msra.mxu0 0.0
    %336 = vmatprep.subr.mxu0 0.0
    %337 = vmatpush1.xpose.msra.mxu0 0.0
    %338 = vmatprep.subr.mxu0 0.0
    %339 = vmatpush1.xpose.msra.mxu0 0.0
    %340 = vmatprep.subr.mxu0 0.0
    %341 = vmatpush1.xpose.msra.mxu0 0.0
    %342 = vmatprep.subr.mxu0 0.0
    %343 = vmatpush1.xpose.msra.mxu0 0.0
    %344 = vmatprep.mubr.f32.mxu0 0.0
    %345 = vmatmul.mubr.f32.gmra.mrb[0].mxu0 %v276
    %v346 = vpop.f32.mrb[0].mxu0
    %v347 = vadd.f32 0.0, %v346
    %v348 = vpop.f32.mrb[0].mxu0
    %349 = vdwg.mxu0
    %v350 = vsel %vm196, %v269, -inf
    %351 = vmax.xlane.f32.xlu0 %v350
    %v352 = vpop.xlane.xlu0 %351
    %v353 = vsel %vm196, %v347, -inf
    %354 = vmax.xlane.f32.xlu0 %v353
    %v355 = vpop.xlane.xlu0 %354
    %v356 = vsub.f32 %v269, %v352
    %v357 = vsub.f32 %v347, %v355
    %v358 = vmul.f32 %v356, 1.442695
    %v359 = vpow.pop %v358
    %v360 = vmul.f32 %v357, 1.442695
    %v361 = vpow.pop %v360
    %v362 = vsel %vm196, %v359, 0.0
    %363 = vadd.xlane.f32.xlu0 %v362
    %v364 = vpop.xlane.xlu0 %363
    %v365 = vsel %vm196, %v361, 0.0
    %366 = vadd.xlane.f32.xlu0 %v365
    %v367 = vpop.xlane.xlu0 %366
    %v368 = vrcp.pop %v364
    %v369 = vrcp.pop %v367
    %v370 = vmul.f32 %v359, %v368
    %v371 = vmul.f32 %v361, %v369
    %372 = vrot.lane.b32.xlu0 %v183, 64
    %v373 = vpop.permute.xlu0 %372
    %v376 = vsel %vm196, %v370, 0
    %378 = vmatprep.subr.mxu0 0.0
    %379 = vmatpush1.msra.mxu0 %v373
    %380 = vmatprep.subr.mxu0 0.0
    %381 = vmatpush1.msra.mxu0 0.0
    %382 = vmatprep.subr.mxu0 0.0
    %383 = vmatpush1.msra.mxu0 0.0
    %384 = vmatprep.subr.mxu0 0.0
    %385 = vmatpush1.msra.mxu0 0.0
    %386 = vmatprep.subr.mxu0 0.0
    %387 = vmatpush1.msra.mxu0 0.0
    %388 = vmatprep.subr.mxu0 0.0
    %389 = vmatpush1.msra.mxu0 0.0
    %390 = vmatprep.subr.mxu0 0.0
    %391 = vmatpush1.msra.mxu0 0.0
    %392 = vmatprep.subr.mxu0 0.0
    %393 = vmatpush1.msra.mxu0 0.0
    %394 = vmatprep.subr.mxu0 0.0
    %395 = vmatpush1.msra.mxu0 0.0
    %396 = vmatprep.subr.mxu0 0.0
    %397 = vmatpush1.msra.mxu0 0.0
    %398 = vmatprep.subr.mxu0 0.0
    %399 = vmatpush1.msra.mxu0 0.0
    %400 = vmatprep.subr.mxu0 0.0
    %401 = vmatpush1.msra.mxu0 0.0
    %402 = vmatprep.subr.mxu0 0.0
    %403 = vmatpush1.msra.mxu0 0.0
    %404 = vmatprep.subr.mxu0 0.0
    %405 = vmatpush1.msra.mxu0 0.0
    %406 = vmatprep.subr.mxu0 0.0
    %407 = vmatpush1.msra.mxu0 0.0
    %408 = vmatprep.subr.mxu0 0.0
    %409 = vmatpush1.msra.mxu0 0.0
    %410 = vmatprep.subr.mxu0 0.0
    %411 = vmatpush1.msra.mxu0 0.0
    %412 = vmatprep.subr.mxu0 0.0
    %413 = vmatpush1.msra.mxu0 0.0
    %414 = vmatprep.subr.mxu0 0.0
    %415 = vmatpush1.msra.mxu0 0.0
    %416 = vmatprep.subr.mxu0 0.0
    %417 = vmatpush1.msra.mxu0 0.0
    %418 = vmatprep.subr.mxu0 0.0
    %419 = vmatpush1.msra.mxu0 0.0
    %420 = vmatprep.subr.mxu0 0.0
    %421 = vmatpush1.msra.mxu0 0.0
    %422 = vmatprep.subr.mxu0 0.0
    %423 = vmatpush1.msra.mxu0 0.0
    %424 = vmatprep.subr.mxu0 0.0
    %425 = vmatpush1.msra.mxu0 0.0
    %426 = vmatprep.subr.mxu0 0.0
    %427 = vmatpush1.msra.mxu0 0.0
    %428 = vmatprep.subr.mxu0 0.0
    %429 = vmatpush1.msra.mxu0 0.0
    %430 = vmatprep.subr.mxu0 0.0
    %431 = vmatpush1.msra.mxu0 0.0
    %432 = vmatprep.subr.mxu0 0.0
    %433 = vmatpush1.msra.mxu0 0.0
    %434 = vmatprep.subr.mxu0 0.0
    %435 = vmatpush1.msra.mxu0 0.0
    %436 = vmatprep.subr.mxu0 0.0
    %437 = vmatpush1.msra.mxu0 0.0
    %438 = vmatprep.subr.mxu0 0.0
    %439 = vmatpush1.msra.mxu0 0.0
    %440 = vmatprep.subr.mxu0 0.0
    %441 = vmatpush1.msra.mxu0 0.0
    %442 = vmatprep.mubr.f32.mxu0 0.0
    %443 = vmatmul.mubr.f32.gmra.mrb[0].mxu0 %v376
    %v444 = vpop.f32.mrb[0].mxu0
    %v445 = vadd.f32 0.0, %v444
    %v446 = vpop.f32.mrb[0].mxu0
    %447 = vdwg.mxu0
    %448 = vrot.lane.b32.xlu0 %v188, 64
    %v449 = vpop.permute.xlu0 %448
    %v452 = vsel %vm196, %v371, 0
    %454 = vmatprep.subr.mxu0 0.0
    %455 = vmatpush1.msra.mxu0 %v449
    %456 = vmatprep.subr.mxu0 0.0
    %457 = vmatpush1.msra.mxu0 0.0
    %458 = vmatprep.subr.mxu0 0.0
    %459 = vmatpush1.msra.mxu0 0.0
    %460 = vmatprep.subr.mxu0 0.0
    %461 = vmatpush1.msra.mxu0 0.0
    %462 = vmatprep.subr.mxu0 0.0
    %463 = vmatpush1.msra.mxu0 0.0
    %464 = vmatprep.subr.mxu0 0.0
    %465 = vmatpush1.msra.mxu0 0.0
    %466 = vmatprep.subr.mxu0 0.0
    %467 = vmatpush1.msra.mxu0 0.0
    %468 = vmatprep.subr.mxu0 0.0
    %469 = vmatpush1.msra.mxu0 0.0
    %470 = vmatprep.subr.mxu0 0.0
    %471 = vmatpush1.msra.mxu0 0.0
    %472 = vmatprep.subr.mxu0 0.0
    %473 = vmatpush1.msra.mxu0 0.0
    %474 = vmatprep.subr.mxu0 0.0
    %475 = vmatpush1.msra.mxu0 0.0
    %476 = vmatprep.subr.mxu0 0.0
    %477 = vmatpush1.msra.mxu0 0.0
    %478 = vmatprep.subr.mxu0 0.0
    %479 = vmatpush1.msra.mxu0 0.0
    %480 = vmatprep.subr.mxu0 0.0
    %481 = vmatpush1.msra.mxu0 0.0
    %482 = vmatprep.subr.mxu0 0.0
    %483 = vmatpush1.msra.mxu0 0.0
    %484 = vmatprep.subr.mxu0 0.0
    %485 = vmatpush1.msra.mxu0 0.0
    %486 = vmatprep.subr.mxu0 0.0
    %487 = vmatpush1.msra.mxu0 0.0
    %488 = vmatprep.subr.mxu0 0.0
    %489 = vmatpush1.msra.mxu0 0.0
    %490 = vmatprep.subr.mxu0 0.0
    %491 = vmatpush1.msra.mxu0 0.0
    %492 = vmatprep.subr.mxu0 0.0
    %493 = vmatpush1.msra.mxu0 0.0
    %494 = vmatprep.subr.mxu0 0.0
    %495 = vmatpush1.msra.mxu0 0.0
    %496 = vmatprep.subr.mxu0 0.0
    %497 = vmatpush1.msra.mxu0 0.0
    %498 = vmatprep.subr.mxu0 0.0
    %499 = vmatpush1.msra.mxu0 0.0
    %500 = vmatprep.subr.mxu0 0.0
    %501 = vmatpush1.msra.mxu0 0.0
    %502 = vmatprep.subr.mxu0 0.0
    %503 = vmatpush1.msra.mxu0 0.0
    %504 = vmatprep.subr.mxu0 0.0
    %505 = vmatpush1.msra.mxu0 0.0
    %506 = vmatprep.subr.mxu0 0.0
    %507 = vmatpush1.msra.mxu0 0.0
    %508 = vmatprep.subr.mxu0 0.0
    %509 = vmatpush1.msra.mxu0 0.0
    %510 = vmatprep.subr.mxu0 0.0
    %511 = vmatpush1.msra.mxu0 0.0
    %512 = vmatprep.subr.mxu0 0.0
    %513 = vmatpush1.msra.mxu0 0.0
    %514 = vmatprep.subr.mxu0 0.0
    %515 = vmatpush1.msra.mxu0 0.0
    %516 = vmatprep.subr.mxu0 0.0
    %517 = vmatpush1.msra.mxu0 0.0
    %518 = vmatprep.mubr.f32.mxu0 0.0
    %519 = vmatmul.mubr.f32.gmra.mrb[0].mxu0 %v452
    %v520 = vpop.f32.mrb[0].mxu0
    %v521 = vadd.f32 0.0, %v520
    %v522 = vpop.f32.mrb[0].mxu0
    %523 = vdwg.mxu0
    %524 = vrot.lane.b32.xlu0 %v191, 120
    %v525 = vpop.permute.xlu0 %524
    %526 = vrot.lane.b32.xlu0 %v183, 88
    %v527 = vpop.permute.xlu0 %526
    %v528 = vsel %vm196, %v525, 0
    %v530 = vsel %vm196, %v527, 0
    %532 = vmatprep.subr.mxu0 0.0
    %533 = vmatpush1.xpose.msra.mxu0 %v530
    %534 = vmatprep.subr.mxu0 0.0
    %535 = vmatpush1.xpose.msra.mxu0 0.0
    %536 = vmatprep.subr.mxu0 0.0
    %537 = vmatpush1.xpose.msra.mxu0 0.0
    %538 = vmatprep.subr.mxu0 0.0
    %539 = vmatpush1.xpose.msra.mxu0 0.0
    %540 = vmatprep.subr.mxu0 0.0
    %541 = vmatpush1.xpose.msra.mxu0 0.0
    %542 = vmatprep.subr.mxu0 0.0
    %543 = vmatpush1.xpose.msra.mxu0 0.0
    %544 = vmatprep.subr.mxu0 0.0
    %545 = vmatpush1.xpose.msra.mxu0 0.0
    %546 = vmatprep.subr.mxu0 0.0
    %547 = vmatpush1.xpose.msra.mxu0 0.0
    %548 = vmatprep.subr.mxu0 0.0
    %549 = vmatpush1.xpose.msra.mxu0 0.0
    %550 = vmatprep.subr.mxu0 0.0
    %551 = vmatpush1.xpose.msra.mxu0 0.0
    %552 = vmatprep.subr.mxu0 0.0
    %553 = vmatpush1.xpose.msra.mxu0 0.0
    %554 = vmatprep.subr.mxu0 0.0
    %555 = vmatpush1.xpose.msra.mxu0 0.0
    %556 = vmatprep.subr.mxu0 0.0
    %557 = vmatpush1.xpose.msra.mxu0 0.0
    %558 = vmatprep.subr.mxu0 0.0
    %559 = vmatpush1.xpose.msra.mxu0 0.0
    %560 = vmatprep.subr.mxu0 0.0
    %561 = vmatpush1.xpose.msra.mxu0 0.0
    %562 = vmatprep.subr.mxu0 0.0
    %563 = vmatpush1.xpose.msra.mxu0 0.0
    %564 = vmatprep.subr.mxu0 0.0
    %565 = vmatpush1.xpose.msra.mxu0 0.0
    %566 = vmatprep.subr.mxu0 0.0
    %567 = vmatpush1.xpose.msra.mxu0 0.0
    %568 = vmatprep.subr.mxu0 0.0
    %569 = vmatpush1.xpose.msra.mxu0 0.0
    %570 = vmatprep.subr.mxu0 0.0
    %571 = vmatpush1.xpose.msra.mxu0 0.0
    %572 = vmatprep.subr.mxu0 0.0
    %573 = vmatpush1.xpose.msra.mxu0 0.0
    %574 = vmatprep.subr.mxu0 0.0
    %575 = vmatpush1.xpose.msra.mxu0 0.0
    %576 = vmatprep.subr.mxu0 0.0
    %577 = vmatpush1.xpose.msra.mxu0 0.0
    %578 = vmatprep.subr.mxu0 0.0
    %579 = vmatpush1.xpose.msra.mxu0 0.0
    %580 = vmatprep.subr.mxu0 0.0
    %581 = vmatpush1.xpose.msra.mxu0 0.0
    %582 = vmatprep.subr.mxu0 0.0
    %583 = vmatpush1.xpose.msra.mxu0 0.0
    %584 = vmatprep.subr.mxu0 0.0
    %585 = vmatpush1.xpose.msra.mxu0 0.0
    %586 = vmatprep.subr.mxu0 0.0
    %587 = vmatpush1.xpose.msra.mxu0 0.0
    %588 = vmatprep.subr.mxu0 0.0
    %589 = vmatpush1.xpose.msra.mxu0 0.0
    %590 = vmatprep.subr.mxu0 0.0
    %591 = vmatpush1.xpose.msra.mxu0 0.0
    %592 = vmatprep.subr.mxu0 0.0
    %593 = vmatpush1.xpose.msra.mxu0 0.0
    %594 = vmatprep.subr.mxu0 0.0
    %595 = vmatpush1.xpose.msra.mxu0 0.0
    %596 = vmatprep.mubr.f32.mxu0 0.0
    %597 = vmatmul.mubr.f32.gmra.mrb[0].mxu0 %v528
    %v598 = vpop.f32.mrb[0].mxu0
    %v599 = vadd.f32 0.0, %v598
    %v600 = vpop.f32.mrb[0].mxu0
    %601 = vdwg.mxu0
    %602 = vrot.lane.b32.xlu0 %v192, 120
    %v603 = vpop.permute.xlu0 %602
    %604 = vrot.lane.b32.xlu0 %v188, 88
    %v605 = vpop.permute.xlu0 %604
    %v606 = vsel %vm196, %v603, 0
    %v608 = vsel %vm196, %v605, 0
    %610 = vmatprep.subr.mxu0 0.0
    %611 = vmatpush1.xpose.msra.mxu0 %v608
    %612 = vmatprep.subr.mxu0 0.0
    %613 = vmatpush1.xpose.msra.mxu0 0.0
    %614 = vmatprep.subr.mxu0 0.0
    %615 = vmatpush1.xpose.msra.mxu0 0.0
    %616 = vmatprep.subr.mxu0 0.0
    %617 = vmatpush1.xpose.msra.mxu0 0.0
    %618 = vmatprep.subr.mxu0 0.0
    %619 = vmatpush1.xpose.msra.mxu0 0.0
    %620 = vmatprep.subr.mxu0 0.0
    %621 = vmatpush1.xpose.msra.mxu0 0.0
    %622 = vmatprep.subr.mxu0 0.0
    %623 = vmatpush1.xpose.msra.mxu0 0.0
    %624 = vmatprep.subr.mxu0 0.0
    %625 = vmatpush1.xpose.msra.mxu0 0.0
    %626 = vmatprep.subr.mxu0 0.0
    %627 = vmatpush1.xpose.msra.mxu0 0.0
    %628 = vmatprep.subr.mxu0 0.0
    %629 = vmatpush1.xpose.msra.mxu0 0.0
    %630 = vmatprep.subr.mxu0 0.0
    %631 = vmatpush1.xpose.msra.mxu0 0.0
    %632 = vmatprep.subr.mxu0 0.0
    %633 = vmatpush1.xpose.msra.mxu0 0.0
    %634 = vmatprep.subr.mxu0 0.0
    %635 = vmatpush1.xpose.msra.mxu0 0.0
    %636 = vmatprep.subr.mxu0 0.0
    %637 = vmatpush1.xpose.msra.mxu0 0.0
    %638 = vmatprep.subr.mxu0 0.0
    %639 = vmatpush1.xpose.msra.mxu0 0.0
    %640 = vmatprep.subr.mxu0 0.0
    %641 = vmatpush1.xpose.msra.mxu0 0.0
    %642 = vmatprep.subr.mxu0 0.0
    %643 = vmatpush1.xpose.msra.mxu0 0.0
    %644 = vmatprep.subr.mxu0 0.0
    %645 = vmatpush1.xpose.msra.mxu0 0.0
    %646 = vmatprep.subr.mxu0 0.0
    %647 = vmatpush1.xpose.msra.mxu0 0.0
    %648 = vmatprep.subr.mxu0 0.0
    %649 = vmatpush1.xpose.msra.mxu0 0.0
    %650 = vmatprep.subr.mxu0 0.0
    %651 = vmatpush1.xpose.msra.mxu0 0.0
    %652 = vmatprep.subr.mxu0 0.0
    %653 = vmatpush1.xpose.msra.mxu0 0.0
    %654 = vmatprep.subr.mxu0 0.0
    %655 = vmatpush1.xpose.msra.mxu0 0.0
    %656 = vmatprep.subr.mxu0 0.0
    %657 = vmatpush1.xpose.msra.mxu0 0.0
    %658 = vmatprep.subr.mxu0 0.0
    %659 = vmatpush1.xpose.msra.mxu0 0.0
    %660 = vmatprep.subr.mxu0 0.0
    %661 = vmatpush1.xpose.msra.mxu0 0.0
    %662 = vmatprep.subr.mxu0 0.0
    %663 = vmatpush1.xpose.msra.mxu0 0.0
    %664 = vmatprep.subr.mxu0 0.0
    %665 = vmatpush1.xpose.msra.mxu0 0.0
    %666 = vmatprep.subr.mxu0 0.0
    %667 = vmatpush1.xpose.msra.mxu0 0.0
    %668 = vmatprep.subr.mxu0 0.0
    %669 = vmatpush1.xpose.msra.mxu0 0.0
    %670 = vmatprep.subr.mxu0 0.0
    %671 = vmatpush1.xpose.msra.mxu0 0.0
    %672 = vmatprep.subr.mxu0 0.0
    %673 = vmatpush1.xpose.msra.mxu0 0.0
    %674 = vmatprep.mubr.f32.mxu0 0.0
    %675 = vmatmul.mubr.f32.gmra.mrb[0].mxu0 %v606
    %v676 = vpop.f32.mrb[0].mxu0
    %v677 = vadd.f32 0.0, %v676
    %v678 = vpop.f32.mrb[0].mxu0
    %679 = vdwg.mxu0
    %v680 = vsel %vm196, %v599, -inf
    %681 = vmax.xlane.f32.xlu0 %v680
    %v682 = vpop.xlane.xlu0 %681
    %v683 = vsel %vm196, %v677, -inf
    %684 = vmax.xlane.f32.xlu0 %v683
    %v685 = vpop.xlane.xlu0 %684
    %v686 = vsub.f32 %v599, %v682
    %v687 = vsub.f32 %v677, %v685
    %v688 = vmul.f32 %v686, 1.442695
    %v689 = vpow.pop %v688
    %v690 = vmul.f32 %v687, 1.442695
    %v691 = vpow.pop %v690
    %v692 = vsel %vm196, %v689, 0.0
    %693 = vadd.xlane.f32.xlu0 %v692
    %v694 = vpop.xlane.xlu0 %693
    %v695 = vsel %vm196, %v691, 0.0
    %696 = vadd.xlane.f32.xlu0 %v695
    %v697 = vpop.xlane.xlu0 %696
    %v698 = vrcp.pop %v694
    %v699 = vrcp.pop %v697
    %v700 = vmul.f32 %v689, %v698
    %v701 = vmul.f32 %v691, %v699
    %702 = vrot.lane.b32.xlu0 %v183, 56
    %v703 = vpop.permute.xlu0 %702
    %v706 = vsel %vm196, %v700, 0
    %708 = vmatprep.subr.mxu0 0.0
    %709 = vmatpush1.msra.mxu0 %v703
    %710 = vmatprep.subr.mxu0 0.0
    %711 = vmatpush1.msra.mxu0 0.0
    %712 = vmatprep.subr.mxu0 0.0
    %713 = vmatpush1.msra.mxu0 0.0
    %714 = vmatprep.subr.mxu0 0.0
    %715 = vmatpush1.msra.mxu0 0.0
    %716 = vmatprep.subr.mxu0 0.0
    %717 = vmatpush1.msra.mxu0 0.0
    %718 = vmatprep.subr.mxu0 0.0
    %719 = vmatpush1.msra.mxu0 0.0
    %720 = vmatprep.subr.mxu0 0.0
    %721 = vmatpush1.msra.mxu0 0.0
    %722 = vmatprep.subr.mxu0 0.0
    %723 = vmatpush1.msra.mxu0 0.0
    %724 = vmatprep.subr.mxu0 0.0
    %725 = vmatpush1.msra.mxu0 0.0
    %726 = vmatprep.subr.mxu0 0.0
    %727 = vmatpush1.msra.mxu0 0.0
    %728 = vmatprep.subr.mxu0 0.0
    %729 = vmatpush1.msra.mxu0 0.0
    %730 = vmatprep.subr.mxu0 0.0
    %731 = vmatpush1.msra.mxu0 0.0
    %732 = vmatprep.subr.mxu0 0.0
    %733 = vmatpush1.msra.mxu0 0.0
    %734 = vmatprep.subr.mxu0 0.0
    %735 = vmatpush1.msra.mxu0 0.0
    %736 = vmatprep.subr.mxu0 0.0
    %737 = vmatpush1.msra.mxu0 0.0
    %738 = vmatprep.subr.mxu0 0.0
    %739 = vmatpush1.msra.mxu0 0.0
    %740 = vmatprep.subr.mxu0 0.0
    %741 = vmatpush1.msra.mxu0 0.0
    %742 = vmatprep.subr.mxu0 0.0
    %743 = vmatpush1.msra.mxu0 0.0
    %744 = vmatprep.subr.mxu0 0.0
    %745 = vmatpush1.msra.mxu0 0.0
    %746 = vmatprep.subr.mxu0 0.0
    %747 = vmatpush1.msra.mxu0 0.0
    %748 = vmatprep.subr.mxu0 0.0
    %749 = vmatpush1.msra.mxu0 0.0
    %750 = vmatprep.subr.mxu0 0.0
    %751 = vmatpush1.msra.mxu0 0.0
    %752 = vmatprep.subr.mxu0 0.0
    %753 = vmatpush1.msra.mxu0 0.0
    %754 = vmatprep.subr.mxu0 0.0
    %755 = vmatpush1.msra.mxu0 0.0
    %756 = vmatprep.subr.mxu0 0.0
    %757 = vmatpush1.msra.mxu0 0.0
    %758 = vmatprep.subr.mxu0 0.0
    %759 = vmatpush1.msra.mxu0 0.0
    %760 = vmatprep.subr.mxu0 0.0
    %761 = vmatpush1.msra.mxu0 0.0
    %762 = vmatprep.subr.mxu0 0.0
    %763 = vmatpush1.msra.mxu0 0.0
    %764 = vmatprep.subr.mxu0 0.0
    %765 = vmatpush1.msra.mxu0 0.0
    %766 = vmatprep.subr.mxu0 0.0
    %767 = vmatpush1.msra.mxu0 0.0
    %768 = vmatprep.subr.mxu0 0.0
    %769 = vmatpush1.msra.mxu0 0.0
    %770 = vmatprep.subr.mxu0 0.0
    %771 = vmatpush1.msra.mxu0 0.0
    %772 = vmatprep.mubr.f32.mxu0 0.0
    %773 = vmatmul.mubr.f32.gmra.mrb[0].mxu0 %v706
    %v774 = vpop.f32.mrb[0].mxu0
    %v775 = vadd.f32 0.0, %v774
    %v776 = vpop.f32.mrb[0].mxu0
    %777 = vdwg.mxu0
    %778 = vrot.lane.b32.xlu0 %v188, 56
    %v779 = vpop.permute.xlu0 %778
    %v782 = vsel %vm196, %v701, 0
    %784 = vmatprep.subr.mxu0 0.0
    %785 = vmatpush1.msra.mxu0 %v779
    %786 = vmatprep.subr.mxu0 0.0
    %787 = vmatpush1.msra.mxu0 0.0
    %788 = vmatprep.subr.mxu0 0.0
    %789 = vmatpush1.msra.mxu0 0.0
    %790 = vmatprep.subr.mxu0 0.0
    %791 = vmatpush1.msra.mxu0 0.0
    %792 = vmatprep.subr.mxu0 0.0
    %793 = vmatpush1.msra.mxu0 0.0
    %794 = vmatprep.subr.mxu0 0.0
    %795 = vmatpush1.msra.mxu0 0.0
    %796 = vmatprep.subr.mxu0 0.0
    %797 = vmatpush1.msra.mxu0 0.0
    %798 = vmatprep.subr.mxu0 0.0
    %799 = vmatpush1.msra.mxu0 0.0
    %800 = vmatprep.subr.mxu0 0.0
    %801 = vmatpush1.msra.mxu0 0.0
    %802 = vmatprep.subr.mxu0 0.0
    %803 = vmatpush1.msra.mxu0 0.0
    %804 = vmatprep.subr.mxu0 0.0
    %805 = vmatpush1.msra.mxu0 0.0
    %806 = vmatprep.subr.mxu0 0.0
    %807 = vmatpush1.msra.mxu0 0.0
    %808 = vmatprep.subr.mxu0 0.0
    %809 = vmatpush1.msra.mxu0 0.0
    %810 = vmatprep.subr.mxu0 0.0
    %811 = vmatpush1.msra.mxu0 0.0
    %812 = vmatprep.subr.mxu0 0.0
    %813 = vmatpush1.msra.mxu0 0.0
    %814 = vmatprep.subr.mxu0 0.0
    %815 = vmatpush1.msra.mxu0 0.0
    %816 = vmatprep.subr.mxu0 0.0
    %817 = vmatpush1.msra.mxu0 0.0
    %818 = vmatprep.subr.mxu0 0.0
    %819 = vmatpush1.msra.mxu0 0.0
    %820 = vmatprep.subr.mxu0 0.0
    %821 = vmatpush1.msra.mxu0 0.0
    %822 = vmatprep.subr.mxu0 0.0
    %823 = vmatpush1.msra.mxu0 0.0
    %824 = vmatprep.subr.mxu0 0.0
    %825 = vmatpush1.msra.mxu0 0.0
    %826 = vmatprep.subr.mxu0 0.0
    %827 = vmatpush1.msra.mxu0 0.0
    %828 = vmatprep.subr.mxu0 0.0
    %829 = vmatpush1.msra.mxu0 0.0
    %830 = vmatprep.subr.mxu0 0.0
    %831 = vmatpush1.msra.mxu0 0.0
    %832 = vmatprep.subr.mxu0 0.0
    %833 = vmatpush1.msra.mxu0 0.0
    %834 = vmatprep.subr.mxu0 0.0
    %835 = vmatpush1.msra.mxu0 0.0
    %836 = vmatprep.subr.mxu0 0.0
    %837 = vmatpush1.msra.mxu0 0.0
    %838 = vmatprep.subr.mxu0 0.0
    %839 = vmatpush1.msra.mxu0 0.0
    %840 = vmatprep.subr.mxu0 0.0
    %841 = vmatpush1.msra.mxu0 0.0
    %842 = vmatprep.subr.mxu0 0.0
    %843 = vmatpush1.msra.mxu0 0.0
    %844 = vmatprep.subr.mxu0 0.0
    %845 = vmatpush1.msra.mxu0 0.0
    %846 = vmatprep.subr.mxu0 0.0
    %847 = vmatpush1.msra.mxu0 0.0
    %848 = vmatprep.mubr.f32.mxu0 0.0
    %849 = vmatmul.mubr.f32.gmra.mrb[0].mxu0 %v782
    %v850 = vpop.f32.mrb[0].mxu0
    %v851 = vadd.f32 0.0, %v850
    %v852 = vpop.f32.mrb[0].mxu0
    %853 = vdwg.mxu0
    %v855 = vsel %vm196, %v775, 0
    %v858 = vsel %vm196, %v851, 0
    %860 = vmatprep.subr.mxu0 0.0
    %861 = vmatpush1.msra.mxu0 %v99
    %862 = vmatprep.subr.mxu0 0.0
    %863 = vmatpush1.msra.mxu0 0.0
    %864 = vmatprep.subr.mxu0 0.0
    %865 = vmatpush1.msra.mxu0 0.0
    %866 = vmatprep.subr.mxu0 0.0
    %867 = vmatpush1.msra.mxu0 0.0
    %868 = vmatprep.subr.mxu0 0.0
    %869 = vmatpush1.msra.mxu0 0.0
    %870 = vmatprep.subr.mxu0 0.0
    %871 = vmatpush1.msra.mxu0 0.0
    %872 = vmatprep.subr.mxu0 0.0
    %873 = vmatpush1.msra.mxu0 0.0
    %874 = vmatprep.subr.mxu0 0.0
    %875 = vmatpush1.msra.mxu0 0.0
    %876 = vmatprep.subr.mxu0 0.0
    %877 = vmatpush1.msra.mxu0 0.0
    %878 = vmatprep.subr.mxu0 0.0
    %879 = vmatpush1.msra.mxu0 0.0
    %880 = vmatprep.subr.mxu0 0.0
    %881 = vmatpush1.msra.mxu0 0.0
    %882 = vmatprep.subr.mxu0 0.0
    %883 = vmatpush1.msra.mxu0 0.0
    %884 = vmatprep.subr.mxu0 0.0
    %885 = vmatpush1.msra.mxu0 0.0
    %886 = vmatprep.subr.mxu0 0.0
    %887 = vmatpush1.msra.mxu0 0.0
    %888 = vmatprep.subr.mxu0 0.0
    %889 = vmatpush1.msra.mxu0 0.0
    %890 = vmatprep.subr.mxu0 0.0
    %891 = vmatpush1.msra.mxu0 0.0
    %892 = vmatprep.subr.mxu0 0.0
    %893 = vmatpush1.msra.mxu0 0.0
    %894 = vmatprep.subr.mxu0 0.0
    %895 = vmatpush1.msra.mxu0 0.0
    %896 = vmatprep.subr.mxu0 0.0
    %897 = vmatpush1.msra.mxu0 0.0
    %898 = vmatprep.subr.mxu0 0.0
    %899 = vmatpush1.msra.mxu0 0.0
    %900 = vmatprep.subr.mxu0 0.0
    %901 = vmatpush1.msra.mxu0 0.0
    %902 = vmatprep.subr.mxu0 0.0
    %903 = vmatpush1.msra.mxu0 0.0
    %904 = vmatprep.subr.mxu0 0.0
    %905 = vmatpush1.msra.mxu0 0.0
    %906 = vmatprep.subr.mxu0 0.0
    %907 = vmatpush1.msra.mxu0 0.0
    %908 = vmatprep.subr.mxu0 0.0
    %909 = vmatpush1.msra.mxu0 0.0
    %910 = vmatprep.subr.mxu0 0.0
    %911 = vmatpush1.msra.mxu0 0.0
    %912 = vmatprep.subr.mxu0 0.0
    %913 = vmatpush1.msra.mxu0 0.0
    %914 = vmatprep.subr.mxu0 0.0
    %915 = vmatpush1.msra.mxu0 0.0
    %916 = vmatprep.subr.mxu0 0.0
    %917 = vmatpush1.msra.mxu0 0.0
    %918 = vmatprep.subr.mxu0 0.0
    %919 = vmatpush1.msra.mxu0 0.0
    %920 = vmatprep.subr.mxu0 0.0
    %921 = vmatpush1.msra.mxu0 0.0
    %922 = vmatprep.subr.mxu0 0.0
    %923 = vmatpush1.msra.mxu0 0.0
    %924 = vmatprep.mubr.f32.mxu0 0.0
    %925 = vmatmul.mubr.f32.gmra.mrb[0].mxu0 %v855
    %v926 = vpop.f32.mrb[0].mxu0
    %v927 = vadd.f32 0.0, %v926
    %v928 = vpop.f32.mrb[0].mxu0
    %929 = vmatprep.mubr.f32.mxu0 0.0
    %930 = vmatmul.mubr.f32.gmra.mrb[0].mxu0 %v858
    %v931 = vpop.f32.mrb[0].mxu0
    %v932 = vadd.f32 0.0, %v931
    %v933 = vpop.f32.mrb[0].mxu0
    %934 = vdwg.mxu0
    %v936 = vsel %vm196, %v445, 0
    %v939 = vsel %vm196, %v521, 0
    %941 = vmatprep.subr.mxu0 0.0
    %942 = vmatpush1.msra.mxu0 %v98
    %943 = vmatprep.subr.mxu0 0.0
    %944 = vmatpush1.msra.mxu0 0.0
    %945 = vmatprep.subr.mxu0 0.0
    %946 = vmatpush1.msra.mxu0 0.0
    %947 = vmatprep.subr.mxu0 0.0
    %948 = vmatpush1.msra.mxu0 0.0
    %949 = vmatprep.subr.mxu0 0.0
    %950 = vmatpush1.msra.mxu0 0.0
    %951 = vmatprep.subr.mxu0 0.0
    %952 = vmatpush1.msra.mxu0 0.0
    %953 = vmatprep.subr.mxu0 0.0
    %954 = vmatpush1.msra.mxu0 0.0
    %955 = vmatprep.subr.mxu0 0.0
    %956 = vmatpush1.msra.mxu0 0.0
    %957 = vmatprep.subr.mxu0 0.0
    %958 = vmatpush1.msra.mxu0 0.0
    %959 = vmatprep.subr.mxu0 0.0
    %960 = vmatpush1.msra.mxu0 0.0
    %961 = vmatprep.subr.mxu0 0.0
    %962 = vmatpush1.msra.mxu0 0.0
    %963 = vmatprep.subr.mxu0 0.0
    %964 = vmatpush1.msra.mxu0 0.0
    %965 = vmatprep.subr.mxu0 0.0
    %966 = vmatpush1.msra.mxu0 0.0
    %967 = vmatprep.subr.mxu0 0.0
    %968 = vmatpush1.msra.mxu0 0.0
    %969 = vmatprep.subr.mxu0 0.0
    %970 = vmatpush1.msra.mxu0 0.0
    %971 = vmatprep.subr.mxu0 0.0
    %972 = vmatpush1.msra.mxu0 0.0
    %973 = vmatprep.subr.mxu0 0.0
    %974 = vmatpush1.msra.mxu0 0.0
    %975 = vmatprep.subr.mxu0 0.0
    %976 = vmatpush1.msra.mxu0 0.0
    %977 = vmatprep.subr.mxu0 0.0
    %978 = vmatpush1.msra.mxu0 0.0
    %979 = vmatprep.subr.mxu0 0.0
    %980 = vmatpush1.msra.mxu0 0.0
    %981 = vmatprep.subr.mxu0 0.0
    %982 = vmatpush1.msra.mxu0 0.0
    %983 = vmatprep.subr.mxu0 0.0
    %984 = vmatpush1.msra.mxu0 0.0
    %985 = vmatprep.subr.mxu0 0.0
    %986 = vmatpush1.msra.mxu0 0.0
    %987 = vmatprep.subr.mxu0 0.0
    %988 = vmatpush1.msra.mxu0 0.0
    %989 = vmatprep.subr.mxu0 0.0
    %990 = vmatpush1.msra.mxu0 0.0
    %991 = vmatprep.subr.mxu0 0.0
    %992 = vmatpush1.msra.mxu0 0.0
    %993 = vmatprep.subr.mxu0 0.0
    %994 = vmatpush1.msra.mxu0 0.0
    %995 = vmatprep.subr.mxu0 0.0
    %996 = vmatpush1.msra.mxu0 0.0
    %997 = vmatprep.subr.mxu0 0.0
    %998 = vmatpush1.msra.mxu0 0.0
    %999 = vmatprep.subr.mxu0 0.0
    %1000 = vmatpush1.msra.mxu0 0.0
    %1001 = vmatprep.subr.mxu0 0.0
    %1002 = vmatpush1.msra.mxu0 0.0
    %1003 = vmatprep.subr.mxu0 0.0
    %1004 = vmatpush1.msra.mxu0 0.0
    %1005 = vmatprep.mubr.f32.mxu0 0.0
    %1006 = vmatmul.mubr.f32.gmra.mrb[0].mxu0 %v936
    %v1007 = vpop.f32.mrb[0].mxu0
    %v1008 = vadd.f32 %v927, %v1007
    %v1009 = vpop.f32.mrb[0].mxu0
    %1010 = vmatprep.mubr.f32.mxu0 0.0
    %1011 = vmatmul.mubr.f32.gmra.mrb[0].mxu0 %v939
    %v1012 = vpop.f32.mrb[0].mxu0
    %v1013 = vadd.f32 %v932, %v1012
    %v1014 = vpop.f32.mrb[0].mxu0
    %1015 = vdwg.mxu0
    %1016 = vrot.lane.b32.xlu0 %v191, 112
    %v1017 = vpop.permute.xlu0 %1016
    %1018 = vrot.lane.b32.xlu0 %v183, 80
    %v1019 = vpop.permute.xlu0 %1018
    %v1020 = vsel %vm196, %v1017, 0
    %v1022 = vsel %vm196, %v1019, 0
    %1024 = vmatprep.subr.mxu0 0.0
    %1025 = vmatpush1.xpose.msra.mxu0 %v1022
    %1026 = vmatprep.subr.mxu0 0.0
    %1027 = vmatpush1.xpose.msra.mxu0 0.0
    %1028 = vmatprep.subr.mxu0 0.0
    %1029 = vmatpush1.xpose.msra.mxu0 0.0
    %1030 = vmatprep.subr.mxu0 0.0
    %1031 = vmatpush1.xpose.msra.mxu0 0.0
    %1032 = vmatprep.subr.mxu0 0.0
    %1033 = vmatpush1.xpose.msra.mxu0 0.0
    %1034 = vmatprep.subr.mxu0 0.0
    %1035 = vmatpush1.xpose.msra.mxu0 0.0
    %1036 = vmatprep.subr.mxu0 0.0
    %1037 = vmatpush1.xpose.msra.mxu0 0.0
    %1038 = vmatprep.subr.mxu0 0.0
    %1039 = vmatpush1.xpose.msra.mxu0 0.0
    %1040 = vmatprep.subr.mxu0 0.0
    %1041 = vmatpush1.xpose.msra.mxu0 0.0
    %1042 = vmatprep.subr.mxu0 0.0
    %1043 = vmatpush1.xpose.msra.mxu0 0.0
    %1044 = vmatprep.subr.mxu0 0.0
    %1045 = vmatpush1.xpose.msra.mxu0 0.0
    %1046 = vmatprep.subr.mxu0 0.0
    %1047 = vmatpush1.xpose.msra.mxu0 0.0
    %1048 = vmatprep.subr.mxu0 0.0
    %1049 = vmatpush1.xpose.msra.mxu0 0.0
    %1050 = vmatprep.subr.mxu0 0.0
    %1051 = vmatpush1.xpose.msra.mxu0 0.0
    %1052 = vmatprep.subr.mxu0 0.0
    %1053 = vmatpush1.xpose.msra.mxu0 0.0
    %1054 = vmatprep.subr.mxu0 0.0
    %1055 = vmatpush1.xpose.msra.mxu0 0.0
    %1056 = vmatprep.subr.mxu0 0.0
    %1057 = vmatpush1.xpose.msra.mxu0 0.0
    %1058 = vmatprep.subr.mxu0 0.0
    %1059 = vmatpush1.xpose.msra.mxu0 0.0
    %1060 = vmatprep.subr.mxu0 0.0
    %1061 = vmatpush1.xpose.msra.mxu0 0.0
    %1062 = vmatprep.subr.mxu0 0.0
    %1063 = vmatpush1.xpose.msra.mxu0 0.0
    %1064 = vmatprep.subr.mxu0 0.0
    %1065 = vmatpush1.xpose.msra.mxu0 0.0
    %1066 = vmatprep.subr.mxu0 0.0
    %1067 = vmatpush1.xpose.msra.mxu0 0.0
    %1068 = vmatprep.subr.mxu0 0.0
    %1069 = vmatpush1.xpose.msra.mxu0 0.0
    %1070 = vmatprep.subr.mxu0 0.0
    %1071 = vmatpush1.xpose.msra.mxu0 0.0
    %1072 = vmatprep.subr.mxu0 0.0
    %1073 = vmatpush1.xpose.msra.mxu0 0.0
    %1074 = vmatprep.subr.mxu0 0.0
    %1075 = vmatpush1.xpose.msra.mxu0 0.0
    %1076 = vmatprep.subr.mxu0 0.0
    %1077 = vmatpush1.xpose.msra.mxu0 0.0
    %1078 = vmatprep.subr.mxu0 0.0
    %1079 = vmatpush1.xpose.msra.mxu0 0.0
    %1080 = vmatprep.subr.mxu0 0.0
    %1081 = vmatpush1.xpose.msra.mxu0 0.0
    %1082 = vmatprep.subr.mxu0 0.0
    %1083 = vmatpush1.xpose.msra.mxu0 0.0
    %1084 = vmatprep.subr.mxu0 0.0
    %1085 = vmatpush1.xpose.msra.mxu0 0.0
    %1086 = vmatprep.subr.mxu0 0.0
    %1087 = vmatpush1.xpose.msra.mxu0 0.0
    %1088 = vmatprep.mubr.f32.mxu0 0.0
    %1089 = vmatmul.mubr.f32.gmra.mrb[0].mxu0 %v1020
    %v1090 = vpop.f32.mrb[0].mxu0
    %v1091 = vadd.f32 0.0, %v1090
    %v1092 = vpop.f32.mrb[0].mxu0
    %1093 = vdwg.mxu0
    %1094 = vrot.lane.b32.xlu0 %v192, 112
    %v1095 = vpop.permute.xlu0 %1094
    %1096 = vrot.lane.b32.xlu0 %v188, 80
    %v1097 = vpop.permute.xlu0 %1096
    %v1098 = vsel %vm196, %v1095, 0
    %v1100 = vsel %vm196, %v1097, 0
    %1102 = vmatprep.subr.mxu0 0.0
    %1103 = vmatpush1.xpose.msra.mxu0 %v1100
    %1104 = vmatprep.subr.mxu0 0.0
    %1105 = vmatpush1.xpose.msra.mxu0 0.0
    %1106 = vmatprep.subr.mxu0 0.0
    %1107 = vmatpush1.xpose.msra.mxu0 0.0
    %1108 = vmatprep.subr.mxu0 0.0
    %1109 = vmatpush1.xpose.msra.mxu0 0.0
    %1110 = vmatprep.subr.mxu0 0.0
    %1111 = vmatpush1.xpose.msra.mxu0 0.0
    %1112 = vmatprep.subr.mxu0 0.0
    %1113 = vmatpush1.xpose.msra.mxu0 0.0
    %1114 = vmatprep.subr.mxu0 0.0
    %1115 = vmatpush1.xpose.msra.mxu0 0.0
    %1116 = vmatprep.subr.mxu0 0.0
    %1117 = vmatpush1.xpose.msra.mxu0 0.0
    %1118 = vmatprep.subr.mxu0 0.0
    %1119 = vmatpush1.xpose.msra.mxu0 0.0
    %1120 = vmatprep.subr.mxu0 0.0
    %1121 = vmatpush1.xpose.msra.mxu0 0.0
    %1122 = vmatprep.subr.mxu0 0.0
    %1123 = vmatpush1.xpose.msra.mxu0 0.0
    %1124 = vmatprep.subr.mxu0 0.0
    %1125 = vmatpush1.xpose.msra.mxu0 0.0
    %1126 = vmatprep.subr.mxu0 0.0
    %1127 = vmatpush1.xpose.msra.mxu0 0.0
    %1128 = vmatprep.subr.mxu0 0.0
    %1129 = vmatpush1.xpose.msra.mxu0 0.0
    %1130 = vmatprep.subr.mxu0 0.0
    %1131 = vmatpush1.xpose.msra.mxu0 0.0
    %1132 = vmatprep.subr.mxu0 0.0
    %1133 = vmatpush1.xpose.msra.mxu0 0.0
    %1134 = vmatprep.subr.mxu0 0.0
    %1135 = vmatpush1.xpose.msra.mxu0 0.0
    %1136 = vmatprep.subr.mxu0 0.0
    %1137 = vmatpush1.xpose.msra.mxu0 0.0
    %1138 = vmatprep.subr.mxu0 0.0
    %1139 = vmatpush1.xpose.msra.mxu0 0.0
    %1140 = vmatprep.subr.mxu0 0.0
    %1141 = vmatpush1.xpose.msra.mxu0 0.0
    %1142 = vmatprep.subr.mxu0 0.0
    %1143 = vmatpush1.xpose.msra.mxu0 0.0
    %1144 = vmatprep.subr.mxu0 0.0
    %1145 = vmatpush1.xpose.msra.mxu0 0.0
    %1146 = vmatprep.subr.mxu0 0.0
    %1147 = vmatpush1.xpose.msra.mxu0 0.0
    %1148 = vmatprep.subr.mxu0 0.0
    %1149 = vmatpush1.xpose.msra.mxu0 0.0
    %1150 = vmatprep.subr.mxu0 0.0
    %1151 = vmatpush1.xpose.msra.mxu0 0.0
    %1152 = vmatprep.subr.mxu0 0.0
    %1153 = vmatpush1.xpose.msra.mxu0 0.0
    %1154 = vmatprep.subr.mxu0 0.0
    %1155 = vmatpush1.xpose.msra.mxu0 0.0
    %1156 = vmatprep.subr.mxu0 0.0
    %1157 = vmatpush1.xpose.msra.mxu0 0.0
    %1158 = vmatprep.subr.mxu0 0.0
    %1159 = vmatpush1.xpose.msra.mxu0 0.0
    %1160 = vmatprep.subr.mxu0 0.0
    %1161 = vmatpush1.xpose.msra.mxu0 0.0
    %1162 = vmatprep.subr.mxu0 0.0
    %1163 = vmatpush1.xpose.msra.mxu0 0.0
    %1164 = vmatprep.subr.mxu0 0.0
    %1165 = vmatpush1.xpose.msra.mxu0 0.0
    %1166 = vmatprep.mubr.f32.mxu0 0.0
    %1167 = vmatmul.mubr.f32.gmra.mrb[0].mxu0 %v1098
    %v1168 = vpop.f32.mrb[0].mxu0
    %v1169 = vadd.f32 0.0, %v1168
    %v1170 = vpop.f32.mrb[0].mxu0
    %1171 = vdwg.mxu0
    %v1172 = vsel %vm196, %v1091, -inf
    %1173 = vmax.xlane.f32.xlu0 %v1172
    %v1174 = vpop.xlane.xlu0 %1173
    %v1175 = vsel %vm196, %v1169, -inf
    %1176 = vmax.xlane.f32.xlu0 %v1175
    %v1177 = vpop.xlane.xlu0 %1176
    %v1178 = vsub.f32 %v1091, %v1174
    %v1179 = vsub.f32 %v1169, %v1177
    %v1180 = vmul.f32 %v1178, 1.442695
    %v1181 = vpow.pop %v1180
    %v1182 = vmul.f32 %v1179, 1.442695
    %v1183 = vpow.pop %v1182
    %v1184 = vsel %vm196, %v1181, 0.0
    %1185 = vadd.xlane.f32.xlu0 %v1184
    %v1186 = vpop.xlane.xlu0 %1185
    %v1187 = vsel %vm196, %v1183, 0.0
    %1188 = vadd.xlane.f32.xlu0 %v1187
    %v1189 = vpop.xlane.xlu0 %1188
    %v1190 = vrcp.pop %v1186
    %v1191 = vrcp.pop %v1189
    %v1192 = vmul.f32 %v1181, %v1190
    %v1193 = vmul.f32 %v1183, %v1191
    %1194 = vrot.lane.b32.xlu0 %v183, 48
    %v1195 = vpop.permute.xlu0 %1194
    %v1198 = vsel %vm196, %v1192, 0
    %1200 = vmatprep.subr.mxu0 0.0
    %1201 = vmatpush1.msra.mxu0 %v1195
    %1202 = vmatprep.subr.mxu0 0.0
    %1203 = vmatpush1.msra.mxu0 0.0
    %1204 = vmatprep.subr.mxu0 0.0
    %1205 = vmatpush1.msra.mxu0 0.0
    %1206 = vmatprep.subr.mxu0 0.0
    %1207 = vmatpush1.msra.mxu0 0.0
    %1208 = vmatprep.subr.mxu0 0.0
    %1209 = vmatpush1.msra.mxu0 0.0
    %1210 = vmatprep.subr.mxu0 0.0
    %1211 = vmatpush1.msra.mxu0 0.0
    %1212 = vmatprep.subr.mxu0 0.0
    %1213 = vmatpush1.msra.mxu0 0.0
    %1214 = vmatprep.subr.mxu0 0.0
    %1215 = vmatpush1.msra.mxu0 0.0
    %1216 = vmatprep.subr.mxu0 0.0
    %1217 = vmatpush1.msra.mxu0 0.0
    %1218 = vmatprep.subr.mxu0 0.0
    %1219 = vmatpush1.msra.mxu0 0.0
    %1220 = vmatprep.subr.mxu0 0.0
    %1221 = vmatpush1.msra.mxu0 0.0
    %1222 = vmatprep.subr.mxu0 0.0
    %1223 = vmatpush1.msra.mxu0 0.0
    %1224 = vmatprep.subr.mxu0 0.0
    %1225 = vmatpush1.msra.mxu0 0.0
    %1226 = vmatprep.subr.mxu0 0.0
    %1227 = vmatpush1.msra.mxu0 0.0
    %1228 = vmatprep.subr.mxu0 0.0
    %1229 = vmatpush1.msra.mxu0 0.0
    %1230 = vmatprep.subr.mxu0 0.0
    %1231 = vmatpush1.msra.mxu0 0.0
    %1232 = vmatprep.subr.mxu0 0.0
    %1233 = vmatpush1.msra.mxu0 0.0
    %1234 = vmatprep.subr.mxu0 0.0
    %1235 = vmatpush1.msra.mxu0 0.0
    %1236 = vmatprep.subr.mxu0 0.0
    %1237 = vmatpush1.msra.mxu0 0.0
    %1238 = vmatprep.subr.mxu0 0.0
    %1239 = vmatpush1.msra.mxu0 0.0
    %1240 = vmatprep.subr.mxu0 0.0
    %1241 = vmatpush1.msra.mxu0 0.0
    %1242 = vmatprep.subr.mxu0 0.0
    %1243 = vmatpush1.msra.mxu0 0.0
    %1244 = vmatprep.subr.mxu0 0.0
    %1245 = vmatpush1.msra.mxu0 0.0
    %1246 = vmatprep.subr.mxu0 0.0
    %1247 = vmatpush1.msra.mxu0 0.0
    %1248 = vmatprep.subr.mxu0 0.0
    %1249 = vmatpush1.msra.mxu0 0.0
    %1250 = vmatprep.subr.mxu0 0.0
    %1251 = vmatpush1.msra.mxu0 0.0
    %1252 = vmatprep.subr.mxu0 0.0
    %1253 = vmatpush1.msra.mxu0 0.0
    %1254 = vmatprep.subr.mxu0 0.0
    %1255 = vmatpush1.msra.mxu0 0.0
    %1256 = vmatprep.subr.mxu0 0.0
    %1257 = vmatpush1.msra.mxu0 0.0
    %1258 = vmatprep.subr.mxu0 0.0
    %1259 = vmatpush1.msra.mxu0 0.0
    %1260 = vmatprep.subr.mxu0 0.0
    %1261 = vmatpush1.msra.mxu0 0.0
    %1262 = vmatprep.subr.mxu0 0.0
    %1263 = vmatpush1.msra.mxu0 0.0
    %1264 = vmatprep.mubr.f32.mxu0 0.0
    %1265 = vmatmul.mubr.f32.gmra.mrb[0].mxu0 %v1198
    %v1266 = vpop.f32.mrb[0].mxu0
    %v1267 = vadd.f32 0.0, %v1266
    %v1268 = vpop.f32.mrb[0].mxu0
    %1269 = vdwg.mxu0
    %1270 = vrot.lane.b32.xlu0 %v188, 48
    %v1271 = vpop.permute.xlu0 %1270
    %v1274 = vsel %vm196, %v1193, 0
    %1276 = vmatprep.subr.mxu0 0.0
    %1277 = vmatpush1.msra.mxu0 %v1271
    %1278 = vmatprep.subr.mxu0 0.0
    %1279 = vmatpush1.msra.mxu0 0.0
    %1280 = vmatprep.subr.mxu0 0.0
    %1281 = vmatpush1.msra.mxu0 0.0
    %1282 = vmatprep.subr.mxu0 0.0
    %1283 = vmatpush1.msra.mxu0 0.0
    %1284 = vmatprep.subr.mxu0 0.0
    %1285 = vmatpush1.msra.mxu0 0.0
    %1286 = vmatprep.subr.mxu0 0.0
    %1287 = vmatpush1.msra.mxu0 0.0
    %1288 = vmatprep.subr.mxu0 0.0
    %1289 = vmatpush1.msra.mxu0 0.0
    %1290 = vmatprep.subr.mxu0 0.0
    %1291 = vmatpush1.msra.mxu0 0.0
    %1292 = vmatprep.subr.mxu0 0.0
    %1293 = vmatpush1.msra.mxu0 0.0
    %1294 = vmatprep.subr.mxu0 0.0
    %1295 = vmatpush1.msra.mxu0 0.0
    %1296 = vmatprep.subr.mxu0 0.0
    %1297 = vmatpush1.msra.mxu0 0.0
    %1298 = vmatprep.subr.mxu0 0.0
    %1299 = vmatpush1.msra.mxu0 0.0
    %1300 = vmatprep.subr.mxu0 0.0
    %1301 = vmatpush1.msra.mxu0 0.0
    %1302 = vmatprep.subr.mxu0 0.0
    %1303 = vmatpush1.msra.mxu0 0.0
    %1304 = vmatprep.subr.mxu0 0.0
    %1305 = vmatpush1.msra.mxu0 0.0
    %1306 = vmatprep.subr.mxu0 0.0
    %1307 = vmatpush1.msra.mxu0 0.0
    %1308 = vmatprep.subr.mxu0 0.0
    %1309 = vmatpush1.msra.mxu0 0.0
    %1310 = vmatprep.subr.mxu0 0.0
    %1311 = vmatpush1.msra.mxu0 0.0
    %1312 = vmatprep.subr.mxu0 0.0
    %1313 = vmatpush1.msra.mxu0 0.0
    %1314 = vmatprep.subr.mxu0 0.0
    %1315 = vmatpush1.msra.mxu0 0.0
    %1316 = vmatprep.subr.mxu0 0.0
    %1317 = vmatpush1.msra.mxu0 0.0
    %1318 = vmatprep.subr.mxu0 0.0
    %1319 = vmatpush1.msra.mxu0 0.0
    %1320 = vmatprep.subr.mxu0 0.0
    %1321 = vmatpush1.msra.mxu0 0.0
    %1322 = vmatprep.subr.mxu0 0.0
    %1323 = vmatpush1.msra.mxu0 0.0
    %1324 = vmatprep.subr.mxu0 0.0
    %1325 = vmatpush1.msra.mxu0 0.0
    %1326 = vmatprep.subr.mxu0 0.0
    %1327 = vmatpush1.msra.mxu0 0.0
    %1328 = vmatprep.subr.mxu0 0.0
    %1329 = vmatpush1.msra.mxu0 0.0
    %1330 = vmatprep.subr.mxu0 0.0
    %1331 = vmatpush1.msra.mxu0 0.0
    %1332 = vmatprep.subr.mxu0 0.0
    %1333 = vmatpush1.msra.mxu0 0.0
    %1334 = vmatprep.subr.mxu0 0.0
    %1335 = vmatpush1.msra.mxu0 0.0
    %1336 = vmatprep.subr.mxu0 0.0
    %1337 = vmatpush1.msra.mxu0 0.0
    %1338 = vmatprep.subr.mxu0 0.0
    %1339 = vmatpush1.msra.mxu0 0.0
    %1340 = vmatprep.mubr.f32.mxu0 0.0
    %1341 = vmatmul.mubr.f32.gmra.mrb[0].mxu0 %v1274
    %v1342 = vpop.f32.mrb[0].mxu0
    %v1343 = vadd.f32 0.0, %v1342
    %v1344 = vpop.f32.mrb[0].mxu0
    %1345 = vdwg.mxu0
    %v1347 = vsel %vm196, %v1267, 0
    %v1350 = vsel %vm196, %v1343, 0
    %1352 = vmatprep.subr.mxu0 0.0
    %1353 = vmatpush1.msra.mxu0 %v100
    %1354 = vmatprep.subr.mxu0 0.0
    %1355 = vmatpush1.msra.mxu0 0.0
    %1356 = vmatprep.subr.mxu0 0.0
    %1357 = vmatpush1.msra.mxu0 0.0
    %1358 = vmatprep.subr.mxu0 0.0
    %1359 = vmatpush1.msra.mxu0 0.0
    %1360 = vmatprep.subr.mxu0 0.0
    %1361 = vmatpush1.msra.mxu0 0.0
    %1362 = vmatprep.subr.mxu0 0.0
    %1363 = vmatpush1.msra.mxu0 0.0
    %1364 = vmatprep.subr.mxu0 0.0
    %1365 = vmatpush1.msra.mxu0 0.0
    %1366 = vmatprep.subr.mxu0 0.0
    %1367 = vmatpush1.msra.mxu0 0.0
    %1368 = vmatprep.subr.mxu0 0.0
    %1369 = vmatpush1.msra.mxu0 0.0
    %1370 = vmatprep.subr.mxu0 0.0
    %1371 = vmatpush1.msra.mxu0 0.0
    %1372 = vmatprep.subr.mxu0 0.0
    %1373 = vmatpush1.msra.mxu0 0.0
    %1374 = vmatprep.subr.mxu0 0.0
    %1375 = vmatpush1.msra.mxu0 0.0
    %1376 = vmatprep.subr.mxu0 0.0
    %1377 = vmatpush1.msra.mxu0 0.0
    %1378 = vmatprep.subr.mxu0 0.0
    %1379 = vmatpush1.msra.mxu0 0.0
    %1380 = vmatprep.subr.mxu0 0.0
    %1381 = vmatpush1.msra.mxu0 0.0
    %1382 = vmatprep.subr.mxu0 0.0
    %1383 = vmatpush1.msra.mxu0 0.0
    %1384 = vmatprep.subr.mxu0 0.0
    %1385 = vmatpush1.msra.mxu0 0.0
    %1386 = vmatprep.subr.mxu0 0.0
    %1387 = vmatpush1.msra.mxu0 0.0
    %1388 = vmatprep.subr.mxu0 0.0
    %1389 = vmatpush1.msra.mxu0 0.0
    %1390 = vmatprep.subr.mxu0 0.0
    %1391 = vmatpush1.msra.mxu0 0.0
    %1392 = vmatprep.subr.mxu0 0.0
    %1393 = vmatpush1.msra.mxu0 0.0
    %1394 = vmatprep.subr.mxu0 0.0
    %1395 = vmatpush1.msra.mxu0 0.0
    %1396 = vmatprep.subr.mxu0 0.0
    %1397 = vmatpush1.msra.mxu0 0.0
    %1398 = vmatprep.subr.mxu0 0.0
    %1399 = vmatpush1.msra.mxu0 0.0
    %1400 = vmatprep.subr.mxu0 0.0
    %1401 = vmatpush1.msra.mxu0 0.0
    %1402 = vmatprep.subr.mxu0 0.0
    %1403 = vmatpush1.msra.mxu0 0.0
    %1404 = vmatprep.subr.mxu0 0.0
    %1405 = vmatpush1.msra.mxu0 0.0
    %1406 = vmatprep.subr.mxu0 0.0
    %1407 = vmatpush1.msra.mxu0 0.0
    %1408 = vmatprep.subr.mxu0 0.0
    %1409 = vmatpush1.msra.mxu0 0.0
    %1410 = vmatprep.subr.mxu0 0.0
    %1411 = vmatpush1.msra.mxu0 0.0
    %1412 = vmatprep.subr.mxu0 0.0
    %1413 = vmatpush1.msra.mxu0 0.0
    %1414 = vmatprep.subr.mxu0 0.0
    %1415 = vmatpush1.msra.mxu0 0.0
    %1416 = vmatprep.mubr.f32.mxu0 0.0
    %1417 = vmatmul.mubr.f32.gmra.mrb[0].mxu0 %v1347
    %v1418 = vpop.f32.mrb[0].mxu0
    %v1419 = vadd.f32 0.0, %v1418
    %v1420 = vpop.f32.mrb[0].mxu0
    %1421 = vmatprep.mubr.f32.mxu0 0.0
    %1422 = vmatmul.mubr.f32.gmra.mrb[0].mxu0 %v1350
    %v1423 = vpop.f32.mrb[0].mxu0
    %v1424 = vadd.f32 0.0, %v1423
    %v1425 = vpop.f32.mrb[0].mxu0
    %1426 = vdwg.mxu0
    %v1427 = vadd.f32 %v1008, %v1419
    %v1428 = vadd.f32 %v1013, %v1424
    %1429 = vrot.lane.b32.xlu0 %v191, 104
    %v1430 = vpop.permute.xlu0 %1429
    %1431 = vrot.lane.b32.xlu0 %v183, 72
    %v1432 = vpop.permute.xlu0 %1431
    %v1433 = vsel %vm196, %v1430, 0
    %v1435 = vsel %vm196, %v1432, 0
    %1437 = vmatprep.subr.mxu0 0.0
    %1438 = vmatpush1.xpose.msra.mxu0 %v1435
    %1439 = vmatprep.subr.mxu0 0.0
    %1440 = vmatpush1.xpose.msra.mxu0 0.0
    %1441 = vmatprep.subr.mxu0 0.0
    %1442 = vmatpush1.xpose.msra.mxu0 0.0
    %1443 = vmatprep.subr.mxu0 0.0
    %1444 = vmatpush1.xpose.msra.mxu0 0.0
    %1445 = vmatprep.subr.mxu0 0.0
    %1446 = vmatpush1.xpose.msra.mxu0 0.0
    %1447 = vmatprep.subr.mxu0 0.0
    %1448 = vmatpush1.xpose.msra.mxu0 0.0
    %1449 = vmatprep.subr.mxu0 0.0
    %1450 = vmatpush1.xpose.msra.mxu0 0.0
    %1451 = vmatprep.subr.mxu0 0.0
    %1452 = vmatpush1.xpose.msra.mxu0 0.0
    %1453 = vmatprep.subr.mxu0 0.0
    %1454 = vmatpush1.xpose.msra.mxu0 0.0
    %1455 = vmatprep.subr.mxu0 0.0
    %1456 = vmatpush1.xpose.msra.mxu0 0.0
    %1457 = vmatprep.subr.mxu0 0.0
    %1458 = vmatpush1.xpose.msra.mxu0 0.0
    %1459 = vmatprep.subr.mxu0 0.0
    %1460 = vmatpush1.xpose.msra.mxu0 0.0
    %1461 = vmatprep.subr.mxu0 0.0
    %1462 = vmatpush1.xpose.msra.mxu0 0.0
    %1463 = vmatprep.subr.mxu0 0.0
    %1464 = vmatpush1.xpose.msra.mxu0 0.0
    %1465 = vmatprep.subr.mxu0 0.0
    %1466 = vmatpush1.xpose.msra.mxu0 0.0
    %1467 = vmatprep.subr.mxu0 0.0
    %1468 = vmatpush1.xpose.msra.mxu0 0.0
    %1469 = vmatprep.subr.mxu0 0.0
    %1470 = vmatpush1.xpose.msra.mxu0 0.0
    %1471 = vmatprep.subr.mxu0 0.0
    %1472 = vmatpush1.xpose.msra.mxu0 0.0
    %1473 = vmatprep.subr.mxu0 0.0
    %1474 = vmatpush1.xpose.msra.mxu0 0.0
    %1475 = vmatprep.subr.mxu0 0.0
    %1476 = vmatpush1.xpose.msra.mxu0 0.0
    %1477 = vmatprep.subr.mxu0 0.0
    %1478 = vmatpush1.xpose.msra.mxu0 0.0
    %1479 = vmatprep.subr.mxu0 0.0
    %1480 = vmatpush1.xpose.msra.mxu0 0.0
    %1481 = vmatprep.subr.mxu0 0.0
    %1482 = vmatpush1.xpose.msra.mxu0 0.0
    %1483 = vmatprep.subr.mxu0 0.0
    %1484 = vmatpush1.xpose.msra.mxu0 0.0
    %1485 = vmatprep.subr.mxu0 0.0
    %1486 = vmatpush1.xpose.msra.mxu0 0.0
    %1487 = vmatprep.subr.mxu0 0.0
    %1488 = vmatpush1.xpose.msra.mxu0 0.0
    %1489 = vmatprep.subr.mxu0 0.0
    %1490 = vmatpush1.xpose.msra.mxu0 0.0
    %1491 = vmatprep.subr.mxu0 0.0
    %1492 = vmatpush1.xpose.msra.mxu0 0.0
    %1493 = vmatprep.subr.mxu0 0.0
    %1494 = vmatpush1.xpose.msra.mxu0 0.0
    %1495 = vmatprep.subr.mxu0 0.0
    %1496 = vmatpush1.xpose.msra.mxu0 0.0
    %1497 = vmatprep.subr.mxu0 0.0
    %1498 = vmatpush1.xpose.msra.mxu0 0.0
    %1499 = vmatprep.subr.mxu0 0.0
    %1500 = vmatpush1.xpose.msra.mxu0 0.0
    %1501 = vmatprep.mubr.f32.mxu0 0.0
    %1502 = vmatmul.mubr.f32.gmra.mrb[0].mxu0 %v1433
    %v1503 = vpop.f32.mrb[0].mxu0
    %v1504 = vadd.f32 0.0, %v1503
    %v1505 = vpop.f32.mrb[0].mxu0
    %1506 = vdwg.mxu0
    %1507 = vrot.lane.b32.xlu0 %v192, 104
    %v1508 = vpop.permute.xlu0 %1507
    %1509 = vrot.lane.b32.xlu0 %v188, 72
    %v1510 = vpop.permute.xlu0 %1509
    %v1511 = vsel %vm196, %v1508, 0
    %v1513 = vsel %vm196, %v1510, 0
    %1515 = vmatprep.subr.mxu0 0.0
    %1516 = vmatpush1.xpose.msra.mxu0 %v1513
    %1517 = vmatprep.subr.mxu0 0.0
    %1518 = vmatpush1.xpose.msra.mxu0 0.0
    %1519 = vmatprep.subr.mxu0 0.0
    %1520 = vmatpush1.xpose.msra.mxu0 0.0
    %1521 = vmatprep.subr.mxu0 0.0
    %1522 = vmatpush1.xpose.msra.mxu0 0.0
    %1523 = vmatprep.subr.mxu0 0.0
    %1524 = vmatpush1.xpose.msra.mxu0 0.0
    %1525 = vmatprep.subr.mxu0 0.0
    %1526 = vmatpush1.xpose.msra.mxu0 0.0
    %1527 = vmatprep.subr.mxu0 0.0
    %1528 = vmatpush1.xpose.msra.mxu0 0.0
    %1529 = vmatprep.subr.mxu0 0.0
    %1530 = vmatpush1.xpose.msra.mxu0 0.0
    %1531 = vmatprep.subr.mxu0 0.0
    %1532 = vmatpush1.xpose.msra.mxu0 0.0
    %1533 = vmatprep.subr.mxu0 0.0
    %1534 = vmatpush1.xpose.msra.mxu0 0.0
    %1535 = vmatprep.subr.mxu0 0.0
    %1536 = vmatpush1.xpose.msra.mxu0 0.0
    %1537 = vmatprep.subr.mxu0 0.0
    %1538 = vmatpush1.xpose.msra.mxu0 0.0
    %1539 = vmatprep.subr.mxu0 0.0
    %1540 = vmatpush1.xpose.msra.mxu0 0.0
    %1541 = vmatprep.subr.mxu0 0.0
    %1542 = vmatpush1.xpose.msra.mxu0 0.0
    %1543 = vmatprep.subr.mxu0 0.0
    %1544 = vmatpush1.xpose.msra.mxu0 0.0
    %1545 = vmatprep.subr.mxu0 0.0
    %1546 = vmatpush1.xpose.msra.mxu0 0.0
    %1547 = vmatprep.subr.mxu0 0.0
    %1548 = vmatpush1.xpose.msra.mxu0 0.0
    %1549 = vmatprep.subr.mxu0 0.0
    %1550 = vmatpush1.xpose.msra.mxu0 0.0
    %1551 = vmatprep.subr.mxu0 0.0
    %1552 = vmatpush1.xpose.msra.mxu0 0.0
    %1553 = vmatprep.subr.mxu0 0.0
    %1554 = vmatpush1.xpose.msra.mxu0 0.0
    %1555 = vmatprep.subr.mxu0 0.0
    %1556 = vmatpush1.xpose.msra.mxu0 0.0
    %1557 = vmatprep.subr.mxu0 0.0
    %1558 = vmatpush1.xpose.msra.mxu0 0.0
    %1559 = vmatprep.subr.mxu0 0.0
    %1560 = vmatpush1.xpose.msra.mxu0 0.0
    %1561 = vmatprep.subr.mxu0 0.0
    %1562 = vmatpush1.xpose.msra.mxu0 0.0
    %1563 = vmatprep.subr.mxu0 0.0
    %1564 = vmatpush1.xpose.msra.mxu0 0.0
    %1565 = vmatprep.subr.mxu0 0.0
    %1566 = vmatpush1.xpose.msra.mxu0 0.0
    %1567 = vmatprep.subr.mxu0 0.0
    %1568 = vmatpush1.xpose.msra.mxu0 0.0
    %1569 = vmatprep.subr.mxu0 0.0
    %1570 = vmatpush1.xpose.msra.mxu0 0.0
    %1571 = vmatprep.subr.mxu0 0.0
    %1572 = vmatpush1.xpose.msra.mxu0 0.0
    %1573 = vmatprep.subr.mxu0 0.0
    %1574 = vmatpush1.xpose.msra.mxu0 0.0
    %1575 = vmatprep.subr.mxu0 0.0
    %1576 = vmatpush1.xpose.msra.mxu0 0.0
    %1577 = vmatprep.subr.mxu0 0.0
    %1578 = vmatpush1.xpose.msra.mxu0 0.0
    %1579 = vmatprep.mubr.f32.mxu0 0.0
    %1580 = vmatmul.mubr.f32.gmra.mrb[0].mxu0 %v1511
    %v1581 = vpop.f32.mrb[0].mxu0
    %v1582 = vadd.f32 0.0, %v1581
    %v1583 = vpop.f32.mrb[0].mxu0
    %1584 = vdwg.mxu0
    %v1585 = vsel %vm196, %v1504, -inf
    %1586 = vmax.xlane.f32.xlu0 %v1585
    %v1587 = vpop.xlane.xlu0 %1586
    %v1588 = vsel %vm196, %v1582, -inf
    %1589 = vmax.xlane.f32.xlu0 %v1588
    %v1590 = vpop.xlane.xlu0 %1589
    %v1591 = vsub.f32 %v1504, %v1587
    %v1592 = vsub.f32 %v1582, %v1590
    %v1593 = vmul.f32 %v1591, 1.442695
    %v1594 = vpow.pop %v1593
    %v1595 = vmul.f32 %v1592, 1.442695
    %v1596 = vpow.pop %v1595
    %v1597 = vsel %vm196, %v1594, 0.0
    %1598 = vadd.xlane.f32.xlu0 %v1597
    %v1599 = vpop.xlane.xlu0 %1598
    %v1600 = vsel %vm196, %v1596, 0.0
    %1601 = vadd.xlane.f32.xlu0 %v1600
    %v1602 = vpop.xlane.xlu0 %1601
    %v1603 = vrcp.pop %v1599
    %v1604 = vrcp.pop %v1602
    %v1605 = vmul.f32 %v1594, %v1603
    %v1606 = vmul.f32 %v1596, %v1604
    %1607 = vrot.lane.b32.xlu0 %v183, 40
    %v1608 = vpop.permute.xlu0 %1607
    %v1611 = vsel %vm196, %v1605, 0
    %1613 = vmatprep.subr.mxu0 0.0
    %1614 = vmatpush1.msra.mxu0 %v1608
    %1615 = vmatprep.subr.mxu0 0.0
    %1616 = vmatpush1.msra.mxu0 0.0
    %1617 = vmatprep.subr.mxu0 0.0
    %1618 = vmatpush1.msra.mxu0 0.0
    %1619 = vmatprep.subr.mxu0 0.0
    %1620 = vmatpush1.msra.mxu0 0.0
    %1621 = vmatprep.subr.mxu0 0.0
    %1622 = vmatpush1.msra.mxu0 0.0
    %1623 = vmatprep.subr.mxu0 0.0
    %1624 = vmatpush1.msra.mxu0 0.0
    %1625 = vmatprep.subr.mxu0 0.0
    %1626 = vmatpush1.msra.mxu0 0.0
    %1627 = vmatprep.subr.mxu0 0.0
    %1628 = vmatpush1.msra.mxu0 0.0
    %1629 = vmatprep.subr.mxu0 0.0
    %1630 = vmatpush1.msra.mxu0 0.0
    %1631 = vmatprep.subr.mxu0 0.0
    %1632 = vmatpush1.msra.mxu0 0.0
    %1633 = vmatprep.subr.mxu0 0.0
    %1634 = vmatpush1.msra.mxu0 0.0
    %1635 = vmatprep.subr.mxu0 0.0
    %1636 = vmatpush1.msra.mxu0 0.0
    %1637 = vmatprep.subr.mxu0 0.0
    %1638 = vmatpush1.msra.mxu0 0.0
    %1639 = vmatprep.subr.mxu0 0.0
    %1640 = vmatpush1.msra.mxu0 0.0
    %1641 = vmatprep.subr.mxu0 0.0
    %1642 = vmatpush1.msra.mxu0 0.0
    %1643 = vmatprep.subr.mxu0 0.0
    %1644 = vmatpush1.msra.mxu0 0.0
    %1645 = vmatprep.subr.mxu0 0.0
    %1646 = vmatpush1.msra.mxu0 0.0
    %1647 = vmatprep.subr.mxu0 0.0
    %1648 = vmatpush1.msra.mxu0 0.0
    %1649 = vmatprep.subr.mxu0 0.0
    %1650 = vmatpush1.msra.mxu0 0.0
    %1651 = vmatprep.subr.mxu0 0.0
    %1652 = vmatpush1.msra.mxu0 0.0
    %1653 = vmatprep.subr.mxu0 0.0
    %1654 = vmatpush1.msra.mxu0 0.0
    %1655 = vmatprep.subr.mxu0 0.0
    %1656 = vmatpush1.msra.mxu0 0.0
    %1657 = vmatprep.subr.mxu0 0.0
    %1658 = vmatpush1.msra.mxu0 0.0
    %1659 = vmatprep.subr.mxu0 0.0
    %1660 = vmatpush1.msra.mxu0 0.0
    %1661 = vmatprep.subr.mxu0 0.0
    %1662 = vmatpush1.msra.mxu0 0.0
    %1663 = vmatprep.subr.mxu0 0.0
    %1664 = vmatpush1.msra.mxu0 0.0
    %1665 = vmatprep.subr.mxu0 0.0
    %1666 = vmatpush1.msra.mxu0 0.0
    %1667 = vmatprep.subr.mxu0 0.0
    %1668 = vmatpush1.msra.mxu0 0.0
    %1669 = vmatprep.subr.mxu0 0.0
    %1670 = vmatpush1.msra.mxu0 0.0
    %1671 = vmatprep.subr.mxu0 0.0
    %1672 = vmatpush1.msra.mxu0 0.0
    %1673 = vmatprep.subr.mxu0 0.0
    %1674 = vmatpush1.msra.mxu0 0.0
    %1675 = vmatprep.subr.mxu0 0.0
    %1676 = vmatpush1.msra.mxu0 0.0
    %1677 = vmatprep.mubr.f32.mxu0 0.0
    %1678 = vmatmul.mubr.f32.gmra.mrb[0].mxu0 %v1611
    %v1679 = vpop.f32.mrb[0].mxu0
    %v1680 = vadd.f32 0.0, %v1679
    %v1681 = vpop.f32.mrb[0].mxu0
    %1682 = vdwg.mxu0
    %1683 = vrot.lane.b32.xlu0 %v188, 40
    %v1684 = vpop.permute.xlu0 %1683
    %v1687 = vsel %vm196, %v1606, 0
    %1689 = vmatprep.subr.mxu0 0.0
    %1690 = vmatpush1.msra.mxu0 %v1684
    %1691 = vmatprep.subr.mxu0 0.0
    %1692 = vmatpush1.msra.mxu0 0.0
    %1693 = vmatprep.subr.mxu0 0.0
    %1694 = vmatpush1.msra.mxu0 0.0
    %1695 = vmatprep.subr.mxu0 0.0
    %1696 = vmatpush1.msra.mxu0 0.0
    %1697 = vmatprep.subr.mxu0 0.0
    %1698 = vmatpush1.msra.mxu0 0.0
    %1699 = vmatprep.subr.mxu0 0.0
    %1700 = vmatpush1.msra.mxu0 0.0
    %1701 = vmatprep.subr.mxu0 0.0
    %1702 = vmatpush1.msra.mxu0 0.0
    %1703 = vmatprep.subr.mxu0 0.0
    %1704 = vmatpush1.msra.mxu0 0.0
    %1705 = vmatprep.subr.mxu0 0.0
    %1706 = vmatpush1.msra.mxu0 0.0
    %1707 = vmatprep.subr.mxu0 0.0
    %1708 = vmatpush1.msra.mxu0 0.0
    %1709 = vmatprep.subr.mxu0 0.0
    %1710 = vmatpush1.msra.mxu0 0.0
    %1711 = vmatprep.subr.mxu0 0.0
    %1712 = vmatpush1.msra.mxu0 0.0
    %1713 = vmatprep.subr.mxu0 0.0
    %1714 = vmatpush1.msra.mxu0 0.0
    %1715 = vmatprep.subr.mxu0 0.0
    %1716 = vmatpush1.msra.mxu0 0.0
    %1717 = vmatprep.subr.mxu0 0.0
    %1718 = vmatpush1.msra.mxu0 0.0
    %1719 = vmatprep.subr.mxu0 0.0
    %1720 = vmatpush1.msra.mxu0 0.0
    %1721 = vmatprep.subr.mxu0 0.0
    %1722 = vmatpush1.msra.mxu0 0.0
    %1723 = vmatprep.subr.mxu0 0.0
    %1724 = vmatpush1.msra.mxu0 0.0
    %1725 = vmatprep.subr.mxu0 0.0
    %1726 = vmatpush1.msra.mxu0 0.0
    %1727 = vmatprep.subr.mxu0 0.0
    %1728 = vmatpush1.msra.mxu0 0.0
    %1729 = vmatprep.subr.mxu0 0.0
    %1730 = vmatpush1.msra.mxu0 0.0
    %1731 = vmatprep.subr.mxu0 0.0
    %1732 = vmatpush1.msra.mxu0 0.0
    %1733 = vmatprep.subr.mxu0 0.0
    %1734 = vmatpush1.msra.mxu0 0.0
    %1735 = vmatprep.subr.mxu0 0.0
    %1736 = vmatpush1.msra.mxu0 0.0
    %1737 = vmatprep.subr.mxu0 0.0
    %1738 = vmatpush1.msra.mxu0 0.0
    %1739 = vmatprep.subr.mxu0 0.0
    %1740 = vmatpush1.msra.mxu0 0.0
    %1741 = vmatprep.subr.mxu0 0.0
    %1742 = vmatpush1.msra.mxu0 0.0
    %1743 = vmatprep.subr.mxu0 0.0
    %1744 = vmatpush1.msra.mxu0 0.0
    %1745 = vmatprep.subr.mxu0 0.0
    %1746 = vmatpush1.msra.mxu0 0.0
    %1747 = vmatprep.subr.mxu0 0.0
    %1748 = vmatpush1.msra.mxu0 0.0
    %1749 = vmatprep.subr.mxu0 0.0
    %1750 = vmatpush1.msra.mxu0 0.0
    %1751 = vmatprep.subr.mxu0 0.0
    %1752 = vmatpush1.msra.mxu0 0.0
    %1753 = vmatprep.mubr.f32.mxu0 0.0
    %1754 = vmatmul.mubr.f32.gmra.mrb[0].mxu0 %v1687
    %v1755 = vpop.f32.mrb[0].mxu0
    %v1756 = vadd.f32 0.0, %v1755
    %v1757 = vpop.f32.mrb[0].mxu0
    %1758 = vdwg.mxu0
    %v1760 = vsel %vm196, %v1680, 0
    %v1763 = vsel %vm196, %v1756, 0
    %1765 = vmatprep.subr.mxu0 0.0
    %1766 = vmatpush1.msra.mxu0 %v101
    %1767 = vmatprep.subr.mxu0 0.0
    %1768 = vmatpush1.msra.mxu0 0.0
    %1769 = vmatprep.subr.mxu0 0.0
    %1770 = vmatpush1.msra.mxu0 0.0
    %1771 = vmatprep.subr.mxu0 0.0
    %1772 = vmatpush1.msra.mxu0 0.0
    %1773 = vmatprep.subr.mxu0 0.0
    %1774 = vmatpush1.msra.mxu0 0.0
    %1775 = vmatprep.subr.mxu0 0.0
    %1776 = vmatpush1.msra.mxu0 0.0
    %1777 = vmatprep.subr.mxu0 0.0
    %1778 = vmatpush1.msra.mxu0 0.0
    %1779 = vmatprep.subr.mxu0 0.0
    %1780 = vmatpush1.msra.mxu0 0.0
    %1781 = vmatprep.subr.mxu0 0.0
    %1782 = vmatpush1.msra.mxu0 0.0
    %1783 = vmatprep.subr.mxu0 0.0
    %1784 = vmatpush1.msra.mxu0 0.0
    %1785 = vmatprep.subr.mxu0 0.0
    %1786 = vmatpush1.msra.mxu0 0.0
    %1787 = vmatprep.subr.mxu0 0.0
    %1788 = vmatpush1.msra.mxu0 0.0
    %1789 = vmatprep.subr.mxu0 0.0
    %1790 = vmatpush1.msra.mxu0 0.0
    %1791 = vmatprep.subr.mxu0 0.0
    %1792 = vmatpush1.msra.mxu0 0.0
    %1793 = vmatprep.subr.mxu0 0.0
    %1794 = vmatpush1.msra.mxu0 0.0
    %1795 = vmatprep.subr.mxu0 0.0
    %1796 = vmatpush1.msra.mxu0 0.0
    %1797 = vmatprep.subr.mxu0 0.0
    %1798 = vmatpush1.msra.mxu0 0.0
    %1799 = vmatprep.subr.mxu0 0.0
    %1800 = vmatpush1.msra.mxu0 0.0
    %1801 = vmatprep.subr.mxu0 0.0
    %1802 = vmatpush1.msra.mxu0 0.0
    %1803 = vmatprep.subr.mxu0 0.0
    %1804 = vmatpush1.msra.mxu0 0.0
    %1805 = vmatprep.subr.mxu0 0.0
    %1806 = vmatpush1.msra.mxu0 0.0
    %1807 = vmatprep.subr.mxu0 0.0
    %1808 = vmatpush1.msra.mxu0 0.0
    %1809 = vmatprep.subr.mxu0 0.0
    %1810 = vmatpush1.msra.mxu0 0.0
    %1811 = vmatprep.subr.mxu0 0.0
    %1812 = vmatpush1.msra.mxu0 0.0
    %1813 = vmatprep.subr.mxu0 0.0
    %1814 = vmatpush1.msra.mxu0 0.0
    %1815 = vmatprep.subr.mxu0 0.0
    %1816 = vmatpush1.msra.mxu0 0.0
    %1817 = vmatprep.subr.mxu0 0.0
    %1818 = vmatpush1.msra.mxu0 0.0
    %1819 = vmatprep.subr.mxu0 0.0
    %1820 = vmatpush1.msra.mxu0 0.0
    %1821 = vmatprep.subr.mxu0 0.0
    %1822 = vmatpush1.msra.mxu0 0.0
    %1823 = vmatprep.subr.mxu0 0.0
    %1824 = vmatpush1.msra.mxu0 0.0
    %1825 = vmatprep.subr.mxu0 0.0
    %1826 = vmatpush1.msra.mxu0 0.0
    %1827 = vmatprep.subr.mxu0 0.0
    %1828 = vmatpush1.msra.mxu0 0.0
    %1829 = vmatprep.mubr.f32.mxu0 0.0
    %1830 = vmatmul.mubr.f32.gmra.mrb[0].mxu0 %v1760
    %v1831 = vpop.f32.mrb[0].mxu0
    %v1832 = vadd.f32 0.0, %v1831
    %v1833 = vpop.f32.mrb[0].mxu0
    %1834 = vmatprep.mubr.f32.mxu0 0.0
    %1835 = vmatmul.mubr.f32.gmra.mrb[0].mxu0 %v1763
    %v1836 = vpop.f32.mrb[0].mxu0
    %v1837 = vadd.f32 0.0, %v1836
    %v1838 = vpop.f32.mrb[0].mxu0
    %1839 = vdwg.mxu0
    %v1840 = vadd.f32 %v1427, %v1832
    %v1841 = vadd.f32 %v1428, %v1837
    %v1843 = vlaneseq
    %v1844 = vshrl.u32 %v1843, 7
    %v1845 = vsub.s32 0, %v1844
    %v1846 = vrot.slane %v102, %v1845
    %v1848 = vadd.f32 %v1840, %v1846
    %v1849 = vadd.f32 %v1841, %v1846
    %v1850 = vadd.f32 %v87, %v1848
    %v1851 = vadd.f32 %v88, %v1849
    %v1852 = vsel %vm109, %v1850, 0.0
    %1853 = vadd.xlane.f32.xlu0 %v1852
    %v1854 = vpop.xlane.xlu0 %1853
    %v1855 = vsel %vm109, %v1851, 0.0
    %1856 = vadd.xlane.f32.xlu0 %v1855
    %v1857 = vpop.xlane.xlu0 %1856
    %v1858 = vrcp.pop 32.0
    %v1859 = vmul.f32 %v1854, %v1858
    %v1860 = vmul.f32 %v1857, %v1858
    %v1861 = vsub.f32 %v1850, %v1859
    %v1862 = vsub.f32 %v1851, %v1860
    %v1863 = vmul.f32 %v1861, %v1861
    %v1864 = vmul.f32 %v1862, %v1862
    %v1865 = vsel %vm109, %v1863, 0.0
    %1866 = vadd.xlane.f32.xlu0 %v1865
    %v1867 = vpop.xlane.xlu0 %1866
    %v1868 = vsel %vm109, %v1864, 0.0
    %1869 = vadd.xlane.f32.xlu0 %v1868
    %v1870 = vpop.xlane.xlu0 %1869
    %v1871 = vmul.f32 %v1867, %v1858
    %v1872 = vmul.f32 %v1870, %v1858
    %v1873 = vadd.f32 %v1871, 1e-05
    %v1874 = vadd.f32 %v1872, 1e-05
    %v1875 = vrsqrt.pop %v1873
    %v1876 = vrsqrt.pop %v1874
    %v1877 = vmul.f32 %v1861, %v1875
    %v1878 = vmul.f32 %v1862, %v1876
    %v1879 = vlaneseq
    %v1880 = vshrl.u32 %v1879, 7
    %v1881 = vsub.s32 0, %v1880
    %v1882 = vrot.slane %v91, %v1881
    %v1883 = vmul.f32 %v1877, %v1882
    %v1884 = vmul.f32 %v1878, %v1882
    %v1885 = vlaneseq
    %v1886 = vshrl.u32 %v1885, 7
    %v1887 = vsub.s32 0, %v1886
    %v1888 = vrot.slane %v92, %v1887
    %v1889 = vadd.f32 %v1883, %v1888
    %v1890 = vadd.f32 %v1884, %v1888
    %v1891 = vld [vmem:[%s6] sm:$0xff]
    %v1892 = vld [vmem:[%s6 + $0x8] sm:$0xff]
    %v1893 = vld [vmem:[%s6 + $0x10] sm:$0xff]
    %v1894 = vld [vmem:[%s6 + $0x18] sm:$0xff]
    %v1895 = vld [vmem:[%s7] sm:$0x1]
    %v1896 = vld [vmem:[#allocation2] sm:$0xff]
    %v1897 = vld [vmem:[#allocation2 + $0x8] sm:$0xff]
    %v1898 = vld [vmem:[#allocation2 + $0x10] sm:$0xff]
    %v1899 = vld [vmem:[#allocation2 + $0x18] sm:$0xff]
    %v1900 = vld [vmem:[%s9] sm:$0x1]
    %v1902 = vlaneseq
    %v1903 = vshrl.u32 %v1902, 7
    %v1904 = vsub.s32 0, %v1903
    %v1905 = vrot.slane %v1895, %v1904
    %v1908 = vsel %vm109, %v1889, 0
    %v1911 = vsel %vm109, %v1890, 0
    %1913 = vmatprep.subr.mxu0 0.0
    %1914 = vmatpush1.msra.mxu0 %v1891
    %1915 = vmatprep.subr.mxu0 0.0
    %1916 = vmatpush1.msra.mxu0 %v1892
    %1917 = vmatprep.subr.mxu0 0.0
    %1918 = vmatpush1.msra.mxu0 %v1893
    %1919 = vmatprep.subr.mxu0 0.0
    %1920 = vmatpush1.msra.mxu0 %v1894
    %1921 = vmatprep.subr.mxu0 0.0
    %1922 = vmatpush1.msra.mxu0 0.0
    %1923 = vmatprep.subr.mxu0 0.0
    %1924 = vmatpush1.msra.mxu0 0.0
    %1925 = vmatprep.subr.mxu0 0.0
    %1926 = vmatpush1.msra.mxu0 0.0
    %1927 = vmatprep.subr.mxu0 0.0
    %1928 = vmatpush1.msra.mxu0 0.0
    %1929 = vmatprep.subr.mxu0 0.0
    %1930 = vmatpush1.msra.mxu0 0.0
    %1931 = vmatprep.subr.mxu0 0.0
    %1932 = vmatpush1.msra.mxu0 0.0
    %1933 = vmatprep.subr.mxu0 0.0
    %1934 = vmatpush1.msra.mxu0 0.0
    %1935 = vmatprep.subr.mxu0 0.0
    %1936 = vmatpush1.msra.mxu0 0.0
    %1937 = vmatprep.subr.mxu0 0.0
    %1938 = vmatpush1.msra.mxu0 0.0
    %1939 = vmatprep.subr.mxu0 0.0
    %1940 = vmatpush1.msra.mxu0 0.0
    %1941 = vmatprep.subr.mxu0 0.0
    %1942 = vmatpush1.msra.mxu0 0.0
    %1943 = vmatprep.subr.mxu0 0.0
    %1944 = vmatpush1.msra.mxu0 0.0
    %1945 = vmatprep.subr.mxu0 0.0
    %1946 = vmatpush1.msra.mxu0 0.0
    %1947 = vmatprep.subr.mxu0 0.0
    %1948 = vmatpush1.msra.mxu0 0.0
    %1949 = vmatprep.subr.mxu0 0.0
    %1950 = vmatpush1.msra.mxu0 0.0
    %1951 = vmatprep.subr.mxu0 0.0
    %1952 = vmatpush1.msra.mxu0 0.0
    %1953 = vmatprep.subr.mxu0 0.0
    %1954 = vmatpush1.msra.mxu0 0.0
    %1955 = vmatprep.subr.mxu0 0.0
    %1956 = vmatpush1.msra.mxu0 0.0
    %1957 = vmatprep.subr.mxu0 0.0
    %1958 = vmatpush1.msra.mxu0 0.0
    %1959 = vmatprep.subr.mxu0 0.0
    %1960 = vmatpush1.msra.mxu0 0.0
    %1961 = vmatprep.subr.mxu0 0.0
    %1962 = vmatpush1.msra.mxu0 0.0
    %1963 = vmatprep.subr.mxu0 0.0
    %1964 = vmatpush1.msra.mxu0 0.0
    %1965 = vmatprep.subr.mxu0 0.0
    %1966 = vmatpush1.msra.mxu0 0.0
    %1967 = vmatprep.subr.mxu0 0.0
    %1968 = vmatpush1.msra.mxu0 0.0
    %1969 = vmatprep.subr.mxu0 0.0
    %1970 = vmatpush1.msra.mxu0 0.0
    %1971 = vmatprep.subr.mxu0 0.0
    %1972 = vmatpush1.msra.mxu0 0.0
    %1973 = vmatprep.subr.mxu0 0.0
    %1974 = vmatpush1.msra.mxu0 0.0
    %1975 = vmatprep.subr.mxu0 0.0
    %1976 = vmatpush1.msra.mxu0 0.0
    %1977 = vmatprep.mubr.f32.mxu0 0.0
    %1978 = vmatmul.mubr.f32.gmra.mrb[0].mxu0 %v1908
    %v1979 = vpop.f32.mrb[0].mxu0
    %v1980 = vadd.f32 %v1905, %v1979
    %v1981 = vpop.f32.mrb[0].mxu0
    %1982 = vmatprep.mubr.f32.mxu0 0.0
    %1983 = vmatmul.mubr.f32.gmra.mrb[0].mxu0 %v1911
    %v1984 = vpop.f32.mrb[0].mxu0
    %v1985 = vadd.f32 %v1905, %v1984
    %v1986 = vpop.f32.mrb[0].mxu0
    %1987 = vdwg.mxu0
    %1992 = vrot.lane.b32.xlu0 %v1891, 96
    %v1993 = vpop.permute.xlu0 %1992
    %1994 = vrot.lane.b32.xlu0 %v1892, 96
    %v1995 = vpop.permute.xlu0 %1994
    %1996 = vrot.lane.b32.xlu0 %v1893, 96
    %v1997 = vpop.permute.xlu0 %1996
    %1998 = vrot.lane.b32.xlu0 %v1894, 96
    %v1999 = vpop.permute.xlu0 %1998
    %2004 = vrot.lane.b32.xlu0 %v1905, 96
    %v2005 = vpop.permute.xlu0 %2004
    %v2008 = vsel %vm109, %v89, 0
    %v2011 = vsel %vm109, %v90, 0
    %2013 = vmatprep.subr.mxu0 0.0
    %2014 = vmatpush1.msra.mxu0 %v1993
    %2015 = vmatprep.subr.mxu0 0.0
    %2016 = vmatpush1.msra.mxu0 %v1995
    %2017 = vmatprep.subr.mxu0 0.0
    %2018 = vmatpush1.msra.mxu0 %v1997
    %2019 = vmatprep.subr.mxu0 0.0
    %2020 = vmatpush1.msra.mxu0 %v1999
    %2021 = vmatprep.subr.mxu0 0.0
    %2022 = vmatpush1.msra.mxu0 0.0
    %2023 = vmatprep.subr.mxu0 0.0
    %2024 = vmatpush1.msra.mxu0 0.0
    %2025 = vmatprep.subr.mxu0 0.0
    %2026 = vmatpush1.msra.mxu0 0.0
    %2027 = vmatprep.subr.mxu0 0.0
    %2028 = vmatpush1.msra.mxu0 0.0
    %2029 = vmatprep.subr.mxu0 0.0
    %2030 = vmatpush1.msra.mxu0 0.0
    %2031 = vmatprep.subr.mxu0 0.0
    %2032 = vmatpush1.msra.mxu0 0.0
    %2033 = vmatprep.subr.mxu0 0.0
    %2034 = vmatpush1.msra.mxu0 0.0
    %2035 = vmatprep.subr.mxu0 0.0
    %2036 = vmatpush1.msra.mxu0 0.0
    %2037 = vmatprep.subr.mxu0 0.0
    %2038 = vmatpush1.msra.mxu0 0.0
    %2039 = vmatprep.subr.mxu0 0.0
    %2040 = vmatpush1.msra.mxu0 0.0
    %2041 = vmatprep.subr.mxu0 0.0
    %2042 = vmatpush1.msra.mxu0 0.0
    %2043 = vmatprep.subr.mxu0 0.0
    %2044 = vmatpush1.msra.mxu0 0.0
    %2045 = vmatprep.subr.mxu0 0.0
    %2046 = vmatpush1.msra.mxu0 0.0
    %2047 = vmatprep.subr.mxu0 0.0
    %2048 = vmatpush1.msra.mxu0 0.0
    %2049 = vmatprep.subr.mxu0 0.0
    %2050 = vmatpush1.msra.mxu0 0.0
    %2051 = vmatprep.subr.mxu0 0.0
    %2052 = vmatpush1.msra.mxu0 0.0
    %2053 = vmatprep.subr.mxu0 0.0
    %2054 = vmatpush1.msra.mxu0 0.0
    %2055 = vmatprep.subr.mxu0 0.0
    %2056 = vmatpush1.msra.mxu0 0.0
    %2057 = vmatprep.subr.mxu0 0.0
    %2058 = vmatpush1.msra.mxu0 0.0
    %2059 = vmatprep.subr.mxu0 0.0
    %2060 = vmatpush1.msra.mxu0 0.0
    %2061 = vmatprep.subr.mxu0 0.0
    %2062 = vmatpush1.msra.mxu0 0.0
    %2063 = vmatprep.subr.mxu0 0.0
    %2064 = vmatpush1.msra.mxu0 0.0
    %2065 = vmatprep.subr.mxu0 0.0
    %2066 = vmatpush1.msra.mxu0 0.0
    %2067 = vmatprep.subr.mxu0 0.0
    %2068 = vmatpush1.msra.mxu0 0.0
    %2069 = vmatprep.subr.mxu0 0.0
    %2070 = vmatpush1.msra.mxu0 0.0
    %2071 = vmatprep.subr.mxu0 0.0
    %2072 = vmatpush1.msra.mxu0 0.0
    %2073 = vmatprep.subr.mxu0 0.0
    %2074 = vmatpush1.msra.mxu0 0.0
    %2075 = vmatprep.subr.mxu0 0.0
    %2076 = vmatpush1.msra.mxu0 0.0
    %2077 = vmatprep.mubr.f32.mxu0 0.0
    %2078 = vmatmul.mubr.f32.gmra.mrb[0].mxu0 %v2008
    %v2079 = vpop.f32.mrb[0].mxu0
    %v2080 = vadd.f32 %v2005, %v2079
    %v2081 = vpop.f32.mrb[0].mxu0
    %2082 = vmatprep.mubr.f32.mxu0 0.0
    %2083 = vmatmul.mubr.f32.gmra.mrb[0].mxu0 %v2011
    %v2084 = vpop.f32.mrb[0].mxu0
    %v2085 = vadd.f32 %v2005, %v2084
    %v2086 = vpop.f32.mrb[0].mxu0
    %2087 = vdwg.mxu0
    %v2088 = vmul.f32 %v1980, 0.35355338
    %v2089 = vmul.f32 %v1985, 0.35355338
    %v2091 = vsel %vm196, %v2088, 0
    %v2094 = vsel %vm196, %v2080, 0
    %2096 = vmatprep.subr.mxu0 0.0
    %2097 = vmatpush1.xpose.msra.mxu0 %v2094
    %2098 = vmatprep.subr.mxu0 0.0
    %2099 = vmatpush1.xpose.msra.mxu0 0.0
    %2100 = vmatprep.subr.mxu0 0.0
    %2101 = vmatpush1.xpose.msra.mxu0 0.0
    %2102 = vmatprep.subr.mxu0 0.0
    %2103 = vmatpush1.xpose.msra.mxu0 0.0
    %2104 = vmatprep.subr.mxu0 0.0
    %2105 = vmatpush1.xpose.msra.mxu0 0.0
    %2106 = vmatprep.subr.mxu0 0.0
    %2107 = vmatpush1.xpose.msra.mxu0 0.0
    %2108 = vmatprep.subr.mxu0 0.0
    %2109 = vmatpush1.xpose.msra.mxu0 0.0
    %2110 = vmatprep.subr.mxu0 0.0
    %2111 = vmatpush1.xpose.msra.mxu0 0.0
    %2112 = vmatprep.subr.mxu0 0.0
    %2113 = vmatpush1.xpose.msra.mxu0 0.0
    %2114 = vmatprep.subr.mxu0 0.0
    %2115 = vmatpush1.xpose.msra.mxu0 0.0
    %2116 = vmatprep.subr.mxu0 0.0
    %2117 = vmatpush1.xpose.msra.mxu0 0.0
    %2118 = vmatprep.subr.mxu0 0.0
    %2119 = vmatpush1.xpose.msra.mxu0 0.0
    %2120 = vmatprep.subr.mxu0 0.0
    %2121 = vmatpush1.xpose.msra.mxu0 0.0
    %2122 = vmatprep.subr.mxu0 0.0
    %2123 = vmatpush1.xpose.msra.mxu0 0.0
    %2124 = vmatprep.subr.mxu0 0.0
    %2125 = vmatpush1.xpose.msra.mxu0 0.0
    %2126 = vmatprep.subr.mxu0 0.0
    %2127 = vmatpush1.xpose.msra.mxu0 0.0
    %2128 = vmatprep.subr.mxu0 0.0
    %2129 = vmatpush1.xpose.msra.mxu0 0.0
    %2130 = vmatprep.subr.mxu0 0.0
    %2131 = vmatpush1.xpose.msra.mxu0 0.0
    %2132 = vmatprep.subr.mxu0 0.0
    %2133 = vmatpush1.xpose.msra.mxu0 0.0
    %2134 = vmatprep.subr.mxu0 0.0
    %2135 = vmatpush1.xpose.msra.mxu0 0.0
    %2136 = vmatprep.subr.mxu0 0.0
    %2137 = vmatpush1.xpose.msra.mxu0 0.0
    %2138 = vmatprep.subr.mxu0 0.0
    %2139 = vmatpush1.xpose.msra.mxu0 0.0
    %2140 = vmatprep.subr.mxu0 0.0
    %2141 = vmatpush1.xpose.msra.mxu0 0.0
    %2142 = vmatprep.subr.mxu0 0.0
    %2143 = vmatpush1.xpose.msra.mxu0 0.0
    %2144 = vmatprep.subr.mxu0 0.0
    %2145 = vmatpush1.xpose.msra.mxu0 0.0
    %2146 = vmatprep.subr.mxu0 0.0
    %2147 = vmatpush1.xpose.msra.mxu0 0.0
    %2148 = vmatprep.subr.mxu0 0.0
    %2149 = vmatpush1.xpose.msra.mxu0 0.0
    %2150 = vmatprep.subr.mxu0 0.0
    %2151 = vmatpush1.xpose.msra.mxu0 0.0
    %2152 = vmatprep.subr.mxu0 0.0
    %2153 = vmatpush1.xpose.msra.mxu0 0.0
    %2154 = vmatprep.subr.mxu0 0.0
    %2155 = vmatpush1.xpose.msra.mxu0 0.0
    %2156 = vmatprep.subr.mxu0 0.0
    %2157 = vmatpush1.xpose.msra.mxu0 0.0
    %2158 = vmatprep.subr.mxu0 0.0
    %2159 = vmatpush1.xpose.msra.mxu0 0.0
    %2160 = vmatprep.mubr.f32.mxu0 0.0
    %2161 = vmatmul.mubr.f32.gmra.mrb[0].mxu0 %v2091
    %v2162 = vpop.f32.mrb[0].mxu0
    %v2163 = vadd.f32 0.0, %v2162
    %v2164 = vpop.f32.mrb[0].mxu0
    %2165 = vdwg.mxu0
    %v2167 = vsel %vm196, %v2089, 0
    %v2170 = vsel %vm196, %v2085, 0
    %2172 = vmatprep.subr.mxu0 0.0
    %2173 = vmatpush1.xpose.msra.mxu0 %v2170
    %2174 = vmatprep.subr.mxu0 0.0
    %2175 = vmatpush1.xpose.msra.mxu0 0.0
    %2176 = vmatprep.subr.mxu0 0.0
    %2177 = vmatpush1.xpose.msra.mxu0 0.0
    %2178 = vmatprep.subr.mxu0 0.0
    %2179 = vmatpush1.xpose.msra.mxu0 0.0
    %2180 = vmatprep.subr.mxu0 0.0
    %2181 = vmatpush1.xpose.msra.mxu0 0.0
    %2182 = vmatprep.subr.mxu0 0.0
    %2183 = vmatpush1.xpose.msra.mxu0 0.0
    %2184 = vmatprep.subr.mxu0 0.0
    %2185 = vmatpush1.xpose.msra.mxu0 0.0
    %2186 = vmatprep.subr.mxu0 0.0
    %2187 = vmatpush1.xpose.msra.mxu0 0.0
    %2188 = vmatprep.subr.mxu0 0.0
    %2189 = vmatpush1.xpose.msra.mxu0 0.0
    %2190 = vmatprep.subr.mxu0 0.0
    %2191 = vmatpush1.xpose.msra.mxu0 0.0
    %2192 = vmatprep.subr.mxu0 0.0
    %2193 = vmatpush1.xpose.msra.mxu0 0.0
    %2194 = vmatprep.subr.mxu0 0.0
    %2195 = vmatpush1.xpose.msra.mxu0 0.0
    %2196 = vmatprep.subr.mxu0 0.0
    %2197 = vmatpush1.xpose.msra.mxu0 0.0
    %2198 = vmatprep.subr.mxu0 0.0
    %2199 = vmatpush1.xpose.msra.mxu0 0.0
    %2200 = vmatprep.subr.mxu0 0.0
    %2201 = vmatpush1.xpose.msra.mxu0 0.0
    %2202 = vmatprep.subr.mxu0 0.0
    %2203 = vmatpush1.xpose.msra.mxu0 0.0
    %2204 = vmatprep.subr.mxu0 0.0
    %2205 = vmatpush1.xpose.msra.mxu0 0.0
    %2206 = vmatprep.subr.mxu0 0.0
    %2207 = vmatpush1.xpose.msra.mxu0 0.0
    %2208 = vmatprep.subr.mxu0 0.0
    %2209 = vmatpush1.xpose.msra.mxu0 0.0
    %2210 = vmatprep.subr.mxu0 0.0
    %2211 = vmatpush1.xpose.msra.mxu0 0.0
    %2212 = vmatprep.subr.mxu0 0.0
    %2213 = vmatpush1.xpose.msra.mxu0 0.0
    %2214 = vmatprep.subr.mxu0 0.0
    %2215 = vmatpush1.xpose.msra.mxu0 0.0
    %2216 = vmatprep.subr.mxu0 0.0
    %2217 = vmatpush1.xpose.msra.mxu0 0.0
    %2218 = vmatprep.subr.mxu0 0.0
    %2219 = vmatpush1.xpose.msra.mxu0 0.0
    %2220 = vmatprep.subr.mxu0 0.0
    %2221 = vmatpush1.xpose.msra.mxu0 0.0
    %2222 = vmatprep.subr.mxu0 0.0
    %2223 = vmatpush1.xpose.msra.mxu0 0.0
    %2224 = vmatprep.subr.mxu0 0.0
    %2225 = vmatpush1.xpose.msra.mxu0 0.0
    %2226 = vmatprep.subr.mxu0 0.0
    %2227 = vmatpush1.xpose.msra.mxu0 0.0
    %2228 = vmatprep.subr.mxu0 0.0
    %2229 = vmatpush1.xpose.msra.mxu0 0.0
    %2230 = vmatprep.subr.mxu0 0.0
    %2231 = vmatpush1.xpose.msra.mxu0 0.0
    %2232 = vmatprep.subr.mxu0 0.0
    %2233 = vmatpush1.xpose.msra.mxu0 0.0
    %2234 = vmatprep.subr.mxu0 0.0
    %2235 = vmatpush1.xpose.msra.mxu0 0.0
    %2236 = vmatprep.mubr.f32.mxu0 0.0
    %2237 = vmatmul.mubr.f32.gmra.mrb[0].mxu0 %v2167
    %v2238 = vpop.f32.mrb[0].mxu0
    %v2239 = vadd.f32 0.0, %v2238
    %v2240 = vpop.f32.mrb[0].mxu0
    %2241 = vdwg.mxu0
    %v2242 = vsel %vm196, %v2163, -inf
    %2243 = vmax.xlane.f32.xlu0 %v2242
    %v2244 = vpop.xlane.xlu0 %2243
    %v2245 = vsel %vm196, %v2239, -inf
    %2246 = vmax.xlane.f32.xlu0 %v2245
    %v2247 = vpop.xlane.xlu0 %2246
    %v2248 = vsub.f32 %v2163, %v2244
    %v2249 = vsub.f32 %v2239, %v2247
    %v2250 = vmul.f32 %v2248, 1.442695
    %v2251 = vpow.pop %v2250
    %v2252 = vmul.f32 %v2249, 1.442695
    %v2253 = vpow.pop %v2252
    %v2254 = vsel %vm196, %v2251, 0.0
    %2255 = vadd.xlane.f32.xlu0 %v2254
    %v2256 = vpop.xlane.xlu0 %2255
    %v2257 = vsel %vm196, %v2253, 0.0
    %2258 = vadd.xlane.f32.xlu0 %v2257
    %v2259 = vpop.xlane.xlu0 %2258
    %v2260 = vrcp.pop %v2256
    %v2261 = vrcp.pop %v2259
    %v2262 = vmul.f32 %v2251, %v2260
    %v2263 = vmul.f32 %v2253, %v2261
    %2264 = vrot.lane.b32.xlu0 %v2080, 96
    %v2265 = vpop.permute.xlu0 %2264
    %v2268 = vsel %vm196, %v2262, 0
    %2270 = vmatprep.subr.mxu0 0.0
    %2271 = vmatpush1.msra.mxu0 %v2265
    %2272 = vmatprep.subr.mxu0 0.0
    %2273 = vmatpush1.msra.mxu0 0.0
    %2274 = vmatprep.subr.mxu0 0.0
    %2275 = vmatpush1.msra.mxu0 0.0
    %2276 = vmatprep.subr.mxu0 0.0
    %2277 = vmatpush1.msra.mxu0 0.0
    %2278 = vmatprep.subr.mxu0 0.0
    %2279 = vmatpush1.msra.mxu0 0.0
    %2280 = vmatprep.subr.mxu0 0.0
    %2281 = vmatpush1.msra.mxu0 0.0
    %2282 = vmatprep.subr.mxu0 0.0
    %2283 = vmatpush1.msra.mxu0 0.0
    %2284 = vmatprep.subr.mxu0 0.0
    %2285 = vmatpush1.msra.mxu0 0.0
    %2286 = vmatprep.subr.mxu0 0.0
    %2287 = vmatpush1.msra.mxu0 0.0
    %2288 = vmatprep.subr.mxu0 0.0
    %2289 = vmatpush1.msra.mxu0 0.0
    %2290 = vmatprep.subr.mxu0 0.0
    %2291 = vmatpush1.msra.mxu0 0.0
    %2292 = vmatprep.subr.mxu0 0.0
    %2293 = vmatpush1.msra.mxu0 0.0
    %2294 = vmatprep.subr.mxu0 0.0
    %2295 = vmatpush1.msra.mxu0 0.0
    %2296 = vmatprep.subr.mxu0 0.0
    %2297 = vmatpush1.msra.mxu0 0.0
    %2298 = vmatprep.subr.mxu0 0.0
    %2299 = vmatpush1.msra.mxu0 0.0
    %2300 = vmatprep.subr.mxu0 0.0
    %2301 = vmatpush1.msra.mxu0 0.0
    %2302 = vmatprep.subr.mxu0 0.0
    %2303 = vmatpush1.msra.mxu0 0.0
    %2304 = vmatprep.subr.mxu0 0.0
    %2305 = vmatpush1.msra.mxu0 0.0
    %2306 = vmatprep.subr.mxu0 0.0
    %2307 = vmatpush1.msra.mxu0 0.0
    %2308 = vmatprep.subr.mxu0 0.0
    %2309 = vmatpush1.msra.mxu0 0.0
    %2310 = vmatprep.subr.mxu0 0.0
    %2311 = vmatpush1.msra.mxu0 0.0
    %2312 = vmatprep.subr.mxu0 0.0
    %2313 = vmatpush1.msra.mxu0 0.0
    %2314 = vmatprep.subr.mxu0 0.0
    %2315 = vmatpush1.msra.mxu0 0.0
    %2316 = vmatprep.subr.mxu0 0.0
    %2317 = vmatpush1.msra.mxu0 0.0
    %2318 = vmatprep.subr.mxu0 0.0
    %2319 = vmatpush1.msra.mxu0 0.0
    %2320 = vmatprep.subr.mxu0 0.0
    %2321 = vmatpush1.msra.mxu0 0.0
    %2322 = vmatprep.subr.mxu0 0.0
    %2323 = vmatpush1.msra.mxu0 0.0
    %2324 = vmatprep.subr.mxu0 0.0
    %2325 = vmatpush1.msra.mxu0 0.0
    %2326 = vmatprep.subr.mxu0 0.0
    %2327 = vmatpush1.msra.mxu0 0.0
    %2328 = vmatprep.subr.mxu0 0.0
    %2329 = vmatpush1.msra.mxu0 0.0
    %2330 = vmatprep.subr.mxu0 0.0
    %2331 = vmatpush1.msra.mxu0 0.0
    %2332 = vmatprep.subr.mxu0 0.0
    %2333 = vmatpush1.msra.mxu0 0.0
    %2334 = vmatprep.mubr.f32.mxu0 0.0
    %2335 = vmatmul.mubr.f32.gmra.mrb[0].mxu0 %v2268
    %v2336 = vpop.f32.mrb[0].mxu0
    %v2337 = vadd.f32 0.0, %v2336
    %v2338 = vpop.f32.mrb[0].mxu0
    %2339 = vdwg.mxu0
    %2340 = vrot.lane.b32.xlu0 %v2085, 96
    %v2341 = vpop.permute.xlu0 %2340
    %v2344 = vsel %vm196, %v2263, 0
    %2346 = vmatprep.subr.mxu0 0.0
    %2347 = vmatpush1.msra.mxu0 %v2341
    %2348 = vmatprep.subr.mxu0 0.0
    %2349 = vmatpush1.msra.mxu0 0.0
    %2350 = vmatprep.subr.mxu0 0.0
    %2351 = vmatpush1.msra.mxu0 0.0
    %2352 = vmatprep.subr.mxu0 0.0
    %2353 = vmatpush1.msra.mxu0 0.0
    %2354 = vmatprep.subr.mxu0 0.0
    %2355 = vmatpush1.msra.mxu0 0.0
    %2356 = vmatprep.subr.mxu0 0.0
    %2357 = vmatpush1.msra.mxu0 0.0
    %2358 = vmatprep.subr.mxu0 0.0
    %2359 = vmatpush1.msra.mxu0 0.0
    %2360 = vmatprep.subr.mxu0 0.0
    %2361 = vmatpush1.msra.mxu0 0.0
    %2362 = vmatprep.subr.mxu0 0.0
    %2363 = vmatpush1.msra.mxu0 0.0
    %2364 = vmatprep.subr.mxu0 0.0
    %2365 = vmatpush1.msra.mxu0 0.0
    %2366 = vmatprep.subr.mxu0 0.0
    %2367 = vmatpush1.msra.mxu0 0.0
    %2368 = vmatprep.subr.mxu0 0.0
    %2369 = vmatpush1.msra.mxu0 0.0
    %2370 = vmatprep.subr.mxu0 0.0
    %2371 = vmatpush1.msra.mxu0 0.0
    %2372 = vmatprep.subr.mxu0 0.0
    %2373 = vmatpush1.msra.mxu0 0.0
    %2374 = vmatprep.subr.mxu0 0.0
    %2375 = vmatpush1.msra.mxu0 0.0
    %2376 = vmatprep.subr.mxu0 0.0
    %2377 = vmatpush1.msra.mxu0 0.0
    %2378 = vmatprep.subr.mxu0 0.0
    %2379 = vmatpush1.msra.mxu0 0.0
    %2380 = vmatprep.subr.mxu0 0.0
    %2381 = vmatpush1.msra.mxu0 0.0
    %2382 = vmatprep.subr.mxu0 0.0
    %2383 = vmatpush1.msra.mxu0 0.0
    %2384 = vmatprep.subr.mxu0 0.0
    %2385 = vmatpush1.msra.mxu0 0.0
    %2386 = vmatprep.subr.mxu0 0.0
    %2387 = vmatpush1.msra.mxu0 0.0
    %2388 = vmatprep.subr.mxu0 0.0
    %2389 = vmatpush1.msra.mxu0 0.0
    %2390 = vmatprep.subr.mxu0 0.0
    %2391 = vmatpush1.msra.mxu0 0.0
    %2392 = vmatprep.subr.mxu0 0.0
    %2393 = vmatpush1.msra.mxu0 0.0
    %2394 = vmatprep.subr.mxu0 0.0
    %2395 = vmatpush1.msra.mxu0 0.0
    %2396 = vmatprep.subr.mxu0 0.0
    %2397 = vmatpush1.msra.mxu0 0.0
    %2398 = vmatprep.subr.mxu0 0.0
    %2399 = vmatpush1.msra.mxu0 0.0
    %2400 = vmatprep.subr.mxu0 0.0
    %2401 = vmatpush1.msra.mxu0 0.0
    %2402 = vmatprep.subr.mxu0 0.0
    %2403 = vmatpush1.msra.mxu0 0.0
    %2404 = vmatprep.subr.mxu0 0.0
    %2405 = vmatpush1.msra.mxu0 0.0
    %2406 = vmatprep.subr.mxu0 0.0
    %2407 = vmatpush1.msra.mxu0 0.0
    %2408 = vmatprep.subr.mxu0 0.0
    %2409 = vmatpush1.msra.mxu0 0.0
    %2410 = vmatprep.mubr.f32.mxu0 0.0
    %2411 = vmatmul.mubr.f32.gmra.mrb[0].mxu0 %v2344
    %v2412 = vpop.f32.mrb[0].mxu0
    %v2413 = vadd.f32 0.0, %v2412
    %v2414 = vpop.f32.mrb[0].mxu0
    %2415 = vdwg.mxu0
    %2416 = vrot.lane.b32.xlu0 %v2088, 120
    %v2417 = vpop.permute.xlu0 %2416
    %2418 = vrot.lane.b32.xlu0 %v2080, 120
    %v2419 = vpop.permute.xlu0 %2418
    %v2420 = vsel %vm196, %v2417, 0
    %v2422 = vsel %vm196, %v2419, 0
    %2424 = vmatprep.subr.mxu0 0.0
    %2425 = vmatpush1.xpose.msra.mxu0 %v2422
    %2426 = vmatprep.subr.mxu0 0.0
    %2427 = vmatpush1.xpose.msra.mxu0 0.0
    %2428 = vmatprep.subr.mxu0 0.0
    %2429 = vmatpush1.xpose.msra.mxu0 0.0
    %2430 = vmatprep.subr.mxu0 0.0
    %2431 = vmatpush1.xpose.msra.mxu0 0.0
    %2432 = vmatprep.subr.mxu0 0.0
    %2433 = vmatpush1.xpose.msra.mxu0 0.0
    %2434 = vmatprep.subr.mxu0 0.0
    %2435 = vmatpush1.xpose.msra.mxu0 0.0
    %2436 = vmatprep.subr.mxu0 0.0
    %2437 = vmatpush1.xpose.msra.mxu0 0.0
    %2438 = vmatprep.subr.mxu0 0.0
    %2439 = vmatpush1.xpose.msra.mxu0 0.0
    %2440 = vmatprep.subr.mxu0 0.0
    %2441 = vmatpush1.xpose.msra.mxu0 0.0
    %2442 = vmatprep.subr.mxu0 0.0
    %2443 = vmatpush1.xpose.msra.mxu0 0.0
    %2444 = vmatprep.subr.mxu0 0.0
    %2445 = vmatpush1.xpose.msra.mxu0 0.0
    %2446 = vmatprep.subr.mxu0 0.0
    %2447 = vmatpush1.xpose.msra.mxu0 0.0
    %2448 = vmatprep.subr.mxu0 0.0
    %2449 = vmatpush1.xpose.msra.mxu0 0.0
    %2450 = vmatprep.subr.mxu0 0.0
    %2451 = vmatpush1.xpose.msra.mxu0 0.0
    %2452 = vmatprep.subr.mxu0 0.0
    %2453 = vmatpush1.xpose.msra.mxu0 0.0
    %2454 = vmatprep.subr.mxu0 0.0
    %2455 = vmatpush1.xpose.msra.mxu0 0.0
    %2456 = vmatprep.subr.mxu0 0.0
    %2457 = vmatpush1.xpose.msra.mxu0 0.0
    %2458 = vmatprep.subr.mxu0 0.0
    %2459 = vmatpush1.xpose.msra.mxu0 0.0
    %2460 = vmatprep.subr.mxu0 0.0
    %2461 = vmatpush1.xpose.msra.mxu0 0.0
    %2462 = vmatprep.subr.mxu0 0.0
    %2463 = vmatpush1.xpose.msra.mxu0 0.0
    %2464 = vmatprep.subr.mxu0 0.0
    %2465 = vmatpush1.xpose.msra.mxu0 0.0
    %2466 = vmatprep.subr.mxu0 0.0
    %2467 = vmatpush1.xpose.msra.mxu0 0.0
    %2468 = vmatprep.subr.mxu0 0.0
    %2469 = vmatpush1.xpose.msra.mxu0 0.0
    %2470 = vmatprep.subr.mxu0 0.0
    %2471 = vmatpush1.xpose.msra.mxu0 0.0
    %2472 = vmatprep.subr.mxu0 0.0
    %2473 = vmatpush1.xpose.msra.mxu0 0.0
    %2474 = vmatprep.subr.mxu0 0.0
    %2475 = vmatpush1.xpose.msra.mxu0 0.0
    %2476 = vmatprep.subr.mxu0 0.0
    %2477 = vmatpush1.xpose.msra.mxu0 0.0
    %2478 = vmatprep.subr.mxu0 0.0
    %2479 = vmatpush1.xpose.msra.mxu0 0.0
    %2480 = vmatprep.subr.mxu0 0.0
    %2481 = vmatpush1.xpose.msra.mxu0 0.0
    %2482 = vmatprep.subr.mxu0 0.0
    %2483 = vmatpush1.xpose.msra.mxu0 0.0
    %2484 = vmatprep.subr.mxu0 0.0
    %2485 = vmatpush1.xpose.msra.mxu0 0.0
    %2486 = vmatprep.subr.mxu0 0.0
    %2487 = vmatpush1.xpose.msra.mxu0 0.0
    %2488 = vmatprep.mubr.f32.mxu0 0.0
    %2489 = vmatmul.mubr.f32.gmra.mrb[0].mxu0 %v2420
    %v2490 = vpop.f32.mrb[0].mxu0
    %v2491 = vadd.f32 0.0, %v2490
    %v2492 = vpop.f32.mrb[0].mxu0
    %2493 = vdwg.mxu0
    %2494 = vrot.lane.b32.xlu0 %v2089, 120
    %v2495 = vpop.permute.xlu0 %2494
    %2496 = vrot.lane.b32.xlu0 %v2085, 120
    %v2497 = vpop.permute.xlu0 %2496
    %v2498 = vsel %vm196, %v2495, 0
    %v2500 = vsel %vm196, %v2497, 0
    %2502 = vmatprep.subr.mxu0 0.0
    %2503 = vmatpush1.xpose.msra.mxu0 %v2500
    %2504 = vmatprep.subr.mxu0 0.0
    %2505 = vmatpush1.xpose.msra.mxu0 0.0
    %2506 = vmatprep.subr.mxu0 0.0
    %2507 = vmatpush1.xpose.msra.mxu0 0.0
    %2508 = vmatprep.subr.mxu0 0.0
    %2509 = vmatpush1.xpose.msra.mxu0 0.0
    %2510 = vmatprep.subr.mxu0 0.0
    %2511 = vmatpush1.xpose.msra.mxu0 0.0
    %2512 = vmatprep.subr.mxu0 0.0
    %2513 = vmatpush1.xpose.msra.mxu0 0.0
    %2514 = vmatprep.subr.mxu0 0.0
    %2515 = vmatpush1.xpose.msra.mxu0 0.0
    %2516 = vmatprep.subr.mxu0 0.0
    %2517 = vmatpush1.xpose.msra.mxu0 0.0
    %2518 = vmatprep.subr.mxu0 0.0
    %2519 = vmatpush1.xpose.msra.mxu0 0.0
    %2520 = vmatprep.subr.mxu0 0.0
    %2521 = vmatpush1.xpose.msra.mxu0 0.0
    %2522 = vmatprep.subr.mxu0 0.0
    %2523 = vmatpush1.xpose.msra.mxu0 0.0
    %2524 = vmatprep.subr.mxu0 0.0
    %2525 = vmatpush1.xpose.msra.mxu0 0.0
    %2526 = vmatprep.subr.mxu0 0.0
    %2527 = vmatpush1.xpose.msra.mxu0 0.0
    %2528 = vmatprep.subr.mxu0 0.0
    %2529 = vmatpush1.xpose.msra.mxu0 0.0
    %2530 = vmatprep.subr.mxu0 0.0
    %2531 = vmatpush1.xpose.msra.mxu0 0.0
    %2532 = vmatprep.subr.mxu0 0.0
    %2533 = vmatpush1.xpose.msra.mxu0 0.0
    %2534 = vmatprep.subr.mxu0 0.0
    %2535 = vmatpush1.xpose.msra.mxu0 0.0
    %2536 = vmatprep.subr.mxu0 0.0
    %2537 = vmatpush1.xpose.msra.mxu0 0.0
    %2538 = vmatprep.subr.mxu0 0.0
    %2539 = vmatpush1.xpose.msra.mxu0 0.0
    %2540 = vmatprep.subr.mxu0 0.0
    %2541 = vmatpush1.xpose.msra.mxu0 0.0
    %2542 = vmatprep.subr.mxu0 0.0
    %2543 = vmatpush1.xpose.msra.mxu0 0.0
    %2544 = vmatprep.subr.mxu0 0.0
    %2545 = vmatpush1.xpose.msra.mxu0 0.0
    %2546 = vmatprep.subr.mxu0 0.0
    %2547 = vmatpush1.xpose.msra.mxu0 0.0
    %2548 = vmatprep.subr.mxu0 0.0
    %2549 = vmatpush1.xpose.msra.mxu0 0.0
    %2550 = vmatprep.subr.mxu0 0.0
    %2551 = vmatpush1.xpose.msra.mxu0 0.0
    %2552 = vmatprep.subr.mxu0 0.0
    %2553 = vmatpush1.xpose.msra.mxu0 0.0
    %2554 = vmatprep.subr.mxu0 0.0
    %2555 = vmatpush1.xpose.msra.mxu0 0.0
    %2556 = vmatprep.subr.mxu0 0.0
    %2557 = vmatpush1.xpose.msra.mxu0 0.0
    %2558 = vmatprep.subr.mxu0 0.0
    %2559 = vmatpush1.xpose.msra.mxu0 0.0
    %2560 = vmatprep.subr.mxu0 0.0
    %2561 = vmatpush1.xpose.msra.mxu0 0.0
    %2562 = vmatprep.subr.mxu0 0.0
    %2563 = vmatpush1.xpose.msra.mxu0 0.0
    %2564 = vmatprep.subr.mxu0 0.0
    %2565 = vmatpush1.xpose.msra.mxu0 0.0
    %2566 = vmatprep.mubr.f32.mxu0 0.0
    %2567 = vmatmul.mubr.f32.gmra.mrb[0].mxu0 %v2498
    %v2568 = vpop.f32.mrb[0].mxu0
    %v2569 = vadd.f32 0.0, %v2568
    %v2570 = vpop.f32.mrb[0].mxu0
    %2571 = vdwg.mxu0
    %v2572 = vsel %vm196, %v2491, -inf
    %2573 = vmax.xlane.f32.xlu0 %v2572
    %v2574 = vpop.xlane.xlu0 %2573
    %v2575 = vsel %vm196, %v2569, -inf
    %2576 = vmax.xlane.f32.xlu0 %v2575
    %v2577 = vpop.xlane.xlu0 %2576
    %v2578 = vsub.f32 %v2491, %v2574
    %v2579 = vsub.f32 %v2569, %v2577
    %v2580 = vmul.f32 %v2578, 1.442695
    %v2581 = vpow.pop %v2580
    %v2582 = vmul.f32 %v2579, 1.442695
    %v2583 = vpow.pop %v2582
    %v2584 = vsel %vm196, %v2581, 0.0
    %2585 = vadd.xlane.f32.xlu0 %v2584
    %v2586 = vpop.xlane.xlu0 %2585
    %v2587 = vsel %vm196, %v2583, 0.0
    %2588 = vadd.xlane.f32.xlu0 %v2587
    %v2589 = vpop.xlane.xlu0 %2588
    %v2590 = vrcp.pop %v2586
    %v2591 = vrcp.pop %v2589
    %v2592 = vmul.f32 %v2581, %v2590
    %v2593 = vmul.f32 %v2583, %v2591
    %2594 = vrot.lane.b32.xlu0 %v2080, 88
    %v2595 = vpop.permute.xlu0 %2594
    %v2598 = vsel %vm196, %v2592, 0
    %2600 = vmatprep.subr.mxu0 0.0
    %2601 = vmatpush1.msra.mxu0 %v2595
    %2602 = vmatprep.subr.mxu0 0.0
    %2603 = vmatpush1.msra.mxu0 0.0
    %2604 = vmatprep.subr.mxu0 0.0
    %2605 = vmatpush1.msra.mxu0 0.0
    %2606 = vmatprep.subr.mxu0 0.0
    %2607 = vmatpush1.msra.mxu0 0.0
    %2608 = vmatprep.subr.mxu0 0.0
    %2609 = vmatpush1.msra.mxu0 0.0
    %2610 = vmatprep.subr.mxu0 0.0
    %2611 = vmatpush1.msra.mxu0 0.0
    %2612 = vmatprep.subr.mxu0 0.0
    %2613 = vmatpush1.msra.mxu0 0.0
    %2614 = vmatprep.subr.mxu0 0.0
    %2615 = vmatpush1.msra.mxu0 0.0
    %2616 = vmatprep.subr.mxu0 0.0
    %2617 = vmatpush1.msra.mxu0 0.0
    %2618 = vmatprep.subr.mxu0 0.0
    %2619 = vmatpush1.msra.mxu0 0.0
    %2620 = vmatprep.subr.mxu0 0.0
    %2621 = vmatpush1.msra.mxu0 0.0
    %2622 = vmatprep.subr.mxu0 0.0
    %2623 = vmatpush1.msra.mxu0 0.0
    %2624 = vmatprep.subr.mxu0 0.0
    %2625 = vmatpush1.msra.mxu0 0.0
    %2626 = vmatprep.subr.mxu0 0.0
    %2627 = vmatpush1.msra.mxu0 0.0
    %2628 = vmatprep.subr.mxu0 0.0
    %2629 = vmatpush1.msra.mxu0 0.0
    %2630 = vmatprep.subr.mxu0 0.0
    %2631 = vmatpush1.msra.mxu0 0.0
    %2632 = vmatprep.subr.mxu0 0.0
    %2633 = vmatpush1.msra.mxu0 0.0
    %2634 = vmatprep.subr.mxu0 0.0
    %2635 = vmatpush1.msra.mxu0 0.0
    %2636 = vmatprep.subr.mxu0 0.0
    %2637 = vmatpush1.msra.mxu0 0.0
    %2638 = vmatprep.subr.mxu0 0.0
    %2639 = vmatpush1.msra.mxu0 0.0
    %2640 = vmatprep.subr.mxu0 0.0
    %2641 = vmatpush1.msra.mxu0 0.0
    %2642 = vmatprep.subr.mxu0 0.0
    %2643 = vmatpush1.msra.mxu0 0.0
    %2644 = vmatprep.subr.mxu0 0.0
    %2645 = vmatpush1.msra.mxu0 0.0
    %2646 = vmatprep.subr.mxu0 0.0
    %2647 = vmatpush1.msra.mxu0 0.0
    %2648 = vmatprep.subr.mxu0 0.0
    %2649 = vmatpush1.msra.mxu0 0.0
    %2650 = vmatprep.subr.mxu0 0.0
    %2651 = vmatpush1.msra.mxu0 0.0
    %2652 = vmatprep.subr.mxu0 0.0
    %2653 = vmatpush1.msra.mxu0 0.0
    %2654 = vmatprep.subr.mxu0 0.0
    %2655 = vmatpush1.msra.mxu0 0.0
    %2656 = vmatprep.subr.mxu0 0.0
    %2657 = vmatpush1.msra.mxu0 0.0
    %2658 = vmatprep.subr.mxu0 0.0
    %2659 = vmatpush1.msra.mxu0 0.0
    %2660 = vmatprep.subr.mxu0 0.0
    %2661 = vmatpush1.msra.mxu0 0.0
    %2662 = vmatprep.subr.mxu0 0.0
    %2663 = vmatpush1.msra.mxu0 0.0
    %2664 = vmatprep.mubr.f32.mxu0 0.0
    %2665 = vmatmul.mubr.f32.gmra.mrb[0].mxu0 %v2598
    %v2666 = vpop.f32.mrb[0].mxu0
    %v2667 = vadd.f32 0.0, %v2666
    %v2668 = vpop.f32.mrb[0].mxu0
    %2669 = vdwg.mxu0
    %2670 = vrot.lane.b32.xlu0 %v2085, 88
    %v2671 = vpop.permute.xlu0 %2670
    %v2674 = vsel %vm196, %v2593, 0
    %2676 = vmatprep.subr.mxu0 0.0
    %2677 = vmatpush1.msra.mxu0 %v2671
    %2678 = vmatprep.subr.mxu0 0.0
    %2679 = vmatpush1.msra.mxu0 0.0
    %2680 = vmatprep.subr.mxu0 0.0
    %2681 = vmatpush1.msra.mxu0 0.0
    %2682 = vmatprep.subr.mxu0 0.0
    %2683 = vmatpush1.msra.mxu0 0.0
    %2684 = vmatprep.subr.mxu0 0.0
    %2685 = vmatpush1.msra.mxu0 0.0
    %2686 = vmatprep.subr.mxu0 0.0
    %2687 = vmatpush1.msra.mxu0 0.0
    %2688 = vmatprep.subr.mxu0 0.0
    %2689 = vmatpush1.msra.mxu0 0.0
    %2690 = vmatprep.subr.mxu0 0.0
    %2691 = vmatpush1.msra.mxu0 0.0
    %2692 = vmatprep.subr.mxu0 0.0
    %2693 = vmatpush1.msra.mxu0 0.0
    %2694 = vmatprep.subr.mxu0 0.0
    %2695 = vmatpush1.msra.mxu0 0.0
    %2696 = vmatprep.subr.mxu0 0.0
    %2697 = vmatpush1.msra.mxu0 0.0
    %2698 = vmatprep.subr.mxu0 0.0
    %2699 = vmatpush1.msra.mxu0 0.0
    %2700 = vmatprep.subr.mxu0 0.0
    %2701 = vmatpush1.msra.mxu0 0.0
    %2702 = vmatprep.subr.mxu0 0.0
    %2703 = vmatpush1.msra.mxu0 0.0
    %2704 = vmatprep.subr.mxu0 0.0
    %2705 = vmatpush1.msra.mxu0 0.0
    %2706 = vmatprep.subr.mxu0 0.0
    %2707 = vmatpush1.msra.mxu0 0.0
    %2708 = vmatprep.subr.mxu0 0.0
    %2709 = vmatpush1.msra.mxu0 0.0
    %2710 = vmatprep.subr.mxu0 0.0
    %2711 = vmatpush1.msra.mxu0 0.0
    %2712 = vmatprep.subr.mxu0 0.0
    %2713 = vmatpush1.msra.mxu0 0.0
    %2714 = vmatprep.subr.mxu0 0.0
    %2715 = vmatpush1.msra.mxu0 0.0
    %2716 = vmatprep.subr.mxu0 0.0
    %2717 = vmatpush1.msra.mxu0 0.0
    %2718 = vmatprep.subr.mxu0 0.0
    %2719 = vmatpush1.msra.mxu0 0.0
    %2720 = vmatprep.subr.mxu0 0.0
    %2721 = vmatpush1.msra.mxu0 0.0
    %2722 = vmatprep.subr.mxu0 0.0
    %2723 = vmatpush1.msra.mxu0 0.0
    %2724 = vmatprep.subr.mxu0 0.0
    %2725 = vmatpush1.msra.mxu0 0.0
    %2726 = vmatprep.subr.mxu0 0.0
    %2727 = vmatpush1.msra.mxu0 0.0
    %2728 = vmatprep.subr.mxu0 0.0
    %2729 = vmatpush1.msra.mxu0 0.0
    %2730 = vmatprep.subr.mxu0 0.0
    %2731 = vmatpush1.msra.mxu0 0.0
    %2732 = vmatprep.subr.mxu0 0.0
    %2733 = vmatpush1.msra.mxu0 0.0
    %2734 = vmatprep.subr.mxu0 0.0
    %2735 = vmatpush1.msra.mxu0 0.0
    %2736 = vmatprep.subr.mxu0 0.0
    %2737 = vmatpush1.msra.mxu0 0.0
    %2738 = vmatprep.subr.mxu0 0.0
    %2739 = vmatpush1.msra.mxu0 0.0
    %2740 = vmatprep.mubr.f32.mxu0 0.0
    %2741 = vmatmul.mubr.f32.gmra.mrb[0].mxu0 %v2674
    %v2742 = vpop.f32.mrb[0].mxu0
    %v2743 = vadd.f32 0.0, %v2742
    %v2744 = vpop.f32.mrb[0].mxu0
    %2745 = vdwg.mxu0
    %v2747 = vsel %vm196, %v2667, 0
    %v2750 = vsel %vm196, %v2743, 0
    %2752 = vmatprep.subr.mxu0 0.0
    %2753 = vmatpush1.msra.mxu0 %v1897
    %2754 = vmatprep.subr.mxu0 0.0
    %2755 = vmatpush1.msra.mxu0 0.0
    %2756 = vmatprep.subr.mxu0 0.0
    %2757 = vmatpush1.msra.mxu0 0.0
    %2758 = vmatprep.subr.mxu0 0.0
    %2759 = vmatpush1.msra.mxu0 0.0
    %2760 = vmatprep.subr.mxu0 0.0
    %2761 = vmatpush1.msra.mxu0 0.0
    %2762 = vmatprep.subr.mxu0 0.0
    %2763 = vmatpush1.msra.mxu0 0.0
    %2764 = vmatprep.subr.mxu0 0.0
    %2765 = vmatpush1.msra.mxu0 0.0
    %2766 = vmatprep.subr.mxu0 0.0
    %2767 = vmatpush1.msra.mxu0 0.0
    %2768 = vmatprep.subr.mxu0 0.0
    %2769 = vmatpush1.msra.mxu0 0.0
    %2770 = vmatprep.subr.mxu0 0.0
    %2771 = vmatpush1.msra.mxu0 0.0
    %2772 = vmatprep.subr.mxu0 0.0
    %2773 = vmatpush1.msra.mxu0 0.0
    %2774 = vmatprep.subr.mxu0 0.0
    %2775 = vmatpush1.msra.mxu0 0.0
    %2776 = vmatprep.subr.mxu0 0.0
    %2777 = vmatpush1.msra.mxu0 0.0
    %2778 = vmatprep.subr.mxu0 0.0
    %2779 = vmatpush1.msra.mxu0 0.0
    %2780 = vmatprep.subr.mxu0 0.0
    %2781 = vmatpush1.msra.mxu0 0.0
    %2782 = vmatprep.subr.mxu0 0.0
    %2783 = vmatpush1.msra.mxu0 0.0
    %2784 = vmatprep.subr.mxu0 0.0
    %2785 = vmatpush1.msra.mxu0 0.0
    %2786 = vmatprep.subr.mxu0 0.0
    %2787 = vmatpush1.msra.mxu0 0.0
    %2788 = vmatprep.subr.mxu0 0.0
    %2789 = vmatpush1.msra.mxu0 0.0
    %2790 = vmatprep.subr.mxu0 0.0
    %2791 = vmatpush1.msra.mxu0 0.0
    %2792 = vmatprep.subr.mxu0 0.0
    %2793 = vmatpush1.msra.mxu0 0.0
    %2794 = vmatprep.subr.mxu0 0.0
    %2795 = vmatpush1.msra.mxu0 0.0
    %2796 = vmatprep.subr.mxu0 0.0
    %2797 = vmatpush1.msra.mxu0 0.0
    %2798 = vmatprep.subr.mxu0 0.0
    %2799 = vmatpush1.msra.mxu0 0.0
    %2800 = vmatprep.subr.mxu0 0.0
    %2801 = vmatpush1.msra.mxu0 0.0
    %2802 = vmatprep.subr.mxu0 0.0
    %2803 = vmatpush1.msra.mxu0 0.0
    %2804 = vmatprep.subr.mxu0 0.0
    %2805 = vmatpush1.msra.mxu0 0.0
    %2806 = vmatprep.subr.mxu0 0.0
    %2807 = vmatpush1.msra.mxu0 0.0
    %2808 = vmatprep.subr.mxu0 0.0
    %2809 = vmatpush1.msra.mxu0 0.0
    %2810 = vmatprep.subr.mxu0 0.0
    %2811 = vmatpush1.msra.mxu0 0.0
    %2812 = vmatprep.subr.mxu0 0.0
    %2813 = vmatpush1.msra.mxu0 0.0
    %2814 = vmatprep.subr.mxu0 0.0
    %2815 = vmatpush1.msra.mxu0 0.0
    %2816 = vmatprep.mubr.f32.mxu0 0.0
    %2817 = vmatmul.mubr.f32.gmra.mrb[0].mxu0 %v2747
    %v2818 = vpop.f32.mrb[0].mxu0
    %v2819 = vadd.f32 0.0, %v2818
    %v2820 = vpop.f32.mrb[0].mxu0
    %2821 = vmatprep.mubr.f32.mxu0 0.0
    %2822 = vmatmul.mubr.f32.gmra.mrb[0].mxu0 %v2750
    %v2823 = vpop.f32.mrb[0].mxu0
    %v2824 = vadd.f32 0.0, %v2823
    %v2825 = vpop.f32.mrb[0].mxu0
    %2826 = vdwg.mxu0
    %v2828 = vsel %vm196, %v2337, 0
    %v2831 = vsel %vm196, %v2413, 0
    %2833 = vmatprep.subr.mxu0 0.0
    %2834 = vmatpush1.msra.mxu0 %v1896
    %2835 = vmatprep.subr.mxu0 0.0
    %2836 = vmatpush1.msra.mxu0 0.0
    %2837 = vmatprep.subr.mxu0 0.0
    %2838 = vmatpush1.msra.mxu0 0.0
    %2839 = vmatprep.subr.mxu0 0.0
    %2840 = vmatpush1.msra.mxu0 0.0
    %2841 = vmatprep.subr.mxu0 0.0
    %2842 = vmatpush1.msra.mxu0 0.0
    %2843 = vmatprep.subr.mxu0 0.0
    %2844 = vmatpush1.msra.mxu0 0.0
    %2845 = vmatprep.subr.mxu0 0.0
    %2846 = vmatpush1.msra.mxu0 0.0
    %2847 = vmatprep.subr.mxu0 0.0
    %2848 = vmatpush1.msra.mxu0 0.0
    %2849 = vmatprep.subr.mxu0 0.0
    %2850 = vmatpush1.msra.mxu0 0.0
    %2851 = vmatprep.subr.mxu0 0.0
    %2852 = vmatpush1.msra.mxu0 0.0
    %2853 = vmatprep.subr.mxu0 0.0
    %2854 = vmatpush1.msra.mxu0 0.0
    %2855 = vmatprep.subr.mxu0 0.0
    %2856 = vmatpush1.msra.mxu0 0.0
    %2857 = vmatprep.subr.mxu0 0.0
    %2858 = vmatpush1.msra.mxu0 0.0
    %2859 = vmatprep.subr.mxu0 0.0
    %2860 = vmatpush1.msra.mxu0 0.0
    %2861 = vmatprep.subr.mxu0 0.0
    %2862 = vmatpush1.msra.mxu0 0.0
    %2863 = vmatprep.subr.mxu0 0.0
    %2864 = vmatpush1.msra.mxu0 0.0
    %2865 = vmatprep.subr.mxu0 0.0
    %2866 = vmatpush1.msra.mxu0 0.0
    %2867 = vmatprep.subr.mxu0 0.0
    %2868 = vmatpush1.msra.mxu0 0.0
    %2869 = vmatprep.subr.mxu0 0.0
    %2870 = vmatpush1.msra.mxu0 0.0
    %2871 = vmatprep.subr.mxu0 0.0
    %2872 = vmatpush1.msra.mxu0 0.0
    %2873 = vmatprep.subr.mxu0 0.0
    %2874 = vmatpush1.msra.mxu0 0.0
    %2875 = vmatprep.subr.mxu0 0.0
    %2876 = vmatpush1.msra.mxu0 0.0
    %2877 = vmatprep.subr.mxu0 0.0
    %2878 = vmatpush1.msra.mxu0 0.0
    %2879 = vmatprep.subr.mxu0 0.0
    %2880 = vmatpush1.msra.mxu0 0.0
    %2881 = vmatprep.subr.mxu0 0.0
    %2882 = vmatpush1.msra.mxu0 0.0
    %2883 = vmatprep.subr.mxu0 0.0
    %2884 = vmatpush1.msra.mxu0 0.0
    %2885 = vmatprep.subr.mxu0 0.0
    %2886 = vmatpush1.msra.mxu0 0.0
    %2887 = vmatprep.subr.mxu0 0.0
    %2888 = vmatpush1.msra.mxu0 0.0
    %2889 = vmatprep.subr.mxu0 0.0
    %2890 = vmatpush1.msra.mxu0 0.0
    %2891 = vmatprep.subr.mxu0 0.0
    %2892 = vmatpush1.msra.mxu0 0.0
    %2893 = vmatprep.subr.mxu0 0.0
    %2894 = vmatpush1.msra.mxu0 0.0
    %2895 = vmatprep.subr.mxu0 0.0
    %2896 = vmatpush1.msra.mxu0 0.0
    %2897 = vmatprep.mubr.f32.mxu0 0.0
    %2898 = vmatmul.mubr.f32.gmra.mrb[0].mxu0 %v2828
    %v2899 = vpop.f32.mrb[0].mxu0
    %v2900 = vadd.f32 %v2819, %v2899
    %v2901 = vpop.f32.mrb[0].mxu0
    %2902 = vmatprep.mubr.f32.mxu0 0.0
    %2903 = vmatmul.mubr.f32.gmra.mrb[0].mxu0 %v2831
    %v2904 = vpop.f32.mrb[0].mxu0
    %v2905 = vadd.f32 %v2824, %v2904
    %v2906 = vpop.f32.mrb[0].mxu0
    %2907 = vdwg.mxu0
    %2908 = vrot.lane.b32.xlu0 %v2088, 112
    %v2909 = vpop.permute.xlu0 %2908
    %2910 = vrot.lane.b32.xlu0 %v2080, 112
    %v2911 = vpop.permute.xlu0 %2910
    %v2912 = vsel %vm196, %v2909, 0
    %v2914 = vsel %vm196, %v2911, 0
    %2916 = vmatprep.subr.mxu0 0.0
    %2917 = vmatpush1.xpose.msra.mxu0 %v2914
    %2918 = vmatprep.subr.mxu0 0.0
    %2919 = vmatpush1.xpose.msra.mxu0 0.0
    %2920 = vmatprep.subr.mxu0 0.0
    %2921 = vmatpush1.xpose.msra.mxu0 0.0
    %2922 = vmatprep.subr.mxu0 0.0
    %2923 = vmatpush1.xpose.msra.mxu0 0.0
    %2924 = vmatprep.subr.mxu0 0.0
    %2925 = vmatpush1.xpose.msra.mxu0 0.0
    %2926 = vmatprep.subr.mxu0 0.0
    %2927 = vmatpush1.xpose.msra.mxu0 0.0
    %2928 = vmatprep.subr.mxu0 0.0
    %2929 = vmatpush1.xpose.msra.mxu0 0.0
    %2930 = vmatprep.subr.mxu0 0.0
    %2931 = vmatpush1.xpose.msra.mxu0 0.0
    %2932 = vmatprep.subr.mxu0 0.0
    %2933 = vmatpush1.xpose.msra.mxu0 0.0
    %2934 = vmatprep.subr.mxu0 0.0
    %2935 = vmatpush1.xpose.msra.mxu0 0.0
    %2936 = vmatprep.subr.mxu0 0.0
    %2937 = vmatpush1.xpose.msra.mxu0 0.0
    %2938 = vmatprep.subr.mxu0 0.0
    %2939 = vmatpush1.xpose.msra.mxu0 0.0
    %2940 = vmatprep.subr.mxu0 0.0
    %2941 = vmatpush1.xpose.msra.mxu0 0.0
    %2942 = vmatprep.subr.mxu0 0.0
    %2943 = vmatpush1.xpose.msra.mxu0 0.0
    %2944 = vmatprep.subr.mxu0 0.0
    %2945 = vmatpush1.xpose.msra.mxu0 0.0
    %2946 = vmatprep.subr.mxu0 0.0
    %2947 = vmatpush1.xpose.msra.mxu0 0.0
    %2948 = vmatprep.subr.mxu0 0.0
    %2949 = vmatpush1.xpose.msra.mxu0 0.0
    %2950 = vmatprep.subr.mxu0 0.0
    %2951 = vmatpush1.xpose.msra.mxu0 0.0
    %2952 = vmatprep.subr.mxu0 0.0
    %2953 = vmatpush1.xpose.msra.mxu0 0.0
    %2954 = vmatprep.subr.mxu0 0.0
    %2955 = vmatpush1.xpose.msra.mxu0 0.0
    %2956 = vmatprep.subr.mxu0 0.0
    %2957 = vmatpush1.xpose.msra.mxu0 0.0
    %2958 = vmatprep.subr.mxu0 0.0
    %2959 = vmatpush1.xpose.msra.mxu0 0.0
    %2960 = vmatprep.subr.mxu0 0.0
    %2961 = vmatpush1.xpose.msra.mxu0 0.0
    %2962 = vmatprep.subr.mxu0 0.0
    %2963 = vmatpush1.xpose.msra.mxu0 0.0
    %2964 = vmatprep.subr.mxu0 0.0
    %2965 = vmatpush1.xpose.msra.mxu0 0.0
    %2966 = vmatprep.subr.mxu0 0.0
    %2967 = vmatpush1.xpose.msra.mxu0 0.0
    %2968 = vmatprep.subr.mxu0 0.0
    %2969 = vmatpush1.xpose.msra.mxu0 0.0
    %2970 = vmatprep.subr.mxu0 0.0
    %2971 = vmatpush1.xpose.msra.mxu0 0.0
    %2972 = vmatprep.subr.mxu0 0.0
    %2973 = vmatpush1.xpose.msra.mxu0 0.0
    %2974 = vmatprep.subr.mxu0 0.0
    %2975 = vmatpush1.xpose.msra.mxu0 0.0
    %2976 = vmatprep.subr.mxu0 0.0
    %2977 = vmatpush1.xpose.msra.mxu0 0.0
    %2978 = vmatprep.subr.mxu0 0.0
    %2979 = vmatpush1.xpose.msra.mxu0 0.0
    %2980 = vmatprep.mubr.f32.mxu0 0.0
    %2981 = vmatmul.mubr.f32.gmra.mrb[0].mxu0 %v2912
    %v2982 = vpop.f32.mrb[0].mxu0
    %v2983 = vadd.f32 0.0, %v2982
    %v2984 = vpop.f32.mrb[0].mxu0
    %2985 = vdwg.mxu0
    %2986 = vrot.lane.b32.xlu0 %v2089, 112
    %v2987 = vpop.permute.xlu0 %2986
    %2988 = vrot.lane.b32.xlu0 %v2085, 112
    %v2989 = vpop.permute.xlu0 %2988
    %v2990 = vsel %vm196, %v2987, 0
    %v2992 = vsel %vm196, %v2989, 0
    %2994 = vmatprep.subr.mxu0 0.0
    %2995 = vmatpush1.xpose.msra.mxu0 %v2992
    %2996 = vmatprep.subr.mxu0 0.0
    %2997 = vmatpush1.xpose.msra.mxu0 0.0
    %2998 = vmatprep.subr.mxu0 0.0
    %2999 = vmatpush1.xpose.msra.mxu0 0.0
    %3000 = vmatprep.subr.mxu0 0.0
    %3001 = vmatpush1.xpose.msra.mxu0 0.0
    %3002 = vmatprep.subr.mxu0 0.0
    %3003 = vmatpush1.xpose.msra.mxu0 0.0
    %3004 = vmatprep.subr.mxu0 0.0
    %3005 = vmatpush1.xpose.msra.mxu0 0.0
    %3006 = vmatprep.subr.mxu0 0.0
    %3007 = vmatpush1.xpose.msra.mxu0 0.0
    %3008 = vmatprep.subr.mxu0 0.0
    %3009 = vmatpush1.xpose.msra.mxu0 0.0
    %3010 = vmatprep.subr.mxu0 0.0
    %3011 = vmatpush1.xpose.msra.mxu0 0.0
    %3012 = vmatprep.subr.mxu0 0.0
    %3013 = vmatpush1.xpose.msra.mxu0 0.0
    %3014 = vmatprep.subr.mxu0 0.0
    %3015 = vmatpush1.xpose.msra.mxu0 0.0
    %3016 = vmatprep.subr.mxu0 0.0
    %3017 = vmatpush1.xpose.msra.mxu0 0.0
    %3018 = vmatprep.subr.mxu0 0.0
    %3019 = vmatpush1.xpose.msra.mxu0 0.0
    %3020 = vmatprep.subr.mxu0 0.0
    %3021 = vmatpush1.xpose.msra.mxu0 0.0
    %3022 = vmatprep.subr.mxu0 0.0
    %3023 = vmatpush1.xpose.msra.mxu0 0.0
    %3024 = vmatprep.subr.mxu0 0.0
    %3025 = vmatpush1.xpose.msra.mxu0 0.0
    %3026 = vmatprep.subr.mxu0 0.0
    %3027 = vmatpush1.xpose.msra.mxu0 0.0
    %3028 = vmatprep.subr.mxu0 0.0
    %3029 = vmatpush1.xpose.msra.mxu0 0.0
    %3030 = vmatprep.subr.mxu0 0.0
    %3031 = vmatpush1.xpose.msra.mxu0 0.0
    %3032 = vmatprep.subr.mxu0 0.0
    %3033 = vmatpush1.xpose.msra.mxu0 0.0
    %3034 = vmatprep.subr.mxu0 0.0
    %3035 = vmatpush1.xpose.msra.mxu0 0.0
    %3036 = vmatprep.subr.mxu0 0.0
    %3037 = vmatpush1.xpose.msra.mxu0 0.0
    %3038 = vmatprep.subr.mxu0 0.0
    %3039 = vmatpush1.xpose.msra.mxu0 0.0
    %3040 = vmatprep.subr.mxu0 0.0
    %3041 = vmatpush1.xpose.msra.mxu0 0.0
    %3042 = vmatprep.subr.mxu0 0.0
    %3043 = vmatpush1.xpose.msra.mxu0 0.0
    %3044 = vmatprep.subr.mxu0 0.0
    %3045 = vmatpush1.xpose.msra.mxu0 0.0
    %3046 = vmatprep.subr.mxu0 0.0
    %3047 = vmatpush1.xpose.msra.mxu0 0.0
    %3048 = vmatprep.subr.mxu0 0.0
    %3049 = vmatpush1.xpose.msra.mxu0 0.0
    %3050 = vmatprep.subr.mxu0 0.0
    %3051 = vmatpush1.xpose.msra.mxu0 0.0
    %3052 = vmatprep.subr.mxu0 0.0
    %3053 = vmatpush1.xpose.msra.mxu0 0.0
    %3054 = vmatprep.subr.mxu0 0.0
    %3055 = vmatpush1.xpose.msra.mxu0 0.0
    %3056 = vmatprep.subr.mxu0 0.0
    %3057 = vmatpush1.xpose.msra.mxu0 0.0
    %3058 = vmatprep.mubr.f32.mxu0 0.0
    %3059 = vmatmul.mubr.f32.gmra.mrb[0].mxu0 %v2990
    %v3060 = vpop.f32.mrb[0].mxu0
    %v3061 = vadd.f32 0.0, %v3060
    %v3062 = vpop.f32.mrb[0].mxu0
    %3063 = vdwg.mxu0
    %v3064 = vsel %vm196, %v2983, -inf
    %3065 = vmax.xlane.f32.xlu0 %v3064
    %v3066 = vpop.xlane.xlu0 %3065
    %v3067 = vsel %vm196, %v3061, -inf
    %3068 = vmax.xlane.f32.xlu0 %v3067
    %v3069 = vpop.xlane.xlu0 %3068
    %v3070 = vsub.f32 %v2983, %v3066
    %v3071 = vsub.f32 %v3061, %v3069
    %v3072 = vmul.f32 %v3070, 1.442695
    %v3073 = vpow.pop %v3072
    %v3074 = vmul.f32 %v3071, 1.442695
    %v3075 = vpow.pop %v3074
    %v3076 = vsel %vm196, %v3073, 0.0
    %3077 = vadd.xlane.f32.xlu0 %v3076
    %v3078 = vpop.xlane.xlu0 %3077
    %v3079 = vsel %vm196, %v3075, 0.0
    %3080 = vadd.xlane.f32.xlu0 %v3079
    %v3081 = vpop.xlane.xlu0 %3080
    %v3082 = vrcp.pop %v3078
    %v3083 = vrcp.pop %v3081
    %v3084 = vmul.f32 %v3073, %v3082
    %v3085 = vmul.f32 %v3075, %v3083
    %3086 = vrot.lane.b32.xlu0 %v2080, 80
    %v3087 = vpop.permute.xlu0 %3086
    %v3090 = vsel %vm196, %v3084, 0
    %3092 = vmatprep.subr.mxu0 0.0
    %3093 = vmatpush1.msra.mxu0 %v3087
    %3094 = vmatprep.subr.mxu0 0.0
    %3095 = vmatpush1.msra.mxu0 0.0
    %3096 = vmatprep.subr.mxu0 0.0
    %3097 = vmatpush1.msra.mxu0 0.0
    %3098 = vmatprep.subr.mxu0 0.0
    %3099 = vmatpush1.msra.mxu0 0.0
    %3100 = vmatprep.subr.mxu0 0.0
    %3101 = vmatpush1.msra.mxu0 0.0
    %3102 = vmatprep.subr.mxu0 0.0
    %3103 = vmatpush1.msra.mxu0 0.0
    %3104 = vmatprep.subr.mxu0 0.0
    %3105 = vmatpush1.msra.mxu0 0.0
    %3106 = vmatprep.subr.mxu0 0.0
    %3107 = vmatpush1.msra.mxu0 0.0
    %3108 = vmatprep.subr.mxu0 0.0
    %3109 = vmatpush1.msra.mxu0 0.0
    %3110 = vmatprep.subr.mxu0 0.0
    %3111 = vmatpush1.msra.mxu0 0.0
    %3112 = vmatprep.subr.mxu0 0.0
    %3113 = vmatpush1.msra.mxu0 0.0
    %3114 = vmatprep.subr.mxu0 0.0
    %3115 = vmatpush1.msra.mxu0 0.0
    %3116 = vmatprep.subr.mxu0 0.0
    %3117 = vmatpush1.msra.mxu0 0.0
    %3118 = vmatprep.subr.mxu0 0.0
    %3119 = vmatpush1.msra.mxu0 0.0
    %3120 = vmatprep.subr.mxu0 0.0
    %3121 = vmatpush1.msra.mxu0 0.0
    %3122 = vmatprep.subr.mxu0 0.0
    %3123 = vmatpush1.msra.mxu0 0.0
    %3124 = vmatprep.subr.mxu0 0.0
    %3125 = vmatpush1.msra.mxu0 0.0
    %3126 = vmatprep.subr.mxu0 0.0
    %3127 = vmatpush1.msra.mxu0 0.0
    %3128 = vmatprep.subr.mxu0 0.0
    %3129 = vmatpush1.msra.mxu0 0.0
    %3130 = vmatprep.subr.mxu0 0.0
    %3131 = vmatpush1.msra.mxu0 0.0
    %3132 = vmatprep.subr.mxu0 0.0
    %3133 = vmatpush1.msra.mxu0 0.0
    %3134 = vmatprep.subr.mxu0 0.0
    %3135 = vmatpush1.msra.mxu0 0.0
    %3136 = vmatprep.subr.mxu0 0.0
    %3137 = vmatpush1.msra.mxu0 0.0
    %3138 = vmatprep.subr.mxu0 0.0
    %3139 = vmatpush1.msra.mxu0 0.0
    %3140 = vmatprep.subr.mxu0 0.0
    %3141 = vmatpush1.msra.mxu0 0.0
    %3142 = vmatprep.subr.mxu0 0.0
    %3143 = vmatpush1.msra.mxu0 0.0
    %3144 = vmatprep.subr.mxu0 0.0
    %3145 = vmatpush1.msra.mxu0 0.0
    %3146 = vmatprep.subr.mxu0 0.0
    %3147 = vmatpush1.msra.mxu0 0.0
    %3148 = vmatprep.subr.mxu0 0.0
    %3149 = vmatpush1.msra.mxu0 0.0
    %3150 = vmatprep.subr.mxu0 0.0
    %3151 = vmatpush1.msra.mxu0 0.0
    %3152 = vmatprep.subr.mxu0 0.0
    %3153 = vmatpush1.msra.mxu0 0.0
    %3154 = vmatprep.subr.mxu0 0.0
    %3155 = vmatpush1.msra.mxu0 0.0
    %3156 = vmatprep.mubr.f32.mxu0 0.0
    %3157 = vmatmul.mubr.f32.gmra.mrb[0].mxu0 %v3090
    %v3158 = vpop.f32.mrb[0].mxu0
    %v3159 = vadd.f32 0.0, %v3158
    %v3160 = vpop.f32.mrb[0].mxu0
    %3161 = vdwg.mxu0
    %3162 = vrot.lane.b32.xlu0 %v2085, 80
    %v3163 = vpop.permute.xlu0 %3162
    %v3166 = vsel %vm196, %v3085, 0
    %3168 = vmatprep.subr.mxu0 0.0
    %3169 = vmatpush1.msra.mxu0 %v3163
    %3170 = vmatprep.subr.mxu0 0.0
    %3171 = vmatpush1.msra.mxu0 0.0
    %3172 = vmatprep.subr.mxu0 0.0
    %3173 = vmatpush1.msra.mxu0 0.0
    %3174 = vmatprep.subr.mxu0 0.0
    %3175 = vmatpush1.msra.mxu0 0.0
    %3176 = vmatprep.subr.mxu0 0.0
    %3177 = vmatpush1.msra.mxu0 0.0
    %3178 = vmatprep.subr.mxu0 0.0
    %3179 = vmatpush1.msra.mxu0 0.0
    %3180 = vmatprep.subr.mxu0 0.0
    %3181 = vmatpush1.msra.mxu0 0.0
    %3182 = vmatprep.subr.mxu0 0.0
    %3183 = vmatpush1.msra.mxu0 0.0
    %3184 = vmatprep.subr.mxu0 0.0
    %3185 = vmatpush1.msra.mxu0 0.0
    %3186 = vmatprep.subr.mxu0 0.0
    %3187 = vmatpush1.msra.mxu0 0.0
    %3188 = vmatprep.subr.mxu0 0.0
    %3189 = vmatpush1.msra.mxu0 0.0
    %3190 = vmatprep.subr.mxu0 0.0
    %3191 = vmatpush1.msra.mxu0 0.0
    %3192 = vmatprep.subr.mxu0 0.0
    %3193 = vmatpush1.msra.mxu0 0.0
    %3194 = vmatprep.subr.mxu0 0.0
    %3195 = vmatpush1.msra.mxu0 0.0
    %3196 = vmatprep.subr.mxu0 0.0
    %3197 = vmatpush1.msra.mxu0 0.0
    %3198 = vmatprep.subr.mxu0 0.0
    %3199 = vmatpush1.msra.mxu0 0.0
    %3200 = vmatprep.subr.mxu0 0.0
    %3201 = vmatpush1.msra.mxu0 0.0
    %3202 = vmatprep.subr.mxu0 0.0
    %3203 = vmatpush1.msra.mxu0 0.0
    %3204 = vmatprep.subr.mxu0 0.0
    %3205 = vmatpush1.msra.mxu0 0.0
    %3206 = vmatprep.subr.mxu0 0.0
    %3207 = vmatpush1.msra.mxu0 0.0
    %3208 = vmatprep.subr.mxu0 0.0
    %3209 = vmatpush1.msra.mxu0 0.0
    %3210 = vmatprep.subr.mxu0 0.0
    %3211 = vmatpush1.msra.mxu0 0.0
    %3212 = vmatprep.subr.mxu0 0.0
    %3213 = vmatpush1.msra.mxu0 0.0
    %3214 = vmatprep.subr.mxu0 0.0
    %3215 = vmatpush1.msra.mxu0 0.0
    %3216 = vmatprep.subr.mxu0 0.0
    %3217 = vmatpush1.msra.mxu0 0.0
    %3218 = vmatprep.subr.mxu0 0.0
    %3219 = vmatpush1.msra.mxu0 0.0
    %3220 = vmatprep.subr.mxu0 0.0
    %3221 = vmatpush1.msra.mxu0 0.0
    %3222 = vmatprep.subr.mxu0 0.0
    %3223 = vmatpush1.msra.mxu0 0.0
    %3224 = vmatprep.subr.mxu0 0.0
    %3225 = vmatpush1.msra.mxu0 0.0
    %3226 = vmatprep.subr.mxu0 0.0
    %3227 = vmatpush1.msra.mxu0 0.0
    %3228 = vmatprep.subr.mxu0 0.0
    %3229 = vmatpush1.msra.mxu0 0.0
    %3230 = vmatprep.subr.mxu0 0.0
    %3231 = vmatpush1.msra.mxu0 0.0
    %3232 = vmatprep.mubr.f32.mxu0 0.0
    %3233 = vmatmul.mubr.f32.gmra.mrb[0].mxu0 %v3166
    %v3234 = vpop.f32.mrb[0].mxu0
    %v3235 = vadd.f32 0.0, %v3234
    %v3236 = vpop.f32.mrb[0].mxu0
    %3237 = vdwg.mxu0
    %v3239 = vsel %vm196, %v3159, 0
    %v3242 = vsel %vm196, %v3235, 0
    %3244 = vmatprep.subr.mxu0 0.0
    %3245 = vmatpush1.msra.mxu0 %v1898
    %3246 = vmatprep.subr.mxu0 0.0
    %3247 = vmatpush1.msra.mxu0 0.0
    %3248 = vmatprep.subr.mxu0 0.0
    %3249 = vmatpush1.msra.mxu0 0.0
    %3250 = vmatprep.subr.mxu0 0.0
    %3251 = vmatpush1.msra.mxu0 0.0
    %3252 = vmatprep.subr.mxu0 0.0
    %3253 = vmatpush1.msra.mxu0 0.0
    %3254 = vmatprep.subr.mxu0 0.0
    %3255 = vmatpush1.msra.mxu0 0.0
    %3256 = vmatprep.subr.mxu0 0.0
    %3257 = vmatpush1.msra.mxu0 0.0
    %3258 = vmatprep.subr.mxu0 0.0
    %3259 = vmatpush1.msra.mxu0 0.0
    %3260 = vmatprep.subr.mxu0 0.0
    %3261 = vmatpush1.msra.mxu0 0.0
    %3262 = vmatprep.subr.mxu0 0.0
    %3263 = vmatpush1.msra.mxu0 0.0
    %3264 = vmatprep.subr.mxu0 0.0
    %3265 = vmatpush1.msra.mxu0 0.0
    %3266 = vmatprep.subr.mxu0 0.0
    %3267 = vmatpush1.msra.mxu0 0.0
    %3268 = vmatprep.subr.mxu0 0.0
    %3269 = vmatpush1.msra.mxu0 0.0
    %3270 = vmatprep.subr.mxu0 0.0
    %3271 = vmatpush1.msra.mxu0 0.0
    %3272 = vmatprep.subr.mxu0 0.0
    %3273 = vmatpush1.msra.mxu0 0.0
    %3274 = vmatprep.subr.mxu0 0.0
    %3275 = vmatpush1.msra.mxu0 0.0
    %3276 = vmatprep.subr.mxu0 0.0
    %3277 = vmatpush1.msra.mxu0 0.0
    %3278 = vmatprep.subr.mxu0 0.0
    %3279 = vmatpush1.msra.mxu0 0.0
    %3280 = vmatprep.subr.mxu0 0.0
    %3281 = vmatpush1.msra.mxu0 0.0
    %3282 = vmatprep.subr.mxu0 0.0
    %3283 = vmatpush1.msra.mxu0 0.0
    %3284 = vmatprep.subr.mxu0 0.0
    %3285 = vmatpush1.msra.mxu0 0.0
    %3286 = vmatprep.subr.mxu0 0.0
    %3287 = vmatpush1.msra.mxu0 0.0
    %3288 = vmatprep.subr.mxu0 0.0
    %3289 = vmatpush1.msra.mxu0 0.0
    %3290 = vmatprep.subr.mxu0 0.0
    %3291 = vmatpush1.msra.mxu0 0.0
    %3292 = vmatprep.subr.mxu0 0.0
    %3293 = vmatpush1.msra.mxu0 0.0
    %3294 = vmatprep.subr.mxu0 0.0
    %3295 = vmatpush1.msra.mxu0 0.0
    %3296 = vmatprep.subr.mxu0 0.0
    %3297 = vmatpush1.msra.mxu0 0.0
    %3298 = vmatprep.subr.mxu0 0.0
    %3299 = vmatpush1.msra.mxu0 0.0
    %3300 = vmatprep.subr.mxu0 0.0
    %3301 = vmatpush1.msra.mxu0 0.0
    %3302 = vmatprep.subr.mxu0 0.0
    %3303 = vmatpush1.msra.mxu0 0.0
    %3304 = vmatprep.subr.mxu0 0.0
    %3305 = vmatpush1.msra.mxu0 0.0
    %3306 = vmatprep.subr.mxu0 0.0
    %3307 = vmatpush1.msra.mxu0 0.0
    %3308 = vmatprep.mubr.f32.mxu0 0.0
    %3309 = vmatmul.mubr.f32.gmra.mrb[0].mxu0 %v3239
    %v3310 = vpop.f32.mrb[0].mxu0
    %v3311 = vadd.f32 0.0, %v3310
    %v3312 = vpop.f32.mrb[0].mxu0
    %3313 = vmatprep.mubr.f32.mxu0 0.0
    %3314 = vmatmul.mubr.f32.gmra.mrb[0].mxu0 %v3242
    %v3315 = vpop.f32.mrb[0].mxu0
    %v3316 = vadd.f32 0.0, %v3315
    %v3317 = vpop.f32.mrb[0].mxu0
    %3318 = vdwg.mxu0
    %v3319 = vadd.f32 %v2900, %v3311
    %v3320 = vadd.f32 %v2905, %v3316
    %3321 = vrot.lane.b32.xlu0 %v2088, 104
    %v3322 = vpop.permute.xlu0 %3321
    %3323 = vrot.lane.b32.xlu0 %v2080, 104
    %v3324 = vpop.permute.xlu0 %3323
    %v3325 = vsel %vm196, %v3322, 0
    %v3327 = vsel %vm196, %v3324, 0
    %3329 = vmatprep.subr.mxu0 0.0
    %3330 = vmatpush1.xpose.msra.mxu0 %v3327
    %3331 = vmatprep.subr.mxu0 0.0
    %3332 = vmatpush1.xpose.msra.mxu0 0.0
    %3333 = vmatprep.subr.mxu0 0.0
    %3334 = vmatpush1.xpose.msra.mxu0 0.0
    %3335 = vmatprep.subr.mxu0 0.0
    %3336 = vmatpush1.xpose.msra.mxu0 0.0
    %3337 = vmatprep.subr.mxu0 0.0
    %3338 = vmatpush1.xpose.msra.mxu0 0.0
    %3339 = vmatprep.subr.mxu0 0.0
    %3340 = vmatpush1.xpose.msra.mxu0 0.0
    %3341 = vmatprep.subr.mxu0 0.0
    %3342 = vmatpush1.xpose.msra.mxu0 0.0
    %3343 = vmatprep.subr.mxu0 0.0
    %3344 = vmatpush1.xpose.msra.mxu0 0.0
    %3345 = vmatprep.subr.mxu0 0.0
    %3346 = vmatpush1.xpose.msra.mxu0 0.0
    %3347 = vmatprep.subr.mxu0 0.0
    %3348 = vmatpush1.xpose.msra.mxu0 0.0
    %3349 = vmatprep.subr.mxu0 0.0
    %3350 = vmatpush1.xpose.msra.mxu0 0.0
    %3351 = vmatprep.subr.mxu0 0.0
    %3352 = vmatpush1.xpose.msra.mxu0 0.0
    %3353 = vmatprep.subr.mxu0 0.0
    %3354 = vmatpush1.xpose.msra.mxu0 0.0
    %3355 = vmatprep.subr.mxu0 0.0
    %3356 = vmatpush1.xpose.msra.mxu0 0.0
    %3357 = vmatprep.subr.mxu0 0.0
    %3358 = vmatpush1.xpose.msra.mxu0 0.0
    %3359 = vmatprep.subr.mxu0 0.0
    %3360 = vmatpush1.xpose.msra.mxu0 0.0
    %3361 = vmatprep.subr.mxu0 0.0
    %3362 = vmatpush1.xpose.msra.mxu0 0.0
    %3363 = vmatprep.subr.mxu0 0.0
    %3364 = vmatpush1.xpose.msra.mxu0 0.0
    %3365 = vmatprep.subr.mxu0 0.0
    %3366 = vmatpush1.xpose.msra.mxu0 0.0
    %3367 = vmatprep.subr.mxu0 0.0
    %3368 = vmatpush1.xpose.msra.mxu0 0.0
    %3369 = vmatprep.subr.mxu0 0.0
    %3370 = vmatpush1.xpose.msra.mxu0 0.0
    %3371 = vmatprep.subr.mxu0 0.0
    %3372 = vmatpush1.xpose.msra.mxu0 0.0
    %3373 = vmatprep.subr.mxu0 0.0
    %3374 = vmatpush1.xpose.msra.mxu0 0.0
    %3375 = vmatprep.subr.mxu0 0.0
    %3376 = vmatpush1.xpose.msra.mxu0 0.0
    %3377 = vmatprep.subr.mxu0 0.0
    %3378 = vmatpush1.xpose.msra.mxu0 0.0
    %3379 = vmatprep.subr.mxu0 0.0
    %3380 = vmatpush1.xpose.msra.mxu0 0.0
    %3381 = vmatprep.subr.mxu0 0.0
    %3382 = vmatpush1.xpose.msra.mxu0 0.0
    %3383 = vmatprep.subr.mxu0 0.0
    %3384 = vmatpush1.xpose.msra.mxu0 0.0
    %3385 = vmatprep.subr.mxu0 0.0
    %3386 = vmatpush1.xpose.msra.mxu0 0.0
    %3387 = vmatprep.subr.mxu0 0.0
    %3388 = vmatpush1.xpose.msra.mxu0 0.0
    %3389 = vmatprep.subr.mxu0 0.0
    %3390 = vmatpush1.xpose.msra.mxu0 0.0
    %3391 = vmatprep.subr.mxu0 0.0
    %3392 = vmatpush1.xpose.msra.mxu0 0.0
    %3393 = vmatprep.mubr.f32.mxu0 0.0
    %3394 = vmatmul.mubr.f32.gmra.mrb[0].mxu0 %v3325
    %v3395 = vpop.f32.mrb[0].mxu0
    %v3396 = vadd.f32 0.0, %v3395
    %v3397 = vpop.f32.mrb[0].mxu0
    %3398 = vdwg.mxu0
    %3399 = vrot.lane.b32.xlu0 %v2089, 104
    %v3400 = vpop.permute.xlu0 %3399
    %3401 = vrot.lane.b32.xlu0 %v2085, 104
    %v3402 = vpop.permute.xlu0 %3401
    %v3403 = vsel %vm196, %v3400, 0
    %v3405 = vsel %vm196, %v3402, 0
    %3407 = vmatprep.subr.mxu0 0.0
    %3408 = vmatpush1.xpose.msra.mxu0 %v3405
    %3409 = vmatprep.subr.mxu0 0.0
    %3410 = vmatpush1.xpose.msra.mxu0 0.0
    %3411 = vmatprep.subr.mxu0 0.0
    %3412 = vmatpush1.xpose.msra.mxu0 0.0
    %3413 = vmatprep.subr.mxu0 0.0
    %3414 = vmatpush1.xpose.msra.mxu0 0.0
    %3415 = vmatprep.subr.mxu0 0.0
    %3416 = vmatpush1.xpose.msra.mxu0 0.0
    %3417 = vmatprep.subr.mxu0 0.0
    %3418 = vmatpush1.xpose.msra.mxu0 0.0
    %3419 = vmatprep.subr.mxu0 0.0
    %3420 = vmatpush1.xpose.msra.mxu0 0.0
    %3421 = vmatprep.subr.mxu0 0.0
    %3422 = vmatpush1.xpose.msra.mxu0 0.0
    %3423 = vmatprep.subr.mxu0 0.0
    %3424 = vmatpush1.xpose.msra.mxu0 0.0
    %3425 = vmatprep.subr.mxu0 0.0
    %3426 = vmatpush1.xpose.msra.mxu0 0.0
    %3427 = vmatprep.subr.mxu0 0.0
    %3428 = vmatpush1.xpose.msra.mxu0 0.0
    %3429 = vmatprep.subr.mxu0 0.0
    %3430 = vmatpush1.xpose.msra.mxu0 0.0
    %3431 = vmatprep.subr.mxu0 0.0
    %3432 = vmatpush1.xpose.msra.mxu0 0.0
    %3433 = vmatprep.subr.mxu0 0.0
    %3434 = vmatpush1.xpose.msra.mxu0 0.0
    %3435 = vmatprep.subr.mxu0 0.0
    %3436 = vmatpush1.xpose.msra.mxu0 0.0
    %3437 = vmatprep.subr.mxu0 0.0
    %3438 = vmatpush1.xpose.msra.mxu0 0.0
    %3439 = vmatprep.subr.mxu0 0.0
    %3440 = vmatpush1.xpose.msra.mxu0 0.0
    %3441 = vmatprep.subr.mxu0 0.0
    %3442 = vmatpush1.xpose.msra.mxu0 0.0
    %3443 = vmatprep.subr.mxu0 0.0
    %3444 = vmatpush1.xpose.msra.mxu0 0.0
    %3445 = vmatprep.subr.mxu0 0.0
    %3446 = vmatpush1.xpose.msra.mxu0 0.0
    %3447 = vmatprep.subr.mxu0 0.0
    %3448 = vmatpush1.xpose.msra.mxu0 0.0
    %3449 = vmatprep.subr.mxu0 0.0
    %3450 = vmatpush1.xpose.msra.mxu0 0.0
    %3451 = vmatprep.subr.mxu0 0.0
    %3452 = vmatpush1.xpose.msra.mxu0 0.0
    %3453 = vmatprep.subr.mxu0 0.0
    %3454 = vmatpush1.xpose.msra.mxu0 0.0
    %3455 = vmatprep.subr.mxu0 0.0
    %3456 = vmatpush1.xpose.msra.mxu0 0.0
    %3457 = vmatprep.subr.mxu0 0.0
    %3458 = vmatpush1.xpose.msra.mxu0 0.0
    %3459 = vmatprep.subr.mxu0 0.0
    %3460 = vmatpush1.xpose.msra.mxu0 0.0
    %3461 = vmatprep.subr.mxu0 0.0
    %3462 = vmatpush1.xpose.msra.mxu0 0.0
    %3463 = vmatprep.subr.mxu0 0.0
    %3464 = vmatpush1.xpose.msra.mxu0 0.0
    %3465 = vmatprep.subr.mxu0 0.0
    %3466 = vmatpush1.xpose.msra.mxu0 0.0
    %3467 = vmatprep.subr.mxu0 0.0
    %3468 = vmatpush1.xpose.msra.mxu0 0.0
    %3469 = vmatprep.subr.mxu0 0.0
    %3470 = vmatpush1.xpose.msra.mxu0 0.0
    %3471 = vmatprep.mubr.f32.mxu0 0.0
    %3472 = vmatmul.mubr.f32.gmra.mrb[0].mxu0 %v3403
    %v3473 = vpop.f32.mrb[0].mxu0
    %v3474 = vadd.f32 0.0, %v3473
    %v3475 = vpop.f32.mrb[0].mxu0
    %3476 = vdwg.mxu0
    %v3477 = vsel %vm196, %v3396, -inf
    %3478 = vmax.xlane.f32.xlu0 %v3477
    %v3479 = vpop.xlane.xlu0 %3478
    %v3480 = vsel %vm196, %v3474, -inf
    %3481 = vmax.xlane.f32.xlu0 %v3480
    %v3482 = vpop.xlane.xlu0 %3481
    %v3483 = vsub.f32 %v3396, %v3479
    %v3484 = vsub.f32 %v3474, %v3482
    %v3485 = vmul.f32 %v3483, 1.442695
    %v3486 = vpow.pop %v3485
    %v3487 = vmul.f32 %v3484, 1.442695
    %v3488 = vpow.pop %v3487
    %v3489 = vsel %vm196, %v3486, 0.0
    %3490 = vadd.xlane.f32.xlu0 %v3489
    %v3491 = vpop.xlane.xlu0 %3490
    %v3492 = vsel %vm196, %v3488, 0.0
    %3493 = vadd.xlane.f32.xlu0 %v3492
    %v3494 = vpop.xlane.xlu0 %3493
    %v3495 = vrcp.pop %v3491
    %v3496 = vrcp.pop %v3494
    %v3497 = vmul.f32 %v3486, %v3495
    %v3498 = vmul.f32 %v3488, %v3496
    %3499 = vrot.lane.b32.xlu0 %v2080, 72
    %v3500 = vpop.permute.xlu0 %3499
    %v3503 = vsel %vm196, %v3497, 0
    %3505 = vmatprep.subr.mxu0 0.0
    %3506 = vmatpush1.msra.mxu0 %v3500
    %3507 = vmatprep.subr.mxu0 0.0
    %3508 = vmatpush1.msra.mxu0 0.0
    %3509 = vmatprep.subr.mxu0 0.0
    %3510 = vmatpush1.msra.mxu0 0.0
    %3511 = vmatprep.subr.mxu0 0.0
    %3512 = vmatpush1.msra.mxu0 0.0
    %3513 = vmatprep.subr.mxu0 0.0
    %3514 = vmatpush1.msra.mxu0 0.0
    %3515 = vmatprep.subr.mxu0 0.0
    %3516 = vmatpush1.msra.mxu0 0.0
    %3517 = vmatprep.subr.mxu0 0.0
    %3518 = vmatpush1.msra.mxu0 0.0
    %3519 = vmatprep.subr.mxu0 0.0
    %3520 = vmatpush1.msra.mxu0 0.0
    %3521 = vmatprep.subr.mxu0 0.0
    %3522 = vmatpush1.msra.mxu0 0.0
    %3523 = vmatprep.subr.mxu0 0.0
    %3524 = vmatpush1.msra.mxu0 0.0
    %3525 = vmatprep.subr.mxu0 0.0
    %3526 = vmatpush1.msra.mxu0 0.0
    %3527 = vmatprep.subr.mxu0 0.0
    %3528 = vmatpush1.msra.mxu0 0.0
    %3529 = vmatprep.subr.mxu0 0.0
    %3530 = vmatpush1.msra.mxu0 0.0
    %3531 = vmatprep.subr.mxu0 0.0
    %3532 = vmatpush1.msra.mxu0 0.0
    %3533 = vmatprep.subr.mxu0 0.0
    %3534 = vmatpush1.msra.mxu0 0.0
    %3535 = vmatprep.subr.mxu0 0.0
    %3536 = vmatpush1.msra.mxu0 0.0
    %3537 = vmatprep.subr.mxu0 0.0
    %3538 = vmatpush1.msra.mxu0 0.0
    %3539 = vmatprep.subr.mxu0 0.0
    %3540 = vmatpush1.msra.mxu0 0.0
    %3541 = vmatprep.subr.mxu0 0.0
    %3542 = vmatpush1.msra.mxu0 0.0
    %3543 = vmatprep.subr.mxu0 0.0
    %3544 = vmatpush1.msra.mxu0 0.0
    %3545 = vmatprep.subr.mxu0 0.0
    %3546 = vmatpush1.msra.mxu0 0.0
    %3547 = vmatprep.subr.mxu0 0.0
    %3548 = vmatpush1.msra.mxu0 0.0
    %3549 = vmatprep.subr.mxu0 0.0
    %3550 = vmatpush1.msra.mxu0 0.0
    %3551 = vmatprep.subr.mxu0 0.0
    %3552 = vmatpush1.msra.mxu0 0.0
    %3553 = vmatprep.subr.mxu0 0.0
    %3554 = vmatpush1.msra.mxu0 0.0
    %3555 = vmatprep.subr.mxu0 0.0
    %3556 = vmatpush1.msra.mxu0 0.0
    %3557 = vmatprep.subr.mxu0 0.0
    %3558 = vmatpush1.msra.mxu0 0.0
    %3559 = vmatprep.subr.mxu0 0.0
    %3560 = vmatpush1.msra.mxu0 0.0
    %3561 = vmatprep.subr.mxu0 0.0
    %3562 = vmatpush1.msra.mxu0 0.0
    %3563 = vmatprep.subr.mxu0 0.0
    %3564 = vmatpush1.msra.mxu0 0.0
    %3565 = vmatprep.subr.mxu0 0.0
    %3566 = vmatpush1.msra.mxu0 0.0
    %3567 = vmatprep.subr.mxu0 0.0
    %3568 = vmatpush1.msra.mxu0 0.0
    %3569 = vmatprep.mubr.f32.mxu0 0.0
    %3570 = vmatmul.mubr.f32.gmra.mrb[0].mxu0 %v3503
    %v3571 = vpop.f32.mrb[0].mxu0
    %v3572 = vadd.f32 0.0, %v3571
    %v3573 = vpop.f32.mrb[0].mxu0
    %3574 = vdwg.mxu0
    %3575 = vrot.lane.b32.xlu0 %v2085, 72
    %v3576 = vpop.permute.xlu0 %3575
    %v3579 = vsel %vm196, %v3498, 0
    %3581 = vmatprep.subr.mxu0 0.0
    %3582 = vmatpush1.msra.mxu0 %v3576
    %3583 = vmatprep.subr.mxu0 0.0
    %3584 = vmatpush1.msra.mxu0 0.0
    %3585 = vmatprep.subr.mxu0 0.0
    %3586 = vmatpush1.msra.mxu0 0.0
    %3587 = vmatprep.subr.mxu0 0.0
    %3588 = vmatpush1.msra.mxu0 0.0
    %3589 = vmatprep.subr.mxu0 0.0
    %3590 = vmatpush1.msra.mxu0 0.0
    %3591 = vmatprep.subr.mxu0 0.0
    %3592 = vmatpush1.msra.mxu0 0.0
    %3593 = vmatprep.subr.mxu0 0.0
    %3594 = vmatpush1.msra.mxu0 0.0
    %3595 = vmatprep.subr.mxu0 0.0
    %3596 = vmatpush1.msra.mxu0 0.0
    %3597 = vmatprep.subr.mxu0 0.0
    %3598 = vmatpush1.msra.mxu0 0.0
    %3599 = vmatprep.subr.mxu0 0.0
    %3600 = vmatpush1.msra.mxu0 0.0
    %3601 = vmatprep.subr.mxu0 0.0
    %3602 = vmatpush1.msra.mxu0 0.0
    %3603 = vmatprep.subr.mxu0 0.0
    %3604 = vmatpush1.msra.mxu0 0.0
    %3605 = vmatprep.subr.mxu0 0.0
    %3606 = vmatpush1.msra.mxu0 0.0
    %3607 = vmatprep.subr.mxu0 0.0
    %3608 = vmatpush1.msra.mxu0 0.0
    %3609 = vmatprep.subr.mxu0 0.0
    %3610 = vmatpush1.msra.mxu0 0.0
    %3611 = vmatprep.subr.mxu0 0.0
    %3612 = vmatpush1.msra.mxu0 0.0
    %3613 = vmatprep.subr.mxu0 0.0
    %3614 = vmatpush1.msra.mxu0 0.0
    %3615 = vmatprep.subr.mxu0 0.0
    %3616 = vmatpush1.msra.mxu0 0.0
    %3617 = vmatprep.subr.mxu0 0.0
    %3618 = vmatpush1.msra.mxu0 0.0
    %3619 = vmatprep.subr.mxu0 0.0
    %3620 = vmatpush1.msra.mxu0 0.0
    %3621 = vmatprep.subr.mxu0 0.0
    %3622 = vmatpush1.msra.mxu0 0.0
    %3623 = vmatprep.subr.mxu0 0.0
    %3624 = vmatpush1.msra.mxu0 0.0
    %3625 = vmatprep.subr.mxu0 0.0
    %3626 = vmatpush1.msra.mxu0 0.0
    %3627 = vmatprep.subr.mxu0 0.0
    %3628 = vmatpush1.msra.mxu0 0.0
    %3629 = vmatprep.subr.mxu0 0.0
    %3630 = vmatpush1.msra.mxu0 0.0
    %3631 = vmatprep.subr.mxu0 0.0
    %3632 = vmatpush1.msra.mxu0 0.0
    %3633 = vmatprep.subr.mxu0 0.0
    %3634 = vmatpush1.msra.mxu0 0.0
    %3635 = vmatprep.subr.mxu0 0.0
    %3636 = vmatpush1.msra.mxu0 0.0
    %3637 = vmatprep.subr.mxu0 0.0
    %3638 = vmatpush1.msra.mxu0 0.0
    %3639 = vmatprep.subr.mxu0 0.0
    %3640 = vmatpush1.msra.mxu0 0.0
    %3641 = vmatprep.subr.mxu0 0.0
    %3642 = vmatpush1.msra.mxu0 0.0
    %3643 = vmatprep.subr.mxu0 0.0
    %3644 = vmatpush1.msra.mxu0 0.0
    %3645 = vmatprep.mubr.f32.mxu0 0.0
    %3646 = vmatmul.mubr.f32.gmra.mrb[0].mxu0 %v3579
    %v3647 = vpop.f32.mrb[0].mxu0
    %v3648 = vadd.f32 0.0, %v3647
    %v3649 = vpop.f32.mrb[0].mxu0
    %3650 = vdwg.mxu0
    %v3652 = vsel %vm196, %v3572, 0
    %v3655 = vsel %vm196, %v3648, 0
    %3657 = vmatprep.subr.mxu0 0.0
    %3658 = vmatpush1.msra.mxu0 %v1899
    %3659 = vmatprep.subr.mxu0 0.0
    %3660 = vmatpush1.msra.mxu0 0.0
    %3661 = vmatprep.subr.mxu0 0.0
    %3662 = vmatpush1.msra.mxu0 0.0
    %3663 = vmatprep.subr.mxu0 0.0
    %3664 = vmatpush1.msra.mxu0 0.0
    %3665 = vmatprep.subr.mxu0 0.0
    %3666 = vmatpush1.msra.mxu0 0.0
    %3667 = vmatprep.subr.mxu0 0.0
    %3668 = vmatpush1.msra.mxu0 0.0
    %3669 = vmatprep.subr.mxu0 0.0
    %3670 = vmatpush1.msra.mxu0 0.0
    %3671 = vmatprep.subr.mxu0 0.0
    %3672 = vmatpush1.msra.mxu0 0.0
    %3673 = vmatprep.subr.mxu0 0.0
    %3674 = vmatpush1.msra.mxu0 0.0
    %3675 = vmatprep.subr.mxu0 0.0
    %3676 = vmatpush1.msra.mxu0 0.0
    %3677 = vmatprep.subr.mxu0 0.0
    %3678 = vmatpush1.msra.mxu0 0.0
    %3679 = vmatprep.subr.mxu0 0.0
    %3680 = vmatpush1.msra.mxu0 0.0
    %3681 = vmatprep.subr.mxu0 0.0
    %3682 = vmatpush1.msra.mxu0 0.0
    %3683 = vmatprep.subr.mxu0 0.0
    %3684 = vmatpush1.msra.mxu0 0.0
    %3685 = vmatprep.subr.mxu0 0.0
    %3686 = vmatpush1.msra.mxu0 0.0
    %3687 = vmatprep.subr.mxu0 0.0
    %3688 = vmatpush1.msra.mxu0 0.0
    %3689 = vmatprep.subr.mxu0 0.0
    %3690 = vmatpush1.msra.mxu0 0.0
    %3691 = vmatprep.subr.mxu0 0.0
    %3692 = vmatpush1.msra.mxu0 0.0
    %3693 = vmatprep.subr.mxu0 0.0
    %3694 = vmatpush1.msra.mxu0 0.0
    %3695 = vmatprep.subr.mxu0 0.0
    %3696 = vmatpush1.msra.mxu0 0.0
    %3697 = vmatprep.subr.mxu0 0.0
    %3698 = vmatpush1.msra.mxu0 0.0
    %3699 = vmatprep.subr.mxu0 0.0
    %3700 = vmatpush1.msra.mxu0 0.0
    %3701 = vmatprep.subr.mxu0 0.0
    %3702 = vmatpush1.msra.mxu0 0.0
    %3703 = vmatprep.subr.mxu0 0.0
    %3704 = vmatpush1.msra.mxu0 0.0
    %3705 = vmatprep.subr.mxu0 0.0
    %3706 = vmatpush1.msra.mxu0 0.0
    %3707 = vmatprep.subr.mxu0 0.0
    %3708 = vmatpush1.msra.mxu0 0.0
    %3709 = vmatprep.subr.mxu0 0.0
    %3710 = vmatpush1.msra.mxu0 0.0
    %3711 = vmatprep.subr.mxu0 0.0
    %3712 = vmatpush1.msra.mxu0 0.0
    %3713 = vmatprep.subr.mxu0 0.0
    %3714 = vmatpush1.msra.mxu0 0.0
    %3715 = vmatprep.subr.mxu0 0.0
    %3716 = vmatpush1.msra.mxu0 0.0
    %3717 = vmatprep.subr.mxu0 0.0
    %3718 = vmatpush1.msra.mxu0 0.0
    %3719 = vmatprep.subr.mxu0 0.0
    %3720 = vmatpush1.msra.mxu0 0.0
    %3721 = vmatprep.mubr.f32.mxu0 0.0
    %3722 = vmatmul.mubr.f32.gmra.mrb[0].mxu0 %v3652
    %v3723 = vpop.f32.mrb[0].mxu0
    %v3724 = vadd.f32 0.0, %v3723
    %v3725 = vpop.f32.mrb[0].mxu0
    %3726 = vmatprep.mubr.f32.mxu0 0.0
    %3727 = vmatmul.mubr.f32.gmra.mrb[0].mxu0 %v3655
    %v3728 = vpop.f32.mrb[0].mxu0
    %v3729 = vadd.f32 0.0, %v3728
    %v3730 = vpop.f32.mrb[0].mxu0
    %3731 = vdwg.mxu0
    %v3732 = vadd.f32 %v3319, %v3724
    %v3733 = vadd.f32 %v3320, %v3729
    %v3735 = vlaneseq
    %v3736 = vshrl.u32 %v3735, 7
    %v3737 = vsub.s32 0, %v3736
    %v3738 = vrot.slane %v1900, %v3737
    %v3740 = vadd.f32 %v3732, %v3738
    %v3741 = vadd.f32 %v3733, %v3738
    %v3742 = vadd.f32 %v1889, %v3740
    %v3743 = vadd.f32 %v1890, %v3741
    %v3744 = vsel %vm109, %v3742, 0.0
    %3745 = vadd.xlane.f32.xlu0 %v3744
    %v3746 = vpop.xlane.xlu0 %3745
    %v3747 = vsel %vm109, %v3743, 0.0
    %3748 = vadd.xlane.f32.xlu0 %v3747
    %v3749 = vpop.xlane.xlu0 %3748
    %v3750 = vmul.f32 %v3746, %v1858
    %v3751 = vmul.f32 %v3749, %v1858
    %v3752 = vsub.f32 %v3742, %v3750
    %v3753 = vsub.f32 %v3743, %v3751
    %v3754 = vmul.f32 %v3752, %v3752
    %v3755 = vmul.f32 %v3753, %v3753
    %v3756 = vsel %vm109, %v3754, 0.0
    %3757 = vadd.xlane.f32.xlu0 %v3756
    %v3758 = vpop.xlane.xlu0 %3757
    %v3759 = vsel %vm109, %v3755, 0.0
    %3760 = vadd.xlane.f32.xlu0 %v3759
    %v3761 = vpop.xlane.xlu0 %3760
    %v3762 = vmul.f32 %v3758, %v1858
    %v3763 = vmul.f32 %v3761, %v1858
    %v3764 = vadd.f32 %v3762, 1e-05
    %v3765 = vadd.f32 %v3763, 1e-05
    %v3766 = vrsqrt.pop %v3764
    %v3767 = vrsqrt.pop %v3765
    %v3768 = vmul.f32 %v3752, %v3766
    %v3769 = vmul.f32 %v3753, %v3767
    %v3770 = vlaneseq
    %v3771 = vshrl.u32 %v3770, 7
    %v3772 = vsub.s32 1, %v3771
    %v3773 = vrot.slane %v91, %v3772
    %v3774 = vmul.f32 %v3768, %v3773
    %v3775 = vmul.f32 %v3769, %v3773
    %v3776 = vlaneseq
    %v3777 = vshrl.u32 %v3776, 7
    %v3778 = vsub.s32 1, %v3777
    %v3779 = vrot.slane %v92, %v3778
    %v3780 = vadd.f32 %v3774, %v3779
    %v3781 = vadd.f32 %v3775, %v3779
    %v3782 = vld [vmem:[#allocation4] sm:$0xff]
    %v3783 = vld [vmem:[#allocation4 + $0x8] sm:$0xff]
    %v3784 = vld [vmem:[#allocation4 + $0x10] sm:$0xff]
    %v3785 = vld [vmem:[#allocation4 + $0x18] sm:$0xff]
    %v3786 = vld [vmem:[%s11] sm:$0x1]
    %v3787 = vld [vmem:[%s12] sm:$0xff]
    %v3788 = vld [vmem:[%s12 + $0x8] sm:$0xff]
    %v3789 = vld [vmem:[%s12 + $0x10] sm:$0xff]
    %v3790 = vld [vmem:[%s12 + $0x18] sm:$0xff]
    %v3791 = vld [vmem:[%s12 + $0x20] sm:$0xff]
    %v3792 = vld [vmem:[%s12 + $0x28] sm:$0xff]
    %v3793 = vld [vmem:[%s12 + $0x30] sm:$0xff]
    %v3794 = vld [vmem:[%s12 + $0x38] sm:$0xff]
    %v3795 = vld [vmem:[%s13] sm:$0x1]
    %v3797 = vlaneseq
    %v3798 = vshrl.u32 %v3797, 7
    %v3799 = vsub.s32 0, %v3798
    %v3800 = vrot.slane %v3786, %v3799
    %v3803 = vsel %vm109, %v3780, 0
    %v3806 = vsel %vm109, %v3781, 0
    %3808 = vmatprep.subr.mxu0 0.0
    %3809 = vmatpush1.msra.mxu0 %v3782
    %3810 = vmatprep.subr.mxu0 0.0
    %3811 = vmatpush1.msra.mxu0 %v3783
    %3812 = vmatprep.subr.mxu0 0.0
    %3813 = vmatpush1.msra.mxu0 %v3784
    %3814 = vmatprep.subr.mxu0 0.0
    %3815 = vmatpush1.msra.mxu0 %v3785
    %3816 = vmatprep.subr.mxu0 0.0
    %3817 = vmatpush1.msra.mxu0 0.0
    %3818 = vmatprep.subr.mxu0 0.0
    %3819 = vmatpush1.msra.mxu0 0.0
    %3820 = vmatprep.subr.mxu0 0.0
    %3821 = vmatpush1.msra.mxu0 0.0
    %3822 = vmatprep.subr.mxu0 0.0
    %3823 = vmatpush1.msra.mxu0 0.0
    %3824 = vmatprep.subr.mxu0 0.0
    %3825 = vmatpush1.msra.mxu0 0.0
    %3826 = vmatprep.subr.mxu0 0.0
    %3827 = vmatpush1.msra.mxu0 0.0
    %3828 = vmatprep.subr.mxu0 0.0
    %3829 = vmatpush1.msra.mxu0 0.0
    %3830 = vmatprep.subr.mxu0 0.0
    %3831 = vmatpush1.msra.mxu0 0.0
    %3832 = vmatprep.subr.mxu0 0.0
    %3833 = vmatpush1.msra.mxu0 0.0
    %3834 = vmatprep.subr.mxu0 0.0
    %3835 = vmatpush1.msra.mxu0 0.0
    %3836 = vmatprep.subr.mxu0 0.0
    %3837 = vmatpush1.msra.mxu0 0.0
    %3838 = vmatprep.subr.mxu0 0.0
    %3839 = vmatpush1.msra.mxu0 0.0
    %3840 = vmatprep.subr.mxu0 0.0
    %3841 = vmatpush1.msra.mxu0 0.0
    %3842 = vmatprep.subr.mxu0 0.0
    %3843 = vmatpush1.msra.mxu0 0.0
    %3844 = vmatprep.subr.mxu0 0.0
    %3845 = vmatpush1.msra.mxu0 0.0
    %3846 = vmatprep.subr.mxu0 0.0
    %3847 = vmatpush1.msra.mxu0 0.0
    %3848 = vmatprep.subr.mxu0 0.0
    %3849 = vmatpush1.msra.mxu0 0.0
    %3850 = vmatprep.subr.mxu0 0.0
    %3851 = vmatpush1.msra.mxu0 0.0
    %3852 = vmatprep.subr.mxu0 0.0
    %3853 = vmatpush1.msra.mxu0 0.0
    %3854 = vmatprep.subr.mxu0 0.0
    %3855 = vmatpush1.msra.mxu0 0.0
    %3856 = vmatprep.subr.mxu0 0.0
    %3857 = vmatpush1.msra.mxu0 0.0
    %3858 = vmatprep.subr.mxu0 0.0
    %3859 = vmatpush1.msra.mxu0 0.0
    %3860 = vmatprep.subr.mxu0 0.0
    %3861 = vmatpush1.msra.mxu0 0.0
    %3862 = vmatprep.subr.mxu0 0.0
    %3863 = vmatpush1.msra.mxu0 0.0
    %3864 = vmatprep.subr.mxu0 0.0
    %3865 = vmatpush1.msra.mxu0 0.0
    %3866 = vmatprep.subr.mxu0 0.0
    %3867 = vmatpush1.msra.mxu0 0.0
    %3868 = vmatprep.subr.mxu0 0.0
    %3869 = vmatpush1.msra.mxu0 0.0
    %3870 = vmatprep.subr.mxu0 0.0
    %3871 = vmatpush1.msra.mxu0 0.0
    %3872 = vmatprep.mubr.f32.mxu0 0.0
    %3873 = vmatmul.mubr.f32.gmra.mrb[0].mxu0 %v3803
    %v3874 = vpop.f32.mrb[0].mxu0
    %v3875 = vadd.f32 %v3800, %v3874
    %v3876 = vpop.f32.mrb[0].mxu0
    %3877 = vmatprep.mubr.f32.mxu0 0.0
    %3878 = vmatmul.mubr.f32.gmra.mrb[0].mxu0 %v3806
    %v3879 = vpop.f32.mrb[0].mxu0
    %v3880 = vadd.f32 %v3800, %v3879
    %v3881 = vpop.f32.mrb[0].mxu0
    %3882 = vdwg.mxu0
    %v3883 = vmax.f32 %v3875, 0.0
    %v3884 = vmax.f32 %v3880, 0.0
    %v3886 = vlaneseq
    %v3887 = vshrl.u32 %v3886, 7
    %v3888 = vsub.s32 0, %v3887
    %v3889 = vrot.slane %v3795, %v3888
    %vm3891 = vcmask 523264
    %v3893 = vsel %vm3891, %v3883, 0
    %v3896 = vsel %vm3891, %v3884, 0
    %3898 = vmatprep.subr.mxu0 0.0
    %3899 = vmatpush1.msra.mxu0 %v3787
    %3900 = vmatprep.subr.mxu0 0.0
    %3901 = vmatpush1.msra.mxu0 %v3788
    %3902 = vmatprep.subr.mxu0 0.0
    %3903 = vmatpush1.msra.mxu0 %v3789
    %3904 = vmatprep.subr.mxu0 0.0
    %3905 = vmatpush1.msra.mxu0 %v3790
    %3906 = vmatprep.subr.mxu0 0.0
    %3907 = vmatpush1.msra.mxu0 %v3791
    %3908 = vmatprep.subr.mxu0 0.0
    %3909 = vmatpush1.msra.mxu0 %v3792
    %3910 = vmatprep.subr.mxu0 0.0
    %3911 = vmatpush1.msra.mxu0 %v3793
    %3912 = vmatprep.subr.mxu0 0.0
    %3913 = vmatpush1.msra.mxu0 %v3794
    %3914 = vmatprep.subr.mxu0 0.0
    %3915 = vmatpush1.msra.mxu0 0.0
    %3916 = vmatprep.subr.mxu0 0.0
    %3917 = vmatpush1.msra.mxu0 0.0
    %3918 = vmatprep.subr.mxu0 0.0
    %3919 = vmatpush1.msra.mxu0 0.0
    %3920 = vmatprep.subr.mxu0 0.0
    %3921 = vmatpush1.msra.mxu0 0.0
    %3922 = vmatprep.subr.mxu0 0.0
    %3923 = vmatpush1.msra.mxu0 0.0
    %3924 = vmatprep.subr.mxu0 0.0
    %3925 = vmatpush1.msra.mxu0 0.0
    %3926 = vmatprep.subr.mxu0 0.0
    %3927 = vmatpush1.msra.mxu0 0.0
    %3928 = vmatprep.subr.mxu0 0.0
    %3929 = vmatpush1.msra.mxu0 0.0
    %3930 = vmatprep.subr.mxu0 0.0
    %3931 = vmatpush1.msra.mxu0 0.0
    %3932 = vmatprep.subr.mxu0 0.0
    %3933 = vmatpush1.msra.mxu0 0.0
    %3934 = vmatprep.subr.mxu0 0.0
    %3935 = vmatpush1.msra.mxu0 0.0
    %3936 = vmatprep.subr.mxu0 0.0
    %3937 = vmatpush1.msra.mxu0 0.0
    %3938 = vmatprep.subr.mxu0 0.0
    %3939 = vmatpush1.msra.mxu0 0.0
    %3940 = vmatprep.subr.mxu0 0.0
    %3941 = vmatpush1.msra.mxu0 0.0
    %3942 = vmatprep.subr.mxu0 0.0
    %3943 = vmatpush1.msra.mxu0 0.0
    %3944 = vmatprep.subr.mxu0 0.0
    %3945 = vmatpush1.msra.mxu0 0.0
    %3946 = vmatprep.subr.mxu0 0.0
    %3947 = vmatpush1.msra.mxu0 0.0
    %3948 = vmatprep.subr.mxu0 0.0
    %3949 = vmatpush1.msra.mxu0 0.0
    %3950 = vmatprep.subr.mxu0 0.0
    %3951 = vmatpush1.msra.mxu0 0.0
    %3952 = vmatprep.subr.mxu0 0.0
    %3953 = vmatpush1.msra.mxu0 0.0
    %3954 = vmatprep.subr.mxu0 0.0
    %3955 = vmatpush1.msra.mxu0 0.0
    %3956 = vmatprep.subr.mxu0 0.0
    %3957 = vmatpush1.msra.mxu0 0.0
    %3958 = vmatprep.subr.mxu0 0.0
    %3959 = vmatpush1.msra.mxu0 0.0
    %3960 = vmatprep.subr.mxu0 0.0
    %3961 = vmatpush1.msra.mxu0 0.0
    %3962 = vmatprep.mubr.f32.mxu0 0.0
    %3963 = vmatmul.mubr.f32.gmra.mrb[0].mxu0 %v3893
    %v3964 = vpop.f32.mrb[0].mxu0
    %v3965 = vadd.f32 %v3889, %v3964
    %v3966 = vpop.f32.mrb[0].mxu0
    %3967 = vmatprep.mubr.f32.mxu0 0.0
    %3968 = vmatmul.mubr.f32.gmra.mrb[0].mxu0 %v3896
    %v3969 = vpop.f32.mrb[0].mxu0
    %v3970 = vadd.f32 %v3889, %v3969
    %v3971 = vpop.f32.mrb[0].mxu0
    %3972 = vdwg.mxu0
    %v3973 = vadd.f32 %v3780, %v3965
    %v3974 = vadd.f32 %v3781, %v3970
    %v3975 = vsel %vm109, %v3973, 0.0
    %3976 = vadd.xlane.f32.xlu0 %v3975
    %v3977 = vpop.xlane.xlu0 %3976
    %v3978 = vsel %vm109, %v3974, 0.0
    %3979 = vadd.xlane.f32.xlu0 %v3978
    %v3980 = vpop.xlane.xlu0 %3979
    %v3981 = vmul.f32 %v3977, %v1858
    %v3982 = vmul.f32 %v3980, %v1858
    %v3983 = vsub.f32 %v3973, %v3981
    %v3984 = vsub.f32 %v3974, %v3982
    %v3985 = vmul.f32 %v3983, %v3983
    %v3986 = vmul.f32 %v3984, %v3984
    %v3987 = vsel %vm109, %v3985, 0.0
    %3988 = vadd.xlane.f32.xlu0 %v3987
    %v3989 = vpop.xlane.xlu0 %3988
    %v3990 = vsel %vm109, %v3986, 0.0
    %3991 = vadd.xlane.f32.xlu0 %v3990
    %v3992 = vpop.xlane.xlu0 %3991
    %v3993 = vmul.f32 %v3989, %v1858
    %v3994 = vmul.f32 %v3992, %v1858
    %v3995 = vadd.f32 %v3993, 1e-05
    %v3996 = vadd.f32 %v3994, 1e-05
    %v3997 = vrsqrt.pop %v3995
    %v3998 = vrsqrt.pop %v3996
    %v3999 = vmul.f32 %v3983, %v3997
    %v4000 = vmul.f32 %v3984, %v3998
    %v4001 = vlaneseq
    %v4002 = vshrl.u32 %v4001, 7
    %v4003 = vsub.s32 2, %v4002
    %v4004 = vrot.slane %v91, %v4003
    %v4005 = vmul.f32 %v3999, %v4004
    %v4006 = vmul.f32 %v4000, %v4004
    %v4007 = vlaneseq
    %v4008 = vshrl.u32 %v4007, 7
    %v4009 = vsub.s32 2, %v4008
    %v4010 = vrot.slane %v92, %v4009
    %v4011 = vadd.f32 %v4005, %v4010
    %v4012 = vadd.f32 %v4006, %v4010
    %s4013 = scalar_lea.vmem %s14, 4
    %v4014 = vld [vmem:[%s4013] sm:$0x7]
    %s4015 = scalar_lea.vmem %s15, 4
    %v4016 = vld [vmem:[%s4015] sm:$0x7]
    %s4017 = scalar_lea.vmem %s2, 32
    %v4018 = vld [vmem:[%s4017] sm:$0xff]
    %v4019 = vld [vmem:[%s4017 + $0x8] sm:$0xff]
    %v4020 = vld [vmem:[%s4017 + $0x10] sm:$0xff]
    %v4021 = vld [vmem:[%s4017 + $0x18] sm:$0xff]
    %s4022 = scalar_lea.vmem %s3, 1
    %v4023 = vld [vmem:[%s4022] sm:$0x1]
    %s4024 = scalar_lea.vmem %s4, 32
    %v4025 = vld [vmem:[%s4024] sm:$0xff]
    %v4026 = vld [vmem:[%s4024 + $0x8] sm:$0xff]
    %v4027 = vld [vmem:[%s4024 + $0x10] sm:$0xff]
    %v4028 = vld [vmem:[%s4024 + $0x18] sm:$0xff]
    %s4029 = scalar_lea.vmem %s5, 1
    %v4030 = vld [vmem:[%s4029] sm:$0x1]
    %v4032 = vlaneseq
    %v4033 = vshrl.u32 %v4032, 7
    %v4034 = vsub.s32 0, %v4033
    %v4035 = vrot.slane %v4023, %v4034
    %v4038 = vsel %vm109, %v4011, 0
    %v4041 = vsel %vm109, %v4012, 0
    %4043 = vmatprep.subr.mxu0 0.0
    %4044 = vmatpush1.msra.mxu0 %v4018
    %4045 = vmatprep.subr.mxu0 0.0
    %4046 = vmatpush1.msra.mxu0 %v4019
    %4047 = vmatprep.subr.mxu0 0.0
    %4048 = vmatpush1.msra.mxu0 %v4020
    %4049 = vmatprep.subr.mxu0 0.0
    %4050 = vmatpush1.msra.mxu0 %v4021
    %4051 = vmatprep.subr.mxu0 0.0
    %4052 = vmatpush1.msra.mxu0 0.0
    %4053 = vmatprep.subr.mxu0 0.0
    %4054 = vmatpush1.msra.mxu0 0.0
    %4055 = vmatprep.subr.mxu0 0.0
    %4056 = vmatpush1.msra.mxu0 0.0
    %4057 = vmatprep.subr.mxu0 0.0
    %4058 = vmatpush1.msra.mxu0 0.0
    %4059 = vmatprep.subr.mxu0 0.0
    %4060 = vmatpush1.msra.mxu0 0.0
    %4061 = vmatprep.subr.mxu0 0.0
    %4062 = vmatpush1.msra.mxu0 0.0
    %4063 = vmatprep.subr.mxu0 0.0
    %4064 = vmatpush1.msra.mxu0 0.0
    %4065 = vmatprep.subr.mxu0 0.0
    %4066 = vmatpush1.msra.mxu0 0.0
    %4067 = vmatprep.subr.mxu0 0.0
    %4068 = vmatpush1.msra.mxu0 0.0
    %4069 = vmatprep.subr.mxu0 0.0
    %4070 = vmatpush1.msra.mxu0 0.0
    %4071 = vmatprep.subr.mxu0 0.0
    %4072 = vmatpush1.msra.mxu0 0.0
    %4073 = vmatprep.subr.mxu0 0.0
    %4074 = vmatpush1.msra.mxu0 0.0
    %4075 = vmatprep.subr.mxu0 0.0
    %4076 = vmatpush1.msra.mxu0 0.0
    %4077 = vmatprep.subr.mxu0 0.0
    %4078 = vmatpush1.msra.mxu0 0.0
    %4079 = vmatprep.subr.mxu0 0.0
    %4080 = vmatpush1.msra.mxu0 0.0
    %4081 = vmatprep.subr.mxu0 0.0
    %4082 = vmatpush1.msra.mxu0 0.0
    %4083 = vmatprep.subr.mxu0 0.0
    %4084 = vmatpush1.msra.mxu0 0.0
    %4085 = vmatprep.subr.mxu0 0.0
    %4086 = vmatpush1.msra.mxu0 0.0
    %4087 = vmatprep.subr.mxu0 0.0
    %4088 = vmatpush1.msra.mxu0 0.0
    %4089 = vmatprep.subr.mxu0 0.0
    %4090 = vmatpush1.msra.mxu0 0.0
    %4091 = vmatprep.subr.mxu0 0.0
    %4092 = vmatpush1.msra.mxu0 0.0
    %4093 = vmatprep.subr.mxu0 0.0
    %4094 = vmatpush1.msra.mxu0 0.0
    %4095 = vmatprep.subr.mxu0 0.0
    %4096 = vmatpush1.msra.mxu0 0.0
    %4097 = vmatprep.subr.mxu0 0.0
    %4098 = vmatpush1.msra.mxu0 0.0
    %4099 = vmatprep.subr.mxu0 0.0
    %4100 = vmatpush1.msra.mxu0 0.0
    %4101 = vmatprep.subr.mxu0 0.0
    %4102 = vmatpush1.msra.mxu0 0.0
    %4103 = vmatprep.subr.mxu0 0.0
    %4104 = vmatpush1.msra.mxu0 0.0
    %4105 = vmatprep.subr.mxu0 0.0
    %4106 = vmatpush1.msra.mxu0 0.0
    %4107 = vmatprep.mubr.f32.mxu0 0.0
    %4108 = vmatmul.mubr.f32.gmra.mrb[0].mxu0 %v4038
    %v4109 = vpop.f32.mrb[0].mxu0
    %v4110 = vadd.f32 %v4035, %v4109
    %v4111 = vpop.f32.mrb[0].mxu0
    %4112 = vmatprep.mubr.f32.mxu0 0.0
    %4113 = vmatmul.mubr.f32.gmra.mrb[0].mxu0 %v4041
    %v4114 = vpop.f32.mrb[0].mxu0
    %v4115 = vadd.f32 %v4035, %v4114
    %v4116 = vpop.f32.mrb[0].mxu0
    %4117 = vdwg.mxu0
    %v4118 = vmul.f32 %v4110, 0.35355338
    %v4119 = vmul.f32 %v4115, 0.35355338
    %4121 = vrot.lane.b32.xlu0 %v4110, 96
    %v4122 = vpop.permute.xlu0 %4121
    %v4124 = vsel %vm196, %v4118, 0
    %v4126 = vsel %vm196, %v4122, 0
    %4128 = vmatprep.subr.mxu0 0.0
    %4129 = vmatpush1.xpose.msra.mxu0 %v4126
    %4130 = vmatprep.subr.mxu0 0.0
    %4131 = vmatpush1.xpose.msra.mxu0 0.0
    %4132 = vmatprep.subr.mxu0 0.0
    %4133 = vmatpush1.xpose.msra.mxu0 0.0
    %4134 = vmatprep.subr.mxu0 0.0
    %4135 = vmatpush1.xpose.msra.mxu0 0.0
    %4136 = vmatprep.subr.mxu0 0.0
    %4137 = vmatpush1.xpose.msra.mxu0 0.0
    %4138 = vmatprep.subr.mxu0 0.0
    %4139 = vmatpush1.xpose.msra.mxu0 0.0
    %4140 = vmatprep.subr.mxu0 0.0
    %4141 = vmatpush1.xpose.msra.mxu0 0.0
    %4142 = vmatprep.subr.mxu0 0.0
    %4143 = vmatpush1.xpose.msra.mxu0 0.0
    %4144 = vmatprep.subr.mxu0 0.0
    %4145 = vmatpush1.xpose.msra.mxu0 0.0
    %4146 = vmatprep.subr.mxu0 0.0
    %4147 = vmatpush1.xpose.msra.mxu0 0.0
    %4148 = vmatprep.subr.mxu0 0.0
    %4149 = vmatpush1.xpose.msra.mxu0 0.0
    %4150 = vmatprep.subr.mxu0 0.0
    %4151 = vmatpush1.xpose.msra.mxu0 0.0
    %4152 = vmatprep.subr.mxu0 0.0
    %4153 = vmatpush1.xpose.msra.mxu0 0.0
    %4154 = vmatprep.subr.mxu0 0.0
    %4155 = vmatpush1.xpose.msra.mxu0 0.0
    %4156 = vmatprep.subr.mxu0 0.0
    %4157 = vmatpush1.xpose.msra.mxu0 0.0
    %4158 = vmatprep.subr.mxu0 0.0
    %4159 = vmatpush1.xpose.msra.mxu0 0.0
    %4160 = vmatprep.subr.mxu0 0.0
    %4161 = vmatpush1.xpose.msra.mxu0 0.0
    %4162 = vmatprep.subr.mxu0 0.0
    %4163 = vmatpush1.xpose.msra.mxu0 0.0
    %4164 = vmatprep.subr.mxu0 0.0
    %4165 = vmatpush1.xpose.msra.mxu0 0.0
    %4166 = vmatprep.subr.mxu0 0.0
    %4167 = vmatpush1.xpose.msra.mxu0 0.0
    %4168 = vmatprep.subr.mxu0 0.0
    %4169 = vmatpush1.xpose.msra.mxu0 0.0
    %4170 = vmatprep.subr.mxu0 0.0
    %4171 = vmatpush1.xpose.msra.mxu0 0.0
    %4172 = vmatprep.subr.mxu0 0.0
    %4173 = vmatpush1.xpose.msra.mxu0 0.0
    %4174 = vmatprep.subr.mxu0 0.0
    %4175 = vmatpush1.xpose.msra.mxu0 0.0
    %4176 = vmatprep.subr.mxu0 0.0
    %4177 = vmatpush1.xpose.msra.mxu0 0.0
    %4178 = vmatprep.subr.mxu0 0.0
    %4179 = vmatpush1.xpose.msra.mxu0 0.0
    %4180 = vmatprep.subr.mxu0 0.0
    %4181 = vmatpush1.xpose.msra.mxu0 0.0
    %4182 = vmatprep.subr.mxu0 0.0
    %4183 = vmatpush1.xpose.msra.mxu0 0.0
    %4184 = vmatprep.subr.mxu0 0.0
    %4185 = vmatpush1.xpose.msra.mxu0 0.0
    %4186 = vmatprep.subr.mxu0 0.0
    %4187 = vmatpush1.xpose.msra.mxu0 0.0
    %4188 = vmatprep.subr.mxu0 0.0
    %4189 = vmatpush1.xpose.msra.mxu0 0.0
    %4190 = vmatprep.subr.mxu0 0.0
    %4191 = vmatpush1.xpose.msra.mxu0 0.0
    %4192 = vmatprep.mubr.f32.mxu0 0.0
    %4193 = vmatmul.mubr.f32.gmra.mrb[0].mxu0 %v4124
    %v4194 = vpop.f32.mrb[0].mxu0
    %v4195 = vadd.f32 0.0, %v4194
    %v4196 = vpop.f32.mrb[0].mxu0
    %4197 = vdwg.mxu0
    %4199 = vrot.lane.b32.xlu0 %v4115, 96
    %v4200 = vpop.permute.xlu0 %4199
    %v4202 = vsel %vm196, %v4119, 0
    %v4204 = vsel %vm196, %v4200, 0
    %4206 = vmatprep.subr.mxu0 0.0
    %4207 = vmatpush1.xpose.msra.mxu0 %v4204
    %4208 = vmatprep.subr.mxu0 0.0
    %4209 = vmatpush1.xpose.msra.mxu0 0.0
    %4210 = vmatprep.subr.mxu0 0.0
    %4211 = vmatpush1.xpose.msra.mxu0 0.0
    %4212 = vmatprep.subr.mxu0 0.0
    %4213 = vmatpush1.xpose.msra.mxu0 0.0
    %4214 = vmatprep.subr.mxu0 0.0
    %4215 = vmatpush1.xpose.msra.mxu0 0.0
    %4216 = vmatprep.subr.mxu0 0.0
    %4217 = vmatpush1.xpose.msra.mxu0 0.0
    %4218 = vmatprep.subr.mxu0 0.0
    %4219 = vmatpush1.xpose.msra.mxu0 0.0
    %4220 = vmatprep.subr.mxu0 0.0
    %4221 = vmatpush1.xpose.msra.mxu0 0.0
    %4222 = vmatprep.subr.mxu0 0.0
    %4223 = vmatpush1.xpose.msra.mxu0 0.0
    %4224 = vmatprep.subr.mxu0 0.0
    %4225 = vmatpush1.xpose.msra.mxu0 0.0
    %4226 = vmatprep.subr.mxu0 0.0
    %4227 = vmatpush1.xpose.msra.mxu0 0.0
    %4228 = vmatprep.subr.mxu0 0.0
    %4229 = vmatpush1.xpose.msra.mxu0 0.0
    %4230 = vmatprep.subr.mxu0 0.0
    %4231 = vmatpush1.xpose.msra.mxu0 0.0
    %4232 = vmatprep.subr.mxu0 0.0
    %4233 = vmatpush1.xpose.msra.mxu0 0.0
    %4234 = vmatprep.subr.mxu0 0.0
    %4235 = vmatpush1.xpose.msra.mxu0 0.0
    %4236 = vmatprep.subr.mxu0 0.0
    %4237 = vmatpush1.xpose.msra.mxu0 0.0
    %4238 = vmatprep.subr.mxu0 0.0
    %4239 = vmatpush1.xpose.msra.mxu0 0.0
    %4240 = vmatprep.subr.mxu0 0.0
    %4241 = vmatpush1.xpose.msra.mxu0 0.0
    %4242 = vmatprep.subr.mxu0 0.0
    %4243 = vmatpush1.xpose.msra.mxu0 0.0
    %4244 = vmatprep.subr.mxu0 0.0
    %4245 = vmatpush1.xpose.msra.mxu0 0.0
    %4246 = vmatprep.subr.mxu0 0.0
    %4247 = vmatpush1.xpose.msra.mxu0 0.0
    %4248 = vmatprep.subr.mxu0 0.0
    %4249 = vmatpush1.xpose.msra.mxu0 0.0
    %4250 = vmatprep.subr.mxu0 0.0
    %4251 = vmatpush1.xpose.msra.mxu0 0.0
    %4252 = vmatprep.subr.mxu0 0.0
    %4253 = vmatpush1.xpose.msra.mxu0 0.0
    %4254 = vmatprep.subr.mxu0 0.0
    %4255 = vmatpush1.xpose.msra.mxu0 0.0
    %4256 = vmatprep.subr.mxu0 0.0
    %4257 = vmatpush1.xpose.msra.mxu0 0.0
    %4258 = vmatprep.subr.mxu0 0.0
    %4259 = vmatpush1.xpose.msra.mxu0 0.0
    %4260 = vmatprep.subr.mxu0 0.0
    %4261 = vmatpush1.xpose.msra.mxu0 0.0
    %4262 = vmatprep.subr.mxu0 0.0
    %4263 = vmatpush1.xpose.msra.mxu0 0.0
    %4264 = vmatprep.subr.mxu0 0.0
    %4265 = vmatpush1.xpose.msra.mxu0 0.0
    %4266 = vmatprep.subr.mxu0 0.0
    %4267 = vmatpush1.xpose.msra.mxu0 0.0
    %4268 = vmatprep.subr.mxu0 0.0
    %4269 = vmatpush1.xpose.msra.mxu0 0.0
    %4270 = vmatprep.mubr.f32.mxu0 0.0
    %4271 = vmatmul.mubr.f32.gmra.mrb[0].mxu0 %v4202
    %v4272 = vpop.f32.mrb[0].mxu0
    %v4273 = vadd.f32 0.0, %v4272
    %v4274 = vpop.f32.mrb[0].mxu0
    %4275 = vdwg.mxu0
    %v4276 = vsel %vm196, %v4195, -inf
    %4277 = vmax.xlane.f32.xlu0 %v4276
    %v4278 = vpop.xlane.xlu0 %4277
    %v4279 = vsel %vm196, %v4273, -inf
    %4280 = vmax.xlane.f32.xlu0 %v4279
    %v4281 = vpop.xlane.xlu0 %4280
    %v4282 = vsub.f32 %v4195, %v4278
    %v4283 = vsub.f32 %v4273, %v4281
    %v4284 = vmul.f32 %v4282, 1.442695
    %v4285 = vpow.pop %v4284
    %v4286 = vmul.f32 %v4283, 1.442695
    %v4287 = vpow.pop %v4286
    %v4288 = vsel %vm196, %v4285, 0.0
    %4289 = vadd.xlane.f32.xlu0 %v4288
    %v4290 = vpop.xlane.xlu0 %4289
    %v4291 = vsel %vm196, %v4287, 0.0
    %4292 = vadd.xlane.f32.xlu0 %v4291
    %v4293 = vpop.xlane.xlu0 %4292
    %v4294 = vrcp.pop %v4290
    %v4295 = vrcp.pop %v4293
    %v4296 = vmul.f32 %v4285, %v4294
    %v4297 = vmul.f32 %v4287, %v4295
    %4298 = vrot.lane.b32.xlu0 %v4110, 64
    %v4299 = vpop.permute.xlu0 %4298
    %v4302 = vsel %vm196, %v4296, 0
    %4304 = vmatprep.subr.mxu0 0.0
    %4305 = vmatpush1.msra.mxu0 %v4299
    %4306 = vmatprep.subr.mxu0 0.0
    %4307 = vmatpush1.msra.mxu0 0.0
    %4308 = vmatprep.subr.mxu0 0.0
    %4309 = vmatpush1.msra.mxu0 0.0
    %4310 = vmatprep.subr.mxu0 0.0
    %4311 = vmatpush1.msra.mxu0 0.0
    %4312 = vmatprep.subr.mxu0 0.0
    %4313 = vmatpush1.msra.mxu0 0.0
    %4314 = vmatprep.subr.mxu0 0.0
    %4315 = vmatpush1.msra.mxu0 0.0
    %4316 = vmatprep.subr.mxu0 0.0
    %4317 = vmatpush1.msra.mxu0 0.0
    %4318 = vmatprep.subr.mxu0 0.0
    %4319 = vmatpush1.msra.mxu0 0.0
    %4320 = vmatprep.subr.mxu0 0.0
    %4321 = vmatpush1.msra.mxu0 0.0
    %4322 = vmatprep.subr.mxu0 0.0
    %4323 = vmatpush1.msra.mxu0 0.0
    %4324 = vmatprep.subr.mxu0 0.0
    %4325 = vmatpush1.msra.mxu0 0.0
    %4326 = vmatprep.subr.mxu0 0.0
    %4327 = vmatpush1.msra.mxu0 0.0
    %4328 = vmatprep.subr.mxu0 0.0
    %4329 = vmatpush1.msra.mxu0 0.0
    %4330 = vmatprep.subr.mxu0 0.0
    %4331 = vmatpush1.msra.mxu0 0.0
    %4332 = vmatprep.subr.mxu0 0.0
    %4333 = vmatpush1.msra.mxu0 0.0
    %4334 = vmatprep.subr.mxu0 0.0
    %4335 = vmatpush1.msra.mxu0 0.0
    %4336 = vmatprep.subr.mxu0 0.0
    %4337 = vmatpush1.msra.mxu0 0.0
    %4338 = vmatprep.subr.mxu0 0.0
    %4339 = vmatpush1.msra.mxu0 0.0
    %4340 = vmatprep.subr.mxu0 0.0
    %4341 = vmatpush1.msra.mxu0 0.0
    %4342 = vmatprep.subr.mxu0 0.0
    %4343 = vmatpush1.msra.mxu0 0.0
    %4344 = vmatprep.subr.mxu0 0.0
    %4345 = vmatpush1.msra.mxu0 0.0
    %4346 = vmatprep.subr.mxu0 0.0
    %4347 = vmatpush1.msra.mxu0 0.0
    %4348 = vmatprep.subr.mxu0 0.0
    %4349 = vmatpush1.msra.mxu0 0.0
    %4350 = vmatprep.subr.mxu0 0.0
    %4351 = vmatpush1.msra.mxu0 0.0
    %4352 = vmatprep.subr.mxu0 0.0
    %4353 = vmatpush1.msra.mxu0 0.0
    %4354 = vmatprep.subr.mxu0 0.0
    %4355 = vmatpush1.msra.mxu0 0.0
    %4356 = vmatprep.subr.mxu0 0.0
    %4357 = vmatpush1.msra.mxu0 0.0
    %4358 = vmatprep.subr.mxu0 0.0
    %4359 = vmatpush1.msra.mxu0 0.0
    %4360 = vmatprep.subr.mxu0 0.0
    %4361 = vmatpush1.msra.mxu0 0.0
    %4362 = vmatprep.subr.mxu0 0.0
    %4363 = vmatpush1.msra.mxu0 0.0
    %4364 = vmatprep.subr.mxu0 0.0
    %4365 = vmatpush1.msra.mxu0 0.0
    %4366 = vmatprep.subr.mxu0 0.0
    %4367 = vmatpush1.msra.mxu0 0.0
    %4368 = vmatprep.mubr.f32.mxu0 0.0
    %4369 = vmatmul.mubr.f32.gmra.mrb[0].mxu0 %v4302
    %v4370 = vpop.f32.mrb[0].mxu0
    %v4371 = vadd.f32 0.0, %v4370
    %v4372 = vpop.f32.mrb[0].mxu0
    %4373 = vdwg.mxu0
    %4374 = vrot.lane.b32.xlu0 %v4115, 64
    %v4375 = vpop.permute.xlu0 %4374
    %v4378 = vsel %vm196, %v4297, 0
    %4380 = vmatprep.subr.mxu0 0.0
    %4381 = vmatpush1.msra.mxu0 %v4375
    %4382 = vmatprep.subr.mxu0 0.0
    %4383 = vmatpush1.msra.mxu0 0.0
    %4384 = vmatprep.subr.mxu0 0.0
    %4385 = vmatpush1.msra.mxu0 0.0
    %4386 = vmatprep.subr.mxu0 0.0
    %4387 = vmatpush1.msra.mxu0 0.0
    %4388 = vmatprep.subr.mxu0 0.0
    %4389 = vmatpush1.msra.mxu0 0.0
    %4390 = vmatprep.subr.mxu0 0.0
    %4391 = vmatpush1.msra.mxu0 0.0
    %4392 = vmatprep.subr.mxu0 0.0
    %4393 = vmatpush1.msra.mxu0 0.0
    %4394 = vmatprep.subr.mxu0 0.0
    %4395 = vmatpush1.msra.mxu0 0.0
    %4396 = vmatprep.subr.mxu0 0.0
    %4397 = vmatpush1.msra.mxu0 0.0
    %4398 = vmatprep.subr.mxu0 0.0
    %4399 = vmatpush1.msra.mxu0 0.0
    %4400 = vmatprep.subr.mxu0 0.0
    %4401 = vmatpush1.msra.mxu0 0.0
    %4402 = vmatprep.subr.mxu0 0.0
    %4403 = vmatpush1.msra.mxu0 0.0
    %4404 = vmatprep.subr.mxu0 0.0
    %4405 = vmatpush1.msra.mxu0 0.0
    %4406 = vmatprep.subr.mxu0 0.0
    %4407 = vmatpush1.msra.mxu0 0.0
    %4408 = vmatprep.subr.mxu0 0.0
    %4409 = vmatpush1.msra.mxu0 0.0
    %4410 = vmatprep.subr.mxu0 0.0
    %4411 = vmatpush1.msra.mxu0 0.0
    %4412 = vmatprep.subr.mxu0 0.0
    %4413 = vmatpush1.msra.mxu0 0.0
    %4414 = vmatprep.subr.mxu0 0.0
    %4415 = vmatpush1.msra.mxu0 0.0
    %4416 = vmatprep.subr.mxu0 0.0
    %4417 = vmatpush1.msra.mxu0 0.0
    %4418 = vmatprep.subr.mxu0 0.0
    %4419 = vmatpush1.msra.mxu0 0.0
    %4420 = vmatprep.subr.mxu0 0.0
    %4421 = vmatpush1.msra.mxu0 0.0
    %4422 = vmatprep.subr.mxu0 0.0
    %4423 = vmatpush1.msra.mxu0 0.0
    %4424 = vmatprep.subr.mxu0 0.0
    %4425 = vmatpush1.msra.mxu0 0.0
    %4426 = vmatprep.subr.mxu0 0.0
    %4427 = vmatpush1.msra.mxu0 0.0
    %4428 = vmatprep.subr.mxu0 0.0
    %4429 = vmatpush1.msra.mxu0 0.0
    %4430 = vmatprep.subr.mxu0 0.0
    %4431 = vmatpush1.msra.mxu0 0.0
    %4432 = vmatprep.subr.mxu0 0.0
    %4433 = vmatpush1.msra.mxu0 0.0
    %4434 = vmatprep.subr.mxu0 0.0
    %4435 = vmatpush1.msra.mxu0 0.0
    %4436 = vmatprep.subr.mxu0 0.0
    %4437 = vmatpush1.msra.mxu0 0.0
    %4438 = vmatprep.subr.mxu0 0.0
    %4439 = vmatpush1.msra.mxu0 0.0
    %4440 = vmatprep.subr.mxu0 0.0
    %4441 = vmatpush1.msra.mxu0 0.0
    %4442 = vmatprep.subr.mxu0 0.0
    %4443 = vmatpush1.msra.mxu0 0.0
    %4444 = vmatprep.mubr.f32.mxu0 0.0
    %4445 = vmatmul.mubr.f32.gmra.mrb[0].mxu0 %v4378
    %v4446 = vpop.f32.mrb[0].mxu0
    %v4447 = vadd.f32 0.0, %v4446
    %v4448 = vpop.f32.mrb[0].mxu0
    %4449 = vdwg.mxu0
    %4450 = vrot.lane.b32.xlu0 %v4118, 120
    %v4451 = vpop.permute.xlu0 %4450
    %4452 = vrot.lane.b32.xlu0 %v4110, 88
    %v4453 = vpop.permute.xlu0 %4452
    %v4454 = vsel %vm196, %v4451, 0
    %v4456 = vsel %vm196, %v4453, 0
    %4458 = vmatprep.subr.mxu0 0.0
    %4459 = vmatpush1.xpose.msra.mxu0 %v4456
    %4460 = vmatprep.subr.mxu0 0.0
    %4461 = vmatpush1.xpose.msra.mxu0 0.0
    %4462 = vmatprep.subr.mxu0 0.0
    %4463 = vmatpush1.xpose.msra.mxu0 0.0
    %4464 = vmatprep.subr.mxu0 0.0
    %4465 = vmatpush1.xpose.msra.mxu0 0.0
    %4466 = vmatprep.subr.mxu0 0.0
    %4467 = vmatpush1.xpose.msra.mxu0 0.0
    %4468 = vmatprep.subr.mxu0 0.0
    %4469 = vmatpush1.xpose.msra.mxu0 0.0
    %4470 = vmatprep.subr.mxu0 0.0
    %4471 = vmatpush1.xpose.msra.mxu0 0.0
    %4472 = vmatprep.subr.mxu0 0.0
    %4473 = vmatpush1.xpose.msra.mxu0 0.0
    %4474 = vmatprep.subr.mxu0 0.0
    %4475 = vmatpush1.xpose.msra.mxu0 0.0
    %4476 = vmatprep.subr.mxu0 0.0
    %4477 = vmatpush1.xpose.msra.mxu0 0.0
    %4478 = vmatprep.subr.mxu0 0.0
    %4479 = vmatpush1.xpose.msra.mxu0 0.0
    %4480 = vmatprep.subr.mxu0 0.0
    %4481 = vmatpush1.xpose.msra.mxu0 0.0
    %4482 = vmatprep.subr.mxu0 0.0
    %4483 = vmatpush1.xpose.msra.mxu0 0.0
    %4484 = vmatprep.subr.mxu0 0.0
    %4485 = vmatpush1.xpose.msra.mxu0 0.0
    %4486 = vmatprep.subr.mxu0 0.0
    %4487 = vmatpush1.xpose.msra.mxu0 0.0
    %4488 = vmatprep.subr.mxu0 0.0
    %4489 = vmatpush1.xpose.msra.mxu0 0.0
    %4490 = vmatprep.subr.mxu0 0.0
    %4491 = vmatpush1.xpose.msra.mxu0 0.0
    %4492 = vmatprep.subr.mxu0 0.0
    %4493 = vmatpush1.xpose.msra.mxu0 0.0
    %4494 = vmatprep.subr.mxu0 0.0
    %4495 = vmatpush1.xpose.msra.mxu0 0.0
    %4496 = vmatprep.subr.mxu0 0.0
    %4497 = vmatpush1.xpose.msra.mxu0 0.0
    %4498 = vmatprep.subr.mxu0 0.0
    %4499 = vmatpush1.xpose.msra.mxu0 0.0
    %4500 = vmatprep.subr.mxu0 0.0
    %4501 = vmatpush1.xpose.msra.mxu0 0.0
    %4502 = vmatprep.subr.mxu0 0.0
    %4503 = vmatpush1.xpose.msra.mxu0 0.0
    %4504 = vmatprep.subr.mxu0 0.0
    %4505 = vmatpush1.xpose.msra.mxu0 0.0
    %4506 = vmatprep.subr.mxu0 0.0
    %4507 = vmatpush1.xpose.msra.mxu0 0.0
    %4508 = vmatprep.subr.mxu0 0.0
    %4509 = vmatpush1.xpose.msra.mxu0 0.0
    %4510 = vmatprep.subr.mxu0 0.0
    %4511 = vmatpush1.xpose.msra.mxu0 0.0
    %4512 = vmatprep.subr.mxu0 0.0
    %4513 = vmatpush1.xpose.msra.mxu0 0.0
    %4514 = vmatprep.subr.mxu0 0.0
    %4515 = vmatpush1.xpose.msra.mxu0 0.0
    %4516 = vmatprep.subr.mxu0 0.0
    %4517 = vmatpush1.xpose.msra.mxu0 0.0
    %4518 = vmatprep.subr.mxu0 0.0
    %4519 = vmatpush1.xpose.msra.mxu0 0.0
    %4520 = vmatprep.subr.mxu0 0.0
    %4521 = vmatpush1.xpose.msra.mxu0 0.0
    %4522 = vmatprep.mubr.f32.mxu0 0.0
    %4523 = vmatmul.mubr.f32.gmra.mrb[0].mxu0 %v4454
    %v4524 = vpop.f32.mrb[0].mxu0
    %v4525 = vadd.f32 0.0, %v4524
    %v4526 = vpop.f32.mrb[0].mxu0
    %4527 = vdwg.mxu0
    %4528 = vrot.lane.b32.xlu0 %v4119, 120
    %v4529 = vpop.permute.xlu0 %4528
    %4530 = vrot.lane.b32.xlu0 %v4115, 88
    %v4531 = vpop.permute.xlu0 %4530
    %v4532 = vsel %vm196, %v4529, 0
    %v4534 = vsel %vm196, %v4531, 0
    %4536 = vmatprep.subr.mxu0 0.0
    %4537 = vmatpush1.xpose.msra.mxu0 %v4534
    %4538 = vmatprep.subr.mxu0 0.0
    %4539 = vmatpush1.xpose.msra.mxu0 0.0
    %4540 = vmatprep.subr.mxu0 0.0
    %4541 = vmatpush1.xpose.msra.mxu0 0.0
    %4542 = vmatprep.subr.mxu0 0.0
    %4543 = vmatpush1.xpose.msra.mxu0 0.0
    %4544 = vmatprep.subr.mxu0 0.0
    %4545 = vmatpush1.xpose.msra.mxu0 0.0
    %4546 = vmatprep.subr.mxu0 0.0
    %4547 = vmatpush1.xpose.msra.mxu0 0.0
    %4548 = vmatprep.subr.mxu0 0.0
    %4549 = vmatpush1.xpose.msra.mxu0 0.0
    %4550 = vmatprep.subr.mxu0 0.0
    %4551 = vmatpush1.xpose.msra.mxu0 0.0
    %4552 = vmatprep.subr.mxu0 0.0
    %4553 = vmatpush1.xpose.msra.mxu0 0.0
    %4554 = vmatprep.subr.mxu0 0.0
    %4555 = vmatpush1.xpose.msra.mxu0 0.0
    %4556 = vmatprep.subr.mxu0 0.0
    %4557 = vmatpush1.xpose.msra.mxu0 0.0
    %4558 = vmatprep.subr.mxu0 0.0
    %4559 = vmatpush1.xpose.msra.mxu0 0.0
    %4560 = vmatprep.subr.mxu0 0.0
    %4561 = vmatpush1.xpose.msra.mxu0 0.0
    %4562 = vmatprep.subr.mxu0 0.0
    %4563 = vmatpush1.xpose.msra.mxu0 0.0
    %4564 = vmatprep.subr.mxu0 0.0
    %4565 = vmatpush1.xpose.msra.mxu0 0.0
    %4566 = vmatprep.subr.mxu0 0.0
    %4567 = vmatpush1.xpose.msra.mxu0 0.0
    %4568 = vmatprep.subr.mxu0 0.0
    %4569 = vmatpush1.xpose.msra.mxu0 0.0
    %4570 = vmatprep.subr.mxu0 0.0
    %4571 = vmatpush1.xpose.msra.mxu0 0.0
    %4572 = vmatprep.subr.mxu0 0.0
    %4573 = vmatpush1.xpose.msra.mxu0 0.0
    %4574 = vmatprep.subr.mxu0 0.0
    %4575 = vmatpush1.xpose.msra.mxu0 0.0
    %4576 = vmatprep.subr.mxu0 0.0
    %4577 = vmatpush1.xpose.msra.mxu0 0.0
    %4578 = vmatprep.subr.mxu0 0.0
    %4579 = vmatpush1.xpose.msra.mxu0 0.0
    %4580 = vmatprep.subr.mxu0 0.0
    %4581 = vmatpush1.xpose.msra.mxu0 0.0
    %4582 = vmatprep.subr.mxu0 0.0
    %4583 = vmatpush1.xpose.msra.mxu0 0.0
    %4584 = vmatprep.subr.mxu0 0.0
    %4585 = vmatpush1.xpose.msra.mxu0 0.0
    %4586 = vmatprep.subr.mxu0 0.0
    %4587 = vmatpush1.xpose.msra.mxu0 0.0
    %4588 = vmatprep.subr.mxu0 0.0
    %4589 = vmatpush1.xpose.msra.mxu0 0.0
    %4590 = vmatprep.subr.mxu0 0.0
    %4591 = vmatpush1.xpose.msra.mxu0 0.0
    %4592 = vmatprep.subr.mxu0 0.0
    %4593 = vmatpush1.xpose.msra.mxu0 0.0
    %4594 = vmatprep.subr.mxu0 0.0
    %4595 = vmatpush1.xpose.msra.mxu0 0.0
    %4596 = vmatprep.subr.mxu0 0.0
    %4597 = vmatpush1.xpose.msra.mxu0 0.0
    %4598 = vmatprep.subr.mxu0 0.0
    %4599 = vmatpush1.xpose.msra.mxu0 0.0
    %4600 = vmatprep.mubr.f32.mxu0 0.0
    %4601 = vmatmul.mubr.f32.gmra.mrb[0].mxu0 %v4532
    %v4602 = vpop.f32.mrb[0].mxu0
    %v4603 = vadd.f32 0.0, %v4602
    %v4604 = vpop.f32.mrb[0].mxu0
    %4605 = vdwg.mxu0
    %v4606 = vsel %vm196, %v4525, -inf
    %4607 = vmax.xlane.f32.xlu0 %v4606
    %v4608 = vpop.xlane.xlu0 %4607
    %v4609 = vsel %vm196, %v4603, -inf
    %4610 = vmax.xlane.f32.xlu0 %v4609
    %v4611 = vpop.xlane.xlu0 %4610
    %v4612 = vsub.f32 %v4525, %v4608
    %v4613 = vsub.f32 %v4603, %v4611
    %v4614 = vmul.f32 %v4612, 1.442695
    %v4615 = vpow.pop %v4614
    %v4616 = vmul.f32 %v4613, 1.442695
    %v4617 = vpow.pop %v4616
    %v4618 = vsel %vm196, %v4615, 0.0
    %4619 = vadd.xlane.f32.xlu0 %v4618
    %v4620 = vpop.xlane.xlu0 %4619
    %v4621 = vsel %vm196, %v4617, 0.0
    %4622 = vadd.xlane.f32.xlu0 %v4621
    %v4623 = vpop.xlane.xlu0 %4622
    %v4624 = vrcp.pop %v4620
    %v4625 = vrcp.pop %v4623
    %v4626 = vmul.f32 %v4615, %v4624
    %v4627 = vmul.f32 %v4617, %v4625
    %4628 = vrot.lane.b32.xlu0 %v4110, 56
    %v4629 = vpop.permute.xlu0 %4628
    %v4632 = vsel %vm196, %v4626, 0
    %4634 = vmatprep.subr.mxu0 0.0
    %4635 = vmatpush1.msra.mxu0 %v4629
    %4636 = vmatprep.subr.mxu0 0.0
    %4637 = vmatpush1.msra.mxu0 0.0
    %4638 = vmatprep.subr.mxu0 0.0
    %4639 = vmatpush1.msra.mxu0 0.0
    %4640 = vmatprep.subr.mxu0 0.0
    %4641 = vmatpush1.msra.mxu0 0.0
    %4642 = vmatprep.subr.mxu0 0.0
    %4643 = vmatpush1.msra.mxu0 0.0
    %4644 = vmatprep.subr.mxu0 0.0
    %4645 = vmatpush1.msra.mxu0 0.0
    %4646 = vmatprep.subr.mxu0 0.0
    %4647 = vmatpush1.msra.mxu0 0.0
    %4648 = vmatprep.subr.mxu0 0.0
    %4649 = vmatpush1.msra.mxu0 0.0
    %4650 = vmatprep.subr.mxu0 0.0
    %4651 = vmatpush1.msra.mxu0 0.0
    %4652 = vmatprep.subr.mxu0 0.0
    %4653 = vmatpush1.msra.mxu0 0.0
    %4654 = vmatprep.subr.mxu0 0.0
    %4655 = vmatpush1.msra.mxu0 0.0
    %4656 = vmatprep.subr.mxu0 0.0
    %4657 = vmatpush1.msra.mxu0 0.0
    %4658 = vmatprep.subr.mxu0 0.0
    %4659 = vmatpush1.msra.mxu0 0.0
    %4660 = vmatprep.subr.mxu0 0.0
    %4661 = vmatpush1.msra.mxu0 0.0
    %4662 = vmatprep.subr.mxu0 0.0
    %4663 = vmatpush1.msra.mxu0 0.0
    %4664 = vmatprep.subr.mxu0 0.0
    %4665 = vmatpush1.msra.mxu0 0.0
    %4666 = vmatprep.subr.mxu0 0.0
    %4667 = vmatpush1.msra.mxu0 0.0
    %4668 = vmatprep.subr.mxu0 0.0
    %4669 = vmatpush1.msra.mxu0 0.0
    %4670 = vmatprep.subr.mxu0 0.0
    %4671 = vmatpush1.msra.mxu0 0.0
    %4672 = vmatprep.subr.mxu0 0.0
    %4673 = vmatpush1.msra.mxu0 0.0
    %4674 = vmatprep.subr.mxu0 0.0
    %4675 = vmatpush1.msra.mxu0 0.0
    %4676 = vmatprep.subr.mxu0 0.0
    %4677 = vmatpush1.msra.mxu0 0.0
    %4678 = vmatprep.subr.mxu0 0.0
    %4679 = vmatpush1.msra.mxu0 0.0
    %4680 = vmatprep.subr.mxu0 0.0
    %4681 = vmatpush1.msra.mxu0 0.0
    %4682 = vmatprep.subr.mxu0 0.0
    %4683 = vmatpush1.msra.mxu0 0.0
    %4684 = vmatprep.subr.mxu0 0.0
    %4685 = vmatpush1.msra.mxu0 0.0
    %4686 = vmatprep.subr.mxu0 0.0
    %4687 = vmatpush1.msra.mxu0 0.0
    %4688 = vmatprep.subr.mxu0 0.0
    %4689 = vmatpush1.msra.mxu0 0.0
    %4690 = vmatprep.subr.mxu0 0.0
    %4691 = vmatpush1.msra.mxu0 0.0
    %4692 = vmatprep.subr.mxu0 0.0
    %4693 = vmatpush1.msra.mxu0 0.0
    %4694 = vmatprep.subr.mxu0 0.0
    %4695 = vmatpush1.msra.mxu0 0.0
    %4696 = vmatprep.subr.mxu0 0.0
    %4697 = vmatpush1.msra.mxu0 0.0
    %4698 = vmatprep.mubr.f32.mxu0 0.0
    %4699 = vmatmul.mubr.f32.gmra.mrb[0].mxu0 %v4632
    %v4700 = vpop.f32.mrb[0].mxu0
    %v4701 = vadd.f32 0.0, %v4700
    %v4702 = vpop.f32.mrb[0].mxu0
    %4703 = vdwg.mxu0
    %4704 = vrot.lane.b32.xlu0 %v4115, 56
    %v4705 = vpop.permute.xlu0 %4704
    %v4708 = vsel %vm196, %v4627, 0
    %4710 = vmatprep.subr.mxu0 0.0
    %4711 = vmatpush1.msra.mxu0 %v4705
    %4712 = vmatprep.subr.mxu0 0.0
    %4713 = vmatpush1.msra.mxu0 0.0
    %4714 = vmatprep.subr.mxu0 0.0
    %4715 = vmatpush1.msra.mxu0 0.0
    %4716 = vmatprep.subr.mxu0 0.0
    %4717 = vmatpush1.msra.mxu0 0.0
    %4718 = vmatprep.subr.mxu0 0.0
    %4719 = vmatpush1.msra.mxu0 0.0
    %4720 = vmatprep.subr.mxu0 0.0
    %4721 = vmatpush1.msra.mxu0 0.0
    %4722 = vmatprep.subr.mxu0 0.0
    %4723 = vmatpush1.msra.mxu0 0.0
    %4724 = vmatprep.subr.mxu0 0.0
    %4725 = vmatpush1.msra.mxu0 0.0
    %4726 = vmatprep.subr.mxu0 0.0
    %4727 = vmatpush1.msra.mxu0 0.0
    %4728 = vmatprep.subr.mxu0 0.0
    %4729 = vmatpush1.msra.mxu0 0.0
    %4730 = vmatprep.subr.mxu0 0.0
    %4731 = vmatpush1.msra.mxu0 0.0
    %4732 = vmatprep.subr.mxu0 0.0
    %4733 = vmatpush1.msra.mxu0 0.0
    %4734 = vmatprep.subr.mxu0 0.0
    %4735 = vmatpush1.msra.mxu0 0.0
    %4736 = vmatprep.subr.mxu0 0.0
    %4737 = vmatpush1.msra.mxu0 0.0
    %4738 = vmatprep.subr.mxu0 0.0
    %4739 = vmatpush1.msra.mxu0 0.0
    %4740 = vmatprep.subr.mxu0 0.0
    %4741 = vmatpush1.msra.mxu0 0.0
    %4742 = vmatprep.subr.mxu0 0.0
    %4743 = vmatpush1.msra.mxu0 0.0
    %4744 = vmatprep.subr.mxu0 0.0
    %4745 = vmatpush1.msra.mxu0 0.0
    %4746 = vmatprep.subr.mxu0 0.0
    %4747 = vmatpush1.msra.mxu0 0.0
    %4748 = vmatprep.subr.mxu0 0.0
    %4749 = vmatpush1.msra.mxu0 0.0
    %4750 = vmatprep.subr.mxu0 0.0
    %4751 = vmatpush1.msra.mxu0 0.0
    %4752 = vmatprep.subr.mxu0 0.0
    %4753 = vmatpush1.msra.mxu0 0.0
    %4754 = vmatprep.subr.mxu0 0.0
    %4755 = vmatpush1.msra.mxu0 0.0
    %4756 = vmatprep.subr.mxu0 0.0
    %4757 = vmatpush1.msra.mxu0 0.0
    %4758 = vmatprep.subr.mxu0 0.0
    %4759 = vmatpush1.msra.mxu0 0.0
    %4760 = vmatprep.subr.mxu0 0.0
    %4761 = vmatpush1.msra.mxu0 0.0
    %4762 = vmatprep.subr.mxu0 0.0
    %4763 = vmatpush1.msra.mxu0 0.0
    %4764 = vmatprep.subr.mxu0 0.0
    %4765 = vmatpush1.msra.mxu0 0.0
    %4766 = vmatprep.subr.mxu0 0.0
    %4767 = vmatpush1.msra.mxu0 0.0
    %4768 = vmatprep.subr.mxu0 0.0
    %4769 = vmatpush1.msra.mxu0 0.0
    %4770 = vmatprep.subr.mxu0 0.0
    %4771 = vmatpush1.msra.mxu0 0.0
    %4772 = vmatprep.subr.mxu0 0.0
    %4773 = vmatpush1.msra.mxu0 0.0
    %4774 = vmatprep.mubr.f32.mxu0 0.0
    %4775 = vmatmul.mubr.f32.gmra.mrb[0].mxu0 %v4708
    %v4776 = vpop.f32.mrb[0].mxu0
    %v4777 = vadd.f32 0.0, %v4776
    %v4778 = vpop.f32.mrb[0].mxu0
    %4779 = vdwg.mxu0
    %v4781 = vsel %vm196, %v4701, 0
    %v4784 = vsel %vm196, %v4777, 0
    %4786 = vmatprep.subr.mxu0 0.0
    %4787 = vmatpush1.msra.mxu0 %v4026
    %4788 = vmatprep.subr.mxu0 0.0
    %4789 = vmatpush1.msra.mxu0 0.0
    %4790 = vmatprep.subr.mxu0 0.0
    %4791 = vmatpush1.msra.mxu0 0.0
    %4792 = vmatprep.subr.mxu0 0.0
    %4793 = vmatpush1.msra.mxu0 0.0
    %4794 = vmatprep.subr.mxu0 0.0
    %4795 = vmatpush1.msra.mxu0 0.0
    %4796 = vmatprep.subr.mxu0 0.0
    %4797 = vmatpush1.msra.mxu0 0.0
    %4798 = vmatprep.subr.mxu0 0.0
    %4799 = vmatpush1.msra.mxu0 0.0
    %4800 = vmatprep.subr.mxu0 0.0
    %4801 = vmatpush1.msra.mxu0 0.0
    %4802 = vmatprep.subr.mxu0 0.0
    %4803 = vmatpush1.msra.mxu0 0.0
    %4804 = vmatprep.subr.mxu0 0.0
    %4805 = vmatpush1.msra.mxu0 0.0
    %4806 = vmatprep.subr.mxu0 0.0
    %4807 = vmatpush1.msra.mxu0 0.0
    %4808 = vmatprep.subr.mxu0 0.0
    %4809 = vmatpush1.msra.mxu0 0.0
    %4810 = vmatprep.subr.mxu0 0.0
    %4811 = vmatpush1.msra.mxu0 0.0
    %4812 = vmatprep.subr.mxu0 0.0
    %4813 = vmatpush1.msra.mxu0 0.0
    %4814 = vmatprep.subr.mxu0 0.0
    %4815 = vmatpush1.msra.mxu0 0.0
    %4816 = vmatprep.subr.mxu0 0.0
    %4817 = vmatpush1.msra.mxu0 0.0
    %4818 = vmatprep.subr.mxu0 0.0
    %4819 = vmatpush1.msra.mxu0 0.0
    %4820 = vmatprep.subr.mxu0 0.0
    %4821 = vmatpush1.msra.mxu0 0.0
    %4822 = vmatprep.subr.mxu0 0.0
    %4823 = vmatpush1.msra.mxu0 0.0
    %4824 = vmatprep.subr.mxu0 0.0
    %4825 = vmatpush1.msra.mxu0 0.0
    %4826 = vmatprep.subr.mxu0 0.0
    %4827 = vmatpush1.msra.mxu0 0.0
    %4828 = vmatprep.subr.mxu0 0.0
    %4829 = vmatpush1.msra.mxu0 0.0
    %4830 = vmatprep.subr.mxu0 0.0
    %4831 = vmatpush1.msra.mxu0 0.0
    %4832 = vmatprep.subr.mxu0 0.0
    %4833 = vmatpush1.msra.mxu0 0.0
    %4834 = vmatprep.subr.mxu0 0.0
    %4835 = vmatpush1.msra.mxu0 0.0
    %4836 = vmatprep.subr.mxu0 0.0
    %4837 = vmatpush1.msra.mxu0 0.0
    %4838 = vmatprep.subr.mxu0 0.0
    %4839 = vmatpush1.msra.mxu0 0.0
    %4840 = vmatprep.subr.mxu0 0.0
    %4841 = vmatpush1.msra.mxu0 0.0
    %4842 = vmatprep.subr.mxu0 0.0
    %4843 = vmatpush1.msra.mxu0 0.0
    %4844 = vmatprep.subr.mxu0 0.0
    %4845 = vmatpush1.msra.mxu0 0.0
    %4846 = vmatprep.subr.mxu0 0.0
    %4847 = vmatpush1.msra.mxu0 0.0
    %4848 = vmatprep.subr.mxu0 0.0
    %4849 = vmatpush1.msra.mxu0 0.0
    %4850 = vmatprep.mubr.f32.mxu0 0.0
    %4851 = vmatmul.mubr.f32.gmra.mrb[0].mxu0 %v4781
    %v4852 = vpop.f32.mrb[0].mxu0
    %v4853 = vadd.f32 0.0, %v4852
    %v4854 = vpop.f32.mrb[0].mxu0
    %4855 = vmatprep.mubr.f32.mxu0 0.0
    %4856 = vmatmul.mubr.f32.gmra.mrb[0].mxu0 %v4784
    %v4857 = vpop.f32.mrb[0].mxu0
    %v4858 = vadd.f32 0.0, %v4857
    %v4859 = vpop.f32.mrb[0].mxu0
    %4860 = vdwg.mxu0
    %v4862 = vsel %vm196, %v4371, 0
    %v4865 = vsel %vm196, %v4447, 0
    %4867 = vmatprep.subr.mxu0 0.0
    %4868 = vmatpush1.msra.mxu0 %v4025
    %4869 = vmatprep.subr.mxu0 0.0
    %4870 = vmatpush1.msra.mxu0 0.0
    %4871 = vmatprep.subr.mxu0 0.0
    %4872 = vmatpush1.msra.mxu0 0.0
    %4873 = vmatprep.subr.mxu0 0.0
    %4874 = vmatpush1.msra.mxu0 0.0
    %4875 = vmatprep.subr.mxu0 0.0
    %4876 = vmatpush1.msra.mxu0 0.0
    %4877 = vmatprep.subr.mxu0 0.0
    %4878 = vmatpush1.msra.mxu0 0.0
    %4879 = vmatprep.subr.mxu0 0.0
    %4880 = vmatpush1.msra.mxu0 0.0
    %4881 = vmatprep.subr.mxu0 0.0
    %4882 = vmatpush1.msra.mxu0 0.0
    %4883 = vmatprep.subr.mxu0 0.0
    %4884 = vmatpush1.msra.mxu0 0.0
    %4885 = vmatprep.subr.mxu0 0.0
    %4886 = vmatpush1.msra.mxu0 0.0
    %4887 = vmatprep.subr.mxu0 0.0
    %4888 = vmatpush1.msra.mxu0 0.0
    %4889 = vmatprep.subr.mxu0 0.0
    %4890 = vmatpush1.msra.mxu0 0.0
    %4891 = vmatprep.subr.mxu0 0.0
    %4892 = vmatpush1.msra.mxu0 0.0
    %4893 = vmatprep.subr.mxu0 0.0
    %4894 = vmatpush1.msra.mxu0 0.0
    %4895 = vmatprep.subr.mxu0 0.0
    %4896 = vmatpush1.msra.mxu0 0.0
    %4897 = vmatprep.subr.mxu0 0.0
    %4898 = vmatpush1.msra.mxu0 0.0
    %4899 = vmatprep.subr.mxu0 0.0
    %4900 = vmatpush1.msra.mxu0 0.0
    %4901 = vmatprep.subr.mxu0 0.0
    %4902 = vmatpush1.msra.mxu0 0.0
    %4903 = vmatprep.subr.mxu0 0.0
    %4904 = vmatpush1.msra.mxu0 0.0
    %4905 = vmatprep.subr.mxu0 0.0
    %4906 = vmatpush1.msra.mxu0 0.0
    %4907 = vmatprep.subr.mxu0 0.0
    %4908 = vmatpush1.msra.mxu0 0.0
    %4909 = vmatprep.subr.mxu0 0.0
    %4910 = vmatpush1.msra.mxu0 0.0
    %4911 = vmatprep.subr.mxu0 0.0
    %4912 = vmatpush1.msra.mxu0 0.0
    %4913 = vmatprep.subr.mxu0 0.0
    %4914 = vmatpush1.msra.mxu0 0.0
    %4915 = vmatprep.subr.mxu0 0.0
    %4916 = vmatpush1.msra.mxu0 0.0
    %4917 = vmatprep.subr.mxu0 0.0
    %4918 = vmatpush1.msra.mxu0 0.0
    %4919 = vmatprep.subr.mxu0 0.0
    %4920 = vmatpush1.msra.mxu0 0.0
    %4921 = vmatprep.subr.mxu0 0.0
    %4922 = vmatpush1.msra.mxu0 0.0
    %4923 = vmatprep.subr.mxu0 0.0
    %4924 = vmatpush1.msra.mxu0 0.0
    %4925 = vmatprep.subr.mxu0 0.0
    %4926 = vmatpush1.msra.mxu0 0.0
    %4927 = vmatprep.subr.mxu0 0.0
    %4928 = vmatpush1.msra.mxu0 0.0
    %4929 = vmatprep.subr.mxu0 0.0
    %4930 = vmatpush1.msra.mxu0 0.0
    %4931 = vmatprep.mubr.f32.mxu0 0.0
    %4932 = vmatmul.mubr.f32.gmra.mrb[0].mxu0 %v4862
    %v4933 = vpop.f32.mrb[0].mxu0
    %v4934 = vadd.f32 %v4853, %v4933
    %v4935 = vpop.f32.mrb[0].mxu0
    %4936 = vmatprep.mubr.f32.mxu0 0.0
    %4937 = vmatmul.mubr.f32.gmra.mrb[0].mxu0 %v4865
    %v4938 = vpop.f32.mrb[0].mxu0
    %v4939 = vadd.f32 %v4858, %v4938
    %v4940 = vpop.f32.mrb[0].mxu0
    %4941 = vdwg.mxu0
    %4942 = vrot.lane.b32.xlu0 %v4118, 112
    %v4943 = vpop.permute.xlu0 %4942
    %4944 = vrot.lane.b32.xlu0 %v4110, 80
    %v4945 = vpop.permute.xlu0 %4944
    %v4946 = vsel %vm196, %v4943, 0
    %v4948 = vsel %vm196, %v4945, 0
    %4950 = vmatprep.subr.mxu0 0.0
    %4951 = vmatpush1.xpose.msra.mxu0 %v4948
    %4952 = vmatprep.subr.mxu0 0.0
    %4953 = vmatpush1.xpose.msra.mxu0 0.0
    %4954 = vmatprep.subr.mxu0 0.0
    %4955 = vmatpush1.xpose.msra.mxu0 0.0
    %4956 = vmatprep.subr.mxu0 0.0
    %4957 = vmatpush1.xpose.msra.mxu0 0.0
    %4958 = vmatprep.subr.mxu0 0.0
    %4959 = vmatpush1.xpose.msra.mxu0 0.0
    %4960 = vmatprep.subr.mxu0 0.0
    %4961 = vmatpush1.xpose.msra.mxu0 0.0
    %4962 = vmatprep.subr.mxu0 0.0
    %4963 = vmatpush1.xpose.msra.mxu0 0.0
    %4964 = vmatprep.subr.mxu0 0.0
    %4965 = vmatpush1.xpose.msra.mxu0 0.0
    %4966 = vmatprep.subr.mxu0 0.0
    %4967 = vmatpush1.xpose.msra.mxu0 0.0
    %4968 = vmatprep.subr.mxu0 0.0
    %4969 = vmatpush1.xpose.msra.mxu0 0.0
    %4970 = vmatprep.subr.mxu0 0.0
    %4971 = vmatpush1.xpose.msra.mxu0 0.0
    %4972 = vmatprep.subr.mxu0 0.0
    %4973 = vmatpush1.xpose.msra.mxu0 0.0
    %4974 = vmatprep.subr.mxu0 0.0
    %4975 = vmatpush1.xpose.msra.mxu0 0.0
    %4976 = vmatprep.subr.mxu0 0.0
    %4977 = vmatpush1.xpose.msra.mxu0 0.0
    %4978 = vmatprep.subr.mxu0 0.0
    %4979 = vmatpush1.xpose.msra.mxu0 0.0
    %4980 = vmatprep.subr.mxu0 0.0
    %4981 = vmatpush1.xpose.msra.mxu0 0.0
    %4982 = vmatprep.subr.mxu0 0.0
    %4983 = vmatpush1.xpose.msra.mxu0 0.0
    %4984 = vmatprep.subr.mxu0 0.0
    %4985 = vmatpush1.xpose.msra.mxu0 0.0
    %4986 = vmatprep.subr.mxu0 0.0
    %4987 = vmatpush1.xpose.msra.mxu0 0.0
    %4988 = vmatprep.subr.mxu0 0.0
    %4989 = vmatpush1.xpose.msra.mxu0 0.0
    %4990 = vmatprep.subr.mxu0 0.0
    %4991 = vmatpush1.xpose.msra.mxu0 0.0
    %4992 = vmatprep.subr.mxu0 0.0
    %4993 = vmatpush1.xpose.msra.mxu0 0.0
    %4994 = vmatprep.subr.mxu0 0.0
    %4995 = vmatpush1.xpose.msra.mxu0 0.0
    %4996 = vmatprep.subr.mxu0 0.0
    %4997 = vmatpush1.xpose.msra.mxu0 0.0
    %4998 = vmatprep.subr.mxu0 0.0
    %4999 = vmatpush1.xpose.msra.mxu0 0.0
    %5000 = vmatprep.subr.mxu0 0.0
    %5001 = vmatpush1.xpose.msra.mxu0 0.0
    %5002 = vmatprep.subr.mxu0 0.0
    %5003 = vmatpush1.xpose.msra.mxu0 0.0
    %5004 = vmatprep.subr.mxu0 0.0
    %5005 = vmatpush1.xpose.msra.mxu0 0.0
    %5006 = vmatprep.subr.mxu0 0.0
    %5007 = vmatpush1.xpose.msra.mxu0 0.0
    %5008 = vmatprep.subr.mxu0 0.0
    %5009 = vmatpush1.xpose.msra.mxu0 0.0
    %5010 = vmatprep.subr.mxu0 0.0
    %5011 = vmatpush1.xpose.msra.mxu0 0.0
    %5012 = vmatprep.subr.mxu0 0.0
    %5013 = vmatpush1.xpose.msra.mxu0 0.0
    %5014 = vmatprep.mubr.f32.mxu0 0.0
    %5015 = vmatmul.mubr.f32.gmra.mrb[0].mxu0 %v4946
    %v5016 = vpop.f32.mrb[0].mxu0
    %v5017 = vadd.f32 0.0, %v5016
    %v5018 = vpop.f32.mrb[0].mxu0
    %5019 = vdwg.mxu0
    %5020 = vrot.lane.b32.xlu0 %v4119, 112
    %v5021 = vpop.permute.xlu0 %5020
    %5022 = vrot.lane.b32.xlu0 %v4115, 80
    %v5023 = vpop.permute.xlu0 %5022
    %v5024 = vsel %vm196, %v5021, 0
    %v5026 = vsel %vm196, %v5023, 0
    %5028 = vmatprep.subr.mxu0 0.0
    %5029 = vmatpush1.xpose.msra.mxu0 %v5026
    %5030 = vmatprep.subr.mxu0 0.0
    %5031 = vmatpush1.xpose.msra.mxu0 0.0
    %5032 = vmatprep.subr.mxu0 0.0
    %5033 = vmatpush1.xpose.msra.mxu0 0.0
    %5034 = vmatprep.subr.mxu0 0.0
    %5035 = vmatpush1.xpose.msra.mxu0 0.0
    %5036 = vmatprep.subr.mxu0 0.0
    %5037 = vmatpush1.xpose.msra.mxu0 0.0
    %5038 = vmatprep.subr.mxu0 0.0
    %5039 = vmatpush1.xpose.msra.mxu0 0.0
    %5040 = vmatprep.subr.mxu0 0.0
    %5041 = vmatpush1.xpose.msra.mxu0 0.0
    %5042 = vmatprep.subr.mxu0 0.0
    %5043 = vmatpush1.xpose.msra.mxu0 0.0
    %5044 = vmatprep.subr.mxu0 0.0
    %5045 = vmatpush1.xpose.msra.mxu0 0.0
    %5046 = vmatprep.subr.mxu0 0.0
    %5047 = vmatpush1.xpose.msra.mxu0 0.0
    %5048 = vmatprep.subr.mxu0 0.0
    %5049 = vmatpush1.xpose.msra.mxu0 0.0
    %5050 = vmatprep.subr.mxu0 0.0
    %5051 = vmatpush1.xpose.msra.mxu0 0.0
    %5052 = vmatprep.subr.mxu0 0.0
    %5053 = vmatpush1.xpose.msra.mxu0 0.0
    %5054 = vmatprep.subr.mxu0 0.0
    %5055 = vmatpush1.xpose.msra.mxu0 0.0
    %5056 = vmatprep.subr.mxu0 0.0
    %5057 = vmatpush1.xpose.msra.mxu0 0.0
    %5058 = vmatprep.subr.mxu0 0.0
    %5059 = vmatpush1.xpose.msra.mxu0 0.0
    %5060 = vmatprep.subr.mxu0 0.0
    %5061 = vmatpush1.xpose.msra.mxu0 0.0
    %5062 = vmatprep.subr.mxu0 0.0
    %5063 = vmatpush1.xpose.msra.mxu0 0.0
    %5064 = vmatprep.subr.mxu0 0.0
    %5065 = vmatpush1.xpose.msra.mxu0 0.0
    %5066 = vmatprep.subr.mxu0 0.0
    %5067 = vmatpush1.xpose.msra.mxu0 0.0
    %5068 = vmatprep.subr.mxu0 0.0
    %5069 = vmatpush1.xpose.msra.mxu0 0.0
    %5070 = vmatprep.subr.mxu0 0.0
    %5071 = vmatpush1.xpose.msra.mxu0 0.0
    %5072 = vmatprep.subr.mxu0 0.0
    %5073 = vmatpush1.xpose.msra.mxu0 0.0
    %5074 = vmatprep.subr.mxu0 0.0
    %5075 = vmatpush1.xpose.msra.mxu0 0.0
    %5076 = vmatprep.subr.mxu0 0.0
    %5077 = vmatpush1.xpose.msra.mxu0 0.0
    %5078 = vmatprep.subr.mxu0 0.0
    %5079 = vmatpush1.xpose.msra.mxu0 0.0
    %5080 = vmatprep.subr.mxu0 0.0
    %5081 = vmatpush1.xpose.msra.mxu0 0.0
    %5082 = vmatprep.subr.mxu0 0.0
    %5083 = vmatpush1.xpose.msra.mxu0 0.0
    %5084 = vmatprep.subr.mxu0 0.0
    %5085 = vmatpush1.xpose.msra.mxu0 0.0
    %5086 = vmatprep.subr.mxu0 0.0
    %5087 = vmatpush1.xpose.msra.mxu0 0.0
    %5088 = vmatprep.subr.mxu0 0.0
    %5089 = vmatpush1.xpose.msra.mxu0 0.0
    %5090 = vmatprep.subr.mxu0 0.0
    %5091 = vmatpush1.xpose.msra.mxu0 0.0
    %5092 = vmatprep.mubr.f32.mxu0 0.0
    %5093 = vmatmul.mubr.f32.gmra.mrb[0].mxu0 %v5024
    %v5094 = vpop.f32.mrb[0].mxu0
    %v5095 = vadd.f32 0.0, %v5094
    %v5096 = vpop.f32.mrb[0].mxu0
    %5097 = vdwg.mxu0
    %v5098 = vsel %vm196, %v5017, -inf
    %5099 = vmax.xlane.f32.xlu0 %v5098
    %v5100 = vpop.xlane.xlu0 %5099
    %v5101 = vsel %vm196, %v5095, -inf
    %5102 = vmax.xlane.f32.xlu0 %v5101
    %v5103 = vpop.xlane.xlu0 %5102
    %v5104 = vsub.f32 %v5017, %v5100
    %v5105 = vsub.f32 %v5095, %v5103
    %v5106 = vmul.f32 %v5104, 1.442695
    %v5107 = vpow.pop %v5106
    %v5108 = vmul.f32 %v5105, 1.442695
    %v5109 = vpow.pop %v5108
    %v5110 = vsel %vm196, %v5107, 0.0
    %5111 = vadd.xlane.f32.xlu0 %v5110
    %v5112 = vpop.xlane.xlu0 %5111
    %v5113 = vsel %vm196, %v5109, 0.0
    %5114 = vadd.xlane.f32.xlu0 %v5113
    %v5115 = vpop.xlane.xlu0 %5114
    %v5116 = vrcp.pop %v5112
    %v5117 = vrcp.pop %v5115
    %v5118 = vmul.f32 %v5107, %v5116
    %v5119 = vmul.f32 %v5109, %v5117
    %5120 = vrot.lane.b32.xlu0 %v4110, 48
    %v5121 = vpop.permute.xlu0 %5120
    %v5124 = vsel %vm196, %v5118, 0
    %5126 = vmatprep.subr.mxu0 0.0
    %5127 = vmatpush1.msra.mxu0 %v5121
    %5128 = vmatprep.subr.mxu0 0.0
    %5129 = vmatpush1.msra.mxu0 0.0
    %5130 = vmatprep.subr.mxu0 0.0
    %5131 = vmatpush1.msra.mxu0 0.0
    %5132 = vmatprep.subr.mxu0 0.0
    %5133 = vmatpush1.msra.mxu0 0.0
    %5134 = vmatprep.subr.mxu0 0.0
    %5135 = vmatpush1.msra.mxu0 0.0
    %5136 = vmatprep.subr.mxu0 0.0
    %5137 = vmatpush1.msra.mxu0 0.0
    %5138 = vmatprep.subr.mxu0 0.0
    %5139 = vmatpush1.msra.mxu0 0.0
    %5140 = vmatprep.subr.mxu0 0.0
    %5141 = vmatpush1.msra.mxu0 0.0
    %5142 = vmatprep.subr.mxu0 0.0
    %5143 = vmatpush1.msra.mxu0 0.0
    %5144 = vmatprep.subr.mxu0 0.0
    %5145 = vmatpush1.msra.mxu0 0.0
    %5146 = vmatprep.subr.mxu0 0.0
    %5147 = vmatpush1.msra.mxu0 0.0
    %5148 = vmatprep.subr.mxu0 0.0
    %5149 = vmatpush1.msra.mxu0 0.0
    %5150 = vmatprep.subr.mxu0 0.0
    %5151 = vmatpush1.msra.mxu0 0.0
    %5152 = vmatprep.subr.mxu0 0.0
    %5153 = vmatpush1.msra.mxu0 0.0
    %5154 = vmatprep.subr.mxu0 0.0
    %5155 = vmatpush1.msra.mxu0 0.0
    %5156 = vmatprep.subr.mxu0 0.0
    %5157 = vmatpush1.msra.mxu0 0.0
    %5158 = vmatprep.subr.mxu0 0.0
    %5159 = vmatpush1.msra.mxu0 0.0
    %5160 = vmatprep.subr.mxu0 0.0
    %5161 = vmatpush1.msra.mxu0 0.0
    %5162 = vmatprep.subr.mxu0 0.0
    %5163 = vmatpush1.msra.mxu0 0.0
    %5164 = vmatprep.subr.mxu0 0.0
    %5165 = vmatpush1.msra.mxu0 0.0
    %5166 = vmatprep.subr.mxu0 0.0
    %5167 = vmatpush1.msra.mxu0 0.0
    %5168 = vmatprep.subr.mxu0 0.0
    %5169 = vmatpush1.msra.mxu0 0.0
    %5170 = vmatprep.subr.mxu0 0.0
    %5171 = vmatpush1.msra.mxu0 0.0
    %5172 = vmatprep.subr.mxu0 0.0
    %5173 = vmatpush1.msra.mxu0 0.0
    %5174 = vmatprep.subr.mxu0 0.0
    %5175 = vmatpush1.msra.mxu0 0.0
    %5176 = vmatprep.subr.mxu0 0.0
    %5177 = vmatpush1.msra.mxu0 0.0
    %5178 = vmatprep.subr.mxu0 0.0
    %5179 = vmatpush1.msra.mxu0 0.0
    %5180 = vmatprep.subr.mxu0 0.0
    %5181 = vmatpush1.msra.mxu0 0.0
    %5182 = vmatprep.subr.mxu0 0.0
    %5183 = vmatpush1.msra.mxu0 0.0
    %5184 = vmatprep.subr.mxu0 0.0
    %5185 = vmatpush1.msra.mxu0 0.0
    %5186 = vmatprep.subr.mxu0 0.0
    %5187 = vmatpush1.msra.mxu0 0.0
    %5188 = vmatprep.subr.mxu0 0.0
    %5189 = vmatpush1.msra.mxu0 0.0
    %5190 = vmatprep.mubr.f32.mxu0 0.0
    %5191 = vmatmul.mubr.f32.gmra.mrb[0].mxu0 %v5124
    %v5192 = vpop.f32.mrb[0].mxu0
    %v5193 = vadd.f32 0.0, %v5192
    %v5194 = vpop.f32.mrb[0].mxu0
    %5195 = vdwg.mxu0
    %5196 = vrot.lane.b32.xlu0 %v4115, 48
    %v5197 = vpop.permute.xlu0 %5196
    %v5200 = vsel %vm196, %v5119, 0
    %5202 = vmatprep.subr.mxu0 0.0
    %5203 = vmatpush1.msra.mxu0 %v5197
    %5204 = vmatprep.subr.mxu0 0.0
    %5205 = vmatpush1.msra.mxu0 0.0
    %5206 = vmatprep.subr.mxu0 0.0
    %5207 = vmatpush1.msra.mxu0 0.0
    %5208 = vmatprep.subr.mxu0 0.0
    %5209 = vmatpush1.msra.mxu0 0.0
    %5210 = vmatprep.subr.mxu0 0.0
    %5211 = vmatpush1.msra.mxu0 0.0
    %5212 = vmatprep.subr.mxu0 0.0
    %5213 = vmatpush1.msra.mxu0 0.0
    %5214 = vmatprep.subr.mxu0 0.0
    %5215 = vmatpush1.msra.mxu0 0.0
    %5216 = vmatprep.subr.mxu0 0.0
    %5217 = vmatpush1.msra.mxu0 0.0
    %5218 = vmatprep.subr.mxu0 0.0
    %5219 = vmatpush1.msra.mxu0 0.0
    %5220 = vmatprep.subr.mxu0 0.0
    %5221 = vmatpush1.msra.mxu0 0.0
    %5222 = vmatprep.subr.mxu0 0.0
    %5223 = vmatpush1.msra.mxu0 0.0
    %5224 = vmatprep.subr.mxu0 0.0
    %5225 = vmatpush1.msra.mxu0 0.0
    %5226 = vmatprep.subr.mxu0 0.0
    %5227 = vmatpush1.msra.mxu0 0.0
    %5228 = vmatprep.subr.mxu0 0.0
    %5229 = vmatpush1.msra.mxu0 0.0
    %5230 = vmatprep.subr.mxu0 0.0
    %5231 = vmatpush1.msra.mxu0 0.0
    %5232 = vmatprep.subr.mxu0 0.0
    %5233 = vmatpush1.msra.mxu0 0.0
    %5234 = vmatprep.subr.mxu0 0.0
    %5235 = vmatpush1.msra.mxu0 0.0
    %5236 = vmatprep.subr.mxu0 0.0
    %5237 = vmatpush1.msra.mxu0 0.0
    %5238 = vmatprep.subr.mxu0 0.0
    %5239 = vmatpush1.msra.mxu0 0.0
    %5240 = vmatprep.subr.mxu0 0.0
    %5241 = vmatpush1.msra.mxu0 0.0
    %5242 = vmatprep.subr.mxu0 0.0
    %5243 = vmatpush1.msra.mxu0 0.0
    %5244 = vmatprep.subr.mxu0 0.0
    %5245 = vmatpush1.msra.mxu0 0.0
    %5246 = vmatprep.subr.mxu0 0.0
    %5247 = vmatpush1.msra.mxu0 0.0
    %5248 = vmatprep.subr.mxu0 0.0
    %5249 = vmatpush1.msra.mxu0 0.0
    %5250 = vmatprep.subr.mxu0 0.0
    %5251 = vmatpush1.msra.mxu0 0.0
    %5252 = vmatprep.subr.mxu0 0.0
    %5253 = vmatpush1.msra.mxu0 0.0
    %5254 = vmatprep.subr.mxu0 0.0
    %5255 = vmatpush1.msra.mxu0 0.0
    %5256 = vmatprep.subr.mxu0 0.0
    %5257 = vmatpush1.msra.mxu0 0.0
    %5258 = vmatprep.subr.mxu0 0.0
    %5259 = vmatpush1.msra.mxu0 0.0
    %5260 = vmatprep.subr.mxu0 0.0
    %5261 = vmatpush1.msra.mxu0 0.0
    %5262 = vmatprep.subr.mxu0 0.0
    %5263 = vmatpush1.msra.mxu0 0.0
    %5264 = vmatprep.subr.mxu0 0.0
    %5265 = vmatpush1.msra.mxu0 0.0
    %5266 = vmatprep.mubr.f32.mxu0 0.0
    %5267 = vmatmul.mubr.f32.gmra.mrb[0].mxu0 %v5200
    %v5268 = vpop.f32.mrb[0].mxu0
    %v5269 = vadd.f32 0.0, %v5268
    %v5270 = vpop.f32.mrb[0].mxu0
    %5271 = vdwg.mxu0
    %v5273 = vsel %vm196, %v5193, 0
    %v5276 = vsel %vm196, %v5269, 0
    %5278 = vmatprep.subr.mxu0 0.0
    %5279 = vmatpush1.msra.mxu0 %v4027
    %5280 = vmatprep.subr.mxu0 0.0
    %5281 = vmatpush1.msra.mxu0 0.0
    %5282 = vmatprep.subr.mxu0 0.0
    %5283 = vmatpush1.msra.mxu0 0.0
    %5284 = vmatprep.subr.mxu0 0.0
    %5285 = vmatpush1.msra.mxu0 0.0
    %5286 = vmatprep.subr.mxu0 0.0
    %5287 = vmatpush1.msra.mxu0 0.0
    %5288 = vmatprep.subr.mxu0 0.0
    %5289 = vmatpush1.msra.mxu0 0.0
    %5290 = vmatprep.subr.mxu0 0.0
    %5291 = vmatpush1.msra.mxu0 0.0
    %5292 = vmatprep.subr.mxu0 0.0
    %5293 = vmatpush1.msra.mxu0 0.0
    %5294 = vmatprep.subr.mxu0 0.0
    %5295 = vmatpush1.msra.mxu0 0.0
    %5296 = vmatprep.subr.mxu0 0.0
    %5297 = vmatpush1.msra.mxu0 0.0
    %5298 = vmatprep.subr.mxu0 0.0
    %5299 = vmatpush1.msra.mxu0 0.0
    %5300 = vmatprep.subr.mxu0 0.0
    %5301 = vmatpush1.msra.mxu0 0.0
    %5302 = vmatprep.subr.mxu0 0.0
    %5303 = vmatpush1.msra.mxu0 0.0
    %5304 = vmatprep.subr.mxu0 0.0
    %5305 = vmatpush1.msra.mxu0 0.0
    %5306 = vmatprep.subr.mxu0 0.0
    %5307 = vmatpush1.msra.mxu0 0.0
    %5308 = vmatprep.subr.mxu0 0.0
    %5309 = vmatpush1.msra.mxu0 0.0
    %5310 = vmatprep.subr.mxu0 0.0
    %5311 = vmatpush1.msra.mxu0 0.0
    %5312 = vmatprep.subr.mxu0 0.0
    %5313 = vmatpush1.msra.mxu0 0.0
    %5314 = vmatprep.subr.mxu0 0.0
    %5315 = vmatpush1.msra.mxu0 0.0
    %5316 = vmatprep.subr.mxu0 0.0
    %5317 = vmatpush1.msra.mxu0 0.0
    %5318 = vmatprep.subr.mxu0 0.0
    %5319 = vmatpush1.msra.mxu0 0.0
    %5320 = vmatprep.subr.mxu0 0.0
    %5321 = vmatpush1.msra.mxu0 0.0
    %5322 = vmatprep.subr.mxu0 0.0
    %5323 = vmatpush1.msra.mxu0 0.0
    %5324 = vmatprep.subr.mxu0 0.0
    %5325 = vmatpush1.msra.mxu0 0.0
    %5326 = vmatprep.subr.mxu0 0.0
    %5327 = vmatpush1.msra.mxu0 0.0
    %5328 = vmatprep.subr.mxu0 0.0
    %5329 = vmatpush1.msra.mxu0 0.0
    %5330 = vmatprep.subr.mxu0 0.0
    %5331 = vmatpush1.msra.mxu0 0.0
    %5332 = vmatprep.subr.mxu0 0.0
    %5333 = vmatpush1.msra.mxu0 0.0
    %5334 = vmatprep.subr.mxu0 0.0
    %5335 = vmatpush1.msra.mxu0 0.0
    %5336 = vmatprep.subr.mxu0 0.0
    %5337 = vmatpush1.msra.mxu0 0.0
    %5338 = vmatprep.subr.mxu0 0.0
    %5339 = vmatpush1.msra.mxu0 0.0
    %5340 = vmatprep.subr.mxu0 0.0
    %5341 = vmatpush1.msra.mxu0 0.0
    %5342 = vmatprep.mubr.f32.mxu0 0.0
    %5343 = vmatmul.mubr.f32.gmra.mrb[0].mxu0 %v5273
    %v5344 = vpop.f32.mrb[0].mxu0
    %v5345 = vadd.f32 0.0, %v5344
    %v5346 = vpop.f32.mrb[0].mxu0
    %5347 = vmatprep.mubr.f32.mxu0 0.0
    %5348 = vmatmul.mubr.f32.gmra.mrb[0].mxu0 %v5276
    %v5349 = vpop.f32.mrb[0].mxu0
    %v5350 = vadd.f32 0.0, %v5349
    %v5351 = vpop.f32.mrb[0].mxu0
    %5352 = vdwg.mxu0
    %v5353 = vadd.f32 %v4934, %v5345
    %v5354 = vadd.f32 %v4939, %v5350
    %5355 = vrot.lane.b32.xlu0 %v4118, 104
    %v5356 = vpop.permute.xlu0 %5355
    %5357 = vrot.lane.b32.xlu0 %v4110, 72
    %v5358 = vpop.permute.xlu0 %5357
    %v5359 = vsel %vm196, %v5356, 0
    %v5361 = vsel %vm196, %v5358, 0
    %5363 = vmatprep.subr.mxu0 0.0
    %5364 = vmatpush1.xpose.msra.mxu0 %v5361
    %5365 = vmatprep.subr.mxu0 0.0
    %5366 = vmatpush1.xpose.msra.mxu0 0.0
    %5367 = vmatprep.subr.mxu0 0.0
    %5368 = vmatpush1.xpose.msra.mxu0 0.0
    %5369 = vmatprep.subr.mxu0 0.0
    %5370 = vmatpush1.xpose.msra.mxu0 0.0
    %5371 = vmatprep.subr.mxu0 0.0
    %5372 = vmatpush1.xpose.msra.mxu0 0.0
    %5373 = vmatprep.subr.mxu0 0.0
    %5374 = vmatpush1.xpose.msra.mxu0 0.0
    %5375 = vmatprep.subr.mxu0 0.0
    %5376 = vmatpush1.xpose.msra.mxu0 0.0
    %5377 = vmatprep.subr.mxu0 0.0
    %5378 = vmatpush1.xpose.msra.mxu0 0.0
    %5379 = vmatprep.subr.mxu0 0.0
    %5380 = vmatpush1.xpose.msra.mxu0 0.0
    %5381 = vmatprep.subr.mxu0 0.0
    %5382 = vmatpush1.xpose.msra.mxu0 0.0
    %5383 = vmatprep.subr.mxu0 0.0
    %5384 = vmatpush1.xpose.msra.mxu0 0.0
    %5385 = vmatprep.subr.mxu0 0.0
    %5386 = vmatpush1.xpose.msra.mxu0 0.0
    %5387 = vmatprep.subr.mxu0 0.0
    %5388 = vmatpush1.xpose.msra.mxu0 0.0
    %5389 = vmatprep.subr.mxu0 0.0
    %5390 = vmatpush1.xpose.msra.mxu0 0.0
    %5391 = vmatprep.subr.mxu0 0.0
    %5392 = vmatpush1.xpose.msra.mxu0 0.0
    %5393 = vmatprep.subr.mxu0 0.0
    %5394 = vmatpush1.xpose.msra.mxu0 0.0
    %5395 = vmatprep.subr.mxu0 0.0
    %5396 = vmatpush1.xpose.msra.mxu0 0.0
    %5397 = vmatprep.subr.mxu0 0.0
    %5398 = vmatpush1.xpose.msra.mxu0 0.0
    %5399 = vmatprep.subr.mxu0 0.0
    %5400 = vmatpush1.xpose.msra.mxu0 0.0
    %5401 = vmatprep.subr.mxu0 0.0
    %5402 = vmatpush1.xpose.msra.mxu0 0.0
    %5403 = vmatprep.subr.mxu0 0.0
    %5404 = vmatpush1.xpose.msra.mxu0 0.0
    %5405 = vmatprep.subr.mxu0 0.0
    %5406 = vmatpush1.xpose.msra.mxu0 0.0
    %5407 = vmatprep.subr.mxu0 0.0
    %5408 = vmatpush1.xpose.msra.mxu0 0.0
    %5409 = vmatprep.subr.mxu0 0.0
    %5410 = vmatpush1.xpose.msra.mxu0 0.0
    %5411 = vmatprep.subr.mxu0 0.0
    %5412 = vmatpush1.xpose.msra.mxu0 0.0
    %5413 = vmatprep.subr.mxu0 0.0
    %5414 = vmatpush1.xpose.msra.mxu0 0.0
    %5415 = vmatprep.subr.mxu0 0.0
    %5416 = vmatpush1.xpose.msra.mxu0 0.0
    %5417 = vmatprep.subr.mxu0 0.0
    %5418 = vmatpush1.xpose.msra.mxu0 0.0
    %5419 = vmatprep.subr.mxu0 0.0
    %5420 = vmatpush1.xpose.msra.mxu0 0.0
    %5421 = vmatprep.subr.mxu0 0.0
    %5422 = vmatpush1.xpose.msra.mxu0 0.0
    %5423 = vmatprep.subr.mxu0 0.0
    %5424 = vmatpush1.xpose.msra.mxu0 0.0
    %5425 = vmatprep.subr.mxu0 0.0
    %5426 = vmatpush1.xpose.msra.mxu0 0.0
    %5427 = vmatprep.mubr.f32.mxu0 0.0
    %5428 = vmatmul.mubr.f32.gmra.mrb[0].mxu0 %v5359
    %v5429 = vpop.f32.mrb[0].mxu0
    %v5430 = vadd.f32 0.0, %v5429
    %v5431 = vpop.f32.mrb[0].mxu0
    %5432 = vdwg.mxu0
    %5433 = vrot.lane.b32.xlu0 %v4119, 104
    %v5434 = vpop.permute.xlu0 %5433
    %5435 = vrot.lane.b32.xlu0 %v4115, 72
    %v5436 = vpop.permute.xlu0 %5435
    %v5437 = vsel %vm196, %v5434, 0
    %v5439 = vsel %vm196, %v5436, 0
    %5441 = vmatprep.subr.mxu0 0.0
    %5442 = vmatpush1.xpose.msra.mxu0 %v5439
    %5443 = vmatprep.subr.mxu0 0.0
    %5444 = vmatpush1.xpose.msra.mxu0 0.0
    %5445 = vmatprep.subr.mxu0 0.0
    %5446 = vmatpush1.xpose.msra.mxu0 0.0
    %5447 = vmatprep.subr.mxu0 0.0
    %5448 = vmatpush1.xpose.msra.mxu0 0.0
    %5449 = vmatprep.subr.mxu0 0.0
    %5450 = vmatpush1.xpose.msra.mxu0 0.0
    %5451 = vmatprep.subr.mxu0 0.0
    %5452 = vmatpush1.xpose.msra.mxu0 0.0
    %5453 = vmatprep.subr.mxu0 0.0
    %5454 = vmatpush1.xpose.msra.mxu0 0.0
    %5455 = vmatprep.subr.mxu0 0.0
    %5456 = vmatpush1.xpose.msra.mxu0 0.0
    %5457 = vmatprep.subr.mxu0 0.0
    %5458 = vmatpush1.xpose.msra.mxu0 0.0
    %5459 = vmatprep.subr.mxu0 0.0
    %5460 = vmatpush1.xpose.msra.mxu0 0.0
    %5461 = vmatprep.subr.mxu0 0.0
    %5462 = vmatpush1.xpose.msra.mxu0 0.0
    %5463 = vmatprep.subr.mxu0 0.0
    %5464 = vmatpush1.xpose.msra.mxu0 0.0
    %5465 = vmatprep.subr.mxu0 0.0
    %5466 = vmatpush1.xpose.msra.mxu0 0.0
    %5467 = vmatprep.subr.mxu0 0.0
    %5468 = vmatpush1.xpose.msra.mxu0 0.0
    %5469 = vmatprep.subr.mxu0 0.0
    %5470 = vmatpush1.xpose.msra.mxu0 0.0
    %5471 = vmatprep.subr.mxu0 0.0
    %5472 = vmatpush1.xpose.msra.mxu0 0.0
    %5473 = vmatprep.subr.mxu0 0.0
    %5474 = vmatpush1.xpose.msra.mxu0 0.0
    %5475 = vmatprep.subr.mxu0 0.0
    %5476 = vmatpush1.xpose.msra.mxu0 0.0
    %5477 = vmatprep.subr.mxu0 0.0
    %5478 = vmatpush1.xpose.msra.mxu0 0.0
    %5479 = vmatprep.subr.mxu0 0.0
    %5480 = vmatpush1.xpose.msra.mxu0 0.0
    %5481 = vmatprep.subr.mxu0 0.0
    %5482 = vmatpush1.xpose.msra.mxu0 0.0
    %5483 = vmatprep.subr.mxu0 0.0
    %5484 = vmatpush1.xpose.msra.mxu0 0.0
    %5485 = vmatprep.subr.mxu0 0.0
    %5486 = vmatpush1.xpose.msra.mxu0 0.0
    %5487 = vmatprep.subr.mxu0 0.0
    %5488 = vmatpush1.xpose.msra.mxu0 0.0
    %5489 = vmatprep.subr.mxu0 0.0
    %5490 = vmatpush1.xpose.msra.mxu0 0.0
    %5491 = vmatprep.subr.mxu0 0.0
    %5492 = vmatpush1.xpose.msra.mxu0 0.0
    %5493 = vmatprep.subr.mxu0 0.0
    %5494 = vmatpush1.xpose.msra.mxu0 0.0
    %5495 = vmatprep.subr.mxu0 0.0
    %5496 = vmatpush1.xpose.msra.mxu0 0.0
    %5497 = vmatprep.subr.mxu0 0.0
    %5498 = vmatpush1.xpose.msra.mxu0 0.0
    %5499 = vmatprep.subr.mxu0 0.0
    %5500 = vmatpush1.xpose.msra.mxu0 0.0
    %5501 = vmatprep.subr.mxu0 0.0
    %5502 = vmatpush1.xpose.msra.mxu0 0.0
    %5503 = vmatprep.subr.mxu0 0.0
    %5504 = vmatpush1.xpose.msra.mxu0 0.0
    %5505 = vmatprep.mubr.f32.mxu0 0.0
    %5506 = vmatmul.mubr.f32.gmra.mrb[0].mxu0 %v5437
    %v5507 = vpop.f32.mrb[0].mxu0
    %v5508 = vadd.f32 0.0, %v5507
    %v5509 = vpop.f32.mrb[0].mxu0
    %5510 = vdwg.mxu0
    %v5511 = vsel %vm196, %v5430, -inf
    %5512 = vmax.xlane.f32.xlu0 %v5511
    %v5513 = vpop.xlane.xlu0 %5512
    %v5514 = vsel %vm196, %v5508, -inf
    %5515 = vmax.xlane.f32.xlu0 %v5514
    %v5516 = vpop.xlane.xlu0 %5515
    %v5517 = vsub.f32 %v5430, %v5513
    %v5518 = vsub.f32 %v5508, %v5516
    %v5519 = vmul.f32 %v5517, 1.442695
    %v5520 = vpow.pop %v5519
    %v5521 = vmul.f32 %v5518, 1.442695
    %v5522 = vpow.pop %v5521
    %v5523 = vsel %vm196, %v5520, 0.0
    %5524 = vadd.xlane.f32.xlu0 %v5523
    %v5525 = vpop.xlane.xlu0 %5524
    %v5526 = vsel %vm196, %v5522, 0.0
    %5527 = vadd.xlane.f32.xlu0 %v5526
    %v5528 = vpop.xlane.xlu0 %5527
    %v5529 = vrcp.pop %v5525
    %v5530 = vrcp.pop %v5528
    %v5531 = vmul.f32 %v5520, %v5529
    %v5532 = vmul.f32 %v5522, %v5530
    %5533 = vrot.lane.b32.xlu0 %v4110, 40
    %v5534 = vpop.permute.xlu0 %5533
    %v5537 = vsel %vm196, %v5531, 0
    %5539 = vmatprep.subr.mxu0 0.0
    %5540 = vmatpush1.msra.mxu0 %v5534
    %5541 = vmatprep.subr.mxu0 0.0
    %5542 = vmatpush1.msra.mxu0 0.0
    %5543 = vmatprep.subr.mxu0 0.0
    %5544 = vmatpush1.msra.mxu0 0.0
    %5545 = vmatprep.subr.mxu0 0.0
    %5546 = vmatpush1.msra.mxu0 0.0
    %5547 = vmatprep.subr.mxu0 0.0
    %5548 = vmatpush1.msra.mxu0 0.0
    %5549 = vmatprep.subr.mxu0 0.0
    %5550 = vmatpush1.msra.mxu0 0.0
    %5551 = vmatprep.subr.mxu0 0.0
    %5552 = vmatpush1.msra.mxu0 0.0
    %5553 = vmatprep.subr.mxu0 0.0
    %5554 = vmatpush1.msra.mxu0 0.0
    %5555 = vmatprep.subr.mxu0 0.0
    %5556 = vmatpush1.msra.mxu0 0.0
    %5557 = vmatprep.subr.mxu0 0.0
    %5558 = vmatpush1.msra.mxu0 0.0
    %5559 = vmatprep.subr.mxu0 0.0
    %5560 = vmatpush1.msra.mxu0 0.0
    %5561 = vmatprep.subr.mxu0 0.0
    %5562 = vmatpush1.msra.mxu0 0.0
    %5563 = vmatprep.subr.mxu0 0.0
    %5564 = vmatpush1.msra.mxu0 0.0
    %5565 = vmatprep.subr.mxu0 0.0
    %5566 = vmatpush1.msra.mxu0 0.0
    %5567 = vmatprep.subr.mxu0 0.0
    %5568 = vmatpush1.msra.mxu0 0.0
    %5569 = vmatprep.subr.mxu0 0.0
    %5570 = vmatpush1.msra.mxu0 0.0
    %5571 = vmatprep.subr.mxu0 0.0
    %5572 = vmatpush1.msra.mxu0 0.0
    %5573 = vmatprep.subr.mxu0 0.0
    %5574 = vmatpush1.msra.mxu0 0.0
    %5575 = vmatprep.subr.mxu0 0.0
    %5576 = vmatpush1.msra.mxu0 0.0
    %5577 = vmatprep.subr.mxu0 0.0
    %5578 = vmatpush1.msra.mxu0 0.0
    %5579 = vmatprep.subr.mxu0 0.0
    %5580 = vmatpush1.msra.mxu0 0.0
    %5581 = vmatprep.subr.mxu0 0.0
    %5582 = vmatpush1.msra.mxu0 0.0
    %5583 = vmatprep.subr.mxu0 0.0
    %5584 = vmatpush1.msra.mxu0 0.0
    %5585 = vmatprep.subr.mxu0 0.0
    %5586 = vmatpush1.msra.mxu0 0.0
    %5587 = vmatprep.subr.mxu0 0.0
    %5588 = vmatpush1.msra.mxu0 0.0
    %5589 = vmatprep.subr.mxu0 0.0
    %5590 = vmatpush1.msra.mxu0 0.0
    %5591 = vmatprep.subr.mxu0 0.0
    %5592 = vmatpush1.msra.mxu0 0.0
    %5593 = vmatprep.subr.mxu0 0.0
    %5594 = vmatpush1.msra.mxu0 0.0
    %5595 = vmatprep.subr.mxu0 0.0
    %5596 = vmatpush1.msra.mxu0 0.0
    %5597 = vmatprep.subr.mxu0 0.0
    %5598 = vmatpush1.msra.mxu0 0.0
    %5599 = vmatprep.subr.mxu0 0.0
    %5600 = vmatpush1.msra.mxu0 0.0
    %5601 = vmatprep.subr.mxu0 0.0
    %5602 = vmatpush1.msra.mxu0 0.0
    %5603 = vmatprep.mubr.f32.mxu0 0.0
    %5604 = vmatmul.mubr.f32.gmra.mrb[0].mxu0 %v5537
    %v5605 = vpop.f32.mrb[0].mxu0
    %v5606 = vadd.f32 0.0, %v5605
    %v5607 = vpop.f32.mrb[0].mxu0
    %5608 = vdwg.mxu0
    %5609 = vrot.lane.b32.xlu0 %v4115, 40
    %v5610 = vpop.permute.xlu0 %5609
    %v5613 = vsel %vm196, %v5532, 0
    %5615 = vmatprep.subr.mxu0 0.0
    %5616 = vmatpush1.msra.mxu0 %v5610
    %5617 = vmatprep.subr.mxu0 0.0
    %5618 = vmatpush1.msra.mxu0 0.0
    %5619 = vmatprep.subr.mxu0 0.0
    %5620 = vmatpush1.msra.mxu0 0.0
    %5621 = vmatprep.subr.mxu0 0.0
    %5622 = vmatpush1.msra.mxu0 0.0
    %5623 = vmatprep.subr.mxu0 0.0
    %5624 = vmatpush1.msra.mxu0 0.0
    %5625 = vmatprep.subr.mxu0 0.0
    %5626 = vmatpush1.msra.mxu0 0.0
    %5627 = vmatprep.subr.mxu0 0.0
    %5628 = vmatpush1.msra.mxu0 0.0
    %5629 = vmatprep.subr.mxu0 0.0
    %5630 = vmatpush1.msra.mxu0 0.0
    %5631 = vmatprep.subr.mxu0 0.0
    %5632 = vmatpush1.msra.mxu0 0.0
    %5633 = vmatprep.subr.mxu0 0.0
    %5634 = vmatpush1.msra.mxu0 0.0
    %5635 = vmatprep.subr.mxu0 0.0
    %5636 = vmatpush1.msra.mxu0 0.0
    %5637 = vmatprep.subr.mxu0 0.0
    %5638 = vmatpush1.msra.mxu0 0.0
    %5639 = vmatprep.subr.mxu0 0.0
    %5640 = vmatpush1.msra.mxu0 0.0
    %5641 = vmatprep.subr.mxu0 0.0
    %5642 = vmatpush1.msra.mxu0 0.0
    %5643 = vmatprep.subr.mxu0 0.0
    %5644 = vmatpush1.msra.mxu0 0.0
    %5645 = vmatprep.subr.mxu0 0.0
    %5646 = vmatpush1.msra.mxu0 0.0
    %5647 = vmatprep.subr.mxu0 0.0
    %5648 = vmatpush1.msra.mxu0 0.0
    %5649 = vmatprep.subr.mxu0 0.0
    %5650 = vmatpush1.msra.mxu0 0.0
    %5651 = vmatprep.subr.mxu0 0.0
    %5652 = vmatpush1.msra.mxu0 0.0
    %5653 = vmatprep.subr.mxu0 0.0
    %5654 = vmatpush1.msra.mxu0 0.0
    %5655 = vmatprep.subr.mxu0 0.0
    %5656 = vmatpush1.msra.mxu0 0.0
    %5657 = vmatprep.subr.mxu0 0.0
    %5658 = vmatpush1.msra.mxu0 0.0
    %5659 = vmatprep.subr.mxu0 0.0
    %5660 = vmatpush1.msra.mxu0 0.0
    %5661 = vmatprep.subr.mxu0 0.0
    %5662 = vmatpush1.msra.mxu0 0.0
    %5663 = vmatprep.subr.mxu0 0.0
    %5664 = vmatpush1.msra.mxu0 0.0
    %5665 = vmatprep.subr.mxu0 0.0
    %5666 = vmatpush1.msra.mxu0 0.0
    %5667 = vmatprep.subr.mxu0 0.0
    %5668 = vmatpush1.msra.mxu0 0.0
    %5669 = vmatprep.subr.mxu0 0.0
    %5670 = vmatpush1.msra.mxu0 0.0
    %5671 = vmatprep.subr.mxu0 0.0
    %5672 = vmatpush1.msra.mxu0 0.0
    %5673 = vmatprep.subr.mxu0 0.0
    %5674 = vmatpush1.msra.mxu0 0.0
    %5675 = vmatprep.subr.mxu0 0.0
    %5676 = vmatpush1.msra.mxu0 0.0
    %5677 = vmatprep.subr.mxu0 0.0
    %5678 = vmatpush1.msra.mxu0 0.0
    %5679 = vmatprep.mubr.f32.mxu0 0.0
    %5680 = vmatmul.mubr.f32.gmra.mrb[0].mxu0 %v5613
    %v5681 = vpop.f32.mrb[0].mxu0
    %v5682 = vadd.f32 0.0, %v5681
    %v5683 = vpop.f32.mrb[0].mxu0
    %5684 = vdwg.mxu0
    %v5686 = vsel %vm196, %v5606, 0
    %v5689 = vsel %vm196, %v5682, 0
    %5691 = vmatprep.subr.mxu0 0.0
    %5692 = vmatpush1.msra.mxu0 %v4028
    %5693 = vmatprep.subr.mxu0 0.0
    %5694 = vmatpush1.msra.mxu0 0.0
    %5695 = vmatprep.subr.mxu0 0.0
    %5696 = vmatpush1.msra.mxu0 0.0
    %5697 = vmatprep.subr.mxu0 0.0
    %5698 = vmatpush1.msra.mxu0 0.0
    %5699 = vmatprep.subr.mxu0 0.0
    %5700 = vmatpush1.msra.mxu0 0.0
    %5701 = vmatprep.subr.mxu0 0.0
    %5702 = vmatpush1.msra.mxu0 0.0
    %5703 = vmatprep.subr.mxu0 0.0
    %5704 = vmatpush1.msra.mxu0 0.0
    %5705 = vmatprep.subr.mxu0 0.0
    %5706 = vmatpush1.msra.mxu0 0.0
    %5707 = vmatprep.subr.mxu0 0.0
    %5708 = vmatpush1.msra.mxu0 0.0
    %5709 = vmatprep.subr.mxu0 0.0
    %5710 = vmatpush1.msra.mxu0 0.0
    %5711 = vmatprep.subr.mxu0 0.0
    %5712 = vmatpush1.msra.mxu0 0.0
    %5713 = vmatprep.subr.mxu0 0.0
    %5714 = vmatpush1.msra.mxu0 0.0
    %5715 = vmatprep.subr.mxu0 0.0
    %5716 = vmatpush1.msra.mxu0 0.0
    %5717 = vmatprep.subr.mxu0 0.0
    %5718 = vmatpush1.msra.mxu0 0.0
    %5719 = vmatprep.subr.mxu0 0.0
    %5720 = vmatpush1.msra.mxu0 0.0
    %5721 = vmatprep.subr.mxu0 0.0
    %5722 = vmatpush1.msra.mxu0 0.0
    %5723 = vmatprep.subr.mxu0 0.0
    %5724 = vmatpush1.msra.mxu0 0.0
    %5725 = vmatprep.subr.mxu0 0.0
    %5726 = vmatpush1.msra.mxu0 0.0
    %5727 = vmatprep.subr.mxu0 0.0
    %5728 = vmatpush1.msra.mxu0 0.0
    %5729 = vmatprep.subr.mxu0 0.0
    %5730 = vmatpush1.msra.mxu0 0.0
    %5731 = vmatprep.subr.mxu0 0.0
    %5732 = vmatpush1.msra.mxu0 0.0
    %5733 = vmatprep.subr.mxu0 0.0
    %5734 = vmatpush1.msra.mxu0 0.0
    %5735 = vmatprep.subr.mxu0 0.0
    %5736 = vmatpush1.msra.mxu0 0.0
    %5737 = vmatprep.subr.mxu0 0.0
    %5738 = vmatpush1.msra.mxu0 0.0
    %5739 = vmatprep.subr.mxu0 0.0
    %5740 = vmatpush1.msra.mxu0 0.0
    %5741 = vmatprep.subr.mxu0 0.0
    %5742 = vmatpush1.msra.mxu0 0.0
    %5743 = vmatprep.subr.mxu0 0.0
    %5744 = vmatpush1.msra.mxu0 0.0
    %5745 = vmatprep.subr.mxu0 0.0
    %5746 = vmatpush1.msra.mxu0 0.0
    %5747 = vmatprep.subr.mxu0 0.0
    %5748 = vmatpush1.msra.mxu0 0.0
    %5749 = vmatprep.subr.mxu0 0.0
    %5750 = vmatpush1.msra.mxu0 0.0
    %5751 = vmatprep.subr.mxu0 0.0
    %5752 = vmatpush1.msra.mxu0 0.0
    %5753 = vmatprep.subr.mxu0 0.0
    %5754 = vmatpush1.msra.mxu0 0.0
    %5755 = vmatprep.mubr.f32.mxu0 0.0
    %5756 = vmatmul.mubr.f32.gmra.mrb[0].mxu0 %v5686
    %v5757 = vpop.f32.mrb[0].mxu0
    %v5758 = vadd.f32 0.0, %v5757
    %v5759 = vpop.f32.mrb[0].mxu0
    %5760 = vmatprep.mubr.f32.mxu0 0.0
    %5761 = vmatmul.mubr.f32.gmra.mrb[0].mxu0 %v5689
    %v5762 = vpop.f32.mrb[0].mxu0
    %v5763 = vadd.f32 0.0, %v5762
    %v5764 = vpop.f32.mrb[0].mxu0
    %5765 = vdwg.mxu0
    %v5766 = vadd.f32 %v5353, %v5758
    %v5767 = vadd.f32 %v5354, %v5763
    %v5769 = vlaneseq
    %v5770 = vshrl.u32 %v5769, 7
    %v5771 = vsub.s32 0, %v5770
    %v5772 = vrot.slane %v4030, %v5771
    %v5774 = vadd.f32 %v5766, %v5772
    %v5775 = vadd.f32 %v5767, %v5772
    %v5776 = vadd.f32 %v4011, %v5774
    %v5777 = vadd.f32 %v4012, %v5775
    %v5778 = vsel %vm109, %v5776, 0.0
    %5779 = vadd.xlane.f32.xlu0 %v5778
    %v5780 = vpop.xlane.xlu0 %5779
    %v5781 = vsel %vm109, %v5777, 0.0
    %5782 = vadd.xlane.f32.xlu0 %v5781
    %v5783 = vpop.xlane.xlu0 %5782
    %v5784 = vmul.f32 %v5780, %v1858
    %v5785 = vmul.f32 %v5783, %v1858
    %v5786 = vsub.f32 %v5776, %v5784
    %v5787 = vsub.f32 %v5777, %v5785
    %v5788 = vmul.f32 %v5786, %v5786
    %v5789 = vmul.f32 %v5787, %v5787
    %v5790 = vsel %vm109, %v5788, 0.0
    %5791 = vadd.xlane.f32.xlu0 %v5790
    %v5792 = vpop.xlane.xlu0 %5791
    %v5793 = vsel %vm109, %v5789, 0.0
    %5794 = vadd.xlane.f32.xlu0 %v5793
    %v5795 = vpop.xlane.xlu0 %5794
    %v5796 = vmul.f32 %v5792, %v1858
    %v5797 = vmul.f32 %v5795, %v1858
    %v5798 = vadd.f32 %v5796, 1e-05
    %v5799 = vadd.f32 %v5797, 1e-05
    %v5800 = vrsqrt.pop %v5798
    %v5801 = vrsqrt.pop %v5799
    %v5802 = vmul.f32 %v5786, %v5800
    %v5803 = vmul.f32 %v5787, %v5801
    %v5804 = vlaneseq
    %v5805 = vshrl.u32 %v5804, 7
    %v5806 = vsub.s32 0, %v5805
    %v5807 = vrot.slane %v4014, %v5806
    %v5808 = vmul.f32 %v5802, %v5807
    %v5809 = vmul.f32 %v5803, %v5807
    %v5810 = vlaneseq
    %v5811 = vshrl.u32 %v5810, 7
    %v5812 = vsub.s32 0, %v5811
    %v5813 = vrot.slane %v4016, %v5812
    %v5814 = vadd.f32 %v5808, %v5813
    %v5815 = vadd.f32 %v5809, %v5813
    %s5816 = scalar_lea.vmem %s6, 32
    %v5817 = vld [vmem:[%s5816] sm:$0xff]
    %v5818 = vld [vmem:[%s5816 + $0x8] sm:$0xff]
    %v5819 = vld [vmem:[%s5816 + $0x10] sm:$0xff]
    %v5820 = vld [vmem:[%s5816 + $0x18] sm:$0xff]
    %s5821 = scalar_lea.vmem %s7, 1
    %v5822 = vld [vmem:[%s5821] sm:$0x1]
    %s5823 = scalar_lea.vmem [#allocation2], 32
    %v5824 = vld [vmem:[%s5823] sm:$0xff]
    %v5825 = vld [vmem:[%s5823 + $0x8] sm:$0xff]
    %v5826 = vld [vmem:[%s5823 + $0x10] sm:$0xff]
    %v5827 = vld [vmem:[%s5823 + $0x18] sm:$0xff]
    %s5828 = scalar_lea.vmem %s9, 1
    %v5829 = vld [vmem:[%s5828] sm:$0x1]
    %v5831 = vlaneseq
    %v5832 = vshrl.u32 %v5831, 7
    %v5833 = vsub.s32 0, %v5832
    %v5834 = vrot.slane %v5822, %v5833
    %v5837 = vsel %vm109, %v5814, 0
    %v5840 = vsel %vm109, %v5815, 0
    %5842 = vmatprep.subr.mxu0 0.0
    %5843 = vmatpush1.msra.mxu0 %v5817
    %5844 = vmatprep.subr.mxu0 0.0
    %5845 = vmatpush1.msra.mxu0 %v5818
    %5846 = vmatprep.subr.mxu0 0.0
    %5847 = vmatpush1.msra.mxu0 %v5819
    %5848 = vmatprep.subr.mxu0 0.0
    %5849 = vmatpush1.msra.mxu0 %v5820
    %5850 = vmatprep.subr.mxu0 0.0
    %5851 = vmatpush1.msra.mxu0 0.0
    %5852 = vmatprep.subr.mxu0 0.0
    %5853 = vmatpush1.msra.mxu0 0.0
    %5854 = vmatprep.subr.mxu0 0.0
    %5855 = vmatpush1.msra.mxu0 0.0
    %5856 = vmatprep.subr.mxu0 0.0
    %5857 = vmatpush1.msra.mxu0 0.0
    %5858 = vmatprep.subr.mxu0 0.0
    %5859 = vmatpush1.msra.mxu0 0.0
    %5860 = vmatprep.subr.mxu0 0.0
    %5861 = vmatpush1.msra.mxu0 0.0
    %5862 = vmatprep.subr.mxu0 0.0
    %5863 = vmatpush1.msra.mxu0 0.0
    %5864 = vmatprep.subr.mxu0 0.0
    %5865 = vmatpush1.msra.mxu0 0.0
    %5866 = vmatprep.subr.mxu0 0.0
    %5867 = vmatpush1.msra.mxu0 0.0
    %5868 = vmatprep.subr.mxu0 0.0
    %5869 = vmatpush1.msra.mxu0 0.0
    %5870 = vmatprep.subr.mxu0 0.0
    %5871 = vmatpush1.msra.mxu0 0.0
    %5872 = vmatprep.subr.mxu0 0.0
    %5873 = vmatpush1.msra.mxu0 0.0
    %5874 = vmatprep.subr.mxu0 0.0
    %5875 = vmatpush1.msra.mxu0 0.0
    %5876 = vmatprep.subr.mxu0 0.0
    %5877 = vmatpush1.msra.mxu0 0.0
    %5878 = vmatprep.subr.mxu0 0.0
    %5879 = vmatpush1.msra.mxu0 0.0
    %5880 = vmatprep.subr.mxu0 0.0
    %5881 = vmatpush1.msra.mxu0 0.0
    %5882 = vmatprep.subr.mxu0 0.0
    %5883 = vmatpush1.msra.mxu0 0.0
    %5884 = vmatprep.subr.mxu0 0.0
    %5885 = vmatpush1.msra.mxu0 0.0
    %5886 = vmatprep.subr.mxu0 0.0
    %5887 = vmatpush1.msra.mxu0 0.0
    %5888 = vmatprep.subr.mxu0 0.0
    %5889 = vmatpush1.msra.mxu0 0.0
    %5890 = vmatprep.subr.mxu0 0.0
    %5891 = vmatpush1.msra.mxu0 0.0
    %5892 = vmatprep.subr.mxu0 0.0
    %5893 = vmatpush1.msra.mxu0 0.0
    %5894 = vmatprep.subr.mxu0 0.0
    %5895 = vmatpush1.msra.mxu0 0.0
    %5896 = vmatprep.subr.mxu0 0.0
    %5897 = vmatpush1.msra.mxu0 0.0
    %5898 = vmatprep.subr.mxu0 0.0
    %5899 = vmatpush1.msra.mxu0 0.0
    %5900 = vmatprep.subr.mxu0 0.0
    %5901 = vmatpush1.msra.mxu0 0.0
    %5902 = vmatprep.subr.mxu0 0.0
    %5903 = vmatpush1.msra.mxu0 0.0
    %5904 = vmatprep.subr.mxu0 0.0
    %5905 = vmatpush1.msra.mxu0 0.0
    %5906 = vmatprep.mubr.f32.mxu0 0.0
    %5907 = vmatmul.mubr.f32.gmra.mrb[0].mxu0 %v5837
    %v5908 = vpop.f32.mrb[0].mxu0
    %v5909 = vadd.f32 %v5834, %v5908
    %v5910 = vpop.f32.mrb[0].mxu0
    %5911 = vmatprep.mubr.f32.mxu0 0.0
    %5912 = vmatmul.mubr.f32.gmra.mrb[0].mxu0 %v5840
    %v5913 = vpop.f32.mrb[0].mxu0
    %v5914 = vadd.f32 %v5834, %v5913
    %v5915 = vpop.f32.mrb[0].mxu0
    %5916 = vdwg.mxu0
    %5921 = vrot.lane.b32.xlu0 %v5817, 96
    %v5922 = vpop.permute.xlu0 %5921
    %5923 = vrot.lane.b32.xlu0 %v5818, 96
    %v5924 = vpop.permute.xlu0 %5923
    %5925 = vrot.lane.b32.xlu0 %v5819, 96
    %v5926 = vpop.permute.xlu0 %5925
    %5927 = vrot.lane.b32.xlu0 %v5820, 96
    %v5928 = vpop.permute.xlu0 %5927
    %5933 = vrot.lane.b32.xlu0 %v5834, 96
    %v5934 = vpop.permute.xlu0 %5933
    %5936 = vmatprep.subr.mxu0 0.0
    %5937 = vmatpush1.msra.mxu0 %v5922
    %5938 = vmatprep.subr.mxu0 0.0
    %5939 = vmatpush1.msra.mxu0 %v5924
    %5940 = vmatprep.subr.mxu0 0.0
    %5941 = vmatpush1.msra.mxu0 %v5926
    %5942 = vmatprep.subr.mxu0 0.0
    %5943 = vmatpush1.msra.mxu0 %v5928
    %5944 = vmatprep.subr.mxu0 0.0
    %5945 = vmatpush1.msra.mxu0 0.0
    %5946 = vmatprep.subr.mxu0 0.0
    %5947 = vmatpush1.msra.mxu0 0.0
    %5948 = vmatprep.subr.mxu0 0.0
    %5949 = vmatpush1.msra.mxu0 0.0
    %5950 = vmatprep.subr.mxu0 0.0
    %5951 = vmatpush1.msra.mxu0 0.0
    %5952 = vmatprep.subr.mxu0 0.0
    %5953 = vmatpush1.msra.mxu0 0.0
    %5954 = vmatprep.subr.mxu0 0.0
    %5955 = vmatpush1.msra.mxu0 0.0
    %5956 = vmatprep.subr.mxu0 0.0
    %5957 = vmatpush1.msra.mxu0 0.0
    %5958 = vmatprep.subr.mxu0 0.0
    %5959 = vmatpush1.msra.mxu0 0.0
    %5960 = vmatprep.subr.mxu0 0.0
    %5961 = vmatpush1.msra.mxu0 0.0
    %5962 = vmatprep.subr.mxu0 0.0
    %5963 = vmatpush1.msra.mxu0 0.0
    %5964 = vmatprep.subr.mxu0 0.0
    %5965 = vmatpush1.msra.mxu0 0.0
    %5966 = vmatprep.subr.mxu0 0.0
    %5967 = vmatpush1.msra.mxu0 0.0
    %5968 = vmatprep.subr.mxu0 0.0
    %5969 = vmatpush1.msra.mxu0 0.0
    %5970 = vmatprep.subr.mxu0 0.0
    %5971 = vmatpush1.msra.mxu0 0.0
    %5972 = vmatprep.subr.mxu0 0.0
    %5973 = vmatpush1.msra.mxu0 0.0
    %5974 = vmatprep.subr.mxu0 0.0
    %5975 = vmatpush1.msra.mxu0 0.0
    %5976 = vmatprep.subr.mxu0 0.0
    %5977 = vmatpush1.msra.mxu0 0.0
    %5978 = vmatprep.subr.mxu0 0.0
    %5979 = vmatpush1.msra.mxu0 0.0
    %5980 = vmatprep.subr.mxu0 0.0
    %5981 = vmatpush1.msra.mxu0 0.0
    %5982 = vmatprep.subr.mxu0 0.0
    %5983 = vmatpush1.msra.mxu0 0.0
    %5984 = vmatprep.subr.mxu0 0.0
    %5985 = vmatpush1.msra.mxu0 0.0
    %5986 = vmatprep.subr.mxu0 0.0
    %5987 = vmatpush1.msra.mxu0 0.0
    %5988 = vmatprep.subr.mxu0 0.0
    %5989 = vmatpush1.msra.mxu0 0.0
    %5990 = vmatprep.subr.mxu0 0.0
    %5991 = vmatpush1.msra.mxu0 0.0
    %5992 = vmatprep.subr.mxu0 0.0
    %5993 = vmatpush1.msra.mxu0 0.0
    %5994 = vmatprep.subr.mxu0 0.0
    %5995 = vmatpush1.msra.mxu0 0.0
    %5996 = vmatprep.subr.mxu0 0.0
    %5997 = vmatpush1.msra.mxu0 0.0
    %5998 = vmatprep.subr.mxu0 0.0
    %5999 = vmatpush1.msra.mxu0 0.0
    %6000 = vmatprep.mubr.f32.mxu0 0.0
    %6001 = vmatmul.mubr.f32.gmra.mrb[0].mxu0 %v2008
    %v6002 = vpop.f32.mrb[0].mxu0
    %v6003 = vadd.f32 %v5934, %v6002
    %v6004 = vpop.f32.mrb[0].mxu0
    %6005 = vmatprep.mubr.f32.mxu0 0.0
    %6006 = vmatmul.mubr.f32.gmra.mrb[0].mxu0 %v2011
    %v6007 = vpop.f32.mrb[0].mxu0
    %v6008 = vadd.f32 %v5934, %v6007
    %v6009 = vpop.f32.mrb[0].mxu0
    %6010 = vdwg.mxu0
    %v6011 = vmul.f32 %v5909, 0.35355338
    %v6012 = vmul.f32 %v5914, 0.35355338
    %v6014 = vsel %vm196, %v6011, 0
    %v6017 = vsel %vm196, %v6003, 0
    %6019 = vmatprep.subr.mxu0 0.0
    %6020 = vmatpush1.xpose.msra.mxu0 %v6017
    %6021 = vmatprep.subr.mxu0 0.0
    %6022 = vmatpush1.xpose.msra.mxu0 0.0
    %6023 = vmatprep.subr.mxu0 0.0
    %6024 = vmatpush1.xpose.msra.mxu0 0.0
    %6025 = vmatprep.subr.mxu0 0.0
    %6026 = vmatpush1.xpose.msra.mxu0 0.0
    %6027 = vmatprep.subr.mxu0 0.0
    %6028 = vmatpush1.xpose.msra.mxu0 0.0
    %6029 = vmatprep.subr.mxu0 0.0
    %6030 = vmatpush1.xpose.msra.mxu0 0.0
    %6031 = vmatprep.subr.mxu0 0.0
    %6032 = vmatpush1.xpose.msra.mxu0 0.0
    %6033 = vmatprep.subr.mxu0 0.0
    %6034 = vmatpush1.xpose.msra.mxu0 0.0
    %6035 = vmatprep.subr.mxu0 0.0
    %6036 = vmatpush1.xpose.msra.mxu0 0.0
    %6037 = vmatprep.subr.mxu0 0.0
    %6038 = vmatpush1.xpose.msra.mxu0 0.0
    %6039 = vmatprep.subr.mxu0 0.0
    %6040 = vmatpush1.xpose.msra.mxu0 0.0
    %6041 = vmatprep.subr.mxu0 0.0
    %6042 = vmatpush1.xpose.msra.mxu0 0.0
    %6043 = vmatprep.subr.mxu0 0.0
    %6044 = vmatpush1.xpose.msra.mxu0 0.0
    %6045 = vmatprep.subr.mxu0 0.0
    %6046 = vmatpush1.xpose.msra.mxu0 0.0
    %6047 = vmatprep.subr.mxu0 0.0
    %6048 = vmatpush1.xpose.msra.mxu0 0.0
    %6049 = vmatprep.subr.mxu0 0.0
    %6050 = vmatpush1.xpose.msra.mxu0 0.0
    %6051 = vmatprep.subr.mxu0 0.0
    %6052 = vmatpush1.xpose.msra.mxu0 0.0
    %6053 = vmatprep.subr.mxu0 0.0
    %6054 = vmatpush1.xpose.msra.mxu0 0.0
    %6055 = vmatprep.subr.mxu0 0.0
    %6056 = vmatpush1.xpose.msra.mxu0 0.0
    %6057 = vmatprep.subr.mxu0 0.0
    %6058 = vmatpush1.xpose.msra.mxu0 0.0
    %6059 = vmatprep.subr.mxu0 0.0
    %6060 = vmatpush1.xpose.msra.mxu0 0.0
    %6061 = vmatprep.subr.mxu0 0.0
    %6062 = vmatpush1.xpose.msra.mxu0 0.0
    %6063 = vmatprep.subr.mxu0 0.0
    %6064 = vmatpush1.xpose.msra.mxu0 0.0
    %6065 = vmatprep.subr.mxu0 0.0
    %6066 = vmatpush1.xpose.msra.mxu0 0.0
    %6067 = vmatprep.subr.mxu0 0.0
    %6068 = vmatpush1.xpose.msra.mxu0 0.0
    %6069 = vmatprep.subr.mxu0 0.0
    %6070 = vmatpush1.xpose.msra.mxu0 0.0
    %6071 = vmatprep.subr.mxu0 0.0
    %6072 = vmatpush1.xpose.msra.mxu0 0.0
    %6073 = vmatprep.subr.mxu0 0.0
    %6074 = vmatpush1.xpose.msra.mxu0 0.0
    %6075 = vmatprep.subr.mxu0 0.0
    %6076 = vmatpush1.xpose.msra.mxu0 0.0
    %6077 = vmatprep.subr.mxu0 0.0
    %6078 = vmatpush1.xpose.msra.mxu0 0.0
    %6079 = vmatprep.subr.mxu0 0.0
    %6080 = vmatpush1.xpose.msra.mxu0 0.0
    %6081 = vmatprep.subr.mxu0 0.0
    %6082 = vmatpush1.xpose.msra.mxu0 0.0
    %6083 = vmatprep.mubr.f32.mxu0 0.0
    %6084 = vmatmul.mubr.f32.gmra.mrb[0].mxu0 %v6014
    %v6085 = vpop.f32.mrb[0].mxu0
    %v6086 = vadd.f32 0.0, %v6085
    %v6087 = vpop.f32.mrb[0].mxu0
    %6088 = vdwg.mxu0
    %v6090 = vsel %vm196, %v6012, 0
    %v6093 = vsel %vm196, %v6008, 0
    %6095 = vmatprep.subr.mxu0 0.0
    %6096 = vmatpush1.xpose.msra.mxu0 %v6093
    %6097 = vmatprep.subr.mxu0 0.0
    %6098 = vmatpush1.xpose.msra.mxu0 0.0
    %6099 = vmatprep.subr.mxu0 0.0
    %6100 = vmatpush1.xpose.msra.mxu0 0.0
    %6101 = vmatprep.subr.mxu0 0.0
    %6102 = vmatpush1.xpose.msra.mxu0 0.0
    %6103 = vmatprep.subr.mxu0 0.0
    %6104 = vmatpush1.xpose.msra.mxu0 0.0
    %6105 = vmatprep.subr.mxu0 0.0
    %6106 = vmatpush1.xpose.msra.mxu0 0.0
    %6107 = vmatprep.subr.mxu0 0.0
    %6108 = vmatpush1.xpose.msra.mxu0 0.0
    %6109 = vmatprep.subr.mxu0 0.0
    %6110 = vmatpush1.xpose.msra.mxu0 0.0
    %6111 = vmatprep.subr.mxu0 0.0
    %6112 = vmatpush1.xpose.msra.mxu0 0.0
    %6113 = vmatprep.subr.mxu0 0.0
    %6114 = vmatpush1.xpose.msra.mxu0 0.0
    %6115 = vmatprep.subr.mxu0 0.0
    %6116 = vmatpush1.xpose.msra.mxu0 0.0
    %6117 = vmatprep.subr.mxu0 0.0
    %6118 = vmatpush1.xpose.msra.mxu0 0.0
    %6119 = vmatprep.subr.mxu0 0.0
    %6120 = vmatpush1.xpose.msra.mxu0 0.0
    %6121 = vmatprep.subr.mxu0 0.0
    %6122 = vmatpush1.xpose.msra.mxu0 0.0
    %6123 = vmatprep.subr.mxu0 0.0
    %6124 = vmatpush1.xpose.msra.mxu0 0.0
    %6125 = vmatprep.subr.mxu0 0.0
    %6126 = vmatpush1.xpose.msra.mxu0 0.0
    %6127 = vmatprep.subr.mxu0 0.0
    %6128 = vmatpush1.xpose.msra.mxu0 0.0
    %6129 = vmatprep.subr.mxu0 0.0
    %6130 = vmatpush1.xpose.msra.mxu0 0.0
    %6131 = vmatprep.subr.mxu0 0.0
    %6132 = vmatpush1.xpose.msra.mxu0 0.0
    %6133 = vmatprep.subr.mxu0 0.0
    %6134 = vmatpush1.xpose.msra.mxu0 0.0
    %6135 = vmatprep.subr.mxu0 0.0
    %6136 = vmatpush1.xpose.msra.mxu0 0.0
    %6137 = vmatprep.subr.mxu0 0.0
    %6138 = vmatpush1.xpose.msra.mxu0 0.0
    %6139 = vmatprep.subr.mxu0 0.0
    %6140 = vmatpush1.xpose.msra.mxu0 0.0
    %6141 = vmatprep.subr.mxu0 0.0
    %6142 = vmatpush1.xpose.msra.mxu0 0.0
    %6143 = vmatprep.subr.mxu0 0.0
    %6144 = vmatpush1.xpose.msra.mxu0 0.0
    %6145 = vmatprep.subr.mxu0 0.0
    %6146 = vmatpush1.xpose.msra.mxu0 0.0
    %6147 = vmatprep.subr.mxu0 0.0
    %6148 = vmatpush1.xpose.msra.mxu0 0.0
    %6149 = vmatprep.subr.mxu0 0.0
    %6150 = vmatpush1.xpose.msra.mxu0 0.0
    %6151 = vmatprep.subr.mxu0 0.0
    %6152 = vmatpush1.xpose.msra.mxu0 0.0
    %6153 = vmatprep.subr.mxu0 0.0
    %6154 = vmatpush1.xpose.msra.mxu0 0.0
    %6155 = vmatprep.subr.mxu0 0.0
    %6156 = vmatpush1.xpose.msra.mxu0 0.0
    %6157 = vmatprep.subr.mxu0 0.0
    %6158 = vmatpush1.xpose.msra.mxu0 0.0
    %6159 = vmatprep.mubr.f32.mxu0 0.0
    %6160 = vmatmul.mubr.f32.gmra.mrb[0].mxu0 %v6090
    %v6161 = vpop.f32.mrb[0].mxu0
    %v6162 = vadd.f32 0.0, %v6161
    %v6163 = vpop.f32.mrb[0].mxu0
    %6164 = vdwg.mxu0
    %v6165 = vsel %vm196, %v6086, -inf
    %6166 = vmax.xlane.f32.xlu0 %v6165
    %v6167 = vpop.xlane.xlu0 %6166
    %v6168 = vsel %vm196, %v6162, -inf
    %6169 = vmax.xlane.f32.xlu0 %v6168
    %v6170 = vpop.xlane.xlu0 %6169
    %v6171 = vsub.f32 %v6086, %v6167
    %v6172 = vsub.f32 %v6162, %v6170
    %v6173 = vmul.f32 %v6171, 1.442695
    %v6174 = vpow.pop %v6173
    %v6175 = vmul.f32 %v6172, 1.442695
    %v6176 = vpow.pop %v6175
    %v6177 = vsel %vm196, %v6174, 0.0
    %6178 = vadd.xlane.f32.xlu0 %v6177
    %v6179 = vpop.xlane.xlu0 %6178
    %v6180 = vsel %vm196, %v6176, 0.0
    %6181 = vadd.xlane.f32.xlu0 %v6180
    %v6182 = vpop.xlane.xlu0 %6181
    %v6183 = vrcp.pop %v6179
    %v6184 = vrcp.pop %v6182
    %v6185 = vmul.f32 %v6174, %v6183
    %v6186 = vmul.f32 %v6176, %v6184
    %6187 = vrot.lane.b32.xlu0 %v6003, 96
    %v6188 = vpop.permute.xlu0 %6187
    %v6191 = vsel %vm196, %v6185, 0
    %6193 = vmatprep.subr.mxu0 0.0
    %6194 = vmatpush1.msra.mxu0 %v6188
    %6195 = vmatprep.subr.mxu0 0.0
    %6196 = vmatpush1.msra.mxu0 0.0
    %6197 = vmatprep.subr.mxu0 0.0
    %6198 = vmatpush1.msra.mxu0 0.0
    %6199 = vmatprep.subr.mxu0 0.0
    %6200 = vmatpush1.msra.mxu0 0.0
    %6201 = vmatprep.subr.mxu0 0.0
    %6202 = vmatpush1.msra.mxu0 0.0
    %6203 = vmatprep.subr.mxu0 0.0
    %6204 = vmatpush1.msra.mxu0 0.0
    %6205 = vmatprep.subr.mxu0 0.0
    %6206 = vmatpush1.msra.mxu0 0.0
    %6207 = vmatprep.subr.mxu0 0.0
    %6208 = vmatpush1.msra.mxu0 0.0
    %6209 = vmatprep.subr.mxu0 0.0
    %6210 = vmatpush1.msra.mxu0 0.0
    %6211 = vmatprep.subr.mxu0 0.0
    %6212 = vmatpush1.msra.mxu0 0.0
    %6213 = vmatprep.subr.mxu0 0.0
    %6214 = vmatpush1.msra.mxu0 0.0
    %6215 = vmatprep.subr.mxu0 0.0
    %6216 = vmatpush1.msra.mxu0 0.0
    %6217 = vmatprep.subr.mxu0 0.0
    %6218 = vmatpush1.msra.mxu0 0.0
    %6219 = vmatprep.subr.mxu0 0.0
    %6220 = vmatpush1.msra.mxu0 0.0
    %6221 = vmatprep.subr.mxu0 0.0
    %6222 = vmatpush1.msra.mxu0 0.0
    %6223 = vmatprep.subr.mxu0 0.0
    %6224 = vmatpush1.msra.mxu0 0.0
    %6225 = vmatprep.subr.mxu0 0.0
    %6226 = vmatpush1.msra.mxu0 0.0
    %6227 = vmatprep.subr.mxu0 0.0
    %6228 = vmatpush1.msra.mxu0 0.0
    %6229 = vmatprep.subr.mxu0 0.0
    %6230 = vmatpush1.msra.mxu0 0.0
    %6231 = vmatprep.subr.mxu0 0.0
    %6232 = vmatpush1.msra.mxu0 0.0
    %6233 = vmatprep.subr.mxu0 0.0
    %6234 = vmatpush1.msra.mxu0 0.0
    %6235 = vmatprep.subr.mxu0 0.0
    %6236 = vmatpush1.msra.mxu0 0.0
    %6237 = vmatprep.subr.mxu0 0.0
    %6238 = vmatpush1.msra.mxu0 0.0
    %6239 = vmatprep.subr.mxu0 0.0
    %6240 = vmatpush1.msra.mxu0 0.0
    %6241 = vmatprep.subr.mxu0 0.0
    %6242 = vmatpush1.msra.mxu0 0.0
    %6243 = vmatprep.subr.mxu0 0.0
    %6244 = vmatpush1.msra.mxu0 0.0
    %6245 = vmatprep.subr.mxu0 0.0
    %6246 = vmatpush1.msra.mxu0 0.0
    %6247 = vmatprep.subr.mxu0 0.0
    %6248 = vmatpush1.msra.mxu0 0.0
    %6249 = vmatprep.subr.mxu0 0.0
    %6250 = vmatpush1.msra.mxu0 0.0
    %6251 = vmatprep.subr.mxu0 0.0
    %6252 = vmatpush1.msra.mxu0 0.0
    %6253 = vmatprep.subr.mxu0 0.0
    %6254 = vmatpush1.msra.mxu0 0.0
    %6255 = vmatprep.subr.mxu0 0.0
    %6256 = vmatpush1.msra.mxu0 0.0
    %6257 = vmatprep.mubr.f32.mxu0 0.0
    %6258 = vmatmul.mubr.f32.gmra.mrb[0].mxu0 %v6191
    %v6259 = vpop.f32.mrb[0].mxu0
    %v6260 = vadd.f32 0.0, %v6259
    %v6261 = vpop.f32.mrb[0].mxu0
    %6262 = vdwg.mxu0
    %6263 = vrot.lane.b32.xlu0 %v6008, 96
    %v6264 = vpop.permute.xlu0 %6263
    %v6267 = vsel %vm196, %v6186, 0
    %6269 = vmatprep.subr.mxu0 0.0
    %6270 = vmatpush1.msra.mxu0 %v6264
    %6271 = vmatprep.subr.mxu0 0.0
    %6272 = vmatpush1.msra.mxu0 0.0
    %6273 = vmatprep.subr.mxu0 0.0
    %6274 = vmatpush1.msra.mxu0 0.0
    %6275 = vmatprep.subr.mxu0 0.0
    %6276 = vmatpush1.msra.mxu0 0.0
    %6277 = vmatprep.subr.mxu0 0.0
    %6278 = vmatpush1.msra.mxu0 0.0
    %6279 = vmatprep.subr.mxu0 0.0
    %6280 = vmatpush1.msra.mxu0 0.0
    %6281 = vmatprep.subr.mxu0 0.0
    %6282 = vmatpush1.msra.mxu0 0.0
    %6283 = vmatprep.subr.mxu0 0.0
    %6284 = vmatpush1.msra.mxu0 0.0
    %6285 = vmatprep.subr.mxu0 0.0
    %6286 = vmatpush1.msra.mxu0 0.0
    %6287 = vmatprep.subr.mxu0 0.0
    %6288 = vmatpush1.msra.mxu0 0.0
    %6289 = vmatprep.subr.mxu0 0.0
    %6290 = vmatpush1.msra.mxu0 0.0
    %6291 = vmatprep.subr.mxu0 0.0
    %6292 = vmatpush1.msra.mxu0 0.0
    %6293 = vmatprep.subr.mxu0 0.0
    %6294 = vmatpush1.msra.mxu0 0.0
    %6295 = vmatprep.subr.mxu0 0.0
    %6296 = vmatpush1.msra.mxu0 0.0
    %6297 = vmatprep.subr.mxu0 0.0
    %6298 = vmatpush1.msra.mxu0 0.0
    %6299 = vmatprep.subr.mxu0 0.0
    %6300 = vmatpush1.msra.mxu0 0.0
    %6301 = vmatprep.subr.mxu0 0.0
    %6302 = vmatpush1.msra.mxu0 0.0
    %6303 = vmatprep.subr.mxu0 0.0
    %6304 = vmatpush1.msra.mxu0 0.0
    %6305 = vmatprep.subr.mxu0 0.0
    %6306 = vmatpush1.msra.mxu0 0.0
    %6307 = vmatprep.subr.mxu0 0.0
    %6308 = vmatpush1.msra.mxu0 0.0
    %6309 = vmatprep.subr.mxu0 0.0
    %6310 = vmatpush1.msra.mxu0 0.0
    %6311 = vmatprep.subr.mxu0 0.0
    %6312 = vmatpush1.msra.mxu0 0.0
    %6313 = vmatprep.subr.mxu0 0.0
    %6314 = vmatpush1.msra.mxu0 0.0
    %6315 = vmatprep.subr.mxu0 0.0
    %6316 = vmatpush1.msra.mxu0 0.0
    %6317 = vmatprep.subr.mxu0 0.0
    %6318 = vmatpush1.msra.mxu0 0.0
    %6319 = vmatprep.subr.mxu0 0.0
    %6320 = vmatpush1.msra.mxu0 0.0
    %6321 = vmatprep.subr.mxu0 0.0
    %6322 = vmatpush1.msra.mxu0 0.0
    %6323 = vmatprep.subr.mxu0 0.0
    %6324 = vmatpush1.msra.mxu0 0.0
    %6325 = vmatprep.subr.mxu0 0.0
    %6326 = vmatpush1.msra.mxu0 0.0
    %6327 = vmatprep.subr.mxu0 0.0
    %6328 = vmatpush1.msra.mxu0 0.0
    %6329 = vmatprep.subr.mxu0 0.0
    %6330 = vmatpush1.msra.mxu0 0.0
    %6331 = vmatprep.subr.mxu0 0.0
    %6332 = vmatpush1.msra.mxu0 0.0
    %6333 = vmatprep.mubr.f32.mxu0 0.0
    %6334 = vmatmul.mubr.f32.gmra.mrb[0].mxu0 %v6267
    %v6335 = vpop.f32.mrb[0].mxu0
    %v6336 = vadd.f32 0.0, %v6335
    %v6337 = vpop.f32.mrb[0].mxu0
    %6338 = vdwg.mxu0
    %6339 = vrot.lane.b32.xlu0 %v6011, 120
    %v6340 = vpop.permute.xlu0 %6339
    %6341 = vrot.lane.b32.xlu0 %v6003, 120
    %v6342 = vpop.permute.xlu0 %6341
    %v6343 = vsel %vm196, %v6340, 0
    %v6345 = vsel %vm196, %v6342, 0
    %6347 = vmatprep.subr.mxu0 0.0
    %6348 = vmatpush1.xpose.msra.mxu0 %v6345
    %6349 = vmatprep.subr.mxu0 0.0
    %6350 = vmatpush1.xpose.msra.mxu0 0.0
    %6351 = vmatprep.subr.mxu0 0.0
    %6352 = vmatpush1.xpose.msra.mxu0 0.0
    %6353 = vmatprep.subr.mxu0 0.0
    %6354 = vmatpush1.xpose.msra.mxu0 0.0
    %6355 = vmatprep.subr.mxu0 0.0
    %6356 = vmatpush1.xpose.msra.mxu0 0.0
    %6357 = vmatprep.subr.mxu0 0.0
    %6358 = vmatpush1.xpose.msra.mxu0 0.0
    %6359 = vmatprep.subr.mxu0 0.0
    %6360 = vmatpush1.xpose.msra.mxu0 0.0
    %6361 = vmatprep.subr.mxu0 0.0
    %6362 = vmatpush1.xpose.msra.mxu0 0.0
    %6363 = vmatprep.subr.mxu0 0.0
    %6364 = vmatpush1.xpose.msra.mxu0 0.0
    %6365 = vmatprep.subr.mxu0 0.0
    %6366 = vmatpush1.xpose.msra.mxu0 0.0
    %6367 = vmatprep.subr.mxu0 0.0
    %6368 = vmatpush1.xpose.msra.mxu0 0.0
    %6369 = vmatprep.subr.mxu0 0.0
    %6370 = vmatpush1.xpose.msra.mxu0 0.0
    %6371 = vmatprep.subr.mxu0 0.0
    %6372 = vmatpush1.xpose.msra.mxu0 0.0
    %6373 = vmatprep.subr.mxu0 0.0
    %6374 = vmatpush1.xpose.msra.mxu0 0.0
    %6375 = vmatprep.subr.mxu0 0.0
    %6376 = vmatpush1.xpose.msra.mxu0 0.0
    %6377 = vmatprep.subr.mxu0 0.0
    %6378 = vmatpush1.xpose.msra.mxu0 0.0
    %6379 = vmatprep.subr.mxu0 0.0
    %6380 = vmatpush1.xpose.msra.mxu0 0.0
    %6381 = vmatprep.subr.mxu0 0.0
    %6382 = vmatpush1.xpose.msra.mxu0 0.0
    %6383 = vmatprep.subr.mxu0 0.0
    %6384 = vmatpush1.xpose.msra.mxu0 0.0
    %6385 = vmatprep.subr.mxu0 0.0
    %6386 = vmatpush1.xpose.msra.mxu0 0.0
    %6387 = vmatprep.subr.mxu0 0.0
    %6388 = vmatpush1.xpose.msra.mxu0 0.0
    %6389 = vmatprep.subr.mxu0 0.0
    %6390 = vmatpush1.xpose.msra.mxu0 0.0
    %6391 = vmatprep.subr.mxu0 0.0
    %6392 = vmatpush1.xpose.msra.mxu0 0.0
    %6393 = vmatprep.subr.mxu0 0.0
    %6394 = vmatpush1.xpose.msra.mxu0 0.0
    %6395 = vmatprep.subr.mxu0 0.0
    %6396 = vmatpush1.xpose.msra.mxu0 0.0
    %6397 = vmatprep.subr.mxu0 0.0
    %6398 = vmatpush1.xpose.msra.mxu0 0.0
    %6399 = vmatprep.subr.mxu0 0.0
    %6400 = vmatpush1.xpose.msra.mxu0 0.0
    %6401 = vmatprep.subr.mxu0 0.0
    %6402 = vmatpush1.xpose.msra.mxu0 0.0
    %6403 = vmatprep.subr.mxu0 0.0
    %6404 = vmatpush1.xpose.msra.mxu0 0.0
    %6405 = vmatprep.subr.mxu0 0.0
    %6406 = vmatpush1.xpose.msra.mxu0 0.0
    %6407 = vmatprep.subr.mxu0 0.0
    %6408 = vmatpush1.xpose.msra.mxu0 0.0
    %6409 = vmatprep.subr.mxu0 0.0
    %6410 = vmatpush1.xpose.msra.mxu0 0.0
    %6411 = vmatprep.mubr.f32.mxu0 0.0
    %6412 = vmatmul.mubr.f32.gmra.mrb[0].mxu0 %v6343
    %v6413 = vpop.f32.mrb[0].mxu0
    %v6414 = vadd.f32 0.0, %v6413
    %v6415 = vpop.f32.mrb[0].mxu0
    %6416 = vdwg.mxu0
    %6417 = vrot.lane.b32.xlu0 %v6012, 120
    %v6418 = vpop.permute.xlu0 %6417
    %6419 = vrot.lane.b32.xlu0 %v6008, 120
    %v6420 = vpop.permute.xlu0 %6419
    %v6421 = vsel %vm196, %v6418, 0
    %v6423 = vsel %vm196, %v6420, 0
    %6425 = vmatprep.subr.mxu0 0.0
    %6426 = vmatpush1.xpose.msra.mxu0 %v6423
    %6427 = vmatprep.subr.mxu0 0.0
    %6428 = vmatpush1.xpose.msra.mxu0 0.0
    %6429 = vmatprep.subr.mxu0 0.0
    %6430 = vmatpush1.xpose.msra.mxu0 0.0
    %6431 = vmatprep.subr.mxu0 0.0
    %6432 = vmatpush1.xpose.msra.mxu0 0.0
    %6433 = vmatprep.subr.mxu0 0.0
    %6434 = vmatpush1.xpose.msra.mxu0 0.0
    %6435 = vmatprep.subr.mxu0 0.0
    %6436 = vmatpush1.xpose.msra.mxu0 0.0
    %6437 = vmatprep.subr.mxu0 0.0
    %6438 = vmatpush1.xpose.msra.mxu0 0.0
    %6439 = vmatprep.subr.mxu0 0.0
    %6440 = vmatpush1.xpose.msra.mxu0 0.0
    %6441 = vmatprep.subr.mxu0 0.0
    %6442 = vmatpush1.xpose.msra.mxu0 0.0
    %6443 = vmatprep.subr.mxu0 0.0
    %6444 = vmatpush1.xpose.msra.mxu0 0.0
    %6445 = vmatprep.subr.mxu0 0.0
    %6446 = vmatpush1.xpose.msra.mxu0 0.0
    %6447 = vmatprep.subr.mxu0 0.0
    %6448 = vmatpush1.xpose.msra.mxu0 0.0
    %6449 = vmatprep.subr.mxu0 0.0
    %6450 = vmatpush1.xpose.msra.mxu0 0.0
    %6451 = vmatprep.subr.mxu0 0.0
    %6452 = vmatpush1.xpose.msra.mxu0 0.0
    %6453 = vmatprep.subr.mxu0 0.0
    %6454 = vmatpush1.xpose.msra.mxu0 0.0
    %6455 = vmatprep.subr.mxu0 0.0
    %6456 = vmatpush1.xpose.msra.mxu0 0.0
    %6457 = vmatprep.subr.mxu0 0.0
    %6458 = vmatpush1.xpose.msra.mxu0 0.0
    %6459 = vmatprep.subr.mxu0 0.0
    %6460 = vmatpush1.xpose.msra.mxu0 0.0
    %6461 = vmatprep.subr.mxu0 0.0
    %6462 = vmatpush1.xpose.msra.mxu0 0.0
    %6463 = vmatprep.subr.mxu0 0.0
    %6464 = vmatpush1.xpose.msra.mxu0 0.0
    %6465 = vmatprep.subr.mxu0 0.0
    %6466 = vmatpush1.xpose.msra.mxu0 0.0
    %6467 = vmatprep.subr.mxu0 0.0
    %6468 = vmatpush1.xpose.msra.mxu0 0.0
    %6469 = vmatprep.subr.mxu0 0.0
    %6470 = vmatpush1.xpose.msra.mxu0 0.0
    %6471 = vmatprep.subr.mxu0 0.0
    %6472 = vmatpush1.xpose.msra.mxu0 0.0
    %6473 = vmatprep.subr.mxu0 0.0
    %6474 = vmatpush1.xpose.msra.mxu0 0.0
    %6475 = vmatprep.subr.mxu0 0.0
    %6476 = vmatpush1.xpose.msra.mxu0 0.0
    %6477 = vmatprep.subr.mxu0 0.0
    %6478 = vmatpush1.xpose.msra.mxu0 0.0
    %6479 = vmatprep.subr.mxu0 0.0
    %6480 = vmatpush1.xpose.msra.mxu0 0.0
    %6481 = vmatprep.subr.mxu0 0.0
    %6482 = vmatpush1.xpose.msra.mxu0 0.0
    %6483 = vmatprep.subr.mxu0 0.0
    %6484 = vmatpush1.xpose.msra.mxu0 0.0
    %6485 = vmatprep.subr.mxu0 0.0
    %6486 = vmatpush1.xpose.msra.mxu0 0.0
    %6487 = vmatprep.subr.mxu0 0.0
    %6488 = vmatpush1.xpose.msra.mxu0 0.0
    %6489 = vmatprep.mubr.f32.mxu0 0.0
    %6490 = vmatmul.mubr.f32.gmra.mrb[0].mxu0 %v6421
    %v6491 = vpop.f32.mrb[0].mxu0
    %v6492 = vadd.f32 0.0, %v6491
    %v6493 = vpop.f32.mrb[0].mxu0
    %6494 = vdwg.mxu0
    %v6495 = vsel %vm196, %v6414, -inf
    %6496 = vmax.xlane.f32.xlu0 %v6495
    %v6497 = vpop.xlane.xlu0 %6496
    %v6498 = vsel %vm196, %v6492, -inf
    %6499 = vmax.xlane.f32.xlu0 %v6498
    %v6500 = vpop.xlane.xlu0 %6499
    %v6501 = vsub.f32 %v6414, %v6497
    %v6502 = vsub.f32 %v6492, %v6500
    %v6503 = vmul.f32 %v6501, 1.442695
    %v6504 = vpow.pop %v6503
    %v6505 = vmul.f32 %v6502, 1.442695
    %v6506 = vpow.pop %v6505
    %v6507 = vsel %vm196, %v6504, 0.0
    %6508 = vadd.xlane.f32.xlu0 %v6507
    %v6509 = vpop.xlane.xlu0 %6508
    %v6510 = vsel %vm196, %v6506, 0.0
    %6511 = vadd.xlane.f32.xlu0 %v6510
    %v6512 = vpop.xlane.xlu0 %6511
    %v6513 = vrcp.pop %v6509
    %v6514 = vrcp.pop %v6512
    %v6515 = vmul.f32 %v6504, %v6513
    %v6516 = vmul.f32 %v6506, %v6514
    %6517 = vrot.lane.b32.xlu0 %v6003, 88
    %v6518 = vpop.permute.xlu0 %6517
    %v6521 = vsel %vm196, %v6515, 0
    %6523 = vmatprep.subr.mxu0 0.0
    %6524 = vmatpush1.msra.mxu0 %v6518
    %6525 = vmatprep.subr.mxu0 0.0
    %6526 = vmatpush1.msra.mxu0 0.0
    %6527 = vmatprep.subr.mxu0 0.0
    %6528 = vmatpush1.msra.mxu0 0.0
    %6529 = vmatprep.subr.mxu0 0.0
    %6530 = vmatpush1.msra.mxu0 0.0
    %6531 = vmatprep.subr.mxu0 0.0
    %6532 = vmatpush1.msra.mxu0 0.0
    %6533 = vmatprep.subr.mxu0 0.0
    %6534 = vmatpush1.msra.mxu0 0.0
    %6535 = vmatprep.subr.mxu0 0.0
    %6536 = vmatpush1.msra.mxu0 0.0
    %6537 = vmatprep.subr.mxu0 0.0
    %6538 = vmatpush1.msra.mxu0 0.0
    %6539 = vmatprep.subr.mxu0 0.0
    %6540 = vmatpush1.msra.mxu0 0.0
    %6541 = vmatprep.subr.mxu0 0.0
    %6542 = vmatpush1.msra.mxu0 0.0
    %6543 = vmatprep.subr.mxu0 0.0
    %6544 = vmatpush1.msra.mxu0 0.0
    %6545 = vmatprep.subr.mxu0 0.0
    %6546 = vmatpush1.msra.mxu0 0.0
    %6547 = vmatprep.subr.mxu0 0.0
    %6548 = vmatpush1.msra.mxu0 0.0
    %6549 = vmatprep.subr.mxu0 0.0
    %6550 = vmatpush1.msra.mxu0 0.0
    %6551 = vmatprep.subr.mxu0 0.0
    %6552 = vmatpush1.msra.mxu0 0.0
    %6553 = vmatprep.subr.mxu0 0.0
    %6554 = vmatpush1.msra.mxu0 0.0
    %6555 = vmatprep.subr.mxu0 0.0
    %6556 = vmatpush1.msra.mxu0 0.0
    %6557 = vmatprep.subr.mxu0 0.0
    %6558 = vmatpush1.msra.mxu0 0.0
    %6559 = vmatprep.subr.mxu0 0.0
    %6560 = vmatpush1.msra.mxu0 0.0
    %6561 = vmatprep.subr.mxu0 0.0
    %6562 = vmatpush1.msra.mxu0 0.0
    %6563 = vmatprep.subr.mxu0 0.0
    %6564 = vmatpush1.msra.mxu0 0.0
    %6565 = vmatprep.subr.mxu0 0.0
    %6566 = vmatpush1.msra.mxu0 0.0
    %6567 = vmatprep.subr.mxu0 0.0
    %6568 = vmatpush1.msra.mxu0 0.0
    %6569 = vmatprep.subr.mxu0 0.0
    %6570 = vmatpush1.msra.mxu0 0.0
    %6571 = vmatprep.subr.mxu0 0.0
    %6572 = vmatpush1.msra.mxu0 0.0
    %6573 = vmatprep.subr.mxu0 0.0
    %6574 = vmatpush1.msra.mxu0 0.0
    %6575 = vmatprep.subr.mxu0 0.0
    %6576 = vmatpush1.msra.mxu0 0.0
    %6577 = vmatprep.subr.mxu0 0.0
    %6578 = vmatpush1.msra.mxu0 0.0
    %6579 = vmatprep.subr.mxu0 0.0
    %6580 = vmatpush1.msra.mxu0 0.0
    %6581 = vmatprep.subr.mxu0 0.0
    %6582 = vmatpush1.msra.mxu0 0.0
    %6583 = vmatprep.subr.mxu0 0.0
    %6584 = vmatpush1.msra.mxu0 0.0
    %6585 = vmatprep.subr.mxu0 0.0
    %6586 = vmatpush1.msra.mxu0 0.0
    %6587 = vmatprep.mubr.f32.mxu0 0.0
    %6588 = vmatmul.mubr.f32.gmra.mrb[0].mxu0 %v6521
    %v6589 = vpop.f32.mrb[0].mxu0
    %v6590 = vadd.f32 0.0, %v6589
    %v6591 = vpop.f32.mrb[0].mxu0
    %6592 = vdwg.mxu0
    %6593 = vrot.lane.b32.xlu0 %v6008, 88
    %v6594 = vpop.permute.xlu0 %6593
    %v6597 = vsel %vm196, %v6516, 0
    %6599 = vmatprep.subr.mxu0 0.0
    %6600 = vmatpush1.msra.mxu0 %v6594
    %6601 = vmatprep.subr.mxu0 0.0
    %6602 = vmatpush1.msra.mxu0 0.0
    %6603 = vmatprep.subr.mxu0 0.0
    %6604 = vmatpush1.msra.mxu0 0.0
    %6605 = vmatprep.subr.mxu0 0.0
    %6606 = vmatpush1.msra.mxu0 0.0
    %6607 = vmatprep.subr.mxu0 0.0
    %6608 = vmatpush1.msra.mxu0 0.0
    %6609 = vmatprep.subr.mxu0 0.0
    %6610 = vmatpush1.msra.mxu0 0.0
    %6611 = vmatprep.subr.mxu0 0.0
    %6612 = vmatpush1.msra.mxu0 0.0
    %6613 = vmatprep.subr.mxu0 0.0
    %6614 = vmatpush1.msra.mxu0 0.0
    %6615 = vmatprep.subr.mxu0 0.0
    %6616 = vmatpush1.msra.mxu0 0.0
    %6617 = vmatprep.subr.mxu0 0.0
    %6618 = vmatpush1.msra.mxu0 0.0
    %6619 = vmatprep.subr.mxu0 0.0
    %6620 = vmatpush1.msra.mxu0 0.0
    %6621 = vmatprep.subr.mxu0 0.0
    %6622 = vmatpush1.msra.mxu0 0.0
    %6623 = vmatprep.subr.mxu0 0.0
    %6624 = vmatpush1.msra.mxu0 0.0
    %6625 = vmatprep.subr.mxu0 0.0
    %6626 = vmatpush1.msra.mxu0 0.0
    %6627 = vmatprep.subr.mxu0 0.0
    %6628 = vmatpush1.msra.mxu0 0.0
    %6629 = vmatprep.subr.mxu0 0.0
    %6630 = vmatpush1.msra.mxu0 0.0
    %6631 = vmatprep.subr.mxu0 0.0
    %6632 = vmatpush1.msra.mxu0 0.0
    %6633 = vmatprep.subr.mxu0 0.0
    %6634 = vmatpush1.msra.mxu0 0.0
    %6635 = vmatprep.subr.mxu0 0.0
    %6636 = vmatpush1.msra.mxu0 0.0
    %6637 = vmatprep.subr.mxu0 0.0
    %6638 = vmatpush1.msra.mxu0 0.0
    %6639 = vmatprep.subr.mxu0 0.0
    %6640 = vmatpush1.msra.mxu0 0.0
    %6641 = vmatprep.subr.mxu0 0.0
    %6642 = vmatpush1.msra.mxu0 0.0
    %6643 = vmatprep.subr.mxu0 0.0
    %6644 = vmatpush1.msra.mxu0 0.0
    %6645 = vmatprep.subr.mxu0 0.0
    %6646 = vmatpush1.msra.mxu0 0.0
    %6647 = vmatprep.subr.mxu0 0.0
    %6648 = vmatpush1.msra.mxu0 0.0
    %6649 = vmatprep.subr.mxu0 0.0
    %6650 = vmatpush1.msra.mxu0 0.0
    %6651 = vmatprep.subr.mxu0 0.0
    %6652 = vmatpush1.msra.mxu0 0.0
    %6653 = vmatprep.subr.mxu0 0.0
    %6654 = vmatpush1.msra.mxu0 0.0
    %6655 = vmatprep.subr.mxu0 0.0
    %6656 = vmatpush1.msra.mxu0 0.0
    %6657 = vmatprep.subr.mxu0 0.0
    %6658 = vmatpush1.msra.mxu0 0.0
    %6659 = vmatprep.subr.mxu0 0.0
    %6660 = vmatpush1.msra.mxu0 0.0
    %6661 = vmatprep.subr.mxu0 0.0
    %6662 = vmatpush1.msra.mxu0 0.0
    %6663 = vmatprep.mubr.f32.mxu0 0.0
    %6664 = vmatmul.mubr.f32.gmra.mrb[0].mxu0 %v6597
    %v6665 = vpop.f32.mrb[0].mxu0
    %v6666 = vadd.f32 0.0, %v6665
    %v6667 = vpop.f32.mrb[0].mxu0
    %6668 = vdwg.mxu0
    %v6670 = vsel %vm196, %v6590, 0
    %v6673 = vsel %vm196, %v6666, 0
    %6675 = vmatprep.subr.mxu0 0.0
    %6676 = vmatpush1.msra.mxu0 %v5825
    %6677 = vmatprep.subr.mxu0 0.0
    %6678 = vmatpush1.msra.mxu0 0.0
    %6679 = vmatprep.subr.mxu0 0.0
    %6680 = vmatpush1.msra.mxu0 0.0
    %6681 = vmatprep.subr.mxu0 0.0
    %6682 = vmatpush1.msra.mxu0 0.0
    %6683 = vmatprep.subr.mxu0 0.0
    %6684 = vmatpush1.msra.mxu0 0.0
    %6685 = vmatprep.subr.mxu0 0.0
    %6686 = vmatpush1.msra.mxu0 0.0
    %6687 = vmatprep.subr.mxu0 0.0
    %6688 = vmatpush1.msra.mxu0 0.0
    %6689 = vmatprep.subr.mxu0 0.0
    %6690 = vmatpush1.msra.mxu0 0.0
    %6691 = vmatprep.subr.mxu0 0.0
    %6692 = vmatpush1.msra.mxu0 0.0
    %6693 = vmatprep.subr.mxu0 0.0
    %6694 = vmatpush1.msra.mxu0 0.0
    %6695 = vmatprep.subr.mxu0 0.0
    %6696 = vmatpush1.msra.mxu0 0.0
    %6697 = vmatprep.subr.mxu0 0.0
    %6698 = vmatpush1.msra.mxu0 0.0
    %6699 = vmatprep.subr.mxu0 0.0
    %6700 = vmatpush1.msra.mxu0 0.0
    %6701 = vmatprep.subr.mxu0 0.0
    %6702 = vmatpush1.msra.mxu0 0.0
    %6703 = vmatprep.subr.mxu0 0.0
    %6704 = vmatpush1.msra.mxu0 0.0
    %6705 = vmatprep.subr.mxu0 0.0
    %6706 = vmatpush1.msra.mxu0 0.0
    %6707 = vmatprep.subr.mxu0 0.0
    %6708 = vmatpush1.msra.mxu0 0.0
    %6709 = vmatprep.subr.mxu0 0.0
    %6710 = vmatpush1.msra.mxu0 0.0
    %6711 = vmatprep.subr.mxu0 0.0
    %6712 = vmatpush1.msra.mxu0 0.0
    %6713 = vmatprep.subr.mxu0 0.0
    %6714 = vmatpush1.msra.mxu0 0.0
    %6715 = vmatprep.subr.mxu0 0.0
    %6716 = vmatpush1.msra.mxu0 0.0
    %6717 = vmatprep.subr.mxu0 0.0
    %6718 = vmatpush1.msra.mxu0 0.0
    %6719 = vmatprep.subr.mxu0 0.0
    %6720 = vmatpush1.msra.mxu0 0.0
    %6721 = vmatprep.subr.mxu0 0.0
    %6722 = vmatpush1.msra.mxu0 0.0
    %6723 = vmatprep.subr.mxu0 0.0
    %6724 = vmatpush1.msra.mxu0 0.0
    %6725 = vmatprep.subr.mxu0 0.0
    %6726 = vmatpush1.msra.mxu0 0.0
    %6727 = vmatprep.subr.mxu0 0.0
    %6728 = vmatpush1.msra.mxu0 0.0
    %6729 = vmatprep.subr.mxu0 0.0
    %6730 = vmatpush1.msra.mxu0 0.0
    %6731 = vmatprep.subr.mxu0 0.0
    %6732 = vmatpush1.msra.mxu0 0.0
    %6733 = vmatprep.subr.mxu0 0.0
    %6734 = vmatpush1.msra.mxu0 0.0
    %6735 = vmatprep.subr.mxu0 0.0
    %6736 = vmatpush1.msra.mxu0 0.0
    %6737 = vmatprep.subr.mxu0 0.0
    %6738 = vmatpush1.msra.mxu0 0.0
    %6739 = vmatprep.mubr.f32.mxu0 0.0
    %6740 = vmatmul.mubr.f32.gmra.mrb[0].mxu0 %v6670
    %v6741 = vpop.f32.mrb[0].mxu0
    %v6742 = vadd.f32 0.0, %v6741
    %v6743 = vpop.f32.mrb[0].mxu0
    %6744 = vmatprep.mubr.f32.mxu0 0.0
    %6745 = vmatmul.mubr.f32.gmra.mrb[0].mxu0 %v6673
    %v6746 = vpop.f32.mrb[0].mxu0
    %v6747 = vadd.f32 0.0, %v6746
    %v6748 = vpop.f32.mrb[0].mxu0
    %6749 = vdwg.mxu0
    %v6751 = vsel %vm196, %v6260, 0
    %v6754 = vsel %vm196, %v6336, 0
    %6756 = vmatprep.subr.mxu0 0.0
    %6757 = vmatpush1.msra.mxu0 %v5824
    %6758 = vmatprep.subr.mxu0 0.0
    %6759 = vmatpush1.msra.mxu0 0.0
    %6760 = vmatprep.subr.mxu0 0.0
    %6761 = vmatpush1.msra.mxu0 0.0
    %6762 = vmatprep.subr.mxu0 0.0
    %6763 = vmatpush1.msra.mxu0 0.0
    %6764 = vmatprep.subr.mxu0 0.0
    %6765 = vmatpush1.msra.mxu0 0.0
    %6766 = vmatprep.subr.mxu0 0.0
    %6767 = vmatpush1.msra.mxu0 0.0
    %6768 = vmatprep.subr.mxu0 0.0
    %6769 = vmatpush1.msra.mxu0 0.0
    %6770 = vmatprep.subr.mxu0 0.0
    %6771 = vmatpush1.msra.mxu0 0.0
    %6772 = vmatprep.subr.mxu0 0.0
    %6773 = vmatpush1.msra.mxu0 0.0
    %6774 = vmatprep.subr.mxu0 0.0
    %6775 = vmatpush1.msra.mxu0 0.0
    %6776 = vmatprep.subr.mxu0 0.0
    %6777 = vmatpush1.msra.mxu0 0.0
    %6778 = vmatprep.subr.mxu0 0.0
    %6779 = vmatpush1.msra.mxu0 0.0
    %6780 = vmatprep.subr.mxu0 0.0
    %6781 = vmatpush1.msra.mxu0 0.0
    %6782 = vmatprep.subr.mxu0 0.0
    %6783 = vmatpush1.msra.mxu0 0.0
    %6784 = vmatprep.subr.mxu0 0.0
    %6785 = vmatpush1.msra.mxu0 0.0
    %6786 = vmatprep.subr.mxu0 0.0
    %6787 = vmatpush1.msra.mxu0 0.0
    %6788 = vmatprep.subr.mxu0 0.0
    %6789 = vmatpush1.msra.mxu0 0.0
    %6790 = vmatprep.subr.mxu0 0.0
    %6791 = vmatpush1.msra.mxu0 0.0
    %6792 = vmatprep.subr.mxu0 0.0
    %6793 = vmatpush1.msra.mxu0 0.0
    %6794 = vmatprep.subr.mxu0 0.0
    %6795 = vmatpush1.msra.mxu0 0.0
    %6796 = vmatprep.subr.mxu0 0.0
    %6797 = vmatpush1.msra.mxu0 0.0
    %6798 = vmatprep.subr.mxu0 0.0
    %6799 = vmatpush1.msra.mxu0 0.0
    %6800 = vmatprep.subr.mxu0 0.0
    %6801 = vmatpush1.msra.mxu0 0.0
    %6802 = vmatprep.subr.mxu0 0.0
    %6803 = vmatpush1.msra.mxu0 0.0
    %6804 = vmatprep.subr.mxu0 0.0
    %6805 = vmatpush1.msra.mxu0 0.0
    %6806 = vmatprep.subr.mxu0 0.0
    %6807 = vmatpush1.msra.mxu0 0.0
    %6808 = vmatprep.subr.mxu0 0.0
    %6809 = vmatpush1.msra.mxu0 0.0
    %6810 = vmatprep.subr.mxu0 0.0
    %6811 = vmatpush1.msra.mxu0 0.0
    %6812 = vmatprep.subr.mxu0 0.0
    %6813 = vmatpush1.msra.mxu0 0.0
    %6814 = vmatprep.subr.mxu0 0.0
    %6815 = vmatpush1.msra.mxu0 0.0
    %6816 = vmatprep.subr.mxu0 0.0
    %6817 = vmatpush1.msra.mxu0 0.0
    %6818 = vmatprep.subr.mxu0 0.0
    %6819 = vmatpush1.msra.mxu0 0.0
    %6820 = vmatprep.mubr.f32.mxu0 0.0
    %6821 = vmatmul.mubr.f32.gmra.mrb[0].mxu0 %v6751
    %v6822 = vpop.f32.mrb[0].mxu0
    %v6823 = vadd.f32 %v6742, %v6822
    %v6824 = vpop.f32.mrb[0].mxu0
    %6825 = vmatprep.mubr.f32.mxu0 0.0
    %6826 = vmatmul.mubr.f32.gmra.mrb[0].mxu0 %v6754
    %v6827 = vpop.f32.mrb[0].mxu0
    %v6828 = vadd.f32 %v6747, %v6827
    %v6829 = vpop.f32.mrb[0].mxu0
    %6830 = vdwg.mxu0
    %6831 = vrot.lane.b32.xlu0 %v6011, 112
    %v6832 = vpop.permute.xlu0 %6831
    %6833 = vrot.lane.b32.xlu0 %v6003, 112
    %v6834 = vpop.permute.xlu0 %6833
    %v6835 = vsel %vm196, %v6832, 0
    %v6837 = vsel %vm196, %v6834, 0
    %6839 = vmatprep.subr.mxu0 0.0
    %6840 = vmatpush1.xpose.msra.mxu0 %v6837
    %6841 = vmatprep.subr.mxu0 0.0
    %6842 = vmatpush1.xpose.msra.mxu0 0.0
    %6843 = vmatprep.subr.mxu0 0.0
    %6844 = vmatpush1.xpose.msra.mxu0 0.0
    %6845 = vmatprep.subr.mxu0 0.0
    %6846 = vmatpush1.xpose.msra.mxu0 0.0
    %6847 = vmatprep.subr.mxu0 0.0
    %6848 = vmatpush1.xpose.msra.mxu0 0.0
    %6849 = vmatprep.subr.mxu0 0.0
    %6850 = vmatpush1.xpose.msra.mxu0 0.0
    %6851 = vmatprep.subr.mxu0 0.0
    %6852 = vmatpush1.xpose.msra.mxu0 0.0
    %6853 = vmatprep.subr.mxu0 0.0
    %6854 = vmatpush1.xpose.msra.mxu0 0.0
    %6855 = vmatprep.subr.mxu0 0.0
    %6856 = vmatpush1.xpose.msra.mxu0 0.0
    %6857 = vmatprep.subr.mxu0 0.0
    %6858 = vmatpush1.xpose.msra.mxu0 0.0
    %6859 = vmatprep.subr.mxu0 0.0
    %6860 = vmatpush1.xpose.msra.mxu0 0.0
    %6861 = vmatprep.subr.mxu0 0.0
    %6862 = vmatpush1.xpose.msra.mxu0 0.0
    %6863 = vmatprep.subr.mxu0 0.0
    %6864 = vmatpush1.xpose.msra.mxu0 0.0
    %6865 = vmatprep.subr.mxu0 0.0
    %6866 = vmatpush1.xpose.msra.mxu0 0.0
    %6867 = vmatprep.subr.mxu0 0.0
    %6868 = vmatpush1.xpose.msra.mxu0 0.0
    %6869 = vmatprep.subr.mxu0 0.0
    %6870 = vmatpush1.xpose.msra.mxu0 0.0
    %6871 = vmatprep.subr.mxu0 0.0
    %6872 = vmatpush1.xpose.msra.mxu0 0.0
    %6873 = vmatprep.subr.mxu0 0.0
    %6874 = vmatpush1.xpose.msra.mxu0 0.0
    %6875 = vmatprep.subr.mxu0 0.0
    %6876 = vmatpush1.xpose.msra.mxu0 0.0
    %6877 = vmatprep.subr.mxu0 0.0
    %6878 = vmatpush1.xpose.msra.mxu0 0.0
    %6879 = vmatprep.subr.mxu0 0.0
    %6880 = vmatpush1.xpose.msra.mxu0 0.0
    %6881 = vmatprep.subr.mxu0 0.0
    %6882 = vmatpush1.xpose.msra.mxu0 0.0
    %6883 = vmatprep.subr.mxu0 0.0
    %6884 = vmatpush1.xpose.msra.mxu0 0.0
    %6885 = vmatprep.subr.mxu0 0.0
    %6886 = vmatpush1.xpose.msra.mxu0 0.0
    %6887 = vmatprep.subr.mxu0 0.0
    %6888 = vmatpush1.xpose.msra.mxu0 0.0
    %6889 = vmatprep.subr.mxu0 0.0
    %6890 = vmatpush1.xpose.msra.mxu0 0.0
    %6891 = vmatprep.subr.mxu0 0.0
    %6892 = vmatpush1.xpose.msra.mxu0 0.0
    %6893 = vmatprep.subr.mxu0 0.0
    %6894 = vmatpush1.xpose.msra.mxu0 0.0
    %6895 = vmatprep.subr.mxu0 0.0
    %6896 = vmatpush1.xpose.msra.mxu0 0.0
    %6897 = vmatprep.subr.mxu0 0.0
    %6898 = vmatpush1.xpose.msra.mxu0 0.0
    %6899 = vmatprep.subr.mxu0 0.0
    %6900 = vmatpush1.xpose.msra.mxu0 0.0
    %6901 = vmatprep.subr.mxu0 0.0
    %6902 = vmatpush1.xpose.msra.mxu0 0.0
    %6903 = vmatprep.mubr.f32.mxu0 0.0
    %6904 = vmatmul.mubr.f32.gmra.mrb[0].mxu0 %v6835
    %v6905 = vpop.f32.mrb[0].mxu0
    %v6906 = vadd.f32 0.0, %v6905
    %v6907 = vpop.f32.mrb[0].mxu0
    %6908 = vdwg.mxu0
    %6909 = vrot.lane.b32.xlu0 %v6012, 112
    %v6910 = vpop.permute.xlu0 %6909
    %6911 = vrot.lane.b32.xlu0 %v6008, 112
    %v6912 = vpop.permute.xlu0 %6911
    %v6913 = vsel %vm196, %v6910, 0
    %v6915 = vsel %vm196, %v6912, 0
    %6917 = vmatprep.subr.mxu0 0.0
    %6918 = vmatpush1.xpose.msra.mxu0 %v6915
    %6919 = vmatprep.subr.mxu0 0.0
    %6920 = vmatpush1.xpose.msra.mxu0 0.0
    %6921 = vmatprep.subr.mxu0 0.0
    %6922 = vmatpush1.xpose.msra.mxu0 0.0
    %6923 = vmatprep.subr.mxu0 0.0
    %6924 = vmatpush1.xpose.msra.mxu0 0.0
    %6925 = vmatprep.subr.mxu0 0.0
    %6926 = vmatpush1.xpose.msra.mxu0 0.0
    %6927 = vmatprep.subr.mxu0 0.0
    %6928 = vmatpush1.xpose.msra.mxu0 0.0
    %6929 = vmatprep.subr.mxu0 0.0
    %6930 = vmatpush1.xpose.msra.mxu0 0.0
    %6931 = vmatprep.subr.mxu0 0.0
    %6932 = vmatpush1.xpose.msra.mxu0 0.0
    %6933 = vmatprep.subr.mxu0 0.0
    %6934 = vmatpush1.xpose.msra.mxu0 0.0
    %6935 = vmatprep.subr.mxu0 0.0
    %6936 = vmatpush1.xpose.msra.mxu0 0.0
    %6937 = vmatprep.subr.mxu0 0.0
    %6938 = vmatpush1.xpose.msra.mxu0 0.0
    %6939 = vmatprep.subr.mxu0 0.0
    %6940 = vmatpush1.xpose.msra.mxu0 0.0
    %6941 = vmatprep.subr.mxu0 0.0
    %6942 = vmatpush1.xpose.msra.mxu0 0.0
    %6943 = vmatprep.subr.mxu0 0.0
    %6944 = vmatpush1.xpose.msra.mxu0 0.0
    %6945 = vmatprep.subr.mxu0 0.0
    %6946 = vmatpush1.xpose.msra.mxu0 0.0
    %6947 = vmatprep.subr.mxu0 0.0
    %6948 = vmatpush1.xpose.msra.mxu0 0.0
    %6949 = vmatprep.subr.mxu0 0.0
    %6950 = vmatpush1.xpose.msra.mxu0 0.0
    %6951 = vmatprep.subr.mxu0 0.0
    %6952 = vmatpush1.xpose.msra.mxu0 0.0
    %6953 = vmatprep.subr.mxu0 0.0
    %6954 = vmatpush1.xpose.msra.mxu0 0.0
    %6955 = vmatprep.subr.mxu0 0.0
    %6956 = vmatpush1.xpose.msra.mxu0 0.0
    %6957 = vmatprep.subr.mxu0 0.0
    %6958 = vmatpush1.xpose.msra.mxu0 0.0
    %6959 = vmatprep.subr.mxu0 0.0
    %6960 = vmatpush1.xpose.msra.mxu0 0.0
    %6961 = vmatprep.subr.mxu0 0.0
    %6962 = vmatpush1.xpose.msra.mxu0 0.0
    %6963 = vmatprep.subr.mxu0 0.0
    %6964 = vmatpush1.xpose.msra.mxu0 0.0
    %6965 = vmatprep.subr.mxu0 0.0
    %6966 = vmatpush1.xpose.msra.mxu0 0.0
    %6967 = vmatprep.subr.mxu0 0.0
    %6968 = vmatpush1.xpose.msra.mxu0 0.0
    %6969 = vmatprep.subr.mxu0 0.0
    %6970 = vmatpush1.xpose.msra.mxu0 0.0
    %6971 = vmatprep.subr.mxu0 0.0
    %6972 = vmatpush1.xpose.msra.mxu0 0.0
    %6973 = vmatprep.subr.mxu0 0.0
    %6974 = vmatpush1.xpose.msra.mxu0 0.0
    %6975 = vmatprep.subr.mxu0 0.0
    %6976 = vmatpush1.xpose.msra.mxu0 0.0
    %6977 = vmatprep.subr.mxu0 0.0
    %6978 = vmatpush1.xpose.msra.mxu0 0.0
    %6979 = vmatprep.subr.mxu0 0.0
    %6980 = vmatpush1.xpose.msra.mxu0 0.0
    %6981 = vmatprep.mubr.f32.mxu0 0.0
    %6982 = vmatmul.mubr.f32.gmra.mrb[0].mxu0 %v6913
    %v6983 = vpop.f32.mrb[0].mxu0
    %v6984 = vadd.f32 0.0, %v6983
    %v6985 = vpop.f32.mrb[0].mxu0
    %6986 = vdwg.mxu0
    %v6987 = vsel %vm196, %v6906, -inf
    %6988 = vmax.xlane.f32.xlu0 %v6987
    %v6989 = vpop.xlane.xlu0 %6988
    %v6990 = vsel %vm196, %v6984, -inf
    %6991 = vmax.xlane.f32.xlu0 %v6990
    %v6992 = vpop.xlane.xlu0 %6991
    %v6993 = vsub.f32 %v6906, %v6989
    %v6994 = vsub.f32 %v6984, %v6992
    %v6995 = vmul.f32 %v6993, 1.442695
    %v6996 = vpow.pop %v6995
    %v6997 = vmul.f32 %v6994, 1.442695
    %v6998 = vpow.pop %v6997
    %v6999 = vsel %vm196, %v6996, 0.0
    %7000 = vadd.xlane.f32.xlu0 %v6999
    %v7001 = vpop.xlane.xlu0 %7000
    %v7002 = vsel %vm196, %v6998, 0.0
    %7003 = vadd.xlane.f32.xlu0 %v7002
    %v7004 = vpop.xlane.xlu0 %7003
    %v7005 = vrcp.pop %v7001
    %v7006 = vrcp.pop %v7004
    %v7007 = vmul.f32 %v6996, %v7005
    %v7008 = vmul.f32 %v6998, %v7006
    %7009 = vrot.lane.b32.xlu0 %v6003, 80
    %v7010 = vpop.permute.xlu0 %7009
    %v7013 = vsel %vm196, %v7007, 0
    %7015 = vmatprep.subr.mxu0 0.0
    %7016 = vmatpush1.msra.mxu0 %v7010
    %7017 = vmatprep.subr.mxu0 0.0
    %7018 = vmatpush1.msra.mxu0 0.0
    %7019 = vmatprep.subr.mxu0 0.0
    %7020 = vmatpush1.msra.mxu0 0.0
    %7021 = vmatprep.subr.mxu0 0.0
    %7022 = vmatpush1.msra.mxu0 0.0
    %7023 = vmatprep.subr.mxu0 0.0
    %7024 = vmatpush1.msra.mxu0 0.0
    %7025 = vmatprep.subr.mxu0 0.0
    %7026 = vmatpush1.msra.mxu0 0.0
    %7027 = vmatprep.subr.mxu0 0.0
    %7028 = vmatpush1.msra.mxu0 0.0
    %7029 = vmatprep.subr.mxu0 0.0
    %7030 = vmatpush1.msra.mxu0 0.0
    %7031 = vmatprep.subr.mxu0 0.0
    %7032 = vmatpush1.msra.mxu0 0.0
    %7033 = vmatprep.subr.mxu0 0.0
    %7034 = vmatpush1.msra.mxu0 0.0
    %7035 = vmatprep.subr.mxu0 0.0
    %7036 = vmatpush1.msra.mxu0 0.0
    %7037 = vmatprep.subr.mxu0 0.0
    %7038 = vmatpush1.msra.mxu0 0.0
    %7039 = vmatprep.subr.mxu0 0.0
    %7040 = vmatpush1.msra.mxu0 0.0
    %7041 = vmatprep.subr.mxu0 0.0
    %7042 = vmatpush1.msra.mxu0 0.0
    %7043 = vmatprep.subr.mxu0 0.0
    %7044 = vmatpush1.msra.mxu0 0.0
    %7045 = vmatprep.subr.mxu0 0.0
    %7046 = vmatpush1.msra.mxu0 0.0
    %7047 = vmatprep.subr.mxu0 0.0
    %7048 = vmatpush1.msra.mxu0 0.0
    %7049 = vmatprep.subr.mxu0 0.0
    %7050 = vmatpush1.msra.mxu0 0.0
    %7051 = vmatprep.subr.mxu0 0.0
    %7052 = vmatpush1.msra.mxu0 0.0
    %7053 = vmatprep.subr.mxu0 0.0
    %7054 = vmatpush1.msra.mxu0 0.0
    %7055 = vmatprep.subr.mxu0 0.0
    %7056 = vmatpush1.msra.mxu0 0.0
    %7057 = vmatprep.subr.mxu0 0.0
    %7058 = vmatpush1.msra.mxu0 0.0
    %7059 = vmatprep.subr.mxu0 0.0
    %7060 = vmatpush1.msra.mxu0 0.0
    %7061 = vmatprep.subr.mxu0 0.0
    %7062 = vmatpush1.msra.mxu0 0.0
    %7063 = vmatprep.subr.mxu0 0.0
    %7064 = vmatpush1.msra.mxu0 0.0
    %7065 = vmatprep.subr.mxu0 0.0
    %7066 = vmatpush1.msra.mxu0 0.0
    %7067 = vmatprep.subr.mxu0 0.0
    %7068 = vmatpush1.msra.mxu0 0.0
    %7069 = vmatprep.subr.mxu0 0.0
    %7070 = vmatpush1.msra.mxu0 0.0
    %7071 = vmatprep.subr.mxu0 0.0
    %7072 = vmatpush1.msra.mxu0 0.0
    %7073 = vmatprep.subr.mxu0 0.0
    %7074 = vmatpush1.msra.mxu0 0.0
    %7075 = vmatprep.subr.mxu0 0.0
    %7076 = vmatpush1.msra.mxu0 0.0
    %7077 = vmatprep.subr.mxu0 0.0
    %7078 = vmatpush1.msra.mxu0 0.0
    %7079 = vmatprep.mubr.f32.mxu0 0.0
    %7080 = vmatmul.mubr.f32.gmra.mrb[0].mxu0 %v7013
    %v7081 = vpop.f32.mrb[0].mxu0
    %v7082 = vadd.f32 0.0, %v7081
    %v7083 = vpop.f32.mrb[0].mxu0
    %7084 = vdwg.mxu0
    %7085 = vrot.lane.b32.xlu0 %v6008, 80
    %v7086 = vpop.permute.xlu0 %7085
    %v7089 = vsel %vm196, %v7008, 0
    %7091 = vmatprep.subr.mxu0 0.0
    %7092 = vmatpush1.msra.mxu0 %v7086
    %7093 = vmatprep.subr.mxu0 0.0
    %7094 = vmatpush1.msra.mxu0 0.0
    %7095 = vmatprep.subr.mxu0 0.0
    %7096 = vmatpush1.msra.mxu0 0.0
    %7097 = vmatprep.subr.mxu0 0.0
    %7098 = vmatpush1.msra.mxu0 0.0
    %7099 = vmatprep.subr.mxu0 0.0
    %7100 = vmatpush1.msra.mxu0 0.0
    %7101 = vmatprep.subr.mxu0 0.0
    %7102 = vmatpush1.msra.mxu0 0.0
    %7103 = vmatprep.subr.mxu0 0.0
    %7104 = vmatpush1.msra.mxu0 0.0
    %7105 = vmatprep.subr.mxu0 0.0
    %7106 = vmatpush1.msra.mxu0 0.0
    %7107 = vmatprep.subr.mxu0 0.0
    %7108 = vmatpush1.msra.mxu0 0.0
    %7109 = vmatprep.subr.mxu0 0.0
    %7110 = vmatpush1.msra.mxu0 0.0
    %7111 = vmatprep.subr.mxu0 0.0
    %7112 = vmatpush1.msra.mxu0 0.0
    %7113 = vmatprep.subr.mxu0 0.0
    %7114 = vmatpush1.msra.mxu0 0.0
    %7115 = vmatprep.subr.mxu0 0.0
    %7116 = vmatpush1.msra.mxu0 0.0
    %7117 = vmatprep.subr.mxu0 0.0
    %7118 = vmatpush1.msra.mxu0 0.0
    %7119 = vmatprep.subr.mxu0 0.0
    %7120 = vmatpush1.msra.mxu0 0.0
    %7121 = vmatprep.subr.mxu0 0.0
    %7122 = vmatpush1.msra.mxu0 0.0
    %7123 = vmatprep.subr.mxu0 0.0
    %7124 = vmatpush1.msra.mxu0 0.0
    %7125 = vmatprep.subr.mxu0 0.0
    %7126 = vmatpush1.msra.mxu0 0.0
    %7127 = vmatprep.subr.mxu0 0.0
    %7128 = vmatpush1.msra.mxu0 0.0
    %7129 = vmatprep.subr.mxu0 0.0
    %7130 = vmatpush1.msra.mxu0 0.0
    %7131 = vmatprep.subr.mxu0 0.0
    %7132 = vmatpush1.msra.mxu0 0.0
    %7133 = vmatprep.subr.mxu0 0.0
    %7134 = vmatpush1.msra.mxu0 0.0
    %7135 = vmatprep.subr.mxu0 0.0
    %7136 = vmatpush1.msra.mxu0 0.0
    %7137 = vmatprep.subr.mxu0 0.0
    %7138 = vmatpush1.msra.mxu0 0.0
    %7139 = vmatprep.subr.mxu0 0.0
    %7140 = vmatpush1.msra.mxu0 0.0
    %7141 = vmatprep.subr.mxu0 0.0
    %7142 = vmatpush1.msra.mxu0 0.0
    %7143 = vmatprep.subr.mxu0 0.0
    %7144 = vmatpush1.msra.mxu0 0.0
    %7145 = vmatprep.subr.mxu0 0.0
    %7146 = vmatpush1.msra.mxu0 0.0
    %7147 = vmatprep.subr.mxu0 0.0
    %7148 = vmatpush1.msra.mxu0 0.0
    %7149 = vmatprep.subr.mxu0 0.0
    %7150 = vmatpush1.msra.mxu0 0.0
    %7151 = vmatprep.subr.mxu0 0.0
    %7152 = vmatpush1.msra.mxu0 0.0
    %7153 = vmatprep.subr.mxu0 0.0
    %7154 = vmatpush1.msra.mxu0 0.0
    %7155 = vmatprep.mubr.f32.mxu0 0.0
    %7156 = vmatmul.mubr.f32.gmra.mrb[0].mxu0 %v7089
    %v7157 = vpop.f32.mrb[0].mxu0
    %v7158 = vadd.f32 0.0, %v7157
    %v7159 = vpop.f32.mrb[0].mxu0
    %7160 = vdwg.mxu0
    %v7162 = vsel %vm196, %v7082, 0
    %v7165 = vsel %vm196, %v7158, 0
    %7167 = vmatprep.subr.mxu0 0.0
    %7168 = vmatpush1.msra.mxu0 %v5826
    %7169 = vmatprep.subr.mxu0 0.0
    %7170 = vmatpush1.msra.mxu0 0.0
    %7171 = vmatprep.subr.mxu0 0.0
    %7172 = vmatpush1.msra.mxu0 0.0
    %7173 = vmatprep.subr.mxu0 0.0
    %7174 = vmatpush1.msra.mxu0 0.0
    %7175 = vmatprep.subr.mxu0 0.0
    %7176 = vmatpush1.msra.mxu0 0.0
    %7177 = vmatprep.subr.mxu0 0.0
    %7178 = vmatpush1.msra.mxu0 0.0
    %7179 = vmatprep.subr.mxu0 0.0
    %7180 = vmatpush1.msra.mxu0 0.0
    %7181 = vmatprep.subr.mxu0 0.0
    %7182 = vmatpush1.msra.mxu0 0.0
    %7183 = vmatprep.subr.mxu0 0.0
    %7184 = vmatpush1.msra.mxu0 0.0
    %7185 = vmatprep.subr.mxu0 0.0
    %7186 = vmatpush1.msra.mxu0 0.0
    %7187 = vmatprep.subr.mxu0 0.0
    %7188 = vmatpush1.msra.mxu0 0.0
    %7189 = vmatprep.subr.mxu0 0.0
    %7190 = vmatpush1.msra.mxu0 0.0
    %7191 = vmatprep.subr.mxu0 0.0
    %7192 = vmatpush1.msra.mxu0 0.0
    %7193 = vmatprep.subr.mxu0 0.0
    %7194 = vmatpush1.msra.mxu0 0.0
    %7195 = vmatprep.subr.mxu0 0.0
    %7196 = vmatpush1.msra.mxu0 0.0
    %7197 = vmatprep.subr.mxu0 0.0
    %7198 = vmatpush1.msra.mxu0 0.0
    %7199 = vmatprep.subr.mxu0 0.0
    %7200 = vmatpush1.msra.mxu0 0.0
    %7201 = vmatprep.subr.mxu0 0.0
    %7202 = vmatpush1.msra.mxu0 0.0
    %7203 = vmatprep.subr.mxu0 0.0
    %7204 = vmatpush1.msra.mxu0 0.0
    %7205 = vmatprep.subr.mxu0 0.0
    %7206 = vmatpush1.msra.mxu0 0.0
    %7207 = vmatprep.subr.mxu0 0.0
    %7208 = vmatpush1.msra.mxu0 0.0
    %7209 = vmatprep.subr.mxu0 0.0
    %7210 = vmatpush1.msra.mxu0 0.0
    %7211 = vmatprep.subr.mxu0 0.0
    %7212 = vmatpush1.msra.mxu0 0.0
    %7213 = vmatprep.subr.mxu0 0.0
    %7214 = vmatpush1.msra.mxu0 0.0
    %7215 = vmatprep.subr.mxu0 0.0
    %7216 = vmatpush1.msra.mxu0 0.0
    %7217 = vmatprep.subr.mxu0 0.0
    %7218 = vmatpush1.msra.mxu0 0.0
    %7219 = vmatprep.subr.mxu0 0.0
    %7220 = vmatpush1.msra.mxu0 0.0
    %7221 = vmatprep.subr.mxu0 0.0
    %7222 = vmatpush1.msra.mxu0 0.0
    %7223 = vmatprep.subr.mxu0 0.0
    %7224 = vmatpush1.msra.mxu0 0.0
    %7225 = vmatprep.subr.mxu0 0.0
    %7226 = vmatpush1.msra.mxu0 0.0
    %7227 = vmatprep.subr.mxu0 0.0
    %7228 = vmatpush1.msra.mxu0 0.0
    %7229 = vmatprep.subr.mxu0 0.0
    %7230 = vmatpush1.msra.mxu0 0.0
    %7231 = vmatprep.mubr.f32.mxu0 0.0
    %7232 = vmatmul.mubr.f32.gmra.mrb[0].mxu0 %v7162
    %v7233 = vpop.f32.mrb[0].mxu0
    %v7234 = vadd.f32 0.0, %v7233
    %v7235 = vpop.f32.mrb[0].mxu0
    %7236 = vmatprep.mubr.f32.mxu0 0.0
    %7237 = vmatmul.mubr.f32.gmra.mrb[0].mxu0 %v7165
    %v7238 = vpop.f32.mrb[0].mxu0
    %v7239 = vadd.f32 0.0, %v7238
    %v7240 = vpop.f32.mrb[0].mxu0
    %7241 = vdwg.mxu0
    %v7242 = vadd.f32 %v6823, %v7234
    %v7243 = vadd.f32 %v6828, %v7239
    %7244 = vrot.lane.b32.xlu0 %v6011, 104
    %v7245 = vpop.permute.xlu0 %7244
    %7246 = vrot.lane.b32.xlu0 %v6003, 104
    %v7247 = vpop.permute.xlu0 %7246
    %v7248 = vsel %vm196, %v7245, 0
    %v7250 = vsel %vm196, %v7247, 0
    %7252 = vmatprep.subr.mxu0 0.0
    %7253 = vmatpush1.xpose.msra.mxu0 %v7250
    %7254 = vmatprep.subr.mxu0 0.0
    %7255 = vmatpush1.xpose.msra.mxu0 0.0
    %7256 = vmatprep.subr.mxu0 0.0
    %7257 = vmatpush1.xpose.msra.mxu0 0.0
    %7258 = vmatprep.subr.mxu0 0.0
    %7259 = vmatpush1.xpose.msra.mxu0 0.0
    %7260 = vmatprep.subr.mxu0 0.0
    %7261 = vmatpush1.xpose.msra.mxu0 0.0
    %7262 = vmatprep.subr.mxu0 0.0
    %7263 = vmatpush1.xpose.msra.mxu0 0.0
    %7264 = vmatprep.subr.mxu0 0.0
    %7265 = vmatpush1.xpose.msra.mxu0 0.0
    %7266 = vmatprep.subr.mxu0 0.0
    %7267 = vmatpush1.xpose.msra.mxu0 0.0
    %7268 = vmatprep.subr.mxu0 0.0
    %7269 = vmatpush1.xpose.msra.mxu0 0.0
    %7270 = vmatprep.subr.mxu0 0.0
    %7271 = vmatpush1.xpose.msra.mxu0 0.0
    %7272 = vmatprep.subr.mxu0 0.0
    %7273 = vmatpush1.xpose.msra.mxu0 0.0
    %7274 = vmatprep.subr.mxu0 0.0
    %7275 = vmatpush1.xpose.msra.mxu0 0.0
    %7276 = vmatprep.subr.mxu0 0.0
    %7277 = vmatpush1.xpose.msra.mxu0 0.0
    %7278 = vmatprep.subr.mxu0 0.0
    %7279 = vmatpush1.xpose.msra.mxu0 0.0
    %7280 = vmatprep.subr.mxu0 0.0
    %7281 = vmatpush1.xpose.msra.mxu0 0.0
    %7282 = vmatprep.subr.mxu0 0.0
    %7283 = vmatpush1.xpose.msra.mxu0 0.0
    %7284 = vmatprep.subr.mxu0 0.0
    %7285 = vmatpush1.xpose.msra.mxu0 0.0
    %7286 = vmatprep.subr.mxu0 0.0
    %7287 = vmatpush1.xpose.msra.mxu0 0.0
    %7288 = vmatprep.subr.mxu0 0.0
    %7289 = vmatpush1.xpose.msra.mxu0 0.0
    %7290 = vmatprep.subr.mxu0 0.0
    %7291 = vmatpush1.xpose.msra.mxu0 0.0
    %7292 = vmatprep.subr.mxu0 0.0
    %7293 = vmatpush1.xpose.msra.mxu0 0.0
    %7294 = vmatprep.subr.mxu0 0.0
    %7295 = vmatpush1.xpose.msra.mxu0 0.0
    %7296 = vmatprep.subr.mxu0 0.0
    %7297 = vmatpush1.xpose.msra.mxu0 0.0
    %7298 = vmatprep.subr.mxu0 0.0
    %7299 = vmatpush1.xpose.msra.mxu0 0.0
    %7300 = vmatprep.subr.mxu0 0.0
    %7301 = vmatpush1.xpose.msra.mxu0 0.0
    %7302 = vmatprep.subr.mxu0 0.0
    %7303 = vmatpush1.xpose.msra.mxu0 0.0
    %7304 = vmatprep.subr.mxu0 0.0
    %7305 = vmatpush1.xpose.msra.mxu0 0.0
    %7306 = vmatprep.subr.mxu0 0.0
    %7307 = vmatpush1.xpose.msra.mxu0 0.0
    %7308 = vmatprep.subr.mxu0 0.0
    %7309 = vmatpush1.xpose.msra.mxu0 0.0
    %7310 = vmatprep.subr.mxu0 0.0
    %7311 = vmatpush1.xpose.msra.mxu0 0.0
    %7312 = vmatprep.subr.mxu0 0.0
    %7313 = vmatpush1.xpose.msra.mxu0 0.0
    %7314 = vmatprep.subr.mxu0 0.0
    %7315 = vmatpush1.xpose.msra.mxu0 0.0
    %7316 = vmatprep.mubr.f32.mxu0 0.0
    %7317 = vmatmul.mubr.f32.gmra.mrb[0].mxu0 %v7248
    %v7318 = vpop.f32.mrb[0].mxu0
    %v7319 = vadd.f32 0.0, %v7318
    %v7320 = vpop.f32.mrb[0].mxu0
    %7321 = vdwg.mxu0
    %7322 = vrot.lane.b32.xlu0 %v6012, 104
    %v7323 = vpop.permute.xlu0 %7322
    %7324 = vrot.lane.b32.xlu0 %v6008, 104
    %v7325 = vpop.permute.xlu0 %7324
    %v7326 = vsel %vm196, %v7323, 0
    %v7328 = vsel %vm196, %v7325, 0
    %7330 = vmatprep.subr.mxu0 0.0
    %7331 = vmatpush1.xpose.msra.mxu0 %v7328
    %7332 = vmatprep.subr.mxu0 0.0
    %7333 = vmatpush1.xpose.msra.mxu0 0.0
    %7334 = vmatprep.subr.mxu0 0.0
    %7335 = vmatpush1.xpose.msra.mxu0 0.0
    %7336 = vmatprep.subr.mxu0 0.0
    %7337 = vmatpush1.xpose.msra.mxu0 0.0
    %7338 = vmatprep.subr.mxu0 0.0
    %7339 = vmatpush1.xpose.msra.mxu0 0.0
    %7340 = vmatprep.subr.mxu0 0.0
    %7341 = vmatpush1.xpose.msra.mxu0 0.0
    %7342 = vmatprep.subr.mxu0 0.0
    %7343 = vmatpush1.xpose.msra.mxu0 0.0
    %7344 = vmatprep.subr.mxu0 0.0
    %7345 = vmatpush1.xpose.msra.mxu0 0.0
    %7346 = vmatprep.subr.mxu0 0.0
    %7347 = vmatpush1.xpose.msra.mxu0 0.0
    %7348 = vmatprep.subr.mxu0 0.0
    %7349 = vmatpush1.xpose.msra.mxu0 0.0
    %7350 = vmatprep.subr.mxu0 0.0
    %7351 = vmatpush1.xpose.msra.mxu0 0.0
    %7352 = vmatprep.subr.mxu0 0.0
    %7353 = vmatpush1.xpose.msra.mxu0 0.0
    %7354 = vmatprep.subr.mxu0 0.0
    %7355 = vmatpush1.xpose.msra.mxu0 0.0
    %7356 = vmatprep.subr.mxu0 0.0
    %7357 = vmatpush1.xpose.msra.mxu0 0.0
    %7358 = vmatprep.subr.mxu0 0.0
    %7359 = vmatpush1.xpose.msra.mxu0 0.0
    %7360 = vmatprep.subr.mxu0 0.0
    %7361 = vmatpush1.xpose.msra.mxu0 0.0
    %7362 = vmatprep.subr.mxu0 0.0
    %7363 = vmatpush1.xpose.msra.mxu0 0.0
    %7364 = vmatprep.subr.mxu0 0.0
    %7365 = vmatpush1.xpose.msra.mxu0 0.0
    %7366 = vmatprep.subr.mxu0 0.0
    %7367 = vmatpush1.xpose.msra.mxu0 0.0
    %7368 = vmatprep.subr.mxu0 0.0
    %7369 = vmatpush1.xpose.msra.mxu0 0.0
    %7370 = vmatprep.subr.mxu0 0.0
    %7371 = vmatpush1.xpose.msra.mxu0 0.0
    %7372 = vmatprep.subr.mxu0 0.0
    %7373 = vmatpush1.xpose.msra.mxu0 0.0
    %7374 = vmatprep.subr.mxu0 0.0
    %7375 = vmatpush1.xpose.msra.mxu0 0.0
    %7376 = vmatprep.subr.mxu0 0.0
    %7377 = vmatpush1.xpose.msra.mxu0 0.0
    %7378 = vmatprep.subr.mxu0 0.0
    %7379 = vmatpush1.xpose.msra.mxu0 0.0
    %7380 = vmatprep.subr.mxu0 0.0
    %7381 = vmatpush1.xpose.msra.mxu0 0.0
    %7382 = vmatprep.subr.mxu0 0.0
    %7383 = vmatpush1.xpose.msra.mxu0 0.0
    %7384 = vmatprep.subr.mxu0 0.0
    %7385 = vmatpush1.xpose.msra.mxu0 0.0
    %7386 = vmatprep.subr.mxu0 0.0
    %7387 = vmatpush1.xpose.msra.mxu0 0.0
    %7388 = vmatprep.subr.mxu0 0.0
    %7389 = vmatpush1.xpose.msra.mxu0 0.0
    %7390 = vmatprep.subr.mxu0 0.0
    %7391 = vmatpush1.xpose.msra.mxu0 0.0
    %7392 = vmatprep.subr.mxu0 0.0
    %7393 = vmatpush1.xpose.msra.mxu0 0.0
    %7394 = vmatprep.mubr.f32.mxu0 0.0
    %7395 = vmatmul.mubr.f32.gmra.mrb[0].mxu0 %v7326
    %v7396 = vpop.f32.mrb[0].mxu0
    %v7397 = vadd.f32 0.0, %v7396
    %v7398 = vpop.f32.mrb[0].mxu0
    %7399 = vdwg.mxu0
    %v7400 = vsel %vm196, %v7319, -inf
    %7401 = vmax.xlane.f32.xlu0 %v7400
    %v7402 = vpop.xlane.xlu0 %7401
    %v7403 = vsel %vm196, %v7397, -inf
    %7404 = vmax.xlane.f32.xlu0 %v7403
    %v7405 = vpop.xlane.xlu0 %7404
    %v7406 = vsub.f32 %v7319, %v7402
    %v7407 = vsub.f32 %v7397, %v7405
    %v7408 = vmul.f32 %v7406, 1.442695
    %v7409 = vpow.pop %v7408
    %v7410 = vmul.f32 %v7407, 1.442695
    %v7411 = vpow.pop %v7410
    %v7412 = vsel %vm196, %v7409, 0.0
    %7413 = vadd.xlane.f32.xlu0 %v7412
    %v7414 = vpop.xlane.xlu0 %7413
    %v7415 = vsel %vm196, %v7411, 0.0
    %7416 = vadd.xlane.f32.xlu0 %v7415
    %v7417 = vpop.xlane.xlu0 %7416
    %v7418 = vrcp.pop %v7414
    %v7419 = vrcp.pop %v7417
    %v7420 = vmul.f32 %v7409, %v7418
    %v7421 = vmul.f32 %v7411, %v7419
    %7422 = vrot.lane.b32.xlu0 %v6003, 72
    %v7423 = vpop.permute.xlu0 %7422
    %v7426 = vsel %vm196, %v7420, 0
    %7428 = vmatprep.subr.mxu0 0.0
    %7429 = vmatpush1.msra.mxu0 %v7423
    %7430 = vmatprep.subr.mxu0 0.0
    %7431 = vmatpush1.msra.mxu0 0.0
    %7432 = vmatprep.subr.mxu0 0.0
    %7433 = vmatpush1.msra.mxu0 0.0
    %7434 = vmatprep.subr.mxu0 0.0
    %7435 = vmatpush1.msra.mxu0 0.0
    %7436 = vmatprep.subr.mxu0 0.0
    %7437 = vmatpush1.msra.mxu0 0.0
    %7438 = vmatprep.subr.mxu0 0.0
    %7439 = vmatpush1.msra.mxu0 0.0
    %7440 = vmatprep.subr.mxu0 0.0
    %7441 = vmatpush1.msra.mxu0 0.0
    %7442 = vmatprep.subr.mxu0 0.0
    %7443 = vmatpush1.msra.mxu0 0.0
    %7444 = vmatprep.subr.mxu0 0.0
    %7445 = vmatpush1.msra.mxu0 0.0
    %7446 = vmatprep.subr.mxu0 0.0
    %7447 = vmatpush1.msra.mxu0 0.0
    %7448 = vmatprep.subr.mxu0 0.0
    %7449 = vmatpush1.msra.mxu0 0.0
    %7450 = vmatprep.subr.mxu0 0.0
    %7451 = vmatpush1.msra.mxu0 0.0
    %7452 = vmatprep.subr.mxu0 0.0
    %7453 = vmatpush1.msra.mxu0 0.0
    %7454 = vmatprep.subr.mxu0 0.0
    %7455 = vmatpush1.msra.mxu0 0.0
    %7456 = vmatprep.subr.mxu0 0.0
    %7457 = vmatpush1.msra.mxu0 0.0
    %7458 = vmatprep.subr.mxu0 0.0
    %7459 = vmatpush1.msra.mxu0 0.0
    %7460 = vmatprep.subr.mxu0 0.0
    %7461 = vmatpush1.msra.mxu0 0.0
    %7462 = vmatprep.subr.mxu0 0.0
    %7463 = vmatpush1.msra.mxu0 0.0
    %7464 = vmatprep.subr.mxu0 0.0
    %7465 = vmatpush1.msra.mxu0 0.0
    %7466 = vmatprep.subr.mxu0 0.0
    %7467 = vmatpush1.msra.mxu0 0.0
    %7468 = vmatprep.subr.mxu0 0.0
    %7469 = vmatpush1.msra.mxu0 0.0
    %7470 = vmatprep.subr.mxu0 0.0
    %7471 = vmatpush1.msra.mxu0 0.0
    %7472 = vmatprep.subr.mxu0 0.0
    %7473 = vmatpush1.msra.mxu0 0.0
    %7474 = vmatprep.subr.mxu0 0.0
    %7475 = vmatpush1.msra.mxu0 0.0
    %7476 = vmatprep.subr.mxu0 0.0
    %7477 = vmatpush1.msra.mxu0 0.0
    %7478 = vmatprep.subr.mxu0 0.0
    %7479 = vmatpush1.msra.mxu0 0.0
    %7480 = vmatprep.subr.mxu0 0.0
    %7481 = vmatpush1.msra.mxu0 0.0
    %7482 = vmatprep.subr.mxu0 0.0
    %7483 = vmatpush1.msra.mxu0 0.0
    %7484 = vmatprep.subr.mxu0 0.0
    %7485 = vmatpush1.msra.mxu0 0.0
    %7486 = vmatprep.subr.mxu0 0.0
    %7487 = vmatpush1.msra.mxu0 0.0
    %7488 = vmatprep.subr.mxu0 0.0
    %7489 = vmatpush1.msra.mxu0 0.0
    %7490 = vmatprep.subr.mxu0 0.0
    %7491 = vmatpush1.msra.mxu0 0.0
    %7492 = vmatprep.mubr.f32.mxu0 0.0
    %7493 = vmatmul.mubr.f32.gmra.mrb[0].mxu0 %v7426
    %v7494 = vpop.f32.mrb[0].mxu0
    %v7495 = vadd.f32 0.0, %v7494
    %v7496 = vpop.f32.mrb[0].mxu0
    %7497 = vdwg.mxu0
    %7498 = vrot.lane.b32.xlu0 %v6008, 72
    %v7499 = vpop.permute.xlu0 %7498
    %v7502 = vsel %vm196, %v7421, 0
    %7504 = vmatprep.subr.mxu0 0.0
    %7505 = vmatpush1.msra.mxu0 %v7499
    %7506 = vmatprep.subr.mxu0 0.0
    %7507 = vmatpush1.msra.mxu0 0.0
    %7508 = vmatprep.subr.mxu0 0.0
    %7509 = vmatpush1.msra.mxu0 0.0
    %7510 = vmatprep.subr.mxu0 0.0
    %7511 = vmatpush1.msra.mxu0 0.0
    %7512 = vmatprep.subr.mxu0 0.0
    %7513 = vmatpush1.msra.mxu0 0.0
    %7514 = vmatprep.subr.mxu0 0.0
    %7515 = vmatpush1.msra.mxu0 0.0
    %7516 = vmatprep.subr.mxu0 0.0
    %7517 = vmatpush1.msra.mxu0 0.0
    %7518 = vmatprep.subr.mxu0 0.0
    %7519 = vmatpush1.msra.mxu0 0.0
    %7520 = vmatprep.subr.mxu0 0.0
    %7521 = vmatpush1.msra.mxu0 0.0
    %7522 = vmatprep.subr.mxu0 0.0
    %7523 = vmatpush1.msra.mxu0 0.0
    %7524 = vmatprep.subr.mxu0 0.0
    %7525 = vmatpush1.msra.mxu0 0.0
    %7526 = vmatprep.subr.mxu0 0.0
    %7527 = vmatpush1.msra.mxu0 0.0
    %7528 = vmatprep.subr.mxu0 0.0
    %7529 = vmatpush1.msra.mxu0 0.0
    %7530 = vmatprep.subr.mxu0 0.0
    %7531 = vmatpush1.msra.mxu0 0.0
    %7532 = vmatprep.subr.mxu0 0.0
    %7533 = vmatpush1.msra.mxu0 0.0
    %7534 = vmatprep.subr.mxu0 0.0
    %7535 = vmatpush1.msra.mxu0 0.0
    %7536 = vmatprep.subr.mxu0 0.0
    %7537 = vmatpush1.msra.mxu0 0.0
    %7538 = vmatprep.subr.mxu0 0.0
    %7539 = vmatpush1.msra.mxu0 0.0
    %7540 = vmatprep.subr.mxu0 0.0
    %7541 = vmatpush1.msra.mxu0 0.0
    %7542 = vmatprep.subr.mxu0 0.0
    %7543 = vmatpush1.msra.mxu0 0.0
    %7544 = vmatprep.subr.mxu0 0.0
    %7545 = vmatpush1.msra.mxu0 0.0
    %7546 = vmatprep.subr.mxu0 0.0
    %7547 = vmatpush1.msra.mxu0 0.0
    %7548 = vmatprep.subr.mxu0 0.0
    %7549 = vmatpush1.msra.mxu0 0.0
    %7550 = vmatprep.subr.mxu0 0.0
    %7551 = vmatpush1.msra.mxu0 0.0
    %7552 = vmatprep.subr.mxu0 0.0
    %7553 = vmatpush1.msra.mxu0 0.0
    %7554 = vmatprep.subr.mxu0 0.0
    %7555 = vmatpush1.msra.mxu0 0.0
    %7556 = vmatprep.subr.mxu0 0.0
    %7557 = vmatpush1.msra.mxu0 0.0
    %7558 = vmatprep.subr.mxu0 0.0
    %7559 = vmatpush1.msra.mxu0 0.0
    %7560 = vmatprep.subr.mxu0 0.0
    %7561 = vmatpush1.msra.mxu0 0.0
    %7562 = vmatprep.subr.mxu0 0.0
    %7563 = vmatpush1.msra.mxu0 0.0
    %7564 = vmatprep.subr.mxu0 0.0
    %7565 = vmatpush1.msra.mxu0 0.0
    %7566 = vmatprep.subr.mxu0 0.0
    %7567 = vmatpush1.msra.mxu0 0.0
    %7568 = vmatprep.mubr.f32.mxu0 0.0
    %7569 = vmatmul.mubr.f32.gmra.mrb[0].mxu0 %v7502
    %v7570 = vpop.f32.mrb[0].mxu0
    %v7571 = vadd.f32 0.0, %v7570
    %v7572 = vpop.f32.mrb[0].mxu0
    %7573 = vdwg.mxu0
    %v7575 = vsel %vm196, %v7495, 0
    %v7578 = vsel %vm196, %v7571, 0
    %7580 = vmatprep.subr.mxu0 0.0
    %7581 = vmatpush1.msra.mxu0 %v5827
    %7582 = vmatprep.subr.mxu0 0.0
    %7583 = vmatpush1.msra.mxu0 0.0
    %7584 = vmatprep.subr.mxu0 0.0
    %7585 = vmatpush1.msra.mxu0 0.0
    %7586 = vmatprep.subr.mxu0 0.0
    %7587 = vmatpush1.msra.mxu0 0.0
    %7588 = vmatprep.subr.mxu0 0.0
    %7589 = vmatpush1.msra.mxu0 0.0
    %7590 = vmatprep.subr.mxu0 0.0
    %7591 = vmatpush1.msra.mxu0 0.0
    %7592 = vmatprep.subr.mxu0 0.0
    %7593 = vmatpush1.msra.mxu0 0.0
    %7594 = vmatprep.subr.mxu0 0.0
    %7595 = vmatpush1.msra.mxu0 0.0
    %7596 = vmatprep.subr.mxu0 0.0
    %7597 = vmatpush1.msra.mxu0 0.0
    %7598 = vmatprep.subr.mxu0 0.0
    %7599 = vmatpush1.msra.mxu0 0.0
    %7600 = vmatprep.subr.mxu0 0.0
    %7601 = vmatpush1.msra.mxu0 0.0
    %7602 = vmatprep.subr.mxu0 0.0
    %7603 = vmatpush1.msra.mxu0 0.0
    %7604 = vmatprep.subr.mxu0 0.0
    %7605 = vmatpush1.msra.mxu0 0.0
    %7606 = vmatprep.subr.mxu0 0.0
    %7607 = vmatpush1.msra.mxu0 0.0
    %7608 = vmatprep.subr.mxu0 0.0
    %7609 = vmatpush1.msra.mxu0 0.0
    %7610 = vmatprep.subr.mxu0 0.0
    %7611 = vmatpush1.msra.mxu0 0.0
    %7612 = vmatprep.subr.mxu0 0.0
    %7613 = vmatpush1.msra.mxu0 0.0
    %7614 = vmatprep.subr.mxu0 0.0
    %7615 = vmatpush1.msra.mxu0 0.0
    %7616 = vmatprep.subr.mxu0 0.0
    %7617 = vmatpush1.msra.mxu0 0.0
    %7618 = vmatprep.subr.mxu0 0.0
    %7619 = vmatpush1.msra.mxu0 0.0
    %7620 = vmatprep.subr.mxu0 0.0
    %7621 = vmatpush1.msra.mxu0 0.0
    %7622 = vmatprep.subr.mxu0 0.0
    %7623 = vmatpush1.msra.mxu0 0.0
    %7624 = vmatprep.subr.mxu0 0.0
    %7625 = vmatpush1.msra.mxu0 0.0
    %7626 = vmatprep.subr.mxu0 0.0
    %7627 = vmatpush1.msra.mxu0 0.0
    %7628 = vmatprep.subr.mxu0 0.0
    %7629 = vmatpush1.msra.mxu0 0.0
    %7630 = vmatprep.subr.mxu0 0.0
    %7631 = vmatpush1.msra.mxu0 0.0
    %7632 = vmatprep.subr.mxu0 0.0
    %7633 = vmatpush1.msra.mxu0 0.0
    %7634 = vmatprep.subr.mxu0 0.0
    %7635 = vmatpush1.msra.mxu0 0.0
    %7636 = vmatprep.subr.mxu0 0.0
    %7637 = vmatpush1.msra.mxu0 0.0
    %7638 = vmatprep.subr.mxu0 0.0
    %7639 = vmatpush1.msra.mxu0 0.0
    %7640 = vmatprep.subr.mxu0 0.0
    %7641 = vmatpush1.msra.mxu0 0.0
    %7642 = vmatprep.subr.mxu0 0.0
    %7643 = vmatpush1.msra.mxu0 0.0
    %7644 = vmatprep.mubr.f32.mxu0 0.0
    %7645 = vmatmul.mubr.f32.gmra.mrb[0].mxu0 %v7575
    %v7646 = vpop.f32.mrb[0].mxu0
    %v7647 = vadd.f32 0.0, %v7646
    %v7648 = vpop.f32.mrb[0].mxu0
    %7649 = vmatprep.mubr.f32.mxu0 0.0
    %7650 = vmatmul.mubr.f32.gmra.mrb[0].mxu0 %v7578
    %v7651 = vpop.f32.mrb[0].mxu0
    %v7652 = vadd.f32 0.0, %v7651
    %v7653 = vpop.f32.mrb[0].mxu0
    %7654 = vdwg.mxu0
    %v7655 = vadd.f32 %v7242, %v7647
    %v7656 = vadd.f32 %v7243, %v7652
    %v7658 = vlaneseq
    %v7659 = vshrl.u32 %v7658, 7
    %v7660 = vsub.s32 0, %v7659
    %v7661 = vrot.slane %v5829, %v7660
    %v7663 = vadd.f32 %v7655, %v7661
    %v7664 = vadd.f32 %v7656, %v7661
    %v7665 = vadd.f32 %v5814, %v7663
    %v7666 = vadd.f32 %v5815, %v7664
    %v7667 = vsel %vm109, %v7665, 0.0
    %7668 = vadd.xlane.f32.xlu0 %v7667
    %v7669 = vpop.xlane.xlu0 %7668
    %v7670 = vsel %vm109, %v7666, 0.0
    %7671 = vadd.xlane.f32.xlu0 %v7670
    %v7672 = vpop.xlane.xlu0 %7671
    %v7673 = vmul.f32 %v7669, %v1858
    %v7674 = vmul.f32 %v7672, %v1858
    %v7675 = vsub.f32 %v7665, %v7673
    %v7676 = vsub.f32 %v7666, %v7674
    %v7677 = vmul.f32 %v7675, %v7675
    %v7678 = vmul.f32 %v7676, %v7676
    %v7679 = vsel %vm109, %v7677, 0.0
    %7680 = vadd.xlane.f32.xlu0 %v7679
    %v7681 = vpop.xlane.xlu0 %7680
    %v7682 = vsel %vm109, %v7678, 0.0
    %7683 = vadd.xlane.f32.xlu0 %v7682
    %v7684 = vpop.xlane.xlu0 %7683
    %v7685 = vmul.f32 %v7681, %v1858
    %v7686 = vmul.f32 %v7684, %v1858
    %v7687 = vadd.f32 %v7685, 1e-05
    %v7688 = vadd.f32 %v7686, 1e-05
    %v7689 = vrsqrt.pop %v7687
    %v7690 = vrsqrt.pop %v7688
    %v7691 = vmul.f32 %v7675, %v7689
    %v7692 = vmul.f32 %v7676, %v7690
    %v7693 = vlaneseq
    %v7694 = vshrl.u32 %v7693, 7
    %v7695 = vsub.s32 1, %v7694
    %v7696 = vrot.slane %v4014, %v7695
    %v7697 = vmul.f32 %v7691, %v7696
    %v7698 = vmul.f32 %v7692, %v7696
    %v7699 = vlaneseq
    %v7700 = vshrl.u32 %v7699, 7
    %v7701 = vsub.s32 1, %v7700
    %v7702 = vrot.slane %v4016, %v7701
    %v7703 = vadd.f32 %v7697, %v7702
    %v7704 = vadd.f32 %v7698, %v7702
    %s7705 = scalar_lea.vmem [#allocation4], 32
    %v7706 = vld [vmem:[%s7705] sm:$0xff]
    %v7707 = vld [vmem:[%s7705 + $0x8] sm:$0xff]
    %v7708 = vld [vmem:[%s7705 + $0x10] sm:$0xff]
    %v7709 = vld [vmem:[%s7705 + $0x18] sm:$0xff]
    %s7710 = scalar_lea.vmem %s11, 1
    %v7711 = vld [vmem:[%s7710] sm:$0x1]
    %s7712 = scalar_lea.vmem %s12, 64
    %v7713 = vld [vmem:[%s7712] sm:$0xff]
    %v7714 = vld [vmem:[%s7712 + $0x8] sm:$0xff]
    %v7715 = vld [vmem:[%s7712 + $0x10] sm:$0xff]
    %v7716 = vld [vmem:[%s7712 + $0x18] sm:$0xff]
    %v7717 = vld [vmem:[%s7712 + $0x20] sm:$0xff]
    %v7718 = vld [vmem:[%s7712 + $0x28] sm:$0xff]
    %v7719 = vld [vmem:[%s7712 + $0x30] sm:$0xff]
    %v7720 = vld [vmem:[%s7712 + $0x38] sm:$0xff]
    %s7721 = scalar_lea.vmem %s13, 1
    %v7722 = vld [vmem:[%s7721] sm:$0x1]
    %v7724 = vlaneseq
    %v7725 = vshrl.u32 %v7724, 7
    %v7726 = vsub.s32 0, %v7725
    %v7727 = vrot.slane %v7711, %v7726
    %v7730 = vsel %vm109, %v7703, 0
    %v7733 = vsel %vm109, %v7704, 0
    %7735 = vmatprep.subr.mxu0 0.0
    %7736 = vmatpush1.msra.mxu0 %v7706
    %7737 = vmatprep.subr.mxu0 0.0
    %7738 = vmatpush1.msra.mxu0 %v7707
    %7739 = vmatprep.subr.mxu0 0.0
    %7740 = vmatpush1.msra.mxu0 %v7708
    %7741 = vmatprep.subr.mxu0 0.0
    %7742 = vmatpush1.msra.mxu0 %v7709
    %7743 = vmatprep.subr.mxu0 0.0
    %7744 = vmatpush1.msra.mxu0 0.0
    %7745 = vmatprep.subr.mxu0 0.0
    %7746 = vmatpush1.msra.mxu0 0.0
    %7747 = vmatprep.subr.mxu0 0.0
    %7748 = vmatpush1.msra.mxu0 0.0
    %7749 = vmatprep.subr.mxu0 0.0
    %7750 = vmatpush1.msra.mxu0 0.0
    %7751 = vmatprep.subr.mxu0 0.0
    %7752 = vmatpush1.msra.mxu0 0.0
    %7753 = vmatprep.subr.mxu0 0.0
    %7754 = vmatpush1.msra.mxu0 0.0
    %7755 = vmatprep.subr.mxu0 0.0
    %7756 = vmatpush1.msra.mxu0 0.0
    %7757 = vmatprep.subr.mxu0 0.0
    %7758 = vmatpush1.msra.mxu0 0.0
    %7759 = vmatprep.subr.mxu0 0.0
    %7760 = vmatpush1.msra.mxu0 0.0
    %7761 = vmatprep.subr.mxu0 0.0
    %7762 = vmatpush1.msra.mxu0 0.0
    %7763 = vmatprep.subr.mxu0 0.0
    %7764 = vmatpush1.msra.mxu0 0.0
    %7765 = vmatprep.subr.mxu0 0.0
    %7766 = vmatpush1.msra.mxu0 0.0
    %7767 = vmatprep.subr.mxu0 0.0
    %7768 = vmatpush1.msra.mxu0 0.0
    %7769 = vmatprep.subr.mxu0 0.0
    %7770 = vmatpush1.msra.mxu0 0.0
    %7771 = vmatprep.subr.mxu0 0.0
    %7772 = vmatpush1.msra.mxu0 0.0
    %7773 = vmatprep.subr.mxu0 0.0
    %7774 = vmatpush1.msra.mxu0 0.0
    %7775 = vmatprep.subr.mxu0 0.0
    %7776 = vmatpush1.msra.mxu0 0.0
    %7777 = vmatprep.subr.mxu0 0.0
    %7778 = vmatpush1.msra.mxu0 0.0
    %7779 = vmatprep.subr.mxu0 0.0
    %7780 = vmatpush1.msra.mxu0 0.0
    %7781 = vmatprep.subr.mxu0 0.0
    %7782 = vmatpush1.msra.mxu0 0.0
    %7783 = vmatprep.subr.mxu0 0.0
    %7784 = vmatpush1.msra.mxu0 0.0
    %7785 = vmatprep.subr.mxu0 0.0
    %7786 = vmatpush1.msra.mxu0 0.0
    %7787 = vmatprep.subr.mxu0 0.0
    %7788 = vmatpush1.msra.mxu0 0.0
    %7789 = vmatprep.subr.mxu0 0.0
    %7790 = vmatpush1.msra.mxu0 0.0
    %7791 = vmatprep.subr.mxu0 0.0
    %7792 = vmatpush1.msra.mxu0 0.0
    %7793 = vmatprep.subr.mxu0 0.0
    %7794 = vmatpush1.msra.mxu0 0.0
    %7795 = vmatprep.subr.mxu0 0.0
    %7796 = vmatpush1.msra.mxu0 0.0
    %7797 = vmatprep.subr.mxu0 0.0
    %7798 = vmatpush1.msra.mxu0 0.0
    %7799 = vmatprep.mubr.f32.mxu0 0.0
    %7800 = vmatmul.mubr.f32.gmra.mrb[0].mxu0 %v7730
    %v7801 = vpop.f32.mrb[0].mxu0
    %v7802 = vadd.f32 %v7727, %v7801
    %v7803 = vpop.f32.mrb[0].mxu0
    %7804 = vmatprep.mubr.f32.mxu0 0.0
    %7805 = vmatmul.mubr.f32.gmra.mrb[0].mxu0 %v7733
    %v7806 = vpop.f32.mrb[0].mxu0
    %v7807 = vadd.f32 %v7727, %v7806
    %v7808 = vpop.f32.mrb[0].mxu0
    %7809 = vdwg.mxu0
    %v7810 = vmax.f32 %v7802, 0.0
    %v7811 = vmax.f32 %v7807, 0.0
    %v7813 = vlaneseq
    %v7814 = vshrl.u32 %v7813, 7
    %v7815 = vsub.s32 0, %v7814
    %v7816 = vrot.slane %v7722, %v7815
    %v7819 = vsel %vm3891, %v7810, 0
    %v7822 = vsel %vm3891, %v7811, 0
    %7824 = vmatprep.subr.mxu0 0.0
    %7825 = vmatpush1.msra.mxu0 %v7713
    %7826 = vmatprep.subr.mxu0 0.0
    %7827 = vmatpush1.msra.mxu0 %v7714
    %7828 = vmatprep.subr.mxu0 0.0
    %7829 = vmatpush1.msra.mxu0 %v7715
    %7830 = vmatprep.subr.mxu0 0.0
    %7831 = vmatpush1.msra.mxu0 %v7716
    %7832 = vmatprep.subr.mxu0 0.0
    %7833 = vmatpush1.msra.mxu0 %v7717
    %7834 = vmatprep.subr.mxu0 0.0
    %7835 = vmatpush1.msra.mxu0 %v7718
    %7836 = vmatprep.subr.mxu0 0.0
    %7837 = vmatpush1.msra.mxu0 %v7719
    %7838 = vmatprep.subr.mxu0 0.0
    %7839 = vmatpush1.msra.mxu0 %v7720
    %7840 = vmatprep.subr.mxu0 0.0
    %7841 = vmatpush1.msra.mxu0 0.0
    %7842 = vmatprep.subr.mxu0 0.0
    %7843 = vmatpush1.msra.mxu0 0.0
    %7844 = vmatprep.subr.mxu0 0.0
    %7845 = vmatpush1.msra.mxu0 0.0
    %7846 = vmatprep.subr.mxu0 0.0
    %7847 = vmatpush1.msra.mxu0 0.0
    %7848 = vmatprep.subr.mxu0 0.0
    %7849 = vmatpush1.msra.mxu0 0.0
    %7850 = vmatprep.subr.mxu0 0.0
    %7851 = vmatpush1.msra.mxu0 0.0
    %7852 = vmatprep.subr.mxu0 0.0
    %7853 = vmatpush1.msra.mxu0 0.0
    %7854 = vmatprep.subr.mxu0 0.0
    %7855 = vmatpush1.msra.mxu0 0.0
    %7856 = vmatprep.subr.mxu0 0.0
    %7857 = vmatpush1.msra.mxu0 0.0
    %7858 = vmatprep.subr.mxu0 0.0
    %7859 = vmatpush1.msra.mxu0 0.0
    %7860 = vmatprep.subr.mxu0 0.0
    %7861 = vmatpush1.msra.mxu0 0.0
    %7862 = vmatprep.subr.mxu0 0.0
    %7863 = vmatpush1.msra.mxu0 0.0
    %7864 = vmatprep.subr.mxu0 0.0
    %7865 = vmatpush1.msra.mxu0 0.0
    %7866 = vmatprep.subr.mxu0 0.0
    %7867 = vmatpush1.msra.mxu0 0.0
    %7868 = vmatprep.subr.mxu0 0.0
    %7869 = vmatpush1.msra.mxu0 0.0
    %7870 = vmatprep.subr.mxu0 0.0
    %7871 = vmatpush1.msra.mxu0 0.0
    %7872 = vmatprep.subr.mxu0 0.0
    %7873 = vmatpush1.msra.mxu0 0.0
    %7874 = vmatprep.subr.mxu0 0.0
    %7875 = vmatpush1.msra.mxu0 0.0
    %7876 = vmatprep.subr.mxu0 0.0
    %7877 = vmatpush1.msra.mxu0 0.0
    %7878 = vmatprep.subr.mxu0 0.0
    %7879 = vmatpush1.msra.mxu0 0.0
    %7880 = vmatprep.subr.mxu0 0.0
    %7881 = vmatpush1.msra.mxu0 0.0
    %7882 = vmatprep.subr.mxu0 0.0
    %7883 = vmatpush1.msra.mxu0 0.0
    %7884 = vmatprep.subr.mxu0 0.0
    %7885 = vmatpush1.msra.mxu0 0.0
    %7886 = vmatprep.subr.mxu0 0.0
    %7887 = vmatpush1.msra.mxu0 0.0
    %7888 = vmatprep.mubr.f32.mxu0 0.0
    %7889 = vmatmul.mubr.f32.gmra.mrb[0].mxu0 %v7819
    %v7890 = vpop.f32.mrb[0].mxu0
    %v7891 = vadd.f32 %v7816, %v7890
    %v7892 = vpop.f32.mrb[0].mxu0
    %7893 = vmatprep.mubr.f32.mxu0 0.0
    %7894 = vmatmul.mubr.f32.gmra.mrb[0].mxu0 %v7822
    %v7895 = vpop.f32.mrb[0].mxu0
    %v7896 = vadd.f32 %v7816, %v7895
    %v7897 = vpop.f32.mrb[0].mxu0
    %7898 = vdwg.mxu0
    %v7899 = vadd.f32 %v7703, %v7891
    %v7900 = vadd.f32 %v7704, %v7896
    %v7901 = vsel %vm109, %v7899, 0.0
    %7902 = vadd.xlane.f32.xlu0 %v7901
    %v7903 = vpop.xlane.xlu0 %7902
    %v7904 = vsel %vm109, %v7900, 0.0
    %7905 = vadd.xlane.f32.xlu0 %v7904
    %v7906 = vpop.xlane.xlu0 %7905
    %v7907 = vmul.f32 %v7903, %v1858
    %v7908 = vmul.f32 %v7906, %v1858
    %v7909 = vsub.f32 %v7899, %v7907
    %v7910 = vsub.f32 %v7900, %v7908
    %v7911 = vmul.f32 %v7909, %v7909
    %v7912 = vmul.f32 %v7910, %v7910
    %v7913 = vsel %vm109, %v7911, 0.0
    %7914 = vadd.xlane.f32.xlu0 %v7913
    %v7915 = vpop.xlane.xlu0 %7914
    %v7916 = vsel %vm109, %v7912, 0.0
    %7917 = vadd.xlane.f32.xlu0 %v7916
    %v7918 = vpop.xlane.xlu0 %7917
    %v7919 = vmul.f32 %v7915, %v1858
    %v7920 = vmul.f32 %v7918, %v1858
    %v7921 = vadd.f32 %v7919, 1e-05
    %v7922 = vadd.f32 %v7920, 1e-05
    %v7923 = vrsqrt.pop %v7921
    %v7924 = vrsqrt.pop %v7922
    %v7925 = vmul.f32 %v7909, %v7923
    %v7926 = vmul.f32 %v7910, %v7924
    %v7927 = vlaneseq
    %v7928 = vshrl.u32 %v7927, 7
    %v7929 = vsub.s32 2, %v7928
    %v7930 = vrot.slane %v4014, %v7929
    %v7931 = vmul.f32 %v7925, %v7930
    %v7932 = vmul.f32 %v7926, %v7930
    %v7933 = vlaneseq
    %v7934 = vshrl.u32 %v7933, 7
    %v7935 = vsub.s32 2, %v7934
    %v7936 = vrot.slane %v4016, %v7935
    %v7937 = vadd.f32 %v7931, %v7936
    %v7938 = vadd.f32 %v7932, %v7936
    %v7939 = vsel %vm109, %v7937, 0.0
    %7940 = vadd.xlane.f32.xlu0 %v7939
    %v7941 = vpop.xlane.xlu0 %7940
    %v7942 = vsel %vm109, %v7938, 0.0
    %7943 = vadd.xlane.f32.xlu0 %v7942
    %v7944 = vpop.xlane.xlu0 %7943
    %v7945 = vmul.f32 %v7941, %v1858
    %v7946 = vmul.f32 %v7944, %v1858
    %v7947 = vsub.f32 %v7937, %v7945
    %v7948 = vsub.f32 %v7938, %v7946
    %v7949 = vmul.f32 %v7947, %v7947
    %v7950 = vmul.f32 %v7948, %v7948
    %v7951 = vsel %vm109, %v7949, 0.0
    %7952 = vadd.xlane.f32.xlu0 %v7951
    %v7953 = vpop.xlane.xlu0 %7952
    %v7954 = vsel %vm109, %v7950, 0.0
    %7955 = vadd.xlane.f32.xlu0 %v7954
    %v7956 = vpop.xlane.xlu0 %7955
    %v7957 = vmul.f32 %v7953, %v1858
    %v7958 = vmul.f32 %v7956, %v1858
    %v7959 = vadd.f32 %v7957, 1e-05
    %v7960 = vadd.f32 %v7958, 1e-05
    %v7961 = vrsqrt.pop %v7959
    %v7962 = vrsqrt.pop %v7960
    %v7963 = vmul.f32 %v7947, %v7961
    %v7964 = vmul.f32 %v7948, %v7962
    %v7965 = vld [vmem:[%s16] sm:$0x1]
    %v7967 = vlaneseq
    %v7968 = vshrl.u32 %v7967, 7
    %v7969 = vsub.s32 0, %v7968
    %v7970 = vrot.slane %v7965, %v7969
    %v7972 = vmul.f32 %v7963, %v7970
    %v7973 = vmul.f32 %v7964, %v7970
    %v7974 = vld [vmem:[%s17] sm:$0x1]
    %v7976 = vlaneseq
    %v7977 = vshrl.u32 %v7976, 7
    %v7978 = vsub.s32 0, %v7977
    %v7979 = vrot.slane %v7974, %v7978
    %v7981 = vadd.f32 %v7972, %v7979
    %v7982 = vadd.f32 %v7973, %v7979
    %7983 = vst.msk [vmem:[%s18] sm:$0xff] %vm109, %v7981
    %7984 = vst.msk [vmem:[%s18 + $0x8] sm:$0xff] %vm109, %v7982
    // Predicated region
    $region82: #{question_decoder_forward.1} parent=1 // pred_check
      _
    $region83: #{question_decoder_forward.1} parent=1 // pred_check_branch
      %7986 = sbr.rel (0) target = $region85
    $region84: #{question_decoder_forward.1} parent=1 // pred_region
      _
    $region85: #{question_decoder_forward.1} parent=1 // pred_fallthru
      _
    // Predicated region
    $region86: #{question_decoder_forward.1} parent=1 // pred_check
      _
    $region87: #{question_decoder_forward.1} parent=1 // pred_check_branch
      %7988 = sbr.rel (0) target = $region89
    $region88: #{question_decoder_forward.1} parent=1 // pred_region
      _
    $region89: #{question_decoder_forward.1} parent=1 // pred_fallthru
      _
    %7989 = vsyncpa [#allocation3], 1
    %7990 = vsyncpa [#allocation5], 1

</llo_original>
